<compile_context>
chip_gen: v7x
topology: tpu7x:2x2x1
jax: 0.10.0
libtpu: 0.0.40
codegen_flags: <defaults>
</compile_context>

<pallas_src>
import numpy as np
import jax
import jax.numpy as jnp
from jax import lax
from jax.experimental import pallas as pl
from jax.experimental.pallas import tpu as pltpu

NUM_CLASSES = 10
IN_CHANNELS = 3            # grayscale=False in the reference module
PAD_CLASSES = 128          # lane-dense output slab; sliced back to NUM_CLASSES in wrapper
B_TILE = 8                 # images per grid step (batch is padded to a multiple of this)
CONV1_ROWS = (B_TILE - 1) * 32 + 28   # 252 rows holding all valid conv1 output rows
CONV2_ROWS = (B_TILE - 1) * 14 + 10   # 108 rows holding all valid conv2 output rows


# -----------------------------------------------------------------------------
# Pallas kernel (B_TILE images per grid step, stacked along the row axis)
# -----------------------------------------------------------------------------
def lenet5_kernel(x_ref, t1_ref, b1_ref, t2_ref, b2_ref,
                  se1_ref, so1_ref, sc1e_ref, sc1o_ref,
                  se2_ref, so2_ref, sc2e_ref, sc2o_ref,
                  ra_ref, wf1_ref, bf1_ref, wf2_ref, bf2_ref, wf3_ref, bf3_ref,
                  logits_ref, probas_ref):
    f32 = jnp.float32

    def dot(a, b):
        return jnp.dot(a, b, preferred_element_type=f32)

    # ---- conv1: 3->6 channels, 32x32 -> 28x28 (channel-folded Toeplitz, 5 matmuls) ----
    # x_ref: (B_TILE*32, 96); row b*32+r is image b, spatial row r, channels folded.
    acc1 = dot(x_ref[0:CONV1_ROWS, :], t1_ref[0])                  # (252, 168)
    for ky in range(1, 5):
        acc1 = acc1 + dot(x_ref[ky:ky + CONV1_ROWS, :], t1_ref[ky])
    a1 = jnp.tanh(acc1 + b1_ref[...])                               # (252, 168)

    # ---- maxpool1 2x2/2: block-diag even/odd row selectors, then column selectors ----
    r1 = jnp.maximum(dot(se1_ref[...], a1), dot(so1_ref[...], a1))  # (112, 168)
    p1 = jnp.maximum(dot(r1, sc1e_ref[...]), dot(r1, sc1o_ref[...]))  # (112, 84)

    # ---- conv2: 6->16 channels, 14x14 -> 10x10 (channel-folded Toeplitz, 5 matmuls) ----
    acc2 = dot(p1[0:CONV2_ROWS, :], t2_ref[0])                      # (108, 160)
    for ky in range(1, 5):
        acc2 = acc2 + dot(p1[ky:ky + CONV2_ROWS, :], t2_ref[ky])
    a2 = jnp.tanh(acc2 + b2_ref[...])                               # (108, 160)

    # ---- maxpool2 ----
    r2 = jnp.maximum(dot(se2_ref[...], a2), dot(so2_ref[...], a2))  # (40, 160)
    p2 = jnp.maximum(dot(r2, sc2e_ref[...]), dot(r2, sc2o_ref[...]))  # (40, 80)

    # ---- classifier: 400->120 folded over the 5 spatial rows (no flatten scratch) ----
    h = dot(dot(ra_ref[0], p2), wf1_ref[0])                         # (8, 120)
    for a in range(1, 5):
        h = h + dot(dot(ra_ref[a], p2), wf1_ref[a])
    h = jnp.tanh(h + bf1_ref[...])                                  # (8, 120)
    h = jnp.tanh(dot(h, wf2_ref[...]) + bf2_ref[...])               # (8, 84)
    logits = dot(h, wf3_ref[...]) + bf3_ref[...]                    # (8, 128)

    # ---- softmax (padding lanes carry bias -1e30 -> exp == 0) ----
    m = jnp.max(logits, axis=-1, keepdims=True)
    e = jnp.exp(logits - m)
    probas = e * pl.reciprocal(jnp.sum(e, axis=-1, keepdims=True), approx=True)

    logits_ref[...] = logits
    probas_ref[...] = probas


# -----------------------------------------------------------------------------
# Wrapper: grid over batch tiles, weights resident, lane-dense outputs
# -----------------------------------------------------------------------------
def lenet5_forward(x, packed_params):
    batch = x.shape[0]
    # channel-fold the input: (B, C, H, W) -> (B, H, C*W) so conv1 is 5 matmuls with K=96
    xp = jnp.transpose(x, (0, 2, 1, 3)).reshape(batch, 32, IN_CHANNELS * 32)
    bp = ((batch + B_TILE - 1) // B_TILE) * B_TILE
    if bp != batch:
        xp = jnp.pad(xp, ((0, bp - batch), (0, 0), (0, 0)))
    xp = xp.reshape(bp * 32, IN_CHANNELS * 32)      # images stacked along rows
    n_tiles = bp // B_TILE

    def resident(arr):
        nd = arr.ndim
        return pl.BlockSpec(tuple(arr.shape), lambda g, _n=nd: (0,) * _n)

    in_specs = [pl.BlockSpec((B_TILE * 32, IN_CHANNELS * 32), lambda g: (g, 0))]
    in_specs += [resident(a) for a in packed_params]

    out_shape = (jax.ShapeDtypeStruct((bp, PAD_CLASSES), jnp.float32),
                 jax.ShapeDtypeStruct((bp, PAD_CLASSES), jnp.float32))
    out_specs = (pl.BlockSpec((B_TILE, PAD_CLASSES), lambda g: (g, 0)),
                 pl.BlockSpec((B_TILE, PAD_CLASSES), lambda g: (g, 0)))

    logits_p, probas_p = pl.pallas_call(
        lenet5_kernel,
        out_shape=out_shape,
        grid=(n_tiles,),
        in_specs=in_specs,
        out_specs=out_specs,
        compiler_params=pltpu.CompilerParams(dimension_semantics=("parallel",)),
    )(xp, *packed_params)
    return logits_p[:batch, :NUM_CLASSES], probas_p[:batch, :NUM_CLASSES]


# -----------------------------------------------------------------------------
# Deterministic parameter init (same shapes as the PyTorch module) + packing
# -----------------------------------------------------------------------------
def init_params(key):
    ks = jax.random.split(key, 10)
    w1 = jax.random.normal(ks[0], (6, IN_CHANNELS, 5, 5), jnp.float32) * 0.1
    b1 = jax.random.normal(ks[1], (6,), jnp.float32) * 0.1
    w2 = jax.random.normal(ks[2], (16, 6, 5, 5), jnp.float32) * 0.1
    b2 = jax.random.normal(ks[3], (16,), jnp.float32) * 0.1
    fw1 = jax.random.normal(ks[4], (120, 400), jnp.float32) * 0.05
    fb1 = jax.random.normal(ks[5], (120,), jnp.float32) * 0.05
    fw2 = jax.random.normal(ks[6], (84, 120), jnp.float32) * 0.05
    fb2 = jax.random.normal(ks[7], (84,), jnp.float32) * 0.05
    fw3 = jax.random.normal(ks[8], (NUM_CLASSES, 84), jnp.float32) * 0.05
    fb3 = jax.random.normal(ks[9], (NUM_CLASSES,), jnp.float32) * 0.05
    return w1, b1, w2, b2, fw1, fb1, fw2, fb2, fw3, fb3


def build_conv_toeplitz_folded(w, w_in):
    """t[ky, c*w_in + j + kx, co*w_out + j] = w[co, c, ky, kx]  (valid conv, channels folded)."""
    co_n, ci_n, k, _ = w.shape
    w_out = w_in - k + 1
    t = np.zeros((k, ci_n * w_in, co_n * w_out), np.float32)
    for ky in range(k):
        for c in range(ci_n):
            for co in range(co_n):
                for j in range(w_out):
                    for kx in range(k):
                        t[ky, c * w_in + j + kx, co * w_out + j] = w[co, c, ky, kx]
    return t


def build_batched_row_selectors(b_tile, rows_per_img, valid_rows, total_in_rows):
    """Even/odd row selectors for 2x2 pooling over batch-stacked rows (block-diagonal)."""
    out_per_img = valid_rows // 2
    e = np.zeros((b_tile * out_per_img, total_in_rows), np.float32)
    o = np.zeros_like(e)
    for b in range(b_tile):
        for i in range(out_per_img):
            e[b * out_per_img + i, b * rows_per_img + 2 * i] = 1.0
            o[b * out_per_img + i, b * rows_per_img + 2 * i + 1] = 1.0
    return e, o


def build_col_selectors(co_n, w):
    e = np.zeros((co_n * w, co_n * (w // 2)), np.float32)
    o = np.zeros((co_n * w, co_n * (w // 2)), np.float32)
    for co in range(co_n):
        for j in range(w // 2):
            e[co * w + 2 * j, co * (w // 2) + j] = 1.0
            o[co * w + 2 * j + 1, co * (w // 2) + j] = 1.0
    return e, o


def pack_params(raw):
    w1, b1, w2, b2, fw1, fb1, fw2, fb2, fw3, fb3 = [np.asarray(a) for a in raw]
    t1 = build_conv_toeplitz_folded(w1, 32)            # (5, 96, 168)
    t2 = build_conv_toeplitz_folded(w2, 14)            # (5, 84, 160)
    b1row = np.repeat(b1, 28)[None, :]                 # (1, 168)
    b2row = np.repeat(b2, 10)[None, :]                 # (1, 160)
    se1, so1 = build_batched_row_selectors(B_TILE, 32, 28, CONV1_ROWS)   # (112, 252)
    sc1e, sc1o = build_col_selectors(6, 28)            # (168, 84)
    se2, so2 = build_batched_row_selectors(B_TILE, 14, 10, CONV2_ROWS)   # (40, 108)
    sc2e, sc2o = build_col_selectors(16, 10)           # (160, 80)

    # per-spatial-row selection of image rows: ra[a] @ p2 -> (B_TILE, 80) for spatial row a
    ra = np.zeros((5, B_TILE, B_TILE * 5), np.float32)
    for a in range(5):
        for b in range(B_TILE):
            ra[a, b, b * 5 + a] = 1.0

    # fc1 split per spatial row: wf1p[a, co*5+jj, :] matches PyTorch flatten co*25+a*5+jj
    wf1p = np.zeros((5, 80, 120), np.float32)
    for a in range(5):
        for co in range(16):
            for jj in range(5):
                wf1p[a, co * 5 + jj, :] = fw1[:, co * 25 + a * 5 + jj]

    wf3p = np.zeros((84, PAD_CLASSES), np.float32)
    wf3p[:, :NUM_CLASSES] = fw3.T
    bf3p = np.full((1, PAD_CLASSES), -1e30, np.float32)   # padding lanes vanish in softmax
    bf3p[0, :NUM_CLASSES] = fb3

    packed = (t1, b1row, t2, b2row,
              se1, so1, sc1e, sc1o, se2, so2, sc2e, sc2o,
              ra, wf1p, fb1[None, :], fw2.T, fb2[None, :], wf3p, bf3p)
    return tuple(jnp.asarray(a, jnp.float32) for a in packed)


# -----------------------------------------------------------------------------
# Pure-JAX reference for the correctness check
# -----------------------------------------------------------------------------
def _maxpool2x2(x):
    b, c, h, w = x.shape
    return jnp.max(x.reshape(b, c, h // 2, 2, w // 2, 2), axis=(3, 5))


def lenet5_reference(x, raw):
    w1, b1, w2, b2, fw1, fb1, fw2, fb2, fw3, fb3 = raw
    dn = ('NCHW', 'OIHW', 'NCHW')
    y = lax.conv_general_dilated(x, w1, (1, 1), 'VALID', dimension_numbers=dn)
    y = _maxpool2x2(jnp.tanh(y + b1[None, :, None, None]))
    y = lax.conv_general_dilated(y, w2, (1, 1), 'VALID', dimension_numbers=dn)
    y = _maxpool2x2(jnp.tanh(y + b2[None, :, None, None]))
    f = y.reshape(y.shape[0], -1)
    h = jnp.tanh(f @ fw1.T + fb1)
    h = jnp.tanh(h @ fw2.T + fb2)
    logits = h @ fw3.T + fb3
    return logits, jax.nn.softmax(logits, axis=1)


if __name__ == "__main__":
    key = jax.random.PRNGKey(0)
    pkey, xkey = jax.random.split(key)
    raw = init_params(pkey)
    params = pack_params(raw)
    x = jax.random.normal(xkey, (2, IN_CHANNELS, 32, 32), jnp.float32)

    logits, probas = jax.block_until_ready(lenet5_forward(x, params))

    ref_logits, ref_probas = lenet5_reference(x, raw)
    np.testing.assert_allclose(np.asarray(logits), np.asarray(ref_logits), atol=2e-3, rtol=0)
    np.testing.assert_allclose(np.asarray(probas), np.asarray(ref_probas), atol=2e-3, rtol=0)
    assert np.allclose(np.asarray(probas).sum(axis=1), 1.0, atol=5e-3)
    print("KERNEL_OK")
</pallas_src>

<mosaic_0001>
module attributes {stable_mosaic.version = 11 : i64} {
  func.func @lenet5_kernel(%arg0: i32, %arg1: memref<256x96xf32, #tpu.memory_space<vmem>>, %arg2: memref<5x96x168xf32, #tpu.memory_space<vmem>>, %arg3: memref<1x168xf32, #tpu.memory_space<vmem>>, %arg4: memref<5x84x160xf32, #tpu.memory_space<vmem>>, %arg5: memref<1x160xf32, #tpu.memory_space<vmem>>, %arg6: memref<112x252xf32, #tpu.memory_space<vmem>>, %arg7: memref<112x252xf32, #tpu.memory_space<vmem>>, %arg8: memref<168x84xf32, #tpu.memory_space<vmem>>, %arg9: memref<168x84xf32, #tpu.memory_space<vmem>>, %arg10: memref<40x108xf32, #tpu.memory_space<vmem>>, %arg11: memref<40x108xf32, #tpu.memory_space<vmem>>, %arg12: memref<160x80xf32, #tpu.memory_space<vmem>>, %arg13: memref<160x80xf32, #tpu.memory_space<vmem>>, %arg14: memref<5x8x40xf32, #tpu.memory_space<vmem>>, %arg15: memref<5x80x120xf32, #tpu.memory_space<vmem>>, %arg16: memref<1x120xf32, #tpu.memory_space<vmem>>, %arg17: memref<120x84xf32, #tpu.memory_space<vmem>>, %arg18: memref<1x84xf32, #tpu.memory_space<vmem>>, %arg19: memref<84x128xf32, #tpu.memory_space<vmem>>, %arg20: memref<1x128xf32, #tpu.memory_space<vmem>>, %arg21: memref<8x128xf32, #tpu.memory_space<vmem>>, %arg22: memref<8x128xf32, #tpu.memory_space<vmem>>) attributes {dimension_semantics = [#tpu.dimension_semantics<parallel>], iteration_bounds = array<i64: 1>, scalar_prefetch = 0 : i64, scratch_operands = 0 : i64, tpu.core_type = #tpu.core_type<tc>, window_params = [{transform_indices = @transform_0, window_bounds = array<i64: 256, 96>}, {pipeline_mode = #tpu.pipeline_mode<synchronous>, transform_indices = @transform_1, window_bounds = array<i64: 5, 96, 168>}, {pipeline_mode = #tpu.pipeline_mode<synchronous>, transform_indices = @transform_2, window_bounds = array<i64: 1, 168>}, {pipeline_mode = #tpu.pipeline_mode<synchronous>, transform_indices = @transform_3, window_bounds = array<i64: 5, 84, 160>}, {pipeline_mode = #tpu.pipeline_mode<synchronous>, transform_indices = @transform_4, window_bounds = array<i64: 1, 160>}, {pipeline_mode = #tpu.pipeline_mode<synchronous>, transform_indices = @transform_5, window_bounds = array<i64: 112, 252>}, {pipeline_mode = #tpu.pipeline_mode<synchronous>, transform_indices = @transform_6, window_bounds = array<i64: 112, 252>}, {pipeline_mode = #tpu.pipeline_mode<synchronous>, transform_indices = @transform_7, window_bounds = array<i64: 168, 84>}, {pipeline_mode = #tpu.pipeline_mode<synchronous>, transform_indices = @transform_8, window_bounds = array<i64: 168, 84>}, {pipeline_mode = #tpu.pipeline_mode<synchronous>, transform_indices = @transform_9, window_bounds = array<i64: 40, 108>}, {pipeline_mode = #tpu.pipeline_mode<synchronous>, transform_indices = @transform_10, window_bounds = array<i64: 40, 108>}, {pipeline_mode = #tpu.pipeline_mode<synchronous>, transform_indices = @transform_11, window_bounds = array<i64: 160, 80>}, {pipeline_mode = #tpu.pipeline_mode<synchronous>, transform_indices = @transform_12, window_bounds = array<i64: 160, 80>}, {pipeline_mode = #tpu.pipeline_mode<synchronous>, transform_indices = @transform_13, window_bounds = array<i64: 5, 8, 40>}, {pipeline_mode = #tpu.pipeline_mode<synchronous>, transform_indices = @transform_14, window_bounds = array<i64: 5, 80, 120>}, {pipeline_mode = #tpu.pipeline_mode<synchronous>, transform_indices = @transform_15, window_bounds = array<i64: 1, 120>}, {pipeline_mode = #tpu.pipeline_mode<synchronous>, transform_indices = @transform_16, window_bounds = array<i64: 120, 84>}, {pipeline_mode = #tpu.pipeline_mode<synchronous>, transform_indices = @transform_17, window_bounds = array<i64: 1, 84>}, {pipeline_mode = #tpu.pipeline_mode<synchronous>, transform_indices = @transform_18, window_bounds = array<i64: 84, 128>}, {pipeline_mode = #tpu.pipeline_mode<synchronous>, transform_indices = @transform_19, window_bounds = array<i64: 1, 128>}, {transform_indices = @transform_20, window_bounds = array<i64: 8, 128>}, {transform_indices = @transform_21, window_bounds = array<i64: 8, 128>}]} {
    %c0 = arith.constant 0 : index
    %c0_0 = arith.constant 0 : index
    %0 = vector.load %arg1[%c0, %c0_0] : memref<256x96xf32, #tpu.memory_space<vmem>>, vector<252x96xf32>
    %c0_1 = arith.constant 0 : index
    %c0_2 = arith.constant 0 : index
    %c0_3 = arith.constant 0 : index
    %1 = vector.load %arg2[%c0_1, %c0_2, %c0_3] : memref<5x96x168xf32, #tpu.memory_space<vmem>>, vector<1x96x168xf32>
    %2 = vector.shape_cast %1 : vector<1x96x168xf32> to vector<96x168xf32>
    %cst = arith.constant dense<0.000000e+00> : vector<252x168xf32>
    %3 = tpu.matmul %0, %2, %cst {dimension_numbers = #tpu.dot_dimension_numbers<[1], [0], [0], [1], [0, 0, 1, 1], [], []>} : vector<252x96xf32>, vector<96x168xf32>, vector<252x168xf32> -> vector<252x168xf32>
    %c1 = arith.constant 1 : index
    %c0_4 = arith.constant 0 : index
    %4 = vector.load %arg1[%c1, %c0_4] : memref<256x96xf32, #tpu.memory_space<vmem>>, vector<252x96xf32>
    %c1_5 = arith.constant 1 : index
    %c0_6 = arith.constant 0 : index
    %c0_7 = arith.constant 0 : index
    %5 = vector.load %arg2[%c1_5, %c0_6, %c0_7] : memref<5x96x168xf32, #tpu.memory_space<vmem>>, vector<1x96x168xf32>
    %6 = vector.shape_cast %5 : vector<1x96x168xf32> to vector<96x168xf32>
    %cst_8 = arith.constant dense<0.000000e+00> : vector<252x168xf32>
    %7 = tpu.matmul %4, %6, %cst_8 {dimension_numbers = #tpu.dot_dimension_numbers<[1], [0], [0], [1], [0, 0, 1, 1], [], []>} : vector<252x96xf32>, vector<96x168xf32>, vector<252x168xf32> -> vector<252x168xf32>
    %8 = arith.addf %3, %7 : vector<252x168xf32>
    %c2 = arith.constant 2 : index
    %c0_9 = arith.constant 0 : index
    %9 = vector.load %arg1[%c2, %c0_9] : memref<256x96xf32, #tpu.memory_space<vmem>>, vector<252x96xf32>
    %c2_10 = arith.constant 2 : index
    %c0_11 = arith.constant 0 : index
    %c0_12 = arith.constant 0 : index
    %10 = vector.load %arg2[%c2_10, %c0_11, %c0_12] : memref<5x96x168xf32, #tpu.memory_space<vmem>>, vector<1x96x168xf32>
    %11 = vector.shape_cast %10 : vector<1x96x168xf32> to vector<96x168xf32>
    %cst_13 = arith.constant dense<0.000000e+00> : vector<252x168xf32>
    %12 = tpu.matmul %9, %11, %cst_13 {dimension_numbers = #tpu.dot_dimension_numbers<[1], [0], [0], [1], [0, 0, 1, 1], [], []>} : vector<252x96xf32>, vector<96x168xf32>, vector<252x168xf32> -> vector<252x168xf32>
    %13 = arith.addf %8, %12 : vector<252x168xf32>
    %c3 = arith.constant 3 : index
    %c0_14 = arith.constant 0 : index
    %14 = vector.load %arg1[%c3, %c0_14] : memref<256x96xf32, #tpu.memory_space<vmem>>, vector<252x96xf32>
    %c3_15 = arith.constant 3 : index
    %c0_16 = arith.constant 0 : index
    %c0_17 = arith.constant 0 : index
    %15 = vector.load %arg2[%c3_15, %c0_16, %c0_17] : memref<5x96x168xf32, #tpu.memory_space<vmem>>, vector<1x96x168xf32>
    %16 = vector.shape_cast %15 : vector<1x96x168xf32> to vector<96x168xf32>
    %cst_18 = arith.constant dense<0.000000e+00> : vector<252x168xf32>
    %17 = tpu.matmul %14, %16, %cst_18 {dimension_numbers = #tpu.dot_dimension_numbers<[1], [0], [0], [1], [0, 0, 1, 1], [], []>} : vector<252x96xf32>, vector<96x168xf32>, vector<252x168xf32> -> vector<252x168xf32>
    %18 = arith.addf %13, %17 : vector<252x168xf32>
    %c4 = arith.constant 4 : index
    %c0_19 = arith.constant 0 : index
    %19 = vector.load %arg1[%c4, %c0_19] : memref<256x96xf32, #tpu.memory_space<vmem>>, vector<252x96xf32>
    %c4_20 = arith.constant 4 : index
    %c0_21 = arith.constant 0 : index
    %c0_22 = arith.constant 0 : index
    %20 = vector.load %arg2[%c4_20, %c0_21, %c0_22] : memref<5x96x168xf32, #tpu.memory_space<vmem>>, vector<1x96x168xf32>
    %21 = vector.shape_cast %20 : vector<1x96x168xf32> to vector<96x168xf32>
    %cst_23 = arith.constant dense<0.000000e+00> : vector<252x168xf32>
    %22 = tpu.matmul %19, %21, %cst_23 {dimension_numbers = #tpu.dot_dimension_numbers<[1], [0], [0], [1], [0, 0, 1, 1], [], []>} : vector<252x96xf32>, vector<96x168xf32>, vector<252x168xf32> -> vector<252x168xf32>
    %23 = arith.addf %18, %22 : vector<252x168xf32>
    %c0_24 = arith.constant 0 : index
    %c0_25 = arith.constant 0 : index
    %24 = vector.load %arg3[%c0_24, %c0_25] : memref<1x168xf32, #tpu.memory_space<vmem>>, vector<1x168xf32>
    %25 = vector.broadcast %24 : vector<1x168xf32> to vector<252x168xf32>
    %26 = arith.addf %23, %25 : vector<252x168xf32>
    %27 = math.tanh %26 : vector<252x168xf32>
    %c0_26 = arith.constant 0 : index
    %c0_27 = arith.constant 0 : index
    %28 = vector.load %arg6[%c0_26, %c0_27] : memref<112x252xf32, #tpu.memory_space<vmem>>, vector<112x252xf32>
    %cst_28 = arith.constant dense<0.000000e+00> : vector<112x168xf32>
    %29 = tpu.matmul %28, %27, %cst_28 {dimension_numbers = #tpu.dot_dimension_numbers<[1], [0], [0], [1], [0, 0, 1, 1], [], []>} : vector<112x252xf32>, vector<252x168xf32>, vector<112x168xf32> -> vector<112x168xf32>
    %c0_29 = arith.constant 0 : index
    %c0_30 = arith.constant 0 : index
    %30 = vector.load %arg7[%c0_29, %c0_30] : memref<112x252xf32, #tpu.memory_space<vmem>>, vector<112x252xf32>
    %cst_31 = arith.constant dense<0.000000e+00> : vector<112x168xf32>
    %31 = tpu.matmul %30, %27, %cst_31 {dimension_numbers = #tpu.dot_dimension_numbers<[1], [0], [0], [1], [0, 0, 1, 1], [], []>} : vector<112x252xf32>, vector<252x168xf32>, vector<112x168xf32> -> vector<112x168xf32>
    %32 = arith.maximumf %29, %31 : vector<112x168xf32>
    %c0_32 = arith.constant 0 : index
    %c0_33 = arith.constant 0 : index
    %33 = vector.load %arg8[%c0_32, %c0_33] : memref<168x84xf32, #tpu.memory_space<vmem>>, vector<168x84xf32>
    %cst_34 = arith.constant dense<0.000000e+00> : vector<112x84xf32>
    %34 = tpu.matmul %32, %33, %cst_34 {dimension_numbers = #tpu.dot_dimension_numbers<[1], [0], [0], [1], [0, 0, 1, 1], [], []>} : vector<112x168xf32>, vector<168x84xf32>, vector<112x84xf32> -> vector<112x84xf32>
    %c0_35 = arith.constant 0 : index
    %c0_36 = arith.constant 0 : index
    %35 = vector.load %arg9[%c0_35, %c0_36] : memref<168x84xf32, #tpu.memory_space<vmem>>, vector<168x84xf32>
    %cst_37 = arith.constant dense<0.000000e+00> : vector<112x84xf32>
    %36 = tpu.matmul %32, %35, %cst_37 {dimension_numbers = #tpu.dot_dimension_numbers<[1], [0], [0], [1], [0, 0, 1, 1], [], []>} : vector<112x168xf32>, vector<168x84xf32>, vector<112x84xf32> -> vector<112x84xf32>
    %37 = arith.maximumf %34, %36 : vector<112x84xf32>
    %38 = vector.extract_strided_slice %37 {offsets = [0, 0], sizes = [108, 84], strides = [1, 1]} : vector<112x84xf32> to vector<108x84xf32>
    %c0_38 = arith.constant 0 : index
    %c0_39 = arith.constant 0 : index
    %c0_40 = arith.constant 0 : index
    %39 = vector.load %arg4[%c0_38, %c0_39, %c0_40] : memref<5x84x160xf32, #tpu.memory_space<vmem>>, vector<1x84x160xf32>
    %40 = vector.shape_cast %39 : vector<1x84x160xf32> to vector<84x160xf32>
    %cst_41 = arith.constant dense<0.000000e+00> : vector<108x160xf32>
    %41 = tpu.matmul %38, %40, %cst_41 {dimension_numbers = #tpu.dot_dimension_numbers<[1], [0], [0], [1], [0, 0, 1, 1], [], []>} : vector<108x84xf32>, vector<84x160xf32>, vector<108x160xf32> -> vector<108x160xf32>
    %42 = vector.extract_strided_slice %37 {offsets = [1, 0], sizes = [108, 84], strides = [1, 1]} : vector<112x84xf32> to vector<108x84xf32>
    %c1_42 = arith.constant 1 : index
    %c0_43 = arith.constant 0 : index
    %c0_44 = arith.constant 0 : index
    %43 = vector.load %arg4[%c1_42, %c0_43, %c0_44] : memref<5x84x160xf32, #tpu.memory_space<vmem>>, vector<1x84x160xf32>
    %44 = vector.shape_cast %43 : vector<1x84x160xf32> to vector<84x160xf32>
    %cst_45 = arith.constant dense<0.000000e+00> : vector<108x160xf32>
    %45 = tpu.matmul %42, %44, %cst_45 {dimension_numbers = #tpu.dot_dimension_numbers<[1], [0], [0], [1], [0, 0, 1, 1], [], []>} : vector<108x84xf32>, vector<84x160xf32>, vector<108x160xf32> -> vector<108x160xf32>
    %46 = arith.addf %41, %45 : vector<108x160xf32>
    %47 = vector.extract_strided_slice %37 {offsets = [2, 0], sizes = [108, 84], strides = [1, 1]} : vector<112x84xf32> to vector<108x84xf32>
    %c2_46 = arith.constant 2 : index
    %c0_47 = arith.constant 0 : index
    %c0_48 = arith.constant 0 : index
    %48 = vector.load %arg4[%c2_46, %c0_47, %c0_48] : memref<5x84x160xf32, #tpu.memory_space<vmem>>, vector<1x84x160xf32>
    %49 = vector.shape_cast %48 : vector<1x84x160xf32> to vector<84x160xf32>
    %cst_49 = arith.constant dense<0.000000e+00> : vector<108x160xf32>
    %50 = tpu.matmul %47, %49, %cst_49 {dimension_numbers = #tpu.dot_dimension_numbers<[1], [0], [0], [1], [0, 0, 1, 1], [], []>} : vector<108x84xf32>, vector<84x160xf32>, vector<108x160xf32> -> vector<108x160xf32>
    %51 = arith.addf %46, %50 : vector<108x160xf32>
    %52 = vector.extract_strided_slice %37 {offsets = [3, 0], sizes = [108, 84], strides = [1, 1]} : vector<112x84xf32> to vector<108x84xf32>
    %c3_50 = arith.constant 3 : index
    %c0_51 = arith.constant 0 : index
    %c0_52 = arith.constant 0 : index
    %53 = vector.load %arg4[%c3_50, %c0_51, %c0_52] : memref<5x84x160xf32, #tpu.memory_space<vmem>>, vector<1x84x160xf32>
    %54 = vector.shape_cast %53 : vector<1x84x160xf32> to vector<84x160xf32>
    %cst_53 = arith.constant dense<0.000000e+00> : vector<108x160xf32>
    %55 = tpu.matmul %52, %54, %cst_53 {dimension_numbers = #tpu.dot_dimension_numbers<[1], [0], [0], [1], [0, 0, 1, 1], [], []>} : vector<108x84xf32>, vector<84x160xf32>, vector<108x160xf32> -> vector<108x160xf32>
    %56 = arith.addf %51, %55 : vector<108x160xf32>
    %57 = vector.extract_strided_slice %37 {offsets = [4, 0], sizes = [108, 84], strides = [1, 1]} : vector<112x84xf32> to vector<108x84xf32>
    %c4_54 = arith.constant 4 : index
    %c0_55 = arith.constant 0 : index
    %c0_56 = arith.constant 0 : index
    %58 = vector.load %arg4[%c4_54, %c0_55, %c0_56] : memref<5x84x160xf32, #tpu.memory_space<vmem>>, vector<1x84x160xf32>
    %59 = vector.shape_cast %58 : vector<1x84x160xf32> to vector<84x160xf32>
    %cst_57 = arith.constant dense<0.000000e+00> : vector<108x160xf32>
    %60 = tpu.matmul %57, %59, %cst_57 {dimension_numbers = #tpu.dot_dimension_numbers<[1], [0], [0], [1], [0, 0, 1, 1], [], []>} : vector<108x84xf32>, vector<84x160xf32>, vector<108x160xf32> -> vector<108x160xf32>
    %61 = arith.addf %56, %60 : vector<108x160xf32>
    %c0_58 = arith.constant 0 : index
    %c0_59 = arith.constant 0 : index
    %62 = vector.load %arg5[%c0_58, %c0_59] : memref<1x160xf32, #tpu.memory_space<vmem>>, vector<1x160xf32>
    %63 = vector.broadcast %62 : vector<1x160xf32> to vector<108x160xf32>
    %64 = arith.addf %61, %63 : vector<108x160xf32>
    %65 = math.tanh %64 : vector<108x160xf32>
    %c0_60 = arith.constant 0 : index
    %c0_61 = arith.constant 0 : index
    %66 = vector.load %arg10[%c0_60, %c0_61] : memref<40x108xf32, #tpu.memory_space<vmem>>, vector<40x108xf32>
    %cst_62 = arith.constant dense<0.000000e+00> : vector<40x160xf32>
    %67 = tpu.matmul %66, %65, %cst_62 {dimension_numbers = #tpu.dot_dimension_numbers<[1], [0], [0], [1], [0, 0, 1, 1], [], []>} : vector<40x108xf32>, vector<108x160xf32>, vector<40x160xf32> -> vector<40x160xf32>
    %c0_63 = arith.constant 0 : index
    %c0_64 = arith.constant 0 : index
    %68 = vector.load %arg11[%c0_63, %c0_64] : memref<40x108xf32, #tpu.memory_space<vmem>>, vector<40x108xf32>
    %cst_65 = arith.constant dense<0.000000e+00> : vector<40x160xf32>
    %69 = tpu.matmul %68, %65, %cst_65 {dimension_numbers = #tpu.dot_dimension_numbers<[1], [0], [0], [1], [0, 0, 1, 1], [], []>} : vector<40x108xf32>, vector<108x160xf32>, vector<40x160xf32> -> vector<40x160xf32>
    %70 = arith.maximumf %67, %69 : vector<40x160xf32>
    %c0_66 = arith.constant 0 : index
    %c0_67 = arith.constant 0 : index
    %71 = vector.load %arg12[%c0_66, %c0_67] : memref<160x80xf32, #tpu.memory_space<vmem>>, vector<160x80xf32>
    %cst_68 = arith.constant dense<0.000000e+00> : vector<40x80xf32>
    %72 = tpu.matmul %70, %71, %cst_68 {dimension_numbers = #tpu.dot_dimension_numbers<[1], [0], [0], [1], [0, 0, 1, 1], [], []>} : vector<40x160xf32>, vector<160x80xf32>, vector<40x80xf32> -> vector<40x80xf32>
    %c0_69 = arith.constant 0 : index
    %c0_70 = arith.constant 0 : index
    %73 = vector.load %arg13[%c0_69, %c0_70] : memref<160x80xf32, #tpu.memory_space<vmem>>, vector<160x80xf32>
    %cst_71 = arith.constant dense<0.000000e+00> : vector<40x80xf32>
    %74 = tpu.matmul %70, %73, %cst_71 {dimension_numbers = #tpu.dot_dimension_numbers<[1], [0], [0], [1], [0, 0, 1, 1], [], []>} : vector<40x160xf32>, vector<160x80xf32>, vector<40x80xf32> -> vector<40x80xf32>
    %75 = arith.maximumf %72, %74 : vector<40x80xf32>
    %c0_72 = arith.constant 0 : index
    %c0_73 = arith.constant 0 : index
    %c0_74 = arith.constant 0 : index
    %76 = vector.load %arg14[%c0_72, %c0_73, %c0_74] : memref<5x8x40xf32, #tpu.memory_space<vmem>>, vector<1x8x40xf32>
    %77 = vector.shape_cast %76 : vector<1x8x40xf32> to vector<8x40xf32>
    %cst_75 = arith.constant dense<0.000000e+00> : vector<8x80xf32>
    %78 = tpu.matmul %77, %75, %cst_75 {dimension_numbers = #tpu.dot_dimension_numbers<[1], [0], [0], [1], [0, 0, 1, 1], [], []>} : vector<8x40xf32>, vector<40x80xf32>, vector<8x80xf32> -> vector<8x80xf32>
    %c0_76 = arith.constant 0 : index
    %c0_77 = arith.constant 0 : index
    %c0_78 = arith.constant 0 : index
    %79 = vector.load %arg15[%c0_76, %c0_77, %c0_78] : memref<5x80x120xf32, #tpu.memory_space<vmem>>, vector<1x80x120xf32>
    %80 = vector.shape_cast %79 : vector<1x80x120xf32> to vector<80x120xf32>
    %cst_79 = arith.constant dense<0.000000e+00> : vector<8x120xf32>
    %81 = tpu.matmul %78, %80, %cst_79 {dimension_numbers = #tpu.dot_dimension_numbers<[1], [0], [0], [1], [0, 0, 1, 1], [], []>} : vector<8x80xf32>, vector<80x120xf32>, vector<8x120xf32> -> vector<8x120xf32>
    %c1_80 = arith.constant 1 : index
    %c0_81 = arith.constant 0 : index
    %c0_82 = arith.constant 0 : index
    %82 = vector.load %arg14[%c1_80, %c0_81, %c0_82] : memref<5x8x40xf32, #tpu.memory_space<vmem>>, vector<1x8x40xf32>
    %83 = vector.shape_cast %82 : vector<1x8x40xf32> to vector<8x40xf32>
    %cst_83 = arith.constant dense<0.000000e+00> : vector<8x80xf32>
    %84 = tpu.matmul %83, %75, %cst_83 {dimension_numbers = #tpu.dot_dimension_numbers<[1], [0], [0], [1], [0, 0, 1, 1], [], []>} : vector<8x40xf32>, vector<40x80xf32>, vector<8x80xf32> -> vector<8x80xf32>
    %c1_84 = arith.constant 1 : index
    %c0_85 = arith.constant 0 : index
    %c0_86 = arith.constant 0 : index
    %85 = vector.load %arg15[%c1_84, %c0_85, %c0_86] : memref<5x80x120xf32, #tpu.memory_space<vmem>>, vector<1x80x120xf32>
    %86 = vector.shape_cast %85 : vector<1x80x120xf32> to vector<80x120xf32>
    %cst_87 = arith.constant dense<0.000000e+00> : vector<8x120xf32>
    %87 = tpu.matmul %84, %86, %cst_87 {dimension_numbers = #tpu.dot_dimension_numbers<[1], [0], [0], [1], [0, 0, 1, 1], [], []>} : vector<8x80xf32>, vector<80x120xf32>, vector<8x120xf32> -> vector<8x120xf32>
    %88 = arith.addf %81, %87 : vector<8x120xf32>
    %c2_88 = arith.constant 2 : index
    %c0_89 = arith.constant 0 : index
    %c0_90 = arith.constant 0 : index
    %89 = vector.load %arg14[%c2_88, %c0_89, %c0_90] : memref<5x8x40xf32, #tpu.memory_space<vmem>>, vector<1x8x40xf32>
    %90 = vector.shape_cast %89 : vector<1x8x40xf32> to vector<8x40xf32>
    %cst_91 = arith.constant dense<0.000000e+00> : vector<8x80xf32>
    %91 = tpu.matmul %90, %75, %cst_91 {dimension_numbers = #tpu.dot_dimension_numbers<[1], [0], [0], [1], [0, 0, 1, 1], [], []>} : vector<8x40xf32>, vector<40x80xf32>, vector<8x80xf32> -> vector<8x80xf32>
    %c2_92 = arith.constant 2 : index
    %c0_93 = arith.constant 0 : index
    %c0_94 = arith.constant 0 : index
    %92 = vector.load %arg15[%c2_92, %c0_93, %c0_94] : memref<5x80x120xf32, #tpu.memory_space<vmem>>, vector<1x80x120xf32>
    %93 = vector.shape_cast %92 : vector<1x80x120xf32> to vector<80x120xf32>
    %cst_95 = arith.constant dense<0.000000e+00> : vector<8x120xf32>
    %94 = tpu.matmul %91, %93, %cst_95 {dimension_numbers = #tpu.dot_dimension_numbers<[1], [0], [0], [1], [0, 0, 1, 1], [], []>} : vector<8x80xf32>, vector<80x120xf32>, vector<8x120xf32> -> vector<8x120xf32>
    %95 = arith.addf %88, %94 : vector<8x120xf32>
    %c3_96 = arith.constant 3 : index
    %c0_97 = arith.constant 0 : index
    %c0_98 = arith.constant 0 : index
    %96 = vector.load %arg14[%c3_96, %c0_97, %c0_98] : memref<5x8x40xf32, #tpu.memory_space<vmem>>, vector<1x8x40xf32>
    %97 = vector.shape_cast %96 : vector<1x8x40xf32> to vector<8x40xf32>
    %cst_99 = arith.constant dense<0.000000e+00> : vector<8x80xf32>
    %98 = tpu.matmul %97, %75, %cst_99 {dimension_numbers = #tpu.dot_dimension_numbers<[1], [0], [0], [1], [0, 0, 1, 1], [], []>} : vector<8x40xf32>, vector<40x80xf32>, vector<8x80xf32> -> vector<8x80xf32>
    %c3_100 = arith.constant 3 : index
    %c0_101 = arith.constant 0 : index
    %c0_102 = arith.constant 0 : index
    %99 = vector.load %arg15[%c3_100, %c0_101, %c0_102] : memref<5x80x120xf32, #tpu.memory_space<vmem>>, vector<1x80x120xf32>
    %100 = vector.shape_cast %99 : vector<1x80x120xf32> to vector<80x120xf32>
    %cst_103 = arith.constant dense<0.000000e+00> : vector<8x120xf32>
    %101 = tpu.matmul %98, %100, %cst_103 {dimension_numbers = #tpu.dot_dimension_numbers<[1], [0], [0], [1], [0, 0, 1, 1], [], []>} : vector<8x80xf32>, vector<80x120xf32>, vector<8x120xf32> -> vector<8x120xf32>
    %102 = arith.addf %95, %101 : vector<8x120xf32>
    %c4_104 = arith.constant 4 : index
    %c0_105 = arith.constant 0 : index
    %c0_106 = arith.constant 0 : index
    %103 = vector.load %arg14[%c4_104, %c0_105, %c0_106] : memref<5x8x40xf32, #tpu.memory_space<vmem>>, vector<1x8x40xf32>
    %104 = vector.shape_cast %103 : vector<1x8x40xf32> to vector<8x40xf32>
    %cst_107 = arith.constant dense<0.000000e+00> : vector<8x80xf32>
    %105 = tpu.matmul %104, %75, %cst_107 {dimension_numbers = #tpu.dot_dimension_numbers<[1], [0], [0], [1], [0, 0, 1, 1], [], []>} : vector<8x40xf32>, vector<40x80xf32>, vector<8x80xf32> -> vector<8x80xf32>
    %c4_108 = arith.constant 4 : index
    %c0_109 = arith.constant 0 : index
    %c0_110 = arith.constant 0 : index
    %106 = vector.load %arg15[%c4_108, %c0_109, %c0_110] : memref<5x80x120xf32, #tpu.memory_space<vmem>>, vector<1x80x120xf32>
    %107 = vector.shape_cast %106 : vector<1x80x120xf32> to vector<80x120xf32>
    %cst_111 = arith.constant dense<0.000000e+00> : vector<8x120xf32>
    %108 = tpu.matmul %105, %107, %cst_111 {dimension_numbers = #tpu.dot_dimension_numbers<[1], [0], [0], [1], [0, 0, 1, 1], [], []>} : vector<8x80xf32>, vector<80x120xf32>, vector<8x120xf32> -> vector<8x120xf32>
    %109 = arith.addf %102, %108 : vector<8x120xf32>
    %c0_112 = arith.constant 0 : index
    %c0_113 = arith.constant 0 : index
    %110 = vector.load %arg16[%c0_112, %c0_113] : memref<1x120xf32, #tpu.memory_space<vmem>>, vector<1x120xf32>
    %111 = vector.broadcast %110 : vector<1x120xf32> to vector<8x120xf32>
    %112 = arith.addf %109, %111 : vector<8x120xf32>
    %113 = math.tanh %112 : vector<8x120xf32>
    %c0_114 = arith.constant 0 : index
    %c0_115 = arith.constant 0 : index
    %114 = vector.load %arg17[%c0_114, %c0_115] : memref<120x84xf32, #tpu.memory_space<vmem>>, vector<120x84xf32>
    %cst_116 = arith.constant dense<0.000000e+00> : vector<8x84xf32>
    %115 = tpu.matmul %113, %114, %cst_116 {dimension_numbers = #tpu.dot_dimension_numbers<[1], [0], [0], [1], [0, 0, 1, 1], [], []>} : vector<8x120xf32>, vector<120x84xf32>, vector<8x84xf32> -> vector<8x84xf32>
    %c0_117 = arith.constant 0 : index
    %c0_118 = arith.constant 0 : index
    %116 = vector.load %arg18[%c0_117, %c0_118] : memref<1x84xf32, #tpu.memory_space<vmem>>, vector<1x84xf32>
    %117 = vector.broadcast %116 : vector<1x84xf32> to vector<8x84xf32>
    %118 = arith.addf %115, %117 : vector<8x84xf32>
    %119 = math.tanh %118 : vector<8x84xf32>
    %c0_119 = arith.constant 0 : index
    %c0_120 = arith.constant 0 : index
    %120 = vector.load %arg19[%c0_119, %c0_120] : memref<84x128xf32, #tpu.memory_space<vmem>>, vector<84x128xf32>
    %cst_121 = arith.constant dense<0.000000e+00> : vector<8x128xf32>
    %121 = tpu.matmul %119, %120, %cst_121 {dimension_numbers = #tpu.dot_dimension_numbers<[1], [0], [0], [1], [0, 0, 1, 1], [], []>} : vector<8x84xf32>, vector<84x128xf32>, vector<8x128xf32> -> vector<8x128xf32>
    %c0_122 = arith.constant 0 : index
    %c0_123 = arith.constant 0 : index
    %122 = vector.load %arg20[%c0_122, %c0_123] : memref<1x128xf32, #tpu.memory_space<vmem>>, vector<1x128xf32>
    %123 = vector.broadcast %122 : vector<1x128xf32> to vector<8x128xf32>
    %124 = arith.addf %121, %123 : vector<8x128xf32>
    %cst_124 = arith.constant dense<0xFF800000> : vector<8xf32>
    %125 = vector.multi_reduction <maximumf>, %124, %cst_124 [1] : vector<8x128xf32> to vector<8xf32>
    %126 = vector.shape_cast %125 : vector<8xf32> to vector<8x1xf32>
    %127 = vector.broadcast %126 : vector<8x1xf32> to vector<8x128xf32>
    %128 = arith.subf %124, %127 : vector<8x128xf32>
    %129 = math.exp %128 : vector<8x128xf32>
    %cst_125 = arith.constant dense<0.000000e+00> : vector<8xf32>
    %130 = vector.multi_reduction <add>, %129, %cst_125 [1] : vector<8x128xf32> to vector<8xf32>
    %131 = vector.shape_cast %130 : vector<8xf32> to vector<8x1xf32>
    %132 = tpu.reciprocal %131 {approx = true} : vector<8x1xf32> -> vector<8x1xf32>
    %133 = vector.broadcast %132 : vector<8x1xf32> to vector<8x128xf32>
    %134 = arith.mulf %129, %133 : vector<8x128xf32>
    %c0_126 = arith.constant 0 : index
    %c0_127 = arith.constant 0 : index
    %135 = vector.load %arg21[%c0_126, %c0_127] : memref<8x128xf32, #tpu.memory_space<vmem>>, vector<8x128xf32>
    tpu.vector_store %arg21[%c0_126, %c0_127], %124 {strides = array<i32>} : memref<8x128xf32, #tpu.memory_space<vmem>>, vector<8x128xf32>,
    %c0_128 = arith.constant 0 : index
    %c0_129 = arith.constant 0 : index
    %136 = vector.load %arg22[%c0_128, %c0_129] : memref<8x128xf32, #tpu.memory_space<vmem>>, vector<8x128xf32>
    tpu.vector_store %arg22[%c0_128, %c0_129], %134 {strides = array<i32>} : memref<8x128xf32, #tpu.memory_space<vmem>>, vector<8x128xf32>,
    return
  }
  func.func @transform_0(%arg0: i32) -> (i32, i32) {
    %c0_i32 = arith.constant 0 : i32
    %c0_i32_0 = arith.constant 0 : i32
    return %arg0, %c0_i32 : i32, i32
  }
  func.func @transform_1(%arg0: i32) -> (i32, i32, i32) {
    %c0_i32 = arith.constant 0 : i32
    %c0_i32_0 = arith.constant 0 : i32
    %c0_i32_1 = arith.constant 0 : i32
    %c0_i32_2 = arith.constant 0 : i32
    return %c0_i32, %c0_i32_0, %c0_i32_1 : i32, i32, i32
  }
  func.func @transform_2(%arg0: i32) -> (i32, i32) {
    %c0_i32 = arith.constant 0 : i32
    %c0_i32_0 = arith.constant 0 : i32
    %c0_i32_1 = arith.constant 0 : i32
    return %c0_i32, %c0_i32_0 : i32, i32
  }
  func.func @transform_3(%arg0: i32) -> (i32, i32, i32) {
    %c0_i32 = arith.constant 0 : i32
    %c0_i32_0 = arith.constant 0 : i32
    %c0_i32_1 = arith.constant 0 : i32
    %c0_i32_2 = arith.constant 0 : i32
    return %c0_i32, %c0_i32_0, %c0_i32_1 : i32, i32, i32
  }
  func.func @transform_4(%arg0: i32) -> (i32, i32) {
    %c0_i32 = arith.constant 0 : i32
    %c0_i32_0 = arith.constant 0 : i32
    %c0_i32_1 = arith.constant 0 : i32
    return %c0_i32, %c0_i32_0 : i32, i32
  }
  func.func @transform_5(%arg0: i32) -> (i32, i32) {
    %c0_i32 = arith.constant 0 : i32
    %c0_i32_0 = arith.constant 0 : i32
    %c0_i32_1 = arith.constant 0 : i32
    return %c0_i32, %c0_i32_0 : i32, i32
  }
  func.func @transform_6(%arg0: i32) -> (i32, i32) {
    %c0_i32 = arith.constant 0 : i32
    %c0_i32_0 = arith.constant 0 : i32
    %c0_i32_1 = arith.constant 0 : i32
    return %c0_i32, %c0_i32_0 : i32, i32
  }
  func.func @transform_7(%arg0: i32) -> (i32, i32) {
    %c0_i32 = arith.constant 0 : i32
    %c0_i32_0 = arith.constant 0 : i32
    %c0_i32_1 = arith.constant 0 : i32
    return %c0_i32, %c0_i32_0 : i32, i32
  }
  func.func @transform_8(%arg0: i32) -> (i32, i32) {
    %c0_i32 = arith.constant 0 : i32
    %c0_i32_0 = arith.constant 0 : i32
    %c0_i32_1 = arith.constant 0 : i32
    return %c0_i32, %c0_i32_0 : i32, i32
  }
  func.func @transform_9(%arg0: i32) -> (i32, i32) {
    %c0_i32 = arith.constant 0 : i32
    %c0_i32_0 = arith.constant 0 : i32
    %c0_i32_1 = arith.constant 0 : i32
    return %c0_i32, %c0_i32_0 : i32, i32
  }
  func.func @transform_10(%arg0: i32) -> (i32, i32) {
    %c0_i32 = arith.constant 0 : i32
    %c0_i32_0 = arith.constant 0 : i32
    %c0_i32_1 = arith.constant 0 : i32
    return %c0_i32, %c0_i32_0 : i32, i32
  }
  func.func @transform_11(%arg0: i32) -> (i32, i32) {
    %c0_i32 = arith.constant 0 : i32
    %c0_i32_0 = arith.constant 0 : i32
    %c0_i32_1 = arith.constant 0 : i32
    return %c0_i32, %c0_i32_0 : i32, i32
  }
  func.func @transform_12(%arg0: i32) -> (i32, i32) {
    %c0_i32 = arith.constant 0 : i32
    %c0_i32_0 = arith.constant 0 : i32
    %c0_i32_1 = arith.constant 0 : i32
    return %c0_i32, %c0_i32_0 : i32, i32
  }
  func.func @transform_13(%arg0: i32) -> (i32, i32, i32) {
    %c0_i32 = arith.constant 0 : i32
    %c0_i32_0 = arith.constant 0 : i32
    %c0_i32_1 = arith.constant 0 : i32
    %c0_i32_2 = arith.constant 0 : i32
    return %c0_i32, %c0_i32_0, %c0_i32_1 : i32, i32, i32
  }
  func.func @transform_14(%arg0: i32) -> (i32, i32, i32) {
    %c0_i32 = arith.constant 0 : i32
    %c0_i32_0 = arith.constant 0 : i32
    %c0_i32_1 = arith.constant 0 : i32
    %c0_i32_2 = arith.constant 0 : i32
    return %c0_i32, %c0_i32_0, %c0_i32_1 : i32, i32, i32
  }
  func.func @transform_15(%arg0: i32) -> (i32, i32) {
    %c0_i32 = arith.constant 0 : i32
    %c0_i32_0 = arith.constant 0 : i32
    %c0_i32_1 = arith.constant 0 : i32
    return %c0_i32, %c0_i32_0 : i32, i32
  }
  func.func @transform_16(%arg0: i32) -> (i32, i32) {
    %c0_i32 = arith.constant 0 : i32
    %c0_i32_0 = arith.constant 0 : i32
    %c0_i32_1 = arith.constant 0 : i32
    return %c0_i32, %c0_i32_0 : i32, i32
  }
  func.func @transform_17(%arg0: i32) -> (i32, i32) {
    %c0_i32 = arith.constant 0 : i32
    %c0_i32_0 = arith.constant 0 : i32
    %c0_i32_1 = arith.constant 0 : i32
    return %c0_i32, %c0_i32_0 : i32, i32
  }
  func.func @transform_18(%arg0: i32) -> (i32, i32) {
    %c0_i32 = arith.constant 0 : i32
    %c0_i32_0 = arith.constant 0 : i32
    %c0_i32_1 = arith.constant 0 : i32
    return %c0_i32, %c0_i32_0 : i32, i32
  }
  func.func @transform_19(%arg0: i32) -> (i32, i32) {
    %c0_i32 = arith.constant 0 : i32
    %c0_i32_0 = arith.constant 0 : i32
    %c0_i32_1 = arith.constant 0 : i32
    return %c0_i32, %c0_i32_0 : i32, i32
  }
  func.func @transform_20(%arg0: i32) -> (i32, i32) {
    %c0_i32 = arith.constant 0 : i32
    %c0_i32_0 = arith.constant 0 : i32
    return %arg0, %c0_i32 : i32, i32
  }
  func.func @transform_21(%arg0: i32) -> (i32, i32) {
    %c0_i32 = arith.constant 0 : i32
    %c0_i32_0 = arith.constant 0 : i32
    return %arg0, %c0_i32 : i32, i32
  }
}

</mosaic_0001>

<llo_original>
// kernel: tpu_custom_call.1
$region0: #{tpu_custom_call.1}
  #allocation0 [shape = 'u32[]', space=smem, size = 0x4, offset = 0x4, fixed_abs, tag = 'smem constant byte address 0x4 - core index']
  #allocation1 [shape = 'u32[144,128]{1,0:T(1,128)}', space=vmem, size = 0x12000, scoped, tag = 'internal scratch']
  %s0 = inlined_call_operand.vmem [shape: f32[256,96], index: 0, kind: input, shape index: {}]
  %s1 = inlined_call_operand.vmem [shape: f32[5,96,168], index: 1, kind: input, shape index: {}]
  %s2 = inlined_call_operand.vmem [shape: f32[1,168], index: 2, kind: input, shape index: {}]
  %s3 = inlined_call_operand.vmem [shape: f32[5,84,160], index: 3, kind: input, shape index: {}]
  %s4 = inlined_call_operand.vmem [shape: f32[1,160], index: 4, kind: input, shape index: {}]
  %s5 = inlined_call_operand.vmem [shape: f32[112,252], index: 5, kind: input, shape index: {}]
  %s6 = inlined_call_operand.vmem [shape: f32[112,252], index: 6, kind: input, shape index: {}]
  %s7 = inlined_call_operand.vmem [shape: f32[168,84], index: 7, kind: input, shape index: {}]
  %s8 = inlined_call_operand.vmem [shape: f32[168,84], index: 8, kind: input, shape index: {}]
  %s9 = inlined_call_operand.vmem [shape: f32[40,108], index: 9, kind: input, shape index: {}]
  %s10 = inlined_call_operand.vmem [shape: f32[40,108], index: 10, kind: input, shape index: {}]
  %s11 = inlined_call_operand.vmem [shape: f32[160,80], index: 11, kind: input, shape index: {}]
  %s12 = inlined_call_operand.vmem [shape: f32[160,80], index: 12, kind: input, shape index: {}]
  %s13 = inlined_call_operand.vmem [shape: f32[5,8,40], index: 13, kind: input, shape index: {}]
  %s14 = inlined_call_operand.vmem [shape: f32[5,80,120], index: 14, kind: input, shape index: {}]
  %s15 = inlined_call_operand.vmem [shape: f32[1,120], index: 15, kind: input, shape index: {}]
  %s16 = inlined_call_operand.vmem [shape: f32[120,84], index: 16, kind: input, shape index: {}]
  %s17 = inlined_call_operand.vmem [shape: f32[1,84], index: 17, kind: input, shape index: {}]
  %s18 = inlined_call_operand.vmem [shape: f32[84,128], index: 18, kind: input, shape index: {}]
  %s19 = inlined_call_operand.vmem [shape: f32[1,128], index: 19, kind: input, shape index: {}]
  %s20 = inlined_call_operand.hbm [shape: f32[8,128], index: 20, kind: output, shape index: {0}]
  %s21 = inlined_call_operand.hbm [shape: f32[8,128], index: 21, kind: output, shape index: {1}]
  %22 = xla_tuple %s20, %s21
  %s23 = sld [smem:[#allocation0]]
  $region98: #{tpu_custom_call.1} parent=0
    _
  %s25 = ssub.s32 1, %s23
  %s26 = scalar_select 0, %s25, %s23
  $region1: #{tpu_custom_call.1} parent=0
    #allocation2 [shape = 'u8[4096]{0}', space=vmem, size = 0x1000, scoped, tag = 'output window, operand 0, single buffered']
    #allocation3 [shape = 's32[1]{0}', space=sflag, size = 0x4, scoped, tag = 'scoped memory for tpu_custom_call.1']
    #allocation4 [shape = 'u8[4096]{0}', space=vmem, size = 0x1000, scoped, tag = 'output window, operand 1, single buffered']
    #allocation5 [shape = 's32[1]{0}', space=sflag, size = 0x4, scoped, tag = 'scoped memory for tpu_custom_call.1']
    %27 = vsyncpa [#allocation3], 0
    %28 = vsyncpa [#allocation5], 0
    // Predicated region
    $region2: #{tpu_custom_call.1} parent=1 // pred_check
      _
    $region3: #{tpu_custom_call.1} parent=1 // pred_check_branch
      %30 = sbr.rel (0) target = $region5
    $region4: #{tpu_custom_call.1} parent=1 // pred_region
      _
    $region5: #{tpu_custom_call.1} parent=1 // pred_fallthru
      _
    // Predicated region
    $region6: #{tpu_custom_call.1} parent=1 // pred_check
      _
    $region7: #{tpu_custom_call.1} parent=1 // pred_check_branch
      %32 = sbr.rel (0) target = $region9
    $region8: #{tpu_custom_call.1} parent=1 // pred_region
      _
    $region9: #{tpu_custom_call.1} parent=1 // pred_fallthru
      _
    // Predicated region
    $region10: #{tpu_custom_call.1} parent=1 // pred_check
      _
    $region11: #{tpu_custom_call.1} parent=1 // pred_check_branch
      %34 = sbr.rel (0) target = $region13
    $region12: #{tpu_custom_call.1} parent=1 // pred_region
      _
    $region13: #{tpu_custom_call.1} parent=1 // pred_fallthru
      _
    // Predicated region
    $region14: #{tpu_custom_call.1} parent=1 // pred_check
      _
    $region15: #{tpu_custom_call.1} parent=1 // pred_check_branch
      %36 = sbr.rel (0) target = $region17
    $region16: #{tpu_custom_call.1} parent=1 // pred_region
      _
    $region17: #{tpu_custom_call.1} parent=1 // pred_fallthru
      _
    // Predicated region
    $region18: #{tpu_custom_call.1} parent=1 // pred_check
      _
    $region19: #{tpu_custom_call.1} parent=1 // pred_check_branch
      %38 = sbr.rel (0) target = $region21
    $region20: #{tpu_custom_call.1} parent=1 // pred_region
      _
    $region21: #{tpu_custom_call.1} parent=1 // pred_fallthru
      _
    // Predicated region
    $region22: #{tpu_custom_call.1} parent=1 // pred_check
      _
    $region23: #{tpu_custom_call.1} parent=1 // pred_check_branch
      %40 = sbr.rel (0) target = $region25
    $region24: #{tpu_custom_call.1} parent=1 // pred_region
      _
    $region25: #{tpu_custom_call.1} parent=1 // pred_fallthru
      _
    // Predicated region
    $region26: #{tpu_custom_call.1} parent=1 // pred_check
      _
    $region27: #{tpu_custom_call.1} parent=1 // pred_check_branch
      %42 = sbr.rel (0) target = $region29
    $region28: #{tpu_custom_call.1} parent=1 // pred_region
      _
    $region29: #{tpu_custom_call.1} parent=1 // pred_fallthru
      _
    // Predicated region
    $region30: #{tpu_custom_call.1} parent=1 // pred_check
      _
    $region31: #{tpu_custom_call.1} parent=1 // pred_check_branch
      %44 = sbr.rel (0) target = $region33
    $region32: #{tpu_custom_call.1} parent=1 // pred_region
      _
    $region33: #{tpu_custom_call.1} parent=1 // pred_fallthru
      _
    // Predicated region
    $region34: #{tpu_custom_call.1} parent=1 // pred_check
      _
    $region35: #{tpu_custom_call.1} parent=1 // pred_check_branch
      %46 = sbr.rel (0) target = $region37
    $region36: #{tpu_custom_call.1} parent=1 // pred_region
      _
    $region37: #{tpu_custom_call.1} parent=1 // pred_fallthru
      _
    // Predicated region
    $region38: #{tpu_custom_call.1} parent=1 // pred_check
      _
    $region39: #{tpu_custom_call.1} parent=1 // pred_check_branch
      %48 = sbr.rel (0) target = $region41
    $region40: #{tpu_custom_call.1} parent=1 // pred_region
      _
    $region41: #{tpu_custom_call.1} parent=1 // pred_fallthru
      _
    // Predicated region
    $region42: #{tpu_custom_call.1} parent=1 // pred_check
      _
    $region43: #{tpu_custom_call.1} parent=1 // pred_check_branch
      %50 = sbr.rel (0) target = $region45
    $region44: #{tpu_custom_call.1} parent=1 // pred_region
      _
    $region45: #{tpu_custom_call.1} parent=1 // pred_fallthru
      _
    // Predicated region
    $region46: #{tpu_custom_call.1} parent=1 // pred_check
      _
    $region47: #{tpu_custom_call.1} parent=1 // pred_check_branch
      %52 = sbr.rel (0) target = $region49
    $region48: #{tpu_custom_call.1} parent=1 // pred_region
      _
    $region49: #{tpu_custom_call.1} parent=1 // pred_fallthru
      _
    // Predicated region
    $region50: #{tpu_custom_call.1} parent=1 // pred_check
      _
    $region51: #{tpu_custom_call.1} parent=1 // pred_check_branch
      %54 = sbr.rel (0) target = $region53
    $region52: #{tpu_custom_call.1} parent=1 // pred_region
      _
    $region53: #{tpu_custom_call.1} parent=1 // pred_fallthru
      _
    // Predicated region
    $region54: #{tpu_custom_call.1} parent=1 // pred_check
      _
    $region55: #{tpu_custom_call.1} parent=1 // pred_check_branch
      %56 = sbr.rel (0) target = $region57
    $region56: #{tpu_custom_call.1} parent=1 // pred_region
      _
    $region57: #{tpu_custom_call.1} parent=1 // pred_fallthru
      _
    // Predicated region
    $region58: #{tpu_custom_call.1} parent=1 // pred_check
      _
    $region59: #{tpu_custom_call.1} parent=1 // pred_check_branch
      %58 = sbr.rel (0) target = $region61
    $region60: #{tpu_custom_call.1} parent=1 // pred_region
      _
    $region61: #{tpu_custom_call.1} parent=1 // pred_fallthru
      _
    // Predicated region
    $region62: #{tpu_custom_call.1} parent=1 // pred_check
      _
    $region63: #{tpu_custom_call.1} parent=1 // pred_check_branch
      %60 = sbr.rel (0) target = $region65
    $region64: #{tpu_custom_call.1} parent=1 // pred_region
      _
    $region65: #{tpu_custom_call.1} parent=1 // pred_fallthru
      _
    // Predicated region
    $region66: #{tpu_custom_call.1} parent=1 // pred_check
      _
    $region67: #{tpu_custom_call.1} parent=1 // pred_check_branch
      %62 = sbr.rel (0) target = $region69
    $region68: #{tpu_custom_call.1} parent=1 // pred_region
      _
    $region69: #{tpu_custom_call.1} parent=1 // pred_fallthru
      _
    // Predicated region
    $region70: #{tpu_custom_call.1} parent=1 // pred_check
      _
    $region71: #{tpu_custom_call.1} parent=1 // pred_check_branch
      %64 = sbr.rel (0) target = $region73
    $region72: #{tpu_custom_call.1} parent=1 // pred_region
      _
    $region73: #{tpu_custom_call.1} parent=1 // pred_fallthru
      _
    // Predicated region
    $region74: #{tpu_custom_call.1} parent=1 // pred_check
      _
    $region75: #{tpu_custom_call.1} parent=1 // pred_check_branch
      %66 = sbr.rel (0) target = $region77
    $region76: #{tpu_custom_call.1} parent=1 // pred_region
      _
    $region77: #{tpu_custom_call.1} parent=1 // pred_fallthru
      _
    // Predicated region
    $region78: #{tpu_custom_call.1} parent=1 // pred_check
      _
    $region79: #{tpu_custom_call.1} parent=1 // pred_check_branch
      %68 = sbr.rel (0) target = $region81
    $region80: #{tpu_custom_call.1} parent=1 // pred_region
      _
    $region81: #{tpu_custom_call.1} parent=1 // pred_fallthru
      _
    %v69 = vld [vmem:[%s0] sm:$0xff]
    %v70 = vld [vmem:[%s0 + $0x8] sm:$0xff]
    %v71 = vld [vmem:[%s0 + $0x10] sm:$0xff]
    %v72 = vld [vmem:[%s0 + $0x18] sm:$0xff]
    %v73 = vld [vmem:[%s0 + $0x20] sm:$0xff]
    %v74 = vld [vmem:[%s0 + $0x28] sm:$0xff]
    %v75 = vld [vmem:[%s0 + $0x30] sm:$0xff]
    %v76 = vld [vmem:[%s0 + $0x38] sm:$0xff]
    %v77 = vld [vmem:[%s0 + $0x40] sm:$0xff]
    %v78 = vld [vmem:[%s0 + $0x48] sm:$0xff]
    %v79 = vld [vmem:[%s0 + $0x50] sm:$0xff]
    %v80 = vld [vmem:[%s0 + $0x58] sm:$0xff]
    %v81 = vld [vmem:[%s0 + $0x60] sm:$0xff]
    %v82 = vld [vmem:[%s0 + $0x68] sm:$0xff]
    %v83 = vld [vmem:[%s0 + $0x70] sm:$0xff]
    %v84 = vld [vmem:[%s0 + $0x78] sm:$0xff]
    %v85 = vld [vmem:[%s0 + $0x80] sm:$0xff]
    %v86 = vld [vmem:[%s0 + $0x88] sm:$0xff]
    %v87 = vld [vmem:[%s0 + $0x90] sm:$0xff]
    %v88 = vld [vmem:[%s0 + $0x98] sm:$0xff]
    %v89 = vld [vmem:[%s0 + $0xa0] sm:$0xff]
    %v90 = vld [vmem:[%s0 + $0xa8] sm:$0xff]
    %v91 = vld [vmem:[%s0 + $0xb0] sm:$0xff]
    %v92 = vld [vmem:[%s0 + $0xb8] sm:$0xff]
    %v93 = vld [vmem:[%s0 + $0xc0] sm:$0xff]
    %v94 = vld [vmem:[%s0 + $0xc8] sm:$0xff]
    %v95 = vld [vmem:[%s0 + $0xd0] sm:$0xff]
    %v96 = vld [vmem:[%s0 + $0xd8] sm:$0xff]
    %v97 = vld [vmem:[%s0 + $0xe0] sm:$0xff]
    %v98 = vld [vmem:[%s0 + $0xe8] sm:$0xff]
    %v99 = vld [vmem:[%s0 + $0xf0] sm:$0xff]
    %v100 = vld [vmem:[%s0 + $0xf8] sm:$0xf]
    %v101 = vld [vmem:[%s1] sm:$0xff]
    %v102 = vld [vmem:[%s1 + $0x8] sm:$0xff]
    %v103 = vld [vmem:[%s1 + $0x10] sm:$0xff]
    %v104 = vld [vmem:[%s1 + $0x18] sm:$0xff]
    %v105 = vld [vmem:[%s1 + $0x20] sm:$0xff]
    %v106 = vld [vmem:[%s1 + $0x28] sm:$0xff]
    %v107 = vld [vmem:[%s1 + $0x30] sm:$0xff]
    %v108 = vld [vmem:[%s1 + $0x38] sm:$0xff]
    %v109 = vld [vmem:[%s1 + $0x40] sm:$0xff]
    %v110 = vld [vmem:[%s1 + $0x48] sm:$0xff]
    %v111 = vld [vmem:[%s1 + $0x50] sm:$0xff]
    %v112 = vld [vmem:[%s1 + $0x58] sm:$0xff]
    %v113 = vld [vmem:[%s1 + $0x60] sm:$0xff]
    %v114 = vld [vmem:[%s1 + $0x68] sm:$0xff]
    %v115 = vld [vmem:[%s1 + $0x70] sm:$0xff]
    %v116 = vld [vmem:[%s1 + $0x78] sm:$0xff]
    %v117 = vld [vmem:[%s1 + $0x80] sm:$0xff]
    %v118 = vld [vmem:[%s1 + $0x88] sm:$0xff]
    %v119 = vld [vmem:[%s1 + $0x90] sm:$0xff]
    %v120 = vld [vmem:[%s1 + $0x98] sm:$0xff]
    %v121 = vld [vmem:[%s1 + $0xa0] sm:$0xff]
    %v122 = vld [vmem:[%s1 + $0xa8] sm:$0xff]
    %v123 = vld [vmem:[%s1 + $0xb0] sm:$0xff]
    %v124 = vld [vmem:[%s1 + $0xb8] sm:$0xff]
    %v125 = vld [vmem:[%s0 + $0x1] sm:$0xff]
    %v126 = vld [vmem:[%s0 + $0x9] sm:$0xff]
    %v127 = vld [vmem:[%s0 + $0x11] sm:$0xff]
    %v128 = vld [vmem:[%s0 + $0x19] sm:$0xff]
    %v129 = vld [vmem:[%s0 + $0x21] sm:$0xff]
    %v130 = vld [vmem:[%s0 + $0x29] sm:$0xff]
    %v131 = vld [vmem:[%s0 + $0x31] sm:$0xff]
    %v132 = vld [vmem:[%s0 + $0x39] sm:$0xff]
    %v133 = vld [vmem:[%s0 + $0x41] sm:$0xff]
    %v134 = vld [vmem:[%s0 + $0x49] sm:$0xff]
    %v135 = vld [vmem:[%s0 + $0x51] sm:$0xff]
    %v136 = vld [vmem:[%s0 + $0x59] sm:$0xff]
    %v137 = vld [vmem:[%s0 + $0x61] sm:$0xff]
    %v138 = vld [vmem:[%s0 + $0x69] sm:$0xff]
    %v139 = vld [vmem:[%s0 + $0x71] sm:$0xff]
    %v140 = vld [vmem:[%s0 + $0x79] sm:$0xff]
    %v141 = vld [vmem:[%s0 + $0x81] sm:$0xff]
    %v142 = vld [vmem:[%s0 + $0x89] sm:$0xff]
    %v143 = vld [vmem:[%s0 + $0x91] sm:$0xff]
    %v144 = vld [vmem:[%s0 + $0x99] sm:$0xff]
    %v145 = vld [vmem:[%s0 + $0xa1] sm:$0xff]
    %v146 = vld [vmem:[%s0 + $0xa9] sm:$0xff]
    %v147 = vld [vmem:[%s0 + $0xb1] sm:$0xff]
    %v148 = vld [vmem:[%s0 + $0xb9] sm:$0xff]
    %v149 = vld [vmem:[%s0 + $0xc1] sm:$0xff]
    %v150 = vld [vmem:[%s0 + $0xc9] sm:$0xff]
    %v151 = vld [vmem:[%s0 + $0xd1] sm:$0xff]
    %v152 = vld [vmem:[%s0 + $0xd9] sm:$0xff]
    %v153 = vld [vmem:[%s0 + $0xe1] sm:$0xff]
    %v154 = vld [vmem:[%s0 + $0xe9] sm:$0xff]
    %v155 = vld [vmem:[%s0 + $0xf1] sm:$0xff]
    %v156 = vld [vmem:[%s0 + $0xf9] sm:$0xf]
    %s157 = scalar_lea.vmem %s1, 192
    %v158 = vld [vmem:[%s157] sm:$0xff]
    %v159 = vld [vmem:[%s157 + $0x8] sm:$0xff]
    %v160 = vld [vmem:[%s157 + $0x10] sm:$0xff]
    %v161 = vld [vmem:[%s157 + $0x18] sm:$0xff]
    %v162 = vld [vmem:[%s157 + $0x20] sm:$0xff]
    %v163 = vld [vmem:[%s157 + $0x28] sm:$0xff]
    %v164 = vld [vmem:[%s157 + $0x30] sm:$0xff]
    %v165 = vld [vmem:[%s157 + $0x38] sm:$0xff]
    %v166 = vld [vmem:[%s157 + $0x40] sm:$0xff]
    %v167 = vld [vmem:[%s157 + $0x48] sm:$0xff]
    %v168 = vld [vmem:[%s157 + $0x50] sm:$0xff]
    %v169 = vld [vmem:[%s157 + $0x58] sm:$0xff]
    %v170 = vld [vmem:[%s157 + $0x60] sm:$0xff]
    %v171 = vld [vmem:[%s157 + $0x68] sm:$0xff]
    %v172 = vld [vmem:[%s157 + $0x70] sm:$0xff]
    %v173 = vld [vmem:[%s157 + $0x78] sm:$0xff]
    %v174 = vld [vmem:[%s157 + $0x80] sm:$0xff]
    %v175 = vld [vmem:[%s157 + $0x88] sm:$0xff]
    %v176 = vld [vmem:[%s157 + $0x90] sm:$0xff]
    %v177 = vld [vmem:[%s157 + $0x98] sm:$0xff]
    %v178 = vld [vmem:[%s157 + $0xa0] sm:$0xff]
    %v179 = vld [vmem:[%s157 + $0xa8] sm:$0xff]
    %v180 = vld [vmem:[%s157 + $0xb0] sm:$0xff]
    %v181 = vld [vmem:[%s157 + $0xb8] sm:$0xff]
    %vm182 = vcmask 785408
    %v184 = vsel %vm182, %v125, 0
    %v187 = vsel %vm182, %v126, 0
    %v190 = vsel %vm182, %v127, 0
    %v193 = vsel %vm182, %v128, 0
    %v196 = vsel %vm182, %v129, 0
    %v199 = vsel %vm182, %v130, 0
    %v202 = vsel %vm182, %v131, 0
    %v205 = vsel %vm182, %v132, 0
    %v208 = vsel %vm182, %v133, 0
    %v211 = vsel %vm182, %v134, 0
    %v214 = vsel %vm182, %v135, 0
    %v217 = vsel %vm182, %v136, 0
    %v220 = vsel %vm182, %v137, 0
    %v223 = vsel %vm182, %v138, 0
    %v226 = vsel %vm182, %v139, 0
    %v229 = vsel %vm182, %v140, 0
    %v232 = vsel %vm182, %v141, 0
    %v235 = vsel %vm182, %v142, 0
    %v238 = vsel %vm182, %v143, 0
    %v241 = vsel %vm182, %v144, 0
    %v244 = vsel %vm182, %v145, 0
    %v247 = vsel %vm182, %v146, 0
    %v250 = vsel %vm182, %v147, 0
    %v253 = vsel %vm182, %v148, 0
    %v256 = vsel %vm182, %v149, 0
    %v259 = vsel %vm182, %v150, 0
    %v262 = vsel %vm182, %v151, 0
    %v265 = vsel %vm182, %v152, 0
    %v268 = vsel %vm182, %v153, 0
    %v271 = vsel %vm182, %v154, 0
    %v274 = vsel %vm182, %v155, 0
    %v277 = vsel %vm182, %v156, 0
    %279 = vmatprep.subr.mxu0 %v159
    %280 = vmatpush1.msra.mxu0 %v158
    %281 = vmatprep.subr.mxu0 %v161
    %282 = vmatpush1.msra.mxu0 %v160
    %283 = vmatprep.subr.mxu0 %v163
    %284 = vmatpush1.msra.mxu0 %v162
    %285 = vmatprep.subr.mxu0 %v165
    %286 = vmatpush1.msra.mxu0 %v164
    %287 = vmatprep.subr.mxu0 %v167
    %288 = vmatpush1.msra.mxu0 %v166
    %289 = vmatprep.subr.mxu0 %v169
    %290 = vmatpush1.msra.mxu0 %v168
    %291 = vmatprep.subr.mxu0 %v171
    %292 = vmatpush1.msra.mxu0 %v170
    %293 = vmatprep.subr.mxu0 %v173
    %294 = vmatpush1.msra.mxu0 %v172
    %295 = vmatprep.subr.mxu0 %v175
    %296 = vmatpush1.msra.mxu0 %v174
    %297 = vmatprep.subr.mxu0 %v177
    %298 = vmatpush1.msra.mxu0 %v176
    %299 = vmatprep.subr.mxu0 %v179
    %300 = vmatpush1.msra.mxu0 %v178
    %301 = vmatprep.subr.mxu0 %v181
    %302 = vmatpush1.msra.mxu0 %v180
    %303 = vmatprep.subr.mxu0 0.0
    %304 = vmatpush1.msra.mxu0 0.0
    %305 = vmatprep.subr.mxu0 0.0
    %306 = vmatpush1.msra.mxu0 0.0
    %307 = vmatprep.subr.mxu0 0.0
    %308 = vmatpush1.msra.mxu0 0.0
    %309 = vmatprep.subr.mxu0 0.0
    %310 = vmatpush1.msra.mxu0 0.0
    %311 = vmatprep.subr.mxu0 0.0
    %312 = vmatpush1.msra.mxu0 0.0
    %313 = vmatprep.subr.mxu0 0.0
    %314 = vmatpush1.msra.mxu0 0.0
    %315 = vmatprep.subr.mxu0 0.0
    %316 = vmatpush1.msra.mxu0 0.0
    %317 = vmatprep.subr.mxu0 0.0
    %318 = vmatpush1.msra.mxu0 0.0
    %319 = vmatprep.subr.mxu0 0.0
    %320 = vmatpush1.msra.mxu0 0.0
    %321 = vmatprep.subr.mxu0 0.0
    %322 = vmatpush1.msra.mxu0 0.0
    %323 = vmatprep.subr.mxu0 0.0
    %324 = vmatpush1.msra.mxu0 0.0
    %325 = vmatprep.subr.mxu0 0.0
    %326 = vmatpush1.msra.mxu0 0.0
    %327 = vmatprep.subr.mxu0 0.0
    %328 = vmatpush1.msra.mxu0 0.0
    %329 = vmatprep.subr.mxu0 0.0
    %330 = vmatpush1.msra.mxu0 0.0
    %331 = vmatprep.subr.mxu0 0.0
    %332 = vmatpush1.msra.mxu0 0.0
    %333 = vmatprep.subr.mxu0 0.0
    %334 = vmatpush1.msra.mxu0 0.0
    %335 = vmatprep.subr.mxu0 0.0
    %336 = vmatpush1.msra.mxu0 0.0
    %337 = vmatprep.subr.mxu0 0.0
    %338 = vmatpush1.msra.mxu0 0.0
    %339 = vmatprep.subr.mxu0 0.0
    %340 = vmatpush1.msra.mxu0 0.0
    %341 = vmatprep.subr.mxu0 0.0
    %342 = vmatpush1.msra.mxu0 0.0
    %343 = vmatprep.mubr.f32.mxu0 0.0
    %344 = vmatmul.mubr.f32.gmra.mrb[0].mxu0 %v184
    %v345 = vpop.f32.mrb[0].mxu0
    %v346 = vadd.f32 0.0, %v345
    %v347 = vpop.f32.mrb[0].mxu0
    %v348 = vadd.f32 0.0, %v347
    %349 = vmatprep.mubr.f32.mxu0 0.0
    %350 = vmatmul.mubr.f32.gmra.mrb[0].mxu0 %v187
    %v351 = vpop.f32.mrb[0].mxu0
    %v352 = vadd.f32 0.0, %v351
    %v353 = vpop.f32.mrb[0].mxu0
    %v354 = vadd.f32 0.0, %v353
    %355 = vmatprep.mubr.f32.mxu0 0.0
    %356 = vmatmul.mubr.f32.gmra.mrb[0].mxu0 %v190
    %v357 = vpop.f32.mrb[0].mxu0
    %v358 = vadd.f32 0.0, %v357
    %v359 = vpop.f32.mrb[0].mxu0
    %v360 = vadd.f32 0.0, %v359
    %361 = vmatprep.mubr.f32.mxu0 0.0
    %362 = vmatmul.mubr.f32.gmra.mrb[0].mxu0 %v193
    %v363 = vpop.f32.mrb[0].mxu0
    %v364 = vadd.f32 0.0, %v363
    %v365 = vpop.f32.mrb[0].mxu0
    %v366 = vadd.f32 0.0, %v365
    %367 = vmatprep.mubr.f32.mxu0 0.0
    %368 = vmatmul.mubr.f32.gmra.mrb[0].mxu0 %v196
    %v369 = vpop.f32.mrb[0].mxu0
    %v370 = vadd.f32 0.0, %v369
    %v371 = vpop.f32.mrb[0].mxu0
    %v372 = vadd.f32 0.0, %v371
    %373 = vmatprep.mubr.f32.mxu0 0.0
    %374 = vmatmul.mubr.f32.gmra.mrb[0].mxu0 %v199
    %v375 = vpop.f32.mrb[0].mxu0
    %v376 = vadd.f32 0.0, %v375
    %v377 = vpop.f32.mrb[0].mxu0
    %v378 = vadd.f32 0.0, %v377
    %379 = vmatprep.mubr.f32.mxu0 0.0
    %380 = vmatmul.mubr.f32.gmra.mrb[0].mxu0 %v202
    %v381 = vpop.f32.mrb[0].mxu0
    %v382 = vadd.f32 0.0, %v381
    %v383 = vpop.f32.mrb[0].mxu0
    %v384 = vadd.f32 0.0, %v383
    %385 = vmatprep.mubr.f32.mxu0 0.0
    %386 = vmatmul.mubr.f32.gmra.mrb[0].mxu0 %v205
    %v387 = vpop.f32.mrb[0].mxu0
    %v388 = vadd.f32 0.0, %v387
    %v389 = vpop.f32.mrb[0].mxu0
    %v390 = vadd.f32 0.0, %v389
    %391 = vmatprep.mubr.f32.mxu0 0.0
    %392 = vmatmul.mubr.f32.gmra.mrb[0].mxu0 %v208
    %v393 = vpop.f32.mrb[0].mxu0
    %v394 = vadd.f32 0.0, %v393
    %v395 = vpop.f32.mrb[0].mxu0
    %v396 = vadd.f32 0.0, %v395
    %397 = vmatprep.mubr.f32.mxu0 0.0
    %398 = vmatmul.mubr.f32.gmra.mrb[0].mxu0 %v211
    %v399 = vpop.f32.mrb[0].mxu0
    %v400 = vadd.f32 0.0, %v399
    %v401 = vpop.f32.mrb[0].mxu0
    %v402 = vadd.f32 0.0, %v401
    %403 = vmatprep.mubr.f32.mxu0 0.0
    %404 = vmatmul.mubr.f32.gmra.mrb[0].mxu0 %v214
    %v405 = vpop.f32.mrb[0].mxu0
    %v406 = vadd.f32 0.0, %v405
    %v407 = vpop.f32.mrb[0].mxu0
    %v408 = vadd.f32 0.0, %v407
    %409 = vmatprep.mubr.f32.mxu0 0.0
    %410 = vmatmul.mubr.f32.gmra.mrb[0].mxu0 %v217
    %v411 = vpop.f32.mrb[0].mxu0
    %v412 = vadd.f32 0.0, %v411
    %v413 = vpop.f32.mrb[0].mxu0
    %v414 = vadd.f32 0.0, %v413
    %415 = vmatprep.mubr.f32.mxu0 0.0
    %416 = vmatmul.mubr.f32.gmra.mrb[0].mxu0 %v220
    %v417 = vpop.f32.mrb[0].mxu0
    %v418 = vadd.f32 0.0, %v417
    %v419 = vpop.f32.mrb[0].mxu0
    %v420 = vadd.f32 0.0, %v419
    %421 = vmatprep.mubr.f32.mxu0 0.0
    %422 = vmatmul.mubr.f32.gmra.mrb[0].mxu0 %v223
    %v423 = vpop.f32.mrb[0].mxu0
    %v424 = vadd.f32 0.0, %v423
    %v425 = vpop.f32.mrb[0].mxu0
    %v426 = vadd.f32 0.0, %v425
    %427 = vmatprep.mubr.f32.mxu0 0.0
    %428 = vmatmul.mubr.f32.gmra.mrb[0].mxu0 %v226
    %v429 = vpop.f32.mrb[0].mxu0
    %v430 = vadd.f32 0.0, %v429
    %v431 = vpop.f32.mrb[0].mxu0
    %v432 = vadd.f32 0.0, %v431
    %433 = vmatprep.mubr.f32.mxu0 0.0
    %434 = vmatmul.mubr.f32.gmra.mrb[0].mxu0 %v229
    %v435 = vpop.f32.mrb[0].mxu0
    %v436 = vadd.f32 0.0, %v435
    %v437 = vpop.f32.mrb[0].mxu0
    %v438 = vadd.f32 0.0, %v437
    %439 = vmatprep.mubr.f32.mxu0 0.0
    %440 = vmatmul.mubr.f32.gmra.mrb[0].mxu0 %v232
    %v441 = vpop.f32.mrb[0].mxu0
    %v442 = vadd.f32 0.0, %v441
    %v443 = vpop.f32.mrb[0].mxu0
    %v444 = vadd.f32 0.0, %v443
    %445 = vmatprep.mubr.f32.mxu0 0.0
    %446 = vmatmul.mubr.f32.gmra.mrb[0].mxu0 %v235
    %v447 = vpop.f32.mrb[0].mxu0
    %v448 = vadd.f32 0.0, %v447
    %v449 = vpop.f32.mrb[0].mxu0
    %v450 = vadd.f32 0.0, %v449
    %451 = vmatprep.mubr.f32.mxu0 0.0
    %452 = vmatmul.mubr.f32.gmra.mrb[0].mxu0 %v238
    %v453 = vpop.f32.mrb[0].mxu0
    %v454 = vadd.f32 0.0, %v453
    %v455 = vpop.f32.mrb[0].mxu0
    %v456 = vadd.f32 0.0, %v455
    %457 = vmatprep.mubr.f32.mxu0 0.0
    %458 = vmatmul.mubr.f32.gmra.mrb[0].mxu0 %v241
    %v459 = vpop.f32.mrb[0].mxu0
    %v460 = vadd.f32 0.0, %v459
    %v461 = vpop.f32.mrb[0].mxu0
    %v462 = vadd.f32 0.0, %v461
    %463 = vmatprep.mubr.f32.mxu0 0.0
    %464 = vmatmul.mubr.f32.gmra.mrb[0].mxu0 %v244
    %v465 = vpop.f32.mrb[0].mxu0
    %v466 = vadd.f32 0.0, %v465
    %v467 = vpop.f32.mrb[0].mxu0
    %v468 = vadd.f32 0.0, %v467
    %469 = vmatprep.mubr.f32.mxu0 0.0
    %470 = vmatmul.mubr.f32.gmra.mrb[0].mxu0 %v247
    %v471 = vpop.f32.mrb[0].mxu0
    %v472 = vadd.f32 0.0, %v471
    %v473 = vpop.f32.mrb[0].mxu0
    %v474 = vadd.f32 0.0, %v473
    %475 = vmatprep.mubr.f32.mxu0 0.0
    %476 = vmatmul.mubr.f32.gmra.mrb[0].mxu0 %v250
    %v477 = vpop.f32.mrb[0].mxu0
    %v478 = vadd.f32 0.0, %v477
    %v479 = vpop.f32.mrb[0].mxu0
    %v480 = vadd.f32 0.0, %v479
    %481 = vmatprep.mubr.f32.mxu0 0.0
    %482 = vmatmul.mubr.f32.gmra.mrb[0].mxu0 %v253
    %v483 = vpop.f32.mrb[0].mxu0
    %v484 = vadd.f32 0.0, %v483
    %v485 = vpop.f32.mrb[0].mxu0
    %v486 = vadd.f32 0.0, %v485
    %487 = vmatprep.mubr.f32.mxu0 0.0
    %488 = vmatmul.mubr.f32.gmra.mrb[0].mxu0 %v256
    %v489 = vpop.f32.mrb[0].mxu0
    %v490 = vadd.f32 0.0, %v489
    %v491 = vpop.f32.mrb[0].mxu0
    %v492 = vadd.f32 0.0, %v491
    %493 = vmatprep.mubr.f32.mxu0 0.0
    %494 = vmatmul.mubr.f32.gmra.mrb[0].mxu0 %v259
    %v495 = vpop.f32.mrb[0].mxu0
    %v496 = vadd.f32 0.0, %v495
    %v497 = vpop.f32.mrb[0].mxu0
    %v498 = vadd.f32 0.0, %v497
    %499 = vmatprep.mubr.f32.mxu0 0.0
    %500 = vmatmul.mubr.f32.gmra.mrb[0].mxu0 %v262
    %v501 = vpop.f32.mrb[0].mxu0
    %v502 = vadd.f32 0.0, %v501
    %v503 = vpop.f32.mrb[0].mxu0
    %v504 = vadd.f32 0.0, %v503
    %505 = vmatprep.mubr.f32.mxu0 0.0
    %506 = vmatmul.mubr.f32.gmra.mrb[0].mxu0 %v265
    %v507 = vpop.f32.mrb[0].mxu0
    %v508 = vadd.f32 0.0, %v507
    %v509 = vpop.f32.mrb[0].mxu0
    %v510 = vadd.f32 0.0, %v509
    %511 = vmatprep.mubr.f32.mxu0 0.0
    %512 = vmatmul.mubr.f32.gmra.mrb[0].mxu0 %v268
    %v513 = vpop.f32.mrb[0].mxu0
    %v514 = vadd.f32 0.0, %v513
    %v515 = vpop.f32.mrb[0].mxu0
    %v516 = vadd.f32 0.0, %v515
    %517 = vmatprep.mubr.f32.mxu0 0.0
    %518 = vmatmul.mubr.f32.gmra.mrb[0].mxu0 %v271
    %v519 = vpop.f32.mrb[0].mxu0
    %v520 = vadd.f32 0.0, %v519
    %v521 = vpop.f32.mrb[0].mxu0
    %v522 = vadd.f32 0.0, %v521
    %523 = vmatprep.mubr.f32.mxu0 0.0
    %524 = vmatmul.mubr.f32.gmra.mrb[0].mxu0 %v274
    %v525 = vpop.f32.mrb[0].mxu0
    %v526 = vadd.f32 0.0, %v525
    %v527 = vpop.f32.mrb[0].mxu0
    %v528 = vadd.f32 0.0, %v527
    %529 = vmatprep.mubr.f32.mxu0 0.0
    %530 = vmatmul.mubr.f32.gmra.mrb[0].mxu0 %v277
    %v531 = vpop.f32.mrb[0].mxu0
    %v532 = vadd.f32 0.0, %v531
    %v533 = vpop.f32.mrb[0].mxu0
    %v534 = vadd.f32 0.0, %v533
    %535 = vdwg.mxu0
    %v537 = vsel %vm182, %v69, 0
    %v540 = vsel %vm182, %v70, 0
    %v543 = vsel %vm182, %v71, 0
    %v546 = vsel %vm182, %v72, 0
    %v549 = vsel %vm182, %v73, 0
    %v552 = vsel %vm182, %v74, 0
    %v555 = vsel %vm182, %v75, 0
    %v558 = vsel %vm182, %v76, 0
    %v561 = vsel %vm182, %v77, 0
    %v564 = vsel %vm182, %v78, 0
    %v567 = vsel %vm182, %v79, 0
    %v570 = vsel %vm182, %v80, 0
    %v573 = vsel %vm182, %v81, 0
    %v576 = vsel %vm182, %v82, 0
    %v579 = vsel %vm182, %v83, 0
    %v582 = vsel %vm182, %v84, 0
    %v585 = vsel %vm182, %v85, 0
    %v588 = vsel %vm182, %v86, 0
    %v591 = vsel %vm182, %v87, 0
    %v594 = vsel %vm182, %v88, 0
    %v597 = vsel %vm182, %v89, 0
    %v600 = vsel %vm182, %v90, 0
    %v603 = vsel %vm182, %v91, 0
    %v606 = vsel %vm182, %v92, 0
    %v609 = vsel %vm182, %v93, 0
    %v612 = vsel %vm182, %v94, 0
    %v615 = vsel %vm182, %v95, 0
    %v618 = vsel %vm182, %v96, 0
    %v621 = vsel %vm182, %v97, 0
    %v624 = vsel %vm182, %v98, 0
    %v627 = vsel %vm182, %v99, 0
    %v630 = vsel %vm182, %v100, 0
    %632 = vmatprep.subr.mxu0 %v102
    %633 = vmatpush1.msra.mxu0 %v101
    %634 = vmatprep.subr.mxu0 %v104
    %635 = vmatpush1.msra.mxu0 %v103
    %636 = vmatprep.subr.mxu0 %v106
    %637 = vmatpush1.msra.mxu0 %v105
    %638 = vmatprep.subr.mxu0 %v108
    %639 = vmatpush1.msra.mxu0 %v107
    %640 = vmatprep.subr.mxu0 %v110
    %641 = vmatpush1.msra.mxu0 %v109
    %642 = vmatprep.subr.mxu0 %v112
    %643 = vmatpush1.msra.mxu0 %v111
    %644 = vmatprep.subr.mxu0 %v114
    %645 = vmatpush1.msra.mxu0 %v113
    %646 = vmatprep.subr.mxu0 %v116
    %647 = vmatpush1.msra.mxu0 %v115
    %648 = vmatprep.subr.mxu0 %v118
    %649 = vmatpush1.msra.mxu0 %v117
    %650 = vmatprep.subr.mxu0 %v120
    %651 = vmatpush1.msra.mxu0 %v119
    %652 = vmatprep.subr.mxu0 %v122
    %653 = vmatpush1.msra.mxu0 %v121
    %654 = vmatprep.subr.mxu0 %v124
    %655 = vmatpush1.msra.mxu0 %v123
    %656 = vmatprep.subr.mxu0 0.0
    %657 = vmatpush1.msra.mxu0 0.0
    %658 = vmatprep.subr.mxu0 0.0
    %659 = vmatpush1.msra.mxu0 0.0
    %660 = vmatprep.subr.mxu0 0.0
    %661 = vmatpush1.msra.mxu0 0.0
    %662 = vmatprep.subr.mxu0 0.0
    %663 = vmatpush1.msra.mxu0 0.0
    %664 = vmatprep.subr.mxu0 0.0
    %665 = vmatpush1.msra.mxu0 0.0
    %666 = vmatprep.subr.mxu0 0.0
    %667 = vmatpush1.msra.mxu0 0.0
    %668 = vmatprep.subr.mxu0 0.0
    %669 = vmatpush1.msra.mxu0 0.0
    %670 = vmatprep.subr.mxu0 0.0
    %671 = vmatpush1.msra.mxu0 0.0
    %672 = vmatprep.subr.mxu0 0.0
    %673 = vmatpush1.msra.mxu0 0.0
    %674 = vmatprep.subr.mxu0 0.0
    %675 = vmatpush1.msra.mxu0 0.0
    %676 = vmatprep.subr.mxu0 0.0
    %677 = vmatpush1.msra.mxu0 0.0
    %678 = vmatprep.subr.mxu0 0.0
    %679 = vmatpush1.msra.mxu0 0.0
    %680 = vmatprep.subr.mxu0 0.0
    %681 = vmatpush1.msra.mxu0 0.0
    %682 = vmatprep.subr.mxu0 0.0
    %683 = vmatpush1.msra.mxu0 0.0
    %684 = vmatprep.subr.mxu0 0.0
    %685 = vmatpush1.msra.mxu0 0.0
    %686 = vmatprep.subr.mxu0 0.0
    %687 = vmatpush1.msra.mxu0 0.0
    %688 = vmatprep.subr.mxu0 0.0
    %689 = vmatpush1.msra.mxu0 0.0
    %690 = vmatprep.subr.mxu0 0.0
    %691 = vmatpush1.msra.mxu0 0.0
    %692 = vmatprep.subr.mxu0 0.0
    %693 = vmatpush1.msra.mxu0 0.0
    %694 = vmatprep.subr.mxu0 0.0
    %695 = vmatpush1.msra.mxu0 0.0
    %696 = vmatprep.mubr.f32.mxu0 0.0
    %697 = vmatmul.mubr.f32.gmra.mrb[0].mxu0 %v537
    %v698 = vpop.f32.mrb[0].mxu0
    %v699 = vadd.f32 %v346, %v698
    %v700 = vpop.f32.mrb[0].mxu0
    %v701 = vadd.f32 %v348, %v700
    %702 = vmatprep.mubr.f32.mxu0 0.0
    %703 = vmatmul.mubr.f32.gmra.mrb[0].mxu0 %v540
    %v704 = vpop.f32.mrb[0].mxu0
    %v705 = vadd.f32 %v352, %v704
    %v706 = vpop.f32.mrb[0].mxu0
    %v707 = vadd.f32 %v354, %v706
    %708 = vmatprep.mubr.f32.mxu0 0.0
    %709 = vmatmul.mubr.f32.gmra.mrb[0].mxu0 %v543
    %v710 = vpop.f32.mrb[0].mxu0
    %v711 = vadd.f32 %v358, %v710
    %v712 = vpop.f32.mrb[0].mxu0
    %v713 = vadd.f32 %v360, %v712
    %714 = vmatprep.mubr.f32.mxu0 0.0
    %715 = vmatmul.mubr.f32.gmra.mrb[0].mxu0 %v546
    %v716 = vpop.f32.mrb[0].mxu0
    %v717 = vadd.f32 %v364, %v716
    %v718 = vpop.f32.mrb[0].mxu0
    %v719 = vadd.f32 %v366, %v718
    %720 = vmatprep.mubr.f32.mxu0 0.0
    %721 = vmatmul.mubr.f32.gmra.mrb[0].mxu0 %v549
    %v722 = vpop.f32.mrb[0].mxu0
    %v723 = vadd.f32 %v370, %v722
    %v724 = vpop.f32.mrb[0].mxu0
    %v725 = vadd.f32 %v372, %v724
    %726 = vmatprep.mubr.f32.mxu0 0.0
    %727 = vmatmul.mubr.f32.gmra.mrb[0].mxu0 %v552
    %v728 = vpop.f32.mrb[0].mxu0
    %v729 = vadd.f32 %v376, %v728
    %v730 = vpop.f32.mrb[0].mxu0
    %v731 = vadd.f32 %v378, %v730
    %732 = vmatprep.mubr.f32.mxu0 0.0
    %733 = vmatmul.mubr.f32.gmra.mrb[0].mxu0 %v555
    %v734 = vpop.f32.mrb[0].mxu0
    %v735 = vadd.f32 %v382, %v734
    %v736 = vpop.f32.mrb[0].mxu0
    %v737 = vadd.f32 %v384, %v736
    %738 = vmatprep.mubr.f32.mxu0 0.0
    %739 = vmatmul.mubr.f32.gmra.mrb[0].mxu0 %v558
    %v740 = vpop.f32.mrb[0].mxu0
    %v741 = vadd.f32 %v388, %v740
    %v742 = vpop.f32.mrb[0].mxu0
    %v743 = vadd.f32 %v390, %v742
    %744 = vmatprep.mubr.f32.mxu0 0.0
    %745 = vmatmul.mubr.f32.gmra.mrb[0].mxu0 %v561
    %v746 = vpop.f32.mrb[0].mxu0
    %v747 = vadd.f32 %v394, %v746
    %v748 = vpop.f32.mrb[0].mxu0
    %v749 = vadd.f32 %v396, %v748
    %750 = vmatprep.mubr.f32.mxu0 0.0
    %751 = vmatmul.mubr.f32.gmra.mrb[0].mxu0 %v564
    %v752 = vpop.f32.mrb[0].mxu0
    %v753 = vadd.f32 %v400, %v752
    %v754 = vpop.f32.mrb[0].mxu0
    %v755 = vadd.f32 %v402, %v754
    %756 = vmatprep.mubr.f32.mxu0 0.0
    %757 = vmatmul.mubr.f32.gmra.mrb[0].mxu0 %v567
    %v758 = vpop.f32.mrb[0].mxu0
    %v759 = vadd.f32 %v406, %v758
    %v760 = vpop.f32.mrb[0].mxu0
    %v761 = vadd.f32 %v408, %v760
    %762 = vmatprep.mubr.f32.mxu0 0.0
    %763 = vmatmul.mubr.f32.gmra.mrb[0].mxu0 %v570
    %v764 = vpop.f32.mrb[0].mxu0
    %v765 = vadd.f32 %v412, %v764
    %v766 = vpop.f32.mrb[0].mxu0
    %v767 = vadd.f32 %v414, %v766
    %768 = vmatprep.mubr.f32.mxu0 0.0
    %769 = vmatmul.mubr.f32.gmra.mrb[0].mxu0 %v573
    %v770 = vpop.f32.mrb[0].mxu0
    %v771 = vadd.f32 %v418, %v770
    %v772 = vpop.f32.mrb[0].mxu0
    %v773 = vadd.f32 %v420, %v772
    %774 = vmatprep.mubr.f32.mxu0 0.0
    %775 = vmatmul.mubr.f32.gmra.mrb[0].mxu0 %v576
    %v776 = vpop.f32.mrb[0].mxu0
    %v777 = vadd.f32 %v424, %v776
    %v778 = vpop.f32.mrb[0].mxu0
    %v779 = vadd.f32 %v426, %v778
    %780 = vmatprep.mubr.f32.mxu0 0.0
    %781 = vmatmul.mubr.f32.gmra.mrb[0].mxu0 %v579
    %v782 = vpop.f32.mrb[0].mxu0
    %v783 = vadd.f32 %v430, %v782
    %v784 = vpop.f32.mrb[0].mxu0
    %v785 = vadd.f32 %v432, %v784
    %786 = vmatprep.mubr.f32.mxu0 0.0
    %787 = vmatmul.mubr.f32.gmra.mrb[0].mxu0 %v582
    %v788 = vpop.f32.mrb[0].mxu0
    %v789 = vadd.f32 %v436, %v788
    %v790 = vpop.f32.mrb[0].mxu0
    %v791 = vadd.f32 %v438, %v790
    %792 = vmatprep.mubr.f32.mxu0 0.0
    %793 = vmatmul.mubr.f32.gmra.mrb[0].mxu0 %v585
    %v794 = vpop.f32.mrb[0].mxu0
    %v795 = vadd.f32 %v442, %v794
    %v796 = vpop.f32.mrb[0].mxu0
    %v797 = vadd.f32 %v444, %v796
    %798 = vmatprep.mubr.f32.mxu0 0.0
    %799 = vmatmul.mubr.f32.gmra.mrb[0].mxu0 %v588
    %v800 = vpop.f32.mrb[0].mxu0
    %v801 = vadd.f32 %v448, %v800
    %v802 = vpop.f32.mrb[0].mxu0
    %v803 = vadd.f32 %v450, %v802
    %804 = vmatprep.mubr.f32.mxu0 0.0
    %805 = vmatmul.mubr.f32.gmra.mrb[0].mxu0 %v591
    %v806 = vpop.f32.mrb[0].mxu0
    %v807 = vadd.f32 %v454, %v806
    %v808 = vpop.f32.mrb[0].mxu0
    %v809 = vadd.f32 %v456, %v808
    %810 = vmatprep.mubr.f32.mxu0 0.0
    %811 = vmatmul.mubr.f32.gmra.mrb[0].mxu0 %v594
    %v812 = vpop.f32.mrb[0].mxu0
    %v813 = vadd.f32 %v460, %v812
    %v814 = vpop.f32.mrb[0].mxu0
    %v815 = vadd.f32 %v462, %v814
    %816 = vmatprep.mubr.f32.mxu0 0.0
    %817 = vmatmul.mubr.f32.gmra.mrb[0].mxu0 %v597
    %v818 = vpop.f32.mrb[0].mxu0
    %v819 = vadd.f32 %v466, %v818
    %v820 = vpop.f32.mrb[0].mxu0
    %v821 = vadd.f32 %v468, %v820
    %822 = vmatprep.mubr.f32.mxu0 0.0
    %823 = vmatmul.mubr.f32.gmra.mrb[0].mxu0 %v600
    %v824 = vpop.f32.mrb[0].mxu0
    %v825 = vadd.f32 %v472, %v824
    %v826 = vpop.f32.mrb[0].mxu0
    %v827 = vadd.f32 %v474, %v826
    %828 = vmatprep.mubr.f32.mxu0 0.0
    %829 = vmatmul.mubr.f32.gmra.mrb[0].mxu0 %v603
    %v830 = vpop.f32.mrb[0].mxu0
    %v831 = vadd.f32 %v478, %v830
    %v832 = vpop.f32.mrb[0].mxu0
    %v833 = vadd.f32 %v480, %v832
    %834 = vmatprep.mubr.f32.mxu0 0.0
    %835 = vmatmul.mubr.f32.gmra.mrb[0].mxu0 %v606
    %v836 = vpop.f32.mrb[0].mxu0
    %v837 = vadd.f32 %v484, %v836
    %v838 = vpop.f32.mrb[0].mxu0
    %v839 = vadd.f32 %v486, %v838
    %840 = vmatprep.mubr.f32.mxu0 0.0
    %841 = vmatmul.mubr.f32.gmra.mrb[0].mxu0 %v609
    %v842 = vpop.f32.mrb[0].mxu0
    %v843 = vadd.f32 %v490, %v842
    %v844 = vpop.f32.mrb[0].mxu0
    %v845 = vadd.f32 %v492, %v844
    %846 = vmatprep.mubr.f32.mxu0 0.0
    %847 = vmatmul.mubr.f32.gmra.mrb[0].mxu0 %v612
    %v848 = vpop.f32.mrb[0].mxu0
    %v849 = vadd.f32 %v496, %v848
    %v850 = vpop.f32.mrb[0].mxu0
    %v851 = vadd.f32 %v498, %v850
    %852 = vmatprep.mubr.f32.mxu0 0.0
    %853 = vmatmul.mubr.f32.gmra.mrb[0].mxu0 %v615
    %v854 = vpop.f32.mrb[0].mxu0
    %v855 = vadd.f32 %v502, %v854
    %v856 = vpop.f32.mrb[0].mxu0
    %v857 = vadd.f32 %v504, %v856
    %858 = vmatprep.mubr.f32.mxu0 0.0
    %859 = vmatmul.mubr.f32.gmra.mrb[0].mxu0 %v618
    %v860 = vpop.f32.mrb[0].mxu0
    %v861 = vadd.f32 %v508, %v860
    %v862 = vpop.f32.mrb[0].mxu0
    %v863 = vadd.f32 %v510, %v862
    %864 = vmatprep.mubr.f32.mxu0 0.0
    %865 = vmatmul.mubr.f32.gmra.mrb[0].mxu0 %v621
    %v866 = vpop.f32.mrb[0].mxu0
    %v867 = vadd.f32 %v514, %v866
    %v868 = vpop.f32.mrb[0].mxu0
    %v869 = vadd.f32 %v516, %v868
    %870 = vmatprep.mubr.f32.mxu0 0.0
    %871 = vmatmul.mubr.f32.gmra.mrb[0].mxu0 %v624
    %v872 = vpop.f32.mrb[0].mxu0
    %v873 = vadd.f32 %v520, %v872
    %v874 = vpop.f32.mrb[0].mxu0
    %v875 = vadd.f32 %v522, %v874
    %876 = vmatprep.mubr.f32.mxu0 0.0
    %877 = vmatmul.mubr.f32.gmra.mrb[0].mxu0 %v627
    %v878 = vpop.f32.mrb[0].mxu0
    %v879 = vadd.f32 %v526, %v878
    %v880 = vpop.f32.mrb[0].mxu0
    %v881 = vadd.f32 %v528, %v880
    %882 = vmatprep.mubr.f32.mxu0 0.0
    %883 = vmatmul.mubr.f32.gmra.mrb[0].mxu0 %v630
    %v884 = vpop.f32.mrb[0].mxu0
    %v885 = vadd.f32 %v532, %v884
    %v886 = vpop.f32.mrb[0].mxu0
    %v887 = vadd.f32 %v534, %v886
    %888 = vdwg.mxu0
    %v889 = vld [vmem:[%s0 + $0x2] sm:$0xff]
    %v890 = vld [vmem:[%s0 + $0xa] sm:$0xff]
    %v891 = vld [vmem:[%s0 + $0x12] sm:$0xff]
    %v892 = vld [vmem:[%s0 + $0x1a] sm:$0xff]
    %v893 = vld [vmem:[%s0 + $0x22] sm:$0xff]
    %v894 = vld [vmem:[%s0 + $0x2a] sm:$0xff]
    %v895 = vld [vmem:[%s0 + $0x32] sm:$0xff]
    %v896 = vld [vmem:[%s0 + $0x3a] sm:$0xff]
    %v897 = vld [vmem:[%s0 + $0x42] sm:$0xff]
    %v898 = vld [vmem:[%s0 + $0x4a] sm:$0xff]
    %v899 = vld [vmem:[%s0 + $0x52] sm:$0xff]
    %v900 = vld [vmem:[%s0 + $0x5a] sm:$0xff]
    %v901 = vld [vmem:[%s0 + $0x62] sm:$0xff]
    %v902 = vld [vmem:[%s0 + $0x6a] sm:$0xff]
    %v903 = vld [vmem:[%s0 + $0x72] sm:$0xff]
    %v904 = vld [vmem:[%s0 + $0x7a] sm:$0xff]
    %v905 = vld [vmem:[%s0 + $0x82] sm:$0xff]
    %v906 = vld [vmem:[%s0 + $0x8a] sm:$0xff]
    %v907 = vld [vmem:[%s0 + $0x92] sm:$0xff]
    %v908 = vld [vmem:[%s0 + $0x9a] sm:$0xff]
    %v909 = vld [vmem:[%s0 + $0xa2] sm:$0xff]
    %v910 = vld [vmem:[%s0 + $0xaa] sm:$0xff]
    %v911 = vld [vmem:[%s0 + $0xb2] sm:$0xff]
    %v912 = vld [vmem:[%s0 + $0xba] sm:$0xff]
    %v913 = vld [vmem:[%s0 + $0xc2] sm:$0xff]
    %v914 = vld [vmem:[%s0 + $0xca] sm:$0xff]
    %v915 = vld [vmem:[%s0 + $0xd2] sm:$0xff]
    %v916 = vld [vmem:[%s0 + $0xda] sm:$0xff]
    %v917 = vld [vmem:[%s0 + $0xe2] sm:$0xff]
    %v918 = vld [vmem:[%s0 + $0xea] sm:$0xff]
    %v919 = vld [vmem:[%s0 + $0xf2] sm:$0xff]
    %v920 = vld [vmem:[%s0 + $0xfa] sm:$0xf]
    %s921 = scalar_lea.vmem %s1, 384
    %v922 = vld [vmem:[%s921] sm:$0xff]
    %v923 = vld [vmem:[%s921 + $0x8] sm:$0xff]
    %v924 = vld [vmem:[%s921 + $0x10] sm:$0xff]
    %v925 = vld [vmem:[%s921 + $0x18] sm:$0xff]
    %v926 = vld [vmem:[%s921 + $0x20] sm:$0xff]
    %v927 = vld [vmem:[%s921 + $0x28] sm:$0xff]
    %v928 = vld [vmem:[%s921 + $0x30] sm:$0xff]
    %v929 = vld [vmem:[%s921 + $0x38] sm:$0xff]
    %v930 = vld [vmem:[%s921 + $0x40] sm:$0xff]
    %v931 = vld [vmem:[%s921 + $0x48] sm:$0xff]
    %v932 = vld [vmem:[%s921 + $0x50] sm:$0xff]
    %v933 = vld [vmem:[%s921 + $0x58] sm:$0xff]
    %v934 = vld [vmem:[%s921 + $0x60] sm:$0xff]
    %v935 = vld [vmem:[%s921 + $0x68] sm:$0xff]
    %v936 = vld [vmem:[%s921 + $0x70] sm:$0xff]
    %v937 = vld [vmem:[%s921 + $0x78] sm:$0xff]
    %v938 = vld [vmem:[%s921 + $0x80] sm:$0xff]
    %v939 = vld [vmem:[%s921 + $0x88] sm:$0xff]
    %v940 = vld [vmem:[%s921 + $0x90] sm:$0xff]
    %v941 = vld [vmem:[%s921 + $0x98] sm:$0xff]
    %v942 = vld [vmem:[%s921 + $0xa0] sm:$0xff]
    %v943 = vld [vmem:[%s921 + $0xa8] sm:$0xff]
    %v944 = vld [vmem:[%s921 + $0xb0] sm:$0xff]
    %v945 = vld [vmem:[%s921 + $0xb8] sm:$0xff]
    %v947 = vsel %vm182, %v889, 0
    %v950 = vsel %vm182, %v890, 0
    %v953 = vsel %vm182, %v891, 0
    %v956 = vsel %vm182, %v892, 0
    %v959 = vsel %vm182, %v893, 0
    %v962 = vsel %vm182, %v894, 0
    %v965 = vsel %vm182, %v895, 0
    %v968 = vsel %vm182, %v896, 0
    %v971 = vsel %vm182, %v897, 0
    %v974 = vsel %vm182, %v898, 0
    %v977 = vsel %vm182, %v899, 0
    %v980 = vsel %vm182, %v900, 0
    %v983 = vsel %vm182, %v901, 0
    %v986 = vsel %vm182, %v902, 0
    %v989 = vsel %vm182, %v903, 0
    %v992 = vsel %vm182, %v904, 0
    %v995 = vsel %vm182, %v905, 0
    %v998 = vsel %vm182, %v906, 0
    %v1001 = vsel %vm182, %v907, 0
    %v1004 = vsel %vm182, %v908, 0
    %v1007 = vsel %vm182, %v909, 0
    %v1010 = vsel %vm182, %v910, 0
    %v1013 = vsel %vm182, %v911, 0
    %v1016 = vsel %vm182, %v912, 0
    %v1019 = vsel %vm182, %v913, 0
    %v1022 = vsel %vm182, %v914, 0
    %v1025 = vsel %vm182, %v915, 0
    %v1028 = vsel %vm182, %v916, 0
    %v1031 = vsel %vm182, %v917, 0
    %v1034 = vsel %vm182, %v918, 0
    %v1037 = vsel %vm182, %v919, 0
    %v1040 = vsel %vm182, %v920, 0
    %1042 = vmatprep.subr.mxu0 %v923
    %1043 = vmatpush1.msra.mxu0 %v922
    %1044 = vmatprep.subr.mxu0 %v925
    %1045 = vmatpush1.msra.mxu0 %v924
    %1046 = vmatprep.subr.mxu0 %v927
    %1047 = vmatpush1.msra.mxu0 %v926
    %1048 = vmatprep.subr.mxu0 %v929
    %1049 = vmatpush1.msra.mxu0 %v928
    %1050 = vmatprep.subr.mxu0 %v931
    %1051 = vmatpush1.msra.mxu0 %v930
    %1052 = vmatprep.subr.mxu0 %v933
    %1053 = vmatpush1.msra.mxu0 %v932
    %1054 = vmatprep.subr.mxu0 %v935
    %1055 = vmatpush1.msra.mxu0 %v934
    %1056 = vmatprep.subr.mxu0 %v937
    %1057 = vmatpush1.msra.mxu0 %v936
    %1058 = vmatprep.subr.mxu0 %v939
    %1059 = vmatpush1.msra.mxu0 %v938
    %1060 = vmatprep.subr.mxu0 %v941
    %1061 = vmatpush1.msra.mxu0 %v940
    %1062 = vmatprep.subr.mxu0 %v943
    %1063 = vmatpush1.msra.mxu0 %v942
    %1064 = vmatprep.subr.mxu0 %v945
    %1065 = vmatpush1.msra.mxu0 %v944
    %1066 = vmatprep.subr.mxu0 0.0
    %1067 = vmatpush1.msra.mxu0 0.0
    %1068 = vmatprep.subr.mxu0 0.0
    %1069 = vmatpush1.msra.mxu0 0.0
    %1070 = vmatprep.subr.mxu0 0.0
    %1071 = vmatpush1.msra.mxu0 0.0
    %1072 = vmatprep.subr.mxu0 0.0
    %1073 = vmatpush1.msra.mxu0 0.0
    %1074 = vmatprep.subr.mxu0 0.0
    %1075 = vmatpush1.msra.mxu0 0.0
    %1076 = vmatprep.subr.mxu0 0.0
    %1077 = vmatpush1.msra.mxu0 0.0
    %1078 = vmatprep.subr.mxu0 0.0
    %1079 = vmatpush1.msra.mxu0 0.0
    %1080 = vmatprep.subr.mxu0 0.0
    %1081 = vmatpush1.msra.mxu0 0.0
    %1082 = vmatprep.subr.mxu0 0.0
    %1083 = vmatpush1.msra.mxu0 0.0
    %1084 = vmatprep.subr.mxu0 0.0
    %1085 = vmatpush1.msra.mxu0 0.0
    %1086 = vmatprep.subr.mxu0 0.0
    %1087 = vmatpush1.msra.mxu0 0.0
    %1088 = vmatprep.subr.mxu0 0.0
    %1089 = vmatpush1.msra.mxu0 0.0
    %1090 = vmatprep.subr.mxu0 0.0
    %1091 = vmatpush1.msra.mxu0 0.0
    %1092 = vmatprep.subr.mxu0 0.0
    %1093 = vmatpush1.msra.mxu0 0.0
    %1094 = vmatprep.subr.mxu0 0.0
    %1095 = vmatpush1.msra.mxu0 0.0
    %1096 = vmatprep.subr.mxu0 0.0
    %1097 = vmatpush1.msra.mxu0 0.0
    %1098 = vmatprep.subr.mxu0 0.0
    %1099 = vmatpush1.msra.mxu0 0.0
    %1100 = vmatprep.subr.mxu0 0.0
    %1101 = vmatpush1.msra.mxu0 0.0
    %1102 = vmatprep.subr.mxu0 0.0
    %1103 = vmatpush1.msra.mxu0 0.0
    %1104 = vmatprep.subr.mxu0 0.0
    %1105 = vmatpush1.msra.mxu0 0.0
    %1106 = vmatprep.mubr.f32.mxu0 0.0
    %1107 = vmatmul.mubr.f32.gmra.mrb[0].mxu0 %v947
    %v1108 = vpop.f32.mrb[0].mxu0
    %v1109 = vadd.f32 0.0, %v1108
    %v1110 = vpop.f32.mrb[0].mxu0
    %v1111 = vadd.f32 0.0, %v1110
    %1112 = vmatprep.mubr.f32.mxu0 0.0
    %1113 = vmatmul.mubr.f32.gmra.mrb[0].mxu0 %v950
    %v1114 = vpop.f32.mrb[0].mxu0
    %v1115 = vadd.f32 0.0, %v1114
    %v1116 = vpop.f32.mrb[0].mxu0
    %v1117 = vadd.f32 0.0, %v1116
    %1118 = vmatprep.mubr.f32.mxu0 0.0
    %1119 = vmatmul.mubr.f32.gmra.mrb[0].mxu0 %v953
    %v1120 = vpop.f32.mrb[0].mxu0
    %v1121 = vadd.f32 0.0, %v1120
    %v1122 = vpop.f32.mrb[0].mxu0
    %v1123 = vadd.f32 0.0, %v1122
    %1124 = vmatprep.mubr.f32.mxu0 0.0
    %1125 = vmatmul.mubr.f32.gmra.mrb[0].mxu0 %v956
    %v1126 = vpop.f32.mrb[0].mxu0
    %v1127 = vadd.f32 0.0, %v1126
    %v1128 = vpop.f32.mrb[0].mxu0
    %v1129 = vadd.f32 0.0, %v1128
    %1130 = vmatprep.mubr.f32.mxu0 0.0
    %1131 = vmatmul.mubr.f32.gmra.mrb[0].mxu0 %v959
    %v1132 = vpop.f32.mrb[0].mxu0
    %v1133 = vadd.f32 0.0, %v1132
    %v1134 = vpop.f32.mrb[0].mxu0
    %v1135 = vadd.f32 0.0, %v1134
    %1136 = vmatprep.mubr.f32.mxu0 0.0
    %1137 = vmatmul.mubr.f32.gmra.mrb[0].mxu0 %v962
    %v1138 = vpop.f32.mrb[0].mxu0
    %v1139 = vadd.f32 0.0, %v1138
    %v1140 = vpop.f32.mrb[0].mxu0
    %v1141 = vadd.f32 0.0, %v1140
    %1142 = vmatprep.mubr.f32.mxu0 0.0
    %1143 = vmatmul.mubr.f32.gmra.mrb[0].mxu0 %v965
    %v1144 = vpop.f32.mrb[0].mxu0
    %v1145 = vadd.f32 0.0, %v1144
    %v1146 = vpop.f32.mrb[0].mxu0
    %v1147 = vadd.f32 0.0, %v1146
    %1148 = vmatprep.mubr.f32.mxu0 0.0
    %1149 = vmatmul.mubr.f32.gmra.mrb[0].mxu0 %v968
    %v1150 = vpop.f32.mrb[0].mxu0
    %v1151 = vadd.f32 0.0, %v1150
    %v1152 = vpop.f32.mrb[0].mxu0
    %v1153 = vadd.f32 0.0, %v1152
    %1154 = vmatprep.mubr.f32.mxu0 0.0
    %1155 = vmatmul.mubr.f32.gmra.mrb[0].mxu0 %v971
    %v1156 = vpop.f32.mrb[0].mxu0
    %v1157 = vadd.f32 0.0, %v1156
    %v1158 = vpop.f32.mrb[0].mxu0
    %v1159 = vadd.f32 0.0, %v1158
    %1160 = vmatprep.mubr.f32.mxu0 0.0
    %1161 = vmatmul.mubr.f32.gmra.mrb[0].mxu0 %v974
    %v1162 = vpop.f32.mrb[0].mxu0
    %v1163 = vadd.f32 0.0, %v1162
    %v1164 = vpop.f32.mrb[0].mxu0
    %v1165 = vadd.f32 0.0, %v1164
    %1166 = vmatprep.mubr.f32.mxu0 0.0
    %1167 = vmatmul.mubr.f32.gmra.mrb[0].mxu0 %v977
    %v1168 = vpop.f32.mrb[0].mxu0
    %v1169 = vadd.f32 0.0, %v1168
    %v1170 = vpop.f32.mrb[0].mxu0
    %v1171 = vadd.f32 0.0, %v1170
    %1172 = vmatprep.mubr.f32.mxu0 0.0
    %1173 = vmatmul.mubr.f32.gmra.mrb[0].mxu0 %v980
    %v1174 = vpop.f32.mrb[0].mxu0
    %v1175 = vadd.f32 0.0, %v1174
    %v1176 = vpop.f32.mrb[0].mxu0
    %v1177 = vadd.f32 0.0, %v1176
    %1178 = vmatprep.mubr.f32.mxu0 0.0
    %1179 = vmatmul.mubr.f32.gmra.mrb[0].mxu0 %v983
    %v1180 = vpop.f32.mrb[0].mxu0
    %v1181 = vadd.f32 0.0, %v1180
    %v1182 = vpop.f32.mrb[0].mxu0
    %v1183 = vadd.f32 0.0, %v1182
    %1184 = vmatprep.mubr.f32.mxu0 0.0
    %1185 = vmatmul.mubr.f32.gmra.mrb[0].mxu0 %v986
    %v1186 = vpop.f32.mrb[0].mxu0
    %v1187 = vadd.f32 0.0, %v1186
    %v1188 = vpop.f32.mrb[0].mxu0
    %v1189 = vadd.f32 0.0, %v1188
    %1190 = vmatprep.mubr.f32.mxu0 0.0
    %1191 = vmatmul.mubr.f32.gmra.mrb[0].mxu0 %v989
    %v1192 = vpop.f32.mrb[0].mxu0
    %v1193 = vadd.f32 0.0, %v1192
    %v1194 = vpop.f32.mrb[0].mxu0
    %v1195 = vadd.f32 0.0, %v1194
    %1196 = vmatprep.mubr.f32.mxu0 0.0
    %1197 = vmatmul.mubr.f32.gmra.mrb[0].mxu0 %v992
    %v1198 = vpop.f32.mrb[0].mxu0
    %v1199 = vadd.f32 0.0, %v1198
    %v1200 = vpop.f32.mrb[0].mxu0
    %v1201 = vadd.f32 0.0, %v1200
    %1202 = vmatprep.mubr.f32.mxu0 0.0
    %1203 = vmatmul.mubr.f32.gmra.mrb[0].mxu0 %v995
    %v1204 = vpop.f32.mrb[0].mxu0
    %v1205 = vadd.f32 0.0, %v1204
    %v1206 = vpop.f32.mrb[0].mxu0
    %v1207 = vadd.f32 0.0, %v1206
    %1208 = vmatprep.mubr.f32.mxu0 0.0
    %1209 = vmatmul.mubr.f32.gmra.mrb[0].mxu0 %v998
    %v1210 = vpop.f32.mrb[0].mxu0
    %v1211 = vadd.f32 0.0, %v1210
    %v1212 = vpop.f32.mrb[0].mxu0
    %v1213 = vadd.f32 0.0, %v1212
    %1214 = vmatprep.mubr.f32.mxu0 0.0
    %1215 = vmatmul.mubr.f32.gmra.mrb[0].mxu0 %v1001
    %v1216 = vpop.f32.mrb[0].mxu0
    %v1217 = vadd.f32 0.0, %v1216
    %v1218 = vpop.f32.mrb[0].mxu0
    %v1219 = vadd.f32 0.0, %v1218
    %1220 = vmatprep.mubr.f32.mxu0 0.0
    %1221 = vmatmul.mubr.f32.gmra.mrb[0].mxu0 %v1004
    %v1222 = vpop.f32.mrb[0].mxu0
    %v1223 = vadd.f32 0.0, %v1222
    %v1224 = vpop.f32.mrb[0].mxu0
    %v1225 = vadd.f32 0.0, %v1224
    %1226 = vmatprep.mubr.f32.mxu0 0.0
    %1227 = vmatmul.mubr.f32.gmra.mrb[0].mxu0 %v1007
    %v1228 = vpop.f32.mrb[0].mxu0
    %v1229 = vadd.f32 0.0, %v1228
    %v1230 = vpop.f32.mrb[0].mxu0
    %v1231 = vadd.f32 0.0, %v1230
    %1232 = vmatprep.mubr.f32.mxu0 0.0
    %1233 = vmatmul.mubr.f32.gmra.mrb[0].mxu0 %v1010
    %v1234 = vpop.f32.mrb[0].mxu0
    %v1235 = vadd.f32 0.0, %v1234
    %v1236 = vpop.f32.mrb[0].mxu0
    %v1237 = vadd.f32 0.0, %v1236
    %1238 = vmatprep.mubr.f32.mxu0 0.0
    %1239 = vmatmul.mubr.f32.gmra.mrb[0].mxu0 %v1013
    %v1240 = vpop.f32.mrb[0].mxu0
    %v1241 = vadd.f32 0.0, %v1240
    %v1242 = vpop.f32.mrb[0].mxu0
    %v1243 = vadd.f32 0.0, %v1242
    %1244 = vmatprep.mubr.f32.mxu0 0.0
    %1245 = vmatmul.mubr.f32.gmra.mrb[0].mxu0 %v1016
    %v1246 = vpop.f32.mrb[0].mxu0
    %v1247 = vadd.f32 0.0, %v1246
    %v1248 = vpop.f32.mrb[0].mxu0
    %v1249 = vadd.f32 0.0, %v1248
    %1250 = vmatprep.mubr.f32.mxu0 0.0
    %1251 = vmatmul.mubr.f32.gmra.mrb[0].mxu0 %v1019
    %v1252 = vpop.f32.mrb[0].mxu0
    %v1253 = vadd.f32 0.0, %v1252
    %v1254 = vpop.f32.mrb[0].mxu0
    %v1255 = vadd.f32 0.0, %v1254
    %1256 = vmatprep.mubr.f32.mxu0 0.0
    %1257 = vmatmul.mubr.f32.gmra.mrb[0].mxu0 %v1022
    %v1258 = vpop.f32.mrb[0].mxu0
    %v1259 = vadd.f32 0.0, %v1258
    %v1260 = vpop.f32.mrb[0].mxu0
    %v1261 = vadd.f32 0.0, %v1260
    %1262 = vmatprep.mubr.f32.mxu0 0.0
    %1263 = vmatmul.mubr.f32.gmra.mrb[0].mxu0 %v1025
    %v1264 = vpop.f32.mrb[0].mxu0
    %v1265 = vadd.f32 0.0, %v1264
    %v1266 = vpop.f32.mrb[0].mxu0
    %v1267 = vadd.f32 0.0, %v1266
    %1268 = vmatprep.mubr.f32.mxu0 0.0
    %1269 = vmatmul.mubr.f32.gmra.mrb[0].mxu0 %v1028
    %v1270 = vpop.f32.mrb[0].mxu0
    %v1271 = vadd.f32 0.0, %v1270
    %v1272 = vpop.f32.mrb[0].mxu0
    %v1273 = vadd.f32 0.0, %v1272
    %1274 = vmatprep.mubr.f32.mxu0 0.0
    %1275 = vmatmul.mubr.f32.gmra.mrb[0].mxu0 %v1031
    %v1276 = vpop.f32.mrb[0].mxu0
    %v1277 = vadd.f32 0.0, %v1276
    %v1278 = vpop.f32.mrb[0].mxu0
    %v1279 = vadd.f32 0.0, %v1278
    %1280 = vmatprep.mubr.f32.mxu0 0.0
    %1281 = vmatmul.mubr.f32.gmra.mrb[0].mxu0 %v1034
    %v1282 = vpop.f32.mrb[0].mxu0
    %v1283 = vadd.f32 0.0, %v1282
    %v1284 = vpop.f32.mrb[0].mxu0
    %v1285 = vadd.f32 0.0, %v1284
    %1286 = vmatprep.mubr.f32.mxu0 0.0
    %1287 = vmatmul.mubr.f32.gmra.mrb[0].mxu0 %v1037
    %v1288 = vpop.f32.mrb[0].mxu0
    %v1289 = vadd.f32 0.0, %v1288
    %v1290 = vpop.f32.mrb[0].mxu0
    %v1291 = vadd.f32 0.0, %v1290
    %1292 = vmatprep.mubr.f32.mxu0 0.0
    %1293 = vmatmul.mubr.f32.gmra.mrb[0].mxu0 %v1040
    %v1294 = vpop.f32.mrb[0].mxu0
    %v1295 = vadd.f32 0.0, %v1294
    %v1296 = vpop.f32.mrb[0].mxu0
    %v1297 = vadd.f32 0.0, %v1296
    %1298 = vdwg.mxu0
    %v1299 = vadd.f32 %v699, %v1109
    %v1300 = vadd.f32 %v701, %v1111
    %v1301 = vadd.f32 %v705, %v1115
    %v1302 = vadd.f32 %v707, %v1117
    %v1303 = vadd.f32 %v711, %v1121
    %v1304 = vadd.f32 %v713, %v1123
    %v1305 = vadd.f32 %v717, %v1127
    %v1306 = vadd.f32 %v719, %v1129
    %v1307 = vadd.f32 %v723, %v1133
    %v1308 = vadd.f32 %v725, %v1135
    %v1309 = vadd.f32 %v729, %v1139
    %v1310 = vadd.f32 %v731, %v1141
    %v1311 = vadd.f32 %v735, %v1145
    %v1312 = vadd.f32 %v737, %v1147
    %v1313 = vadd.f32 %v741, %v1151
    %v1314 = vadd.f32 %v743, %v1153
    %v1315 = vadd.f32 %v747, %v1157
    %v1316 = vadd.f32 %v749, %v1159
    %v1317 = vadd.f32 %v753, %v1163
    %v1318 = vadd.f32 %v755, %v1165
    %v1319 = vadd.f32 %v759, %v1169
    %v1320 = vadd.f32 %v761, %v1171
    %v1321 = vadd.f32 %v765, %v1175
    %v1322 = vadd.f32 %v767, %v1177
    %v1323 = vadd.f32 %v771, %v1181
    %v1324 = vadd.f32 %v773, %v1183
    %v1325 = vadd.f32 %v777, %v1187
    %v1326 = vadd.f32 %v779, %v1189
    %v1327 = vadd.f32 %v783, %v1193
    %v1328 = vadd.f32 %v785, %v1195
    %v1329 = vadd.f32 %v789, %v1199
    %v1330 = vadd.f32 %v791, %v1201
    %v1331 = vadd.f32 %v795, %v1205
    %v1332 = vadd.f32 %v797, %v1207
    %v1333 = vadd.f32 %v801, %v1211
    %v1334 = vadd.f32 %v803, %v1213
    %v1335 = vadd.f32 %v807, %v1217
    %v1336 = vadd.f32 %v809, %v1219
    %v1337 = vadd.f32 %v813, %v1223
    %v1338 = vadd.f32 %v815, %v1225
    %v1339 = vadd.f32 %v819, %v1229
    %v1340 = vadd.f32 %v821, %v1231
    %v1341 = vadd.f32 %v825, %v1235
    %v1342 = vadd.f32 %v827, %v1237
    %v1343 = vadd.f32 %v831, %v1241
    %v1344 = vadd.f32 %v833, %v1243
    %v1345 = vadd.f32 %v837, %v1247
    %v1346 = vadd.f32 %v839, %v1249
    %v1347 = vadd.f32 %v843, %v1253
    %v1348 = vadd.f32 %v845, %v1255
    %v1349 = vadd.f32 %v849, %v1259
    %v1350 = vadd.f32 %v851, %v1261
    %v1351 = vadd.f32 %v855, %v1265
    %v1352 = vadd.f32 %v857, %v1267
    %v1353 = vadd.f32 %v861, %v1271
    %v1354 = vadd.f32 %v863, %v1273
    %v1355 = vadd.f32 %v867, %v1277
    %v1356 = vadd.f32 %v869, %v1279
    %v1357 = vadd.f32 %v873, %v1283
    %v1358 = vadd.f32 %v875, %v1285
    %v1359 = vadd.f32 %v879, %v1289
    %v1360 = vadd.f32 %v881, %v1291
    %v1361 = vadd.f32 %v885, %v1295
    %v1362 = vadd.f32 %v887, %v1297
    %v1363 = vld [vmem:[%s0 + $0x3] sm:$0xff]
    %v1364 = vld [vmem:[%s0 + $0xb] sm:$0xff]
    %v1365 = vld [vmem:[%s0 + $0x13] sm:$0xff]
    %v1366 = vld [vmem:[%s0 + $0x1b] sm:$0xff]
    %v1367 = vld [vmem:[%s0 + $0x23] sm:$0xff]
    %v1368 = vld [vmem:[%s0 + $0x2b] sm:$0xff]
    %v1369 = vld [vmem:[%s0 + $0x33] sm:$0xff]
    %v1370 = vld [vmem:[%s0 + $0x3b] sm:$0xff]
    %v1371 = vld [vmem:[%s0 + $0x43] sm:$0xff]
    %v1372 = vld [vmem:[%s0 + $0x4b] sm:$0xff]
    %v1373 = vld [vmem:[%s0 + $0x53] sm:$0xff]
    %v1374 = vld [vmem:[%s0 + $0x5b] sm:$0xff]
    %v1375 = vld [vmem:[%s0 + $0x63] sm:$0xff]
    %v1376 = vld [vmem:[%s0 + $0x6b] sm:$0xff]
    %v1377 = vld [vmem:[%s0 + $0x73] sm:$0xff]
    %v1378 = vld [vmem:[%s0 + $0x7b] sm:$0xff]
    %v1379 = vld [vmem:[%s0 + $0x83] sm:$0xff]
    %v1380 = vld [vmem:[%s0 + $0x8b] sm:$0xff]
    %v1381 = vld [vmem:[%s0 + $0x93] sm:$0xff]
    %v1382 = vld [vmem:[%s0 + $0x9b] sm:$0xff]
    %v1383 = vld [vmem:[%s0 + $0xa3] sm:$0xff]
    %v1384 = vld [vmem:[%s0 + $0xab] sm:$0xff]
    %v1385 = vld [vmem:[%s0 + $0xb3] sm:$0xff]
    %v1386 = vld [vmem:[%s0 + $0xbb] sm:$0xff]
    %v1387 = vld [vmem:[%s0 + $0xc3] sm:$0xff]
    %v1388 = vld [vmem:[%s0 + $0xcb] sm:$0xff]
    %v1389 = vld [vmem:[%s0 + $0xd3] sm:$0xff]
    %v1390 = vld [vmem:[%s0 + $0xdb] sm:$0xff]
    %v1391 = vld [vmem:[%s0 + $0xe3] sm:$0xff]
    %v1392 = vld [vmem:[%s0 + $0xeb] sm:$0xff]
    %v1393 = vld [vmem:[%s0 + $0xf3] sm:$0xff]
    %v1394 = vld [vmem:[%s0 + $0xfb] sm:$0xf]
    %s1395 = scalar_lea.vmem %s1, 576
    %v1396 = vld [vmem:[%s1395] sm:$0xff]
    %v1397 = vld [vmem:[%s1395 + $0x8] sm:$0xff]
    %v1398 = vld [vmem:[%s1395 + $0x10] sm:$0xff]
    %v1399 = vld [vmem:[%s1395 + $0x18] sm:$0xff]
    %v1400 = vld [vmem:[%s1395 + $0x20] sm:$0xff]
    %v1401 = vld [vmem:[%s1395 + $0x28] sm:$0xff]
    %v1402 = vld [vmem:[%s1395 + $0x30] sm:$0xff]
    %v1403 = vld [vmem:[%s1395 + $0x38] sm:$0xff]
    %v1404 = vld [vmem:[%s1395 + $0x40] sm:$0xff]
    %v1405 = vld [vmem:[%s1395 + $0x48] sm:$0xff]
    %v1406 = vld [vmem:[%s1395 + $0x50] sm:$0xff]
    %v1407 = vld [vmem:[%s1395 + $0x58] sm:$0xff]
    %v1408 = vld [vmem:[%s1395 + $0x60] sm:$0xff]
    %v1409 = vld [vmem:[%s1395 + $0x68] sm:$0xff]
    %v1410 = vld [vmem:[%s1395 + $0x70] sm:$0xff]
    %v1411 = vld [vmem:[%s1395 + $0x78] sm:$0xff]
    %v1412 = vld [vmem:[%s1395 + $0x80] sm:$0xff]
    %v1413 = vld [vmem:[%s1395 + $0x88] sm:$0xff]
    %v1414 = vld [vmem:[%s1395 + $0x90] sm:$0xff]
    %v1415 = vld [vmem:[%s1395 + $0x98] sm:$0xff]
    %v1416 = vld [vmem:[%s1395 + $0xa0] sm:$0xff]
    %v1417 = vld [vmem:[%s1395 + $0xa8] sm:$0xff]
    %v1418 = vld [vmem:[%s1395 + $0xb0] sm:$0xff]
    %v1419 = vld [vmem:[%s1395 + $0xb8] sm:$0xff]
    %v1421 = vsel %vm182, %v1363, 0
    %v1424 = vsel %vm182, %v1364, 0
    %v1427 = vsel %vm182, %v1365, 0
    %v1430 = vsel %vm182, %v1366, 0
    %v1433 = vsel %vm182, %v1367, 0
    %v1436 = vsel %vm182, %v1368, 0
    %v1439 = vsel %vm182, %v1369, 0
    %v1442 = vsel %vm182, %v1370, 0
    %v1445 = vsel %vm182, %v1371, 0
    %v1448 = vsel %vm182, %v1372, 0
    %v1451 = vsel %vm182, %v1373, 0
    %v1454 = vsel %vm182, %v1374, 0
    %v1457 = vsel %vm182, %v1375, 0
    %v1460 = vsel %vm182, %v1376, 0
    %v1463 = vsel %vm182, %v1377, 0
    %v1466 = vsel %vm182, %v1378, 0
    %v1469 = vsel %vm182, %v1379, 0
    %v1472 = vsel %vm182, %v1380, 0
    %v1475 = vsel %vm182, %v1381, 0
    %v1478 = vsel %vm182, %v1382, 0
    %v1481 = vsel %vm182, %v1383, 0
    %v1484 = vsel %vm182, %v1384, 0
    %v1487 = vsel %vm182, %v1385, 0
    %v1490 = vsel %vm182, %v1386, 0
    %v1493 = vsel %vm182, %v1387, 0
    %v1496 = vsel %vm182, %v1388, 0
    %v1499 = vsel %vm182, %v1389, 0
    %v1502 = vsel %vm182, %v1390, 0
    %v1505 = vsel %vm182, %v1391, 0
    %v1508 = vsel %vm182, %v1392, 0
    %v1511 = vsel %vm182, %v1393, 0
    %v1514 = vsel %vm182, %v1394, 0
    %1516 = vmatprep.subr.mxu0 %v1397
    %1517 = vmatpush1.msra.mxu0 %v1396
    %1518 = vmatprep.subr.mxu0 %v1399
    %1519 = vmatpush1.msra.mxu0 %v1398
    %1520 = vmatprep.subr.mxu0 %v1401
    %1521 = vmatpush1.msra.mxu0 %v1400
    %1522 = vmatprep.subr.mxu0 %v1403
    %1523 = vmatpush1.msra.mxu0 %v1402
    %1524 = vmatprep.subr.mxu0 %v1405
    %1525 = vmatpush1.msra.mxu0 %v1404
    %1526 = vmatprep.subr.mxu0 %v1407
    %1527 = vmatpush1.msra.mxu0 %v1406
    %1528 = vmatprep.subr.mxu0 %v1409
    %1529 = vmatpush1.msra.mxu0 %v1408
    %1530 = vmatprep.subr.mxu0 %v1411
    %1531 = vmatpush1.msra.mxu0 %v1410
    %1532 = vmatprep.subr.mxu0 %v1413
    %1533 = vmatpush1.msra.mxu0 %v1412
    %1534 = vmatprep.subr.mxu0 %v1415
    %1535 = vmatpush1.msra.mxu0 %v1414
    %1536 = vmatprep.subr.mxu0 %v1417
    %1537 = vmatpush1.msra.mxu0 %v1416
    %1538 = vmatprep.subr.mxu0 %v1419
    %1539 = vmatpush1.msra.mxu0 %v1418
    %1540 = vmatprep.subr.mxu0 0.0
    %1541 = vmatpush1.msra.mxu0 0.0
    %1542 = vmatprep.subr.mxu0 0.0
    %1543 = vmatpush1.msra.mxu0 0.0
    %1544 = vmatprep.subr.mxu0 0.0
    %1545 = vmatpush1.msra.mxu0 0.0
    %1546 = vmatprep.subr.mxu0 0.0
    %1547 = vmatpush1.msra.mxu0 0.0
    %1548 = vmatprep.subr.mxu0 0.0
    %1549 = vmatpush1.msra.mxu0 0.0
    %1550 = vmatprep.subr.mxu0 0.0
    %1551 = vmatpush1.msra.mxu0 0.0
    %1552 = vmatprep.subr.mxu0 0.0
    %1553 = vmatpush1.msra.mxu0 0.0
    %1554 = vmatprep.subr.mxu0 0.0
    %1555 = vmatpush1.msra.mxu0 0.0
    %1556 = vmatprep.subr.mxu0 0.0
    %1557 = vmatpush1.msra.mxu0 0.0
    %1558 = vmatprep.subr.mxu0 0.0
    %1559 = vmatpush1.msra.mxu0 0.0
    %1560 = vmatprep.subr.mxu0 0.0
    %1561 = vmatpush1.msra.mxu0 0.0
    %1562 = vmatprep.subr.mxu0 0.0
    %1563 = vmatpush1.msra.mxu0 0.0
    %1564 = vmatprep.subr.mxu0 0.0
    %1565 = vmatpush1.msra.mxu0 0.0
    %1566 = vmatprep.subr.mxu0 0.0
    %1567 = vmatpush1.msra.mxu0 0.0
    %1568 = vmatprep.subr.mxu0 0.0
    %1569 = vmatpush1.msra.mxu0 0.0
    %1570 = vmatprep.subr.mxu0 0.0
    %1571 = vmatpush1.msra.mxu0 0.0
    %1572 = vmatprep.subr.mxu0 0.0
    %1573 = vmatpush1.msra.mxu0 0.0
    %1574 = vmatprep.subr.mxu0 0.0
    %1575 = vmatpush1.msra.mxu0 0.0
    %1576 = vmatprep.subr.mxu0 0.0
    %1577 = vmatpush1.msra.mxu0 0.0
    %1578 = vmatprep.subr.mxu0 0.0
    %1579 = vmatpush1.msra.mxu0 0.0
    %1580 = vmatprep.mubr.f32.mxu0 0.0
    %1581 = vmatmul.mubr.f32.gmra.mrb[0].mxu0 %v1421
    %v1582 = vpop.f32.mrb[0].mxu0
    %v1583 = vadd.f32 0.0, %v1582
    %v1584 = vpop.f32.mrb[0].mxu0
    %v1585 = vadd.f32 0.0, %v1584
    %1586 = vmatprep.mubr.f32.mxu0 0.0
    %1587 = vmatmul.mubr.f32.gmra.mrb[0].mxu0 %v1424
    %v1588 = vpop.f32.mrb[0].mxu0
    %v1589 = vadd.f32 0.0, %v1588
    %v1590 = vpop.f32.mrb[0].mxu0
    %v1591 = vadd.f32 0.0, %v1590
    %1592 = vmatprep.mubr.f32.mxu0 0.0
    %1593 = vmatmul.mubr.f32.gmra.mrb[0].mxu0 %v1427
    %v1594 = vpop.f32.mrb[0].mxu0
    %v1595 = vadd.f32 0.0, %v1594
    %v1596 = vpop.f32.mrb[0].mxu0
    %v1597 = vadd.f32 0.0, %v1596
    %1598 = vmatprep.mubr.f32.mxu0 0.0
    %1599 = vmatmul.mubr.f32.gmra.mrb[0].mxu0 %v1430
    %v1600 = vpop.f32.mrb[0].mxu0
    %v1601 = vadd.f32 0.0, %v1600
    %v1602 = vpop.f32.mrb[0].mxu0
    %v1603 = vadd.f32 0.0, %v1602
    %1604 = vmatprep.mubr.f32.mxu0 0.0
    %1605 = vmatmul.mubr.f32.gmra.mrb[0].mxu0 %v1433
    %v1606 = vpop.f32.mrb[0].mxu0
    %v1607 = vadd.f32 0.0, %v1606
    %v1608 = vpop.f32.mrb[0].mxu0
    %v1609 = vadd.f32 0.0, %v1608
    %1610 = vmatprep.mubr.f32.mxu0 0.0
    %1611 = vmatmul.mubr.f32.gmra.mrb[0].mxu0 %v1436
    %v1612 = vpop.f32.mrb[0].mxu0
    %v1613 = vadd.f32 0.0, %v1612
    %v1614 = vpop.f32.mrb[0].mxu0
    %v1615 = vadd.f32 0.0, %v1614
    %1616 = vmatprep.mubr.f32.mxu0 0.0
    %1617 = vmatmul.mubr.f32.gmra.mrb[0].mxu0 %v1439
    %v1618 = vpop.f32.mrb[0].mxu0
    %v1619 = vadd.f32 0.0, %v1618
    %v1620 = vpop.f32.mrb[0].mxu0
    %v1621 = vadd.f32 0.0, %v1620
    %1622 = vmatprep.mubr.f32.mxu0 0.0
    %1623 = vmatmul.mubr.f32.gmra.mrb[0].mxu0 %v1442
    %v1624 = vpop.f32.mrb[0].mxu0
    %v1625 = vadd.f32 0.0, %v1624
    %v1626 = vpop.f32.mrb[0].mxu0
    %v1627 = vadd.f32 0.0, %v1626
    %1628 = vmatprep.mubr.f32.mxu0 0.0
    %1629 = vmatmul.mubr.f32.gmra.mrb[0].mxu0 %v1445
    %v1630 = vpop.f32.mrb[0].mxu0
    %v1631 = vadd.f32 0.0, %v1630
    %v1632 = vpop.f32.mrb[0].mxu0
    %v1633 = vadd.f32 0.0, %v1632
    %1634 = vmatprep.mubr.f32.mxu0 0.0
    %1635 = vmatmul.mubr.f32.gmra.mrb[0].mxu0 %v1448
    %v1636 = vpop.f32.mrb[0].mxu0
    %v1637 = vadd.f32 0.0, %v1636
    %v1638 = vpop.f32.mrb[0].mxu0
    %v1639 = vadd.f32 0.0, %v1638
    %1640 = vmatprep.mubr.f32.mxu0 0.0
    %1641 = vmatmul.mubr.f32.gmra.mrb[0].mxu0 %v1451
    %v1642 = vpop.f32.mrb[0].mxu0
    %v1643 = vadd.f32 0.0, %v1642
    %v1644 = vpop.f32.mrb[0].mxu0
    %v1645 = vadd.f32 0.0, %v1644
    %1646 = vmatprep.mubr.f32.mxu0 0.0
    %1647 = vmatmul.mubr.f32.gmra.mrb[0].mxu0 %v1454
    %v1648 = vpop.f32.mrb[0].mxu0
    %v1649 = vadd.f32 0.0, %v1648
    %v1650 = vpop.f32.mrb[0].mxu0
    %v1651 = vadd.f32 0.0, %v1650
    %1652 = vmatprep.mubr.f32.mxu0 0.0
    %1653 = vmatmul.mubr.f32.gmra.mrb[0].mxu0 %v1457
    %v1654 = vpop.f32.mrb[0].mxu0
    %v1655 = vadd.f32 0.0, %v1654
    %v1656 = vpop.f32.mrb[0].mxu0
    %v1657 = vadd.f32 0.0, %v1656
    %1658 = vmatprep.mubr.f32.mxu0 0.0
    %1659 = vmatmul.mubr.f32.gmra.mrb[0].mxu0 %v1460
    %v1660 = vpop.f32.mrb[0].mxu0
    %v1661 = vadd.f32 0.0, %v1660
    %v1662 = vpop.f32.mrb[0].mxu0
    %v1663 = vadd.f32 0.0, %v1662
    %1664 = vmatprep.mubr.f32.mxu0 0.0
    %1665 = vmatmul.mubr.f32.gmra.mrb[0].mxu0 %v1463
    %v1666 = vpop.f32.mrb[0].mxu0
    %v1667 = vadd.f32 0.0, %v1666
    %v1668 = vpop.f32.mrb[0].mxu0
    %v1669 = vadd.f32 0.0, %v1668
    %1670 = vmatprep.mubr.f32.mxu0 0.0
    %1671 = vmatmul.mubr.f32.gmra.mrb[0].mxu0 %v1466
    %v1672 = vpop.f32.mrb[0].mxu0
    %v1673 = vadd.f32 0.0, %v1672
    %v1674 = vpop.f32.mrb[0].mxu0
    %v1675 = vadd.f32 0.0, %v1674
    %1676 = vmatprep.mubr.f32.mxu0 0.0
    %1677 = vmatmul.mubr.f32.gmra.mrb[0].mxu0 %v1469
    %v1678 = vpop.f32.mrb[0].mxu0
    %v1679 = vadd.f32 0.0, %v1678
    %v1680 = vpop.f32.mrb[0].mxu0
    %v1681 = vadd.f32 0.0, %v1680
    %1682 = vmatprep.mubr.f32.mxu0 0.0
    %1683 = vmatmul.mubr.f32.gmra.mrb[0].mxu0 %v1472
    %v1684 = vpop.f32.mrb[0].mxu0
    %v1685 = vadd.f32 0.0, %v1684
    %v1686 = vpop.f32.mrb[0].mxu0
    %v1687 = vadd.f32 0.0, %v1686
    %1688 = vmatprep.mubr.f32.mxu0 0.0
    %1689 = vmatmul.mubr.f32.gmra.mrb[0].mxu0 %v1475
    %v1690 = vpop.f32.mrb[0].mxu0
    %v1691 = vadd.f32 0.0, %v1690
    %v1692 = vpop.f32.mrb[0].mxu0
    %v1693 = vadd.f32 0.0, %v1692
    %1694 = vmatprep.mubr.f32.mxu0 0.0
    %1695 = vmatmul.mubr.f32.gmra.mrb[0].mxu0 %v1478
    %v1696 = vpop.f32.mrb[0].mxu0
    %v1697 = vadd.f32 0.0, %v1696
    %v1698 = vpop.f32.mrb[0].mxu0
    %v1699 = vadd.f32 0.0, %v1698
    %1700 = vmatprep.mubr.f32.mxu0 0.0
    %1701 = vmatmul.mubr.f32.gmra.mrb[0].mxu0 %v1481
    %v1702 = vpop.f32.mrb[0].mxu0
    %v1703 = vadd.f32 0.0, %v1702
    %v1704 = vpop.f32.mrb[0].mxu0
    %v1705 = vadd.f32 0.0, %v1704
    %1706 = vmatprep.mubr.f32.mxu0 0.0
    %1707 = vmatmul.mubr.f32.gmra.mrb[0].mxu0 %v1484
    %v1708 = vpop.f32.mrb[0].mxu0
    %v1709 = vadd.f32 0.0, %v1708
    %v1710 = vpop.f32.mrb[0].mxu0
    %v1711 = vadd.f32 0.0, %v1710
    %1712 = vmatprep.mubr.f32.mxu0 0.0
    %1713 = vmatmul.mubr.f32.gmra.mrb[0].mxu0 %v1487
    %v1714 = vpop.f32.mrb[0].mxu0
    %v1715 = vadd.f32 0.0, %v1714
    %v1716 = vpop.f32.mrb[0].mxu0
    %v1717 = vadd.f32 0.0, %v1716
    %1718 = vmatprep.mubr.f32.mxu0 0.0
    %1719 = vmatmul.mubr.f32.gmra.mrb[0].mxu0 %v1490
    %v1720 = vpop.f32.mrb[0].mxu0
    %v1721 = vadd.f32 0.0, %v1720
    %v1722 = vpop.f32.mrb[0].mxu0
    %v1723 = vadd.f32 0.0, %v1722
    %1724 = vmatprep.mubr.f32.mxu0 0.0
    %1725 = vmatmul.mubr.f32.gmra.mrb[0].mxu0 %v1493
    %v1726 = vpop.f32.mrb[0].mxu0
    %v1727 = vadd.f32 0.0, %v1726
    %v1728 = vpop.f32.mrb[0].mxu0
    %v1729 = vadd.f32 0.0, %v1728
    %1730 = vmatprep.mubr.f32.mxu0 0.0
    %1731 = vmatmul.mubr.f32.gmra.mrb[0].mxu0 %v1496
    %v1732 = vpop.f32.mrb[0].mxu0
    %v1733 = vadd.f32 0.0, %v1732
    %v1734 = vpop.f32.mrb[0].mxu0
    %v1735 = vadd.f32 0.0, %v1734
    %1736 = vmatprep.mubr.f32.mxu0 0.0
    %1737 = vmatmul.mubr.f32.gmra.mrb[0].mxu0 %v1499
    %v1738 = vpop.f32.mrb[0].mxu0
    %v1739 = vadd.f32 0.0, %v1738
    %v1740 = vpop.f32.mrb[0].mxu0
    %v1741 = vadd.f32 0.0, %v1740
    %1742 = vmatprep.mubr.f32.mxu0 0.0
    %1743 = vmatmul.mubr.f32.gmra.mrb[0].mxu0 %v1502
    %v1744 = vpop.f32.mrb[0].mxu0
    %v1745 = vadd.f32 0.0, %v1744
    %v1746 = vpop.f32.mrb[0].mxu0
    %v1747 = vadd.f32 0.0, %v1746
    %1748 = vmatprep.mubr.f32.mxu0 0.0
    %1749 = vmatmul.mubr.f32.gmra.mrb[0].mxu0 %v1505
    %v1750 = vpop.f32.mrb[0].mxu0
    %v1751 = vadd.f32 0.0, %v1750
    %v1752 = vpop.f32.mrb[0].mxu0
    %v1753 = vadd.f32 0.0, %v1752
    %1754 = vmatprep.mubr.f32.mxu0 0.0
    %1755 = vmatmul.mubr.f32.gmra.mrb[0].mxu0 %v1508
    %v1756 = vpop.f32.mrb[0].mxu0
    %v1757 = vadd.f32 0.0, %v1756
    %v1758 = vpop.f32.mrb[0].mxu0
    %v1759 = vadd.f32 0.0, %v1758
    %1760 = vmatprep.mubr.f32.mxu0 0.0
    %1761 = vmatmul.mubr.f32.gmra.mrb[0].mxu0 %v1511
    %v1762 = vpop.f32.mrb[0].mxu0
    %v1763 = vadd.f32 0.0, %v1762
    %v1764 = vpop.f32.mrb[0].mxu0
    %v1765 = vadd.f32 0.0, %v1764
    %1766 = vmatprep.mubr.f32.mxu0 0.0
    %1767 = vmatmul.mubr.f32.gmra.mrb[0].mxu0 %v1514
    %v1768 = vpop.f32.mrb[0].mxu0
    %v1769 = vadd.f32 0.0, %v1768
    %v1770 = vpop.f32.mrb[0].mxu0
    %v1771 = vadd.f32 0.0, %v1770
    %1772 = vdwg.mxu0
    %v1773 = vadd.f32 %v1299, %v1583
    %v1774 = vadd.f32 %v1300, %v1585
    %v1775 = vadd.f32 %v1301, %v1589
    %v1776 = vadd.f32 %v1302, %v1591
    %v1777 = vadd.f32 %v1303, %v1595
    %v1778 = vadd.f32 %v1304, %v1597
    %v1779 = vadd.f32 %v1305, %v1601
    %v1780 = vadd.f32 %v1306, %v1603
    %v1781 = vadd.f32 %v1307, %v1607
    %v1782 = vadd.f32 %v1308, %v1609
    %v1783 = vadd.f32 %v1309, %v1613
    %v1784 = vadd.f32 %v1310, %v1615
    %v1785 = vadd.f32 %v1311, %v1619
    %v1786 = vadd.f32 %v1312, %v1621
    %v1787 = vadd.f32 %v1313, %v1625
    %v1788 = vadd.f32 %v1314, %v1627
    %v1789 = vadd.f32 %v1315, %v1631
    %v1790 = vadd.f32 %v1316, %v1633
    %v1791 = vadd.f32 %v1317, %v1637
    %v1792 = vadd.f32 %v1318, %v1639
    %v1793 = vadd.f32 %v1319, %v1643
    %v1794 = vadd.f32 %v1320, %v1645
    %v1795 = vadd.f32 %v1321, %v1649
    %v1796 = vadd.f32 %v1322, %v1651
    %v1797 = vadd.f32 %v1323, %v1655
    %v1798 = vadd.f32 %v1324, %v1657
    %v1799 = vadd.f32 %v1325, %v1661
    %v1800 = vadd.f32 %v1326, %v1663
    %v1801 = vadd.f32 %v1327, %v1667
    %v1802 = vadd.f32 %v1328, %v1669
    %v1803 = vadd.f32 %v1329, %v1673
    %v1804 = vadd.f32 %v1330, %v1675
    %v1805 = vadd.f32 %v1331, %v1679
    %v1806 = vadd.f32 %v1332, %v1681
    %v1807 = vadd.f32 %v1333, %v1685
    %v1808 = vadd.f32 %v1334, %v1687
    %v1809 = vadd.f32 %v1335, %v1691
    %v1810 = vadd.f32 %v1336, %v1693
    %v1811 = vadd.f32 %v1337, %v1697
    %v1812 = vadd.f32 %v1338, %v1699
    %v1813 = vadd.f32 %v1339, %v1703
    %v1814 = vadd.f32 %v1340, %v1705
    %v1815 = vadd.f32 %v1341, %v1709
    %v1816 = vadd.f32 %v1342, %v1711
    %v1817 = vadd.f32 %v1343, %v1715
    %v1818 = vadd.f32 %v1344, %v1717
    %v1819 = vadd.f32 %v1345, %v1721
    %v1820 = vadd.f32 %v1346, %v1723
    %v1821 = vadd.f32 %v1347, %v1727
    %v1822 = vadd.f32 %v1348, %v1729
    %v1823 = vadd.f32 %v1349, %v1733
    %v1824 = vadd.f32 %v1350, %v1735
    %v1825 = vadd.f32 %v1351, %v1739
    %v1826 = vadd.f32 %v1352, %v1741
    %v1827 = vadd.f32 %v1353, %v1745
    %v1828 = vadd.f32 %v1354, %v1747
    %v1829 = vadd.f32 %v1355, %v1751
    %v1830 = vadd.f32 %v1356, %v1753
    %v1831 = vadd.f32 %v1357, %v1757
    %v1832 = vadd.f32 %v1358, %v1759
    %v1833 = vadd.f32 %v1359, %v1763
    %v1834 = vadd.f32 %v1360, %v1765
    %v1835 = vadd.f32 %v1361, %v1769
    %v1836 = vadd.f32 %v1362, %v1771
    %v1837 = vld [vmem:[%s0 + $0x4] sm:$0xff]
    %v1838 = vld [vmem:[%s0 + $0xc] sm:$0xff]
    %v1839 = vld [vmem:[%s0 + $0x14] sm:$0xff]
    %v1840 = vld [vmem:[%s0 + $0x1c] sm:$0xff]
    %v1841 = vld [vmem:[%s0 + $0x24] sm:$0xff]
    %v1842 = vld [vmem:[%s0 + $0x2c] sm:$0xff]
    %v1843 = vld [vmem:[%s0 + $0x34] sm:$0xff]
    %v1844 = vld [vmem:[%s0 + $0x3c] sm:$0xff]
    %v1845 = vld [vmem:[%s0 + $0x44] sm:$0xff]
    %v1846 = vld [vmem:[%s0 + $0x4c] sm:$0xff]
    %v1847 = vld [vmem:[%s0 + $0x54] sm:$0xff]
    %v1848 = vld [vmem:[%s0 + $0x5c] sm:$0xff]
    %v1849 = vld [vmem:[%s0 + $0x64] sm:$0xff]
    %v1850 = vld [vmem:[%s0 + $0x6c] sm:$0xff]
    %v1851 = vld [vmem:[%s0 + $0x74] sm:$0xff]
    %v1852 = vld [vmem:[%s0 + $0x7c] sm:$0xff]
    %v1853 = vld [vmem:[%s0 + $0x84] sm:$0xff]
    %v1854 = vld [vmem:[%s0 + $0x8c] sm:$0xff]
    %v1855 = vld [vmem:[%s0 + $0x94] sm:$0xff]
    %v1856 = vld [vmem:[%s0 + $0x9c] sm:$0xff]
    %v1857 = vld [vmem:[%s0 + $0xa4] sm:$0xff]
    %v1858 = vld [vmem:[%s0 + $0xac] sm:$0xff]
    %v1859 = vld [vmem:[%s0 + $0xb4] sm:$0xff]
    %v1860 = vld [vmem:[%s0 + $0xbc] sm:$0xff]
    %v1861 = vld [vmem:[%s0 + $0xc4] sm:$0xff]
    %v1862 = vld [vmem:[%s0 + $0xcc] sm:$0xff]
    %v1863 = vld [vmem:[%s0 + $0xd4] sm:$0xff]
    %v1864 = vld [vmem:[%s0 + $0xdc] sm:$0xff]
    %v1865 = vld [vmem:[%s0 + $0xe4] sm:$0xff]
    %v1866 = vld [vmem:[%s0 + $0xec] sm:$0xff]
    %v1867 = vld [vmem:[%s0 + $0xf4] sm:$0xff]
    %v1868 = vld [vmem:[%s0 + $0xfc] sm:$0xf]
    %s1869 = scalar_lea.vmem %s1, 768
    %v1870 = vld [vmem:[%s1869] sm:$0xff]
    %v1871 = vld [vmem:[%s1869 + $0x8] sm:$0xff]
    %v1872 = vld [vmem:[%s1869 + $0x10] sm:$0xff]
    %v1873 = vld [vmem:[%s1869 + $0x18] sm:$0xff]
    %v1874 = vld [vmem:[%s1869 + $0x20] sm:$0xff]
    %v1875 = vld [vmem:[%s1869 + $0x28] sm:$0xff]
    %v1876 = vld [vmem:[%s1869 + $0x30] sm:$0xff]
    %v1877 = vld [vmem:[%s1869 + $0x38] sm:$0xff]
    %v1878 = vld [vmem:[%s1869 + $0x40] sm:$0xff]
    %v1879 = vld [vmem:[%s1869 + $0x48] sm:$0xff]
    %v1880 = vld [vmem:[%s1869 + $0x50] sm:$0xff]
    %v1881 = vld [vmem:[%s1869 + $0x58] sm:$0xff]
    %v1882 = vld [vmem:[%s1869 + $0x60] sm:$0xff]
    %v1883 = vld [vmem:[%s1869 + $0x68] sm:$0xff]
    %v1884 = vld [vmem:[%s1869 + $0x70] sm:$0xff]
    %v1885 = vld [vmem:[%s1869 + $0x78] sm:$0xff]
    %v1886 = vld [vmem:[%s1869 + $0x80] sm:$0xff]
    %v1887 = vld [vmem:[%s1869 + $0x88] sm:$0xff]
    %v1888 = vld [vmem:[%s1869 + $0x90] sm:$0xff]
    %v1889 = vld [vmem:[%s1869 + $0x98] sm:$0xff]
    %v1890 = vld [vmem:[%s1869 + $0xa0] sm:$0xff]
    %v1891 = vld [vmem:[%s1869 + $0xa8] sm:$0xff]
    %v1892 = vld [vmem:[%s1869 + $0xb0] sm:$0xff]
    %v1893 = vld [vmem:[%s1869 + $0xb8] sm:$0xff]
    %v1895 = vsel %vm182, %v1837, 0
    %v1898 = vsel %vm182, %v1838, 0
    %v1901 = vsel %vm182, %v1839, 0
    %v1904 = vsel %vm182, %v1840, 0
    %v1907 = vsel %vm182, %v1841, 0
    %v1910 = vsel %vm182, %v1842, 0
    %v1913 = vsel %vm182, %v1843, 0
    %v1916 = vsel %vm182, %v1844, 0
    %v1919 = vsel %vm182, %v1845, 0
    %v1922 = vsel %vm182, %v1846, 0
    %v1925 = vsel %vm182, %v1847, 0
    %v1928 = vsel %vm182, %v1848, 0
    %v1931 = vsel %vm182, %v1849, 0
    %v1934 = vsel %vm182, %v1850, 0
    %v1937 = vsel %vm182, %v1851, 0
    %v1940 = vsel %vm182, %v1852, 0
    %v1943 = vsel %vm182, %v1853, 0
    %v1946 = vsel %vm182, %v1854, 0
    %v1949 = vsel %vm182, %v1855, 0
    %v1952 = vsel %vm182, %v1856, 0
    %v1955 = vsel %vm182, %v1857, 0
    %v1958 = vsel %vm182, %v1858, 0
    %v1961 = vsel %vm182, %v1859, 0
    %v1964 = vsel %vm182, %v1860, 0
    %v1967 = vsel %vm182, %v1861, 0
    %v1970 = vsel %vm182, %v1862, 0
    %v1973 = vsel %vm182, %v1863, 0
    %v1976 = vsel %vm182, %v1864, 0
    %v1979 = vsel %vm182, %v1865, 0
    %v1982 = vsel %vm182, %v1866, 0
    %v1985 = vsel %vm182, %v1867, 0
    %v1988 = vsel %vm182, %v1868, 0
    %1990 = vmatprep.subr.mxu0 %v1871
    %1991 = vmatpush1.msra.mxu0 %v1870
    %1992 = vmatprep.subr.mxu0 %v1873
    %1993 = vmatpush1.msra.mxu0 %v1872
    %1994 = vmatprep.subr.mxu0 %v1875
    %1995 = vmatpush1.msra.mxu0 %v1874
    %1996 = vmatprep.subr.mxu0 %v1877
    %1997 = vmatpush1.msra.mxu0 %v1876
    %1998 = vmatprep.subr.mxu0 %v1879
    %1999 = vmatpush1.msra.mxu0 %v1878
    %2000 = vmatprep.subr.mxu0 %v1881
    %2001 = vmatpush1.msra.mxu0 %v1880
    %2002 = vmatprep.subr.mxu0 %v1883
    %2003 = vmatpush1.msra.mxu0 %v1882
    %2004 = vmatprep.subr.mxu0 %v1885
    %2005 = vmatpush1.msra.mxu0 %v1884
    %2006 = vmatprep.subr.mxu0 %v1887
    %2007 = vmatpush1.msra.mxu0 %v1886
    %2008 = vmatprep.subr.mxu0 %v1889
    %2009 = vmatpush1.msra.mxu0 %v1888
    %2010 = vmatprep.subr.mxu0 %v1891
    %2011 = vmatpush1.msra.mxu0 %v1890
    %2012 = vmatprep.subr.mxu0 %v1893
    %2013 = vmatpush1.msra.mxu0 %v1892
    %2014 = vmatprep.subr.mxu0 0.0
    %2015 = vmatpush1.msra.mxu0 0.0
    %2016 = vmatprep.subr.mxu0 0.0
    %2017 = vmatpush1.msra.mxu0 0.0
    %2018 = vmatprep.subr.mxu0 0.0
    %2019 = vmatpush1.msra.mxu0 0.0
    %2020 = vmatprep.subr.mxu0 0.0
    %2021 = vmatpush1.msra.mxu0 0.0
    %2022 = vmatprep.subr.mxu0 0.0
    %2023 = vmatpush1.msra.mxu0 0.0
    %2024 = vmatprep.subr.mxu0 0.0
    %2025 = vmatpush1.msra.mxu0 0.0
    %2026 = vmatprep.subr.mxu0 0.0
    %2027 = vmatpush1.msra.mxu0 0.0
    %2028 = vmatprep.subr.mxu0 0.0
    %2029 = vmatpush1.msra.mxu0 0.0
    %2030 = vmatprep.subr.mxu0 0.0
    %2031 = vmatpush1.msra.mxu0 0.0
    %2032 = vmatprep.subr.mxu0 0.0
    %2033 = vmatpush1.msra.mxu0 0.0
    %2034 = vmatprep.subr.mxu0 0.0
    %2035 = vmatpush1.msra.mxu0 0.0
    %2036 = vmatprep.subr.mxu0 0.0
    %2037 = vmatpush1.msra.mxu0 0.0
    %2038 = vmatprep.subr.mxu0 0.0
    %2039 = vmatpush1.msra.mxu0 0.0
    %2040 = vmatprep.subr.mxu0 0.0
    %2041 = vmatpush1.msra.mxu0 0.0
    %2042 = vmatprep.subr.mxu0 0.0
    %2043 = vmatpush1.msra.mxu0 0.0
    %2044 = vmatprep.subr.mxu0 0.0
    %2045 = vmatpush1.msra.mxu0 0.0
    %2046 = vmatprep.subr.mxu0 0.0
    %2047 = vmatpush1.msra.mxu0 0.0
    %2048 = vmatprep.subr.mxu0 0.0
    %2049 = vmatpush1.msra.mxu0 0.0
    %2050 = vmatprep.subr.mxu0 0.0
    %2051 = vmatpush1.msra.mxu0 0.0
    %2052 = vmatprep.subr.mxu0 0.0
    %2053 = vmatpush1.msra.mxu0 0.0
    %2054 = vmatprep.mubr.f32.mxu0 0.0
    %2055 = vmatmul.mubr.f32.gmra.mrb[0].mxu0 %v1895
    %v2056 = vpop.f32.mrb[0].mxu0
    %v2057 = vadd.f32 0.0, %v2056
    %v2058 = vpop.f32.mrb[0].mxu0
    %v2059 = vadd.f32 0.0, %v2058
    %2060 = vmatprep.mubr.f32.mxu0 0.0
    %2061 = vmatmul.mubr.f32.gmra.mrb[0].mxu0 %v1898
    %v2062 = vpop.f32.mrb[0].mxu0
    %v2063 = vadd.f32 0.0, %v2062
    %v2064 = vpop.f32.mrb[0].mxu0
    %v2065 = vadd.f32 0.0, %v2064
    %2066 = vmatprep.mubr.f32.mxu0 0.0
    %2067 = vmatmul.mubr.f32.gmra.mrb[0].mxu0 %v1901
    %v2068 = vpop.f32.mrb[0].mxu0
    %v2069 = vadd.f32 0.0, %v2068
    %v2070 = vpop.f32.mrb[0].mxu0
    %v2071 = vadd.f32 0.0, %v2070
    %2072 = vmatprep.mubr.f32.mxu0 0.0
    %2073 = vmatmul.mubr.f32.gmra.mrb[0].mxu0 %v1904
    %v2074 = vpop.f32.mrb[0].mxu0
    %v2075 = vadd.f32 0.0, %v2074
    %v2076 = vpop.f32.mrb[0].mxu0
    %v2077 = vadd.f32 0.0, %v2076
    %2078 = vmatprep.mubr.f32.mxu0 0.0
    %2079 = vmatmul.mubr.f32.gmra.mrb[0].mxu0 %v1907
    %v2080 = vpop.f32.mrb[0].mxu0
    %v2081 = vadd.f32 0.0, %v2080
    %v2082 = vpop.f32.mrb[0].mxu0
    %v2083 = vadd.f32 0.0, %v2082
    %2084 = vmatprep.mubr.f32.mxu0 0.0
    %2085 = vmatmul.mubr.f32.gmra.mrb[0].mxu0 %v1910
    %v2086 = vpop.f32.mrb[0].mxu0
    %v2087 = vadd.f32 0.0, %v2086
    %v2088 = vpop.f32.mrb[0].mxu0
    %v2089 = vadd.f32 0.0, %v2088
    %2090 = vmatprep.mubr.f32.mxu0 0.0
    %2091 = vmatmul.mubr.f32.gmra.mrb[0].mxu0 %v1913
    %v2092 = vpop.f32.mrb[0].mxu0
    %v2093 = vadd.f32 0.0, %v2092
    %v2094 = vpop.f32.mrb[0].mxu0
    %v2095 = vadd.f32 0.0, %v2094
    %2096 = vmatprep.mubr.f32.mxu0 0.0
    %2097 = vmatmul.mubr.f32.gmra.mrb[0].mxu0 %v1916
    %v2098 = vpop.f32.mrb[0].mxu0
    %v2099 = vadd.f32 0.0, %v2098
    %v2100 = vpop.f32.mrb[0].mxu0
    %v2101 = vadd.f32 0.0, %v2100
    %2102 = vmatprep.mubr.f32.mxu0 0.0
    %2103 = vmatmul.mubr.f32.gmra.mrb[0].mxu0 %v1919
    %v2104 = vpop.f32.mrb[0].mxu0
    %v2105 = vadd.f32 0.0, %v2104
    %v2106 = vpop.f32.mrb[0].mxu0
    %v2107 = vadd.f32 0.0, %v2106
    %2108 = vmatprep.mubr.f32.mxu0 0.0
    %2109 = vmatmul.mubr.f32.gmra.mrb[0].mxu0 %v1922
    %v2110 = vpop.f32.mrb[0].mxu0
    %v2111 = vadd.f32 0.0, %v2110
    %v2112 = vpop.f32.mrb[0].mxu0
    %v2113 = vadd.f32 0.0, %v2112
    %2114 = vmatprep.mubr.f32.mxu0 0.0
    %2115 = vmatmul.mubr.f32.gmra.mrb[0].mxu0 %v1925
    %v2116 = vpop.f32.mrb[0].mxu0
    %v2117 = vadd.f32 0.0, %v2116
    %v2118 = vpop.f32.mrb[0].mxu0
    %v2119 = vadd.f32 0.0, %v2118
    %2120 = vmatprep.mubr.f32.mxu0 0.0
    %2121 = vmatmul.mubr.f32.gmra.mrb[0].mxu0 %v1928
    %v2122 = vpop.f32.mrb[0].mxu0
    %v2123 = vadd.f32 0.0, %v2122
    %v2124 = vpop.f32.mrb[0].mxu0
    %v2125 = vadd.f32 0.0, %v2124
    %2126 = vmatprep.mubr.f32.mxu0 0.0
    %2127 = vmatmul.mubr.f32.gmra.mrb[0].mxu0 %v1931
    %v2128 = vpop.f32.mrb[0].mxu0
    %v2129 = vadd.f32 0.0, %v2128
    %v2130 = vpop.f32.mrb[0].mxu0
    %v2131 = vadd.f32 0.0, %v2130
    %2132 = vmatprep.mubr.f32.mxu0 0.0
    %2133 = vmatmul.mubr.f32.gmra.mrb[0].mxu0 %v1934
    %v2134 = vpop.f32.mrb[0].mxu0
    %v2135 = vadd.f32 0.0, %v2134
    %v2136 = vpop.f32.mrb[0].mxu0
    %v2137 = vadd.f32 0.0, %v2136
    %2138 = vmatprep.mubr.f32.mxu0 0.0
    %2139 = vmatmul.mubr.f32.gmra.mrb[0].mxu0 %v1937
    %v2140 = vpop.f32.mrb[0].mxu0
    %v2141 = vadd.f32 0.0, %v2140
    %v2142 = vpop.f32.mrb[0].mxu0
    %v2143 = vadd.f32 0.0, %v2142
    %2144 = vmatprep.mubr.f32.mxu0 0.0
    %2145 = vmatmul.mubr.f32.gmra.mrb[0].mxu0 %v1940
    %v2146 = vpop.f32.mrb[0].mxu0
    %v2147 = vadd.f32 0.0, %v2146
    %v2148 = vpop.f32.mrb[0].mxu0
    %v2149 = vadd.f32 0.0, %v2148
    %2150 = vmatprep.mubr.f32.mxu0 0.0
    %2151 = vmatmul.mubr.f32.gmra.mrb[0].mxu0 %v1943
    %v2152 = vpop.f32.mrb[0].mxu0
    %v2153 = vadd.f32 0.0, %v2152
    %v2154 = vpop.f32.mrb[0].mxu0
    %v2155 = vadd.f32 0.0, %v2154
    %2156 = vmatprep.mubr.f32.mxu0 0.0
    %2157 = vmatmul.mubr.f32.gmra.mrb[0].mxu0 %v1946
    %v2158 = vpop.f32.mrb[0].mxu0
    %v2159 = vadd.f32 0.0, %v2158
    %v2160 = vpop.f32.mrb[0].mxu0
    %v2161 = vadd.f32 0.0, %v2160
    %2162 = vmatprep.mubr.f32.mxu0 0.0
    %2163 = vmatmul.mubr.f32.gmra.mrb[0].mxu0 %v1949
    %v2164 = vpop.f32.mrb[0].mxu0
    %v2165 = vadd.f32 0.0, %v2164
    %v2166 = vpop.f32.mrb[0].mxu0
    %v2167 = vadd.f32 0.0, %v2166
    %2168 = vmatprep.mubr.f32.mxu0 0.0
    %2169 = vmatmul.mubr.f32.gmra.mrb[0].mxu0 %v1952
    %v2170 = vpop.f32.mrb[0].mxu0
    %v2171 = vadd.f32 0.0, %v2170
    %v2172 = vpop.f32.mrb[0].mxu0
    %v2173 = vadd.f32 0.0, %v2172
    %2174 = vmatprep.mubr.f32.mxu0 0.0
    %2175 = vmatmul.mubr.f32.gmra.mrb[0].mxu0 %v1955
    %v2176 = vpop.f32.mrb[0].mxu0
    %v2177 = vadd.f32 0.0, %v2176
    %v2178 = vpop.f32.mrb[0].mxu0
    %v2179 = vadd.f32 0.0, %v2178
    %2180 = vmatprep.mubr.f32.mxu0 0.0
    %2181 = vmatmul.mubr.f32.gmra.mrb[0].mxu0 %v1958
    %v2182 = vpop.f32.mrb[0].mxu0
    %v2183 = vadd.f32 0.0, %v2182
    %v2184 = vpop.f32.mrb[0].mxu0
    %v2185 = vadd.f32 0.0, %v2184
    %2186 = vmatprep.mubr.f32.mxu0 0.0
    %2187 = vmatmul.mubr.f32.gmra.mrb[0].mxu0 %v1961
    %v2188 = vpop.f32.mrb[0].mxu0
    %v2189 = vadd.f32 0.0, %v2188
    %v2190 = vpop.f32.mrb[0].mxu0
    %v2191 = vadd.f32 0.0, %v2190
    %2192 = vmatprep.mubr.f32.mxu0 0.0
    %2193 = vmatmul.mubr.f32.gmra.mrb[0].mxu0 %v1964
    %v2194 = vpop.f32.mrb[0].mxu0
    %v2195 = vadd.f32 0.0, %v2194
    %v2196 = vpop.f32.mrb[0].mxu0
    %v2197 = vadd.f32 0.0, %v2196
    %2198 = vmatprep.mubr.f32.mxu0 0.0
    %2199 = vmatmul.mubr.f32.gmra.mrb[0].mxu0 %v1967
    %v2200 = vpop.f32.mrb[0].mxu0
    %v2201 = vadd.f32 0.0, %v2200
    %v2202 = vpop.f32.mrb[0].mxu0
    %v2203 = vadd.f32 0.0, %v2202
    %2204 = vmatprep.mubr.f32.mxu0 0.0
    %2205 = vmatmul.mubr.f32.gmra.mrb[0].mxu0 %v1970
    %v2206 = vpop.f32.mrb[0].mxu0
    %v2207 = vadd.f32 0.0, %v2206
    %v2208 = vpop.f32.mrb[0].mxu0
    %v2209 = vadd.f32 0.0, %v2208
    %2210 = vmatprep.mubr.f32.mxu0 0.0
    %2211 = vmatmul.mubr.f32.gmra.mrb[0].mxu0 %v1973
    %v2212 = vpop.f32.mrb[0].mxu0
    %v2213 = vadd.f32 0.0, %v2212
    %v2214 = vpop.f32.mrb[0].mxu0
    %v2215 = vadd.f32 0.0, %v2214
    %2216 = vmatprep.mubr.f32.mxu0 0.0
    %2217 = vmatmul.mubr.f32.gmra.mrb[0].mxu0 %v1976
    %v2218 = vpop.f32.mrb[0].mxu0
    %v2219 = vadd.f32 0.0, %v2218
    %v2220 = vpop.f32.mrb[0].mxu0
    %v2221 = vadd.f32 0.0, %v2220
    %2222 = vmatprep.mubr.f32.mxu0 0.0
    %2223 = vmatmul.mubr.f32.gmra.mrb[0].mxu0 %v1979
    %v2224 = vpop.f32.mrb[0].mxu0
    %v2225 = vadd.f32 0.0, %v2224
    %v2226 = vpop.f32.mrb[0].mxu0
    %v2227 = vadd.f32 0.0, %v2226
    %2228 = vmatprep.mubr.f32.mxu0 0.0
    %2229 = vmatmul.mubr.f32.gmra.mrb[0].mxu0 %v1982
    %v2230 = vpop.f32.mrb[0].mxu0
    %v2231 = vadd.f32 0.0, %v2230
    %v2232 = vpop.f32.mrb[0].mxu0
    %v2233 = vadd.f32 0.0, %v2232
    %2234 = vmatprep.mubr.f32.mxu0 0.0
    %2235 = vmatmul.mubr.f32.gmra.mrb[0].mxu0 %v1985
    %v2236 = vpop.f32.mrb[0].mxu0
    %v2237 = vadd.f32 0.0, %v2236
    %v2238 = vpop.f32.mrb[0].mxu0
    %v2239 = vadd.f32 0.0, %v2238
    %2240 = vmatprep.mubr.f32.mxu0 0.0
    %2241 = vmatmul.mubr.f32.gmra.mrb[0].mxu0 %v1988
    %v2242 = vpop.f32.mrb[0].mxu0
    %v2243 = vadd.f32 0.0, %v2242
    %v2244 = vpop.f32.mrb[0].mxu0
    %v2245 = vadd.f32 0.0, %v2244
    %2246 = vdwg.mxu0
    %v2247 = vadd.f32 %v1773, %v2057
    %v2248 = vadd.f32 %v1774, %v2059
    %v2249 = vadd.f32 %v1775, %v2063
    %v2250 = vadd.f32 %v1776, %v2065
    %v2251 = vadd.f32 %v1777, %v2069
    %v2252 = vadd.f32 %v1778, %v2071
    %v2253 = vadd.f32 %v1779, %v2075
    %v2254 = vadd.f32 %v1780, %v2077
    %v2255 = vadd.f32 %v1781, %v2081
    %v2256 = vadd.f32 %v1782, %v2083
    %v2257 = vadd.f32 %v1783, %v2087
    %v2258 = vadd.f32 %v1784, %v2089
    %v2259 = vadd.f32 %v1785, %v2093
    %v2260 = vadd.f32 %v1786, %v2095
    %v2261 = vadd.f32 %v1787, %v2099
    %v2262 = vadd.f32 %v1788, %v2101
    %v2263 = vadd.f32 %v1789, %v2105
    %v2264 = vadd.f32 %v1790, %v2107
    %v2265 = vadd.f32 %v1791, %v2111
    %v2266 = vadd.f32 %v1792, %v2113
    %v2267 = vadd.f32 %v1793, %v2117
    %v2268 = vadd.f32 %v1794, %v2119
    %v2269 = vadd.f32 %v1795, %v2123
    %v2270 = vadd.f32 %v1796, %v2125
    %v2271 = vadd.f32 %v1797, %v2129
    %v2272 = vadd.f32 %v1798, %v2131
    %v2273 = vadd.f32 %v1799, %v2135
    %v2274 = vadd.f32 %v1800, %v2137
    %v2275 = vadd.f32 %v1801, %v2141
    %v2276 = vadd.f32 %v1802, %v2143
    %v2277 = vadd.f32 %v1803, %v2147
    %v2278 = vadd.f32 %v1804, %v2149
    %v2279 = vadd.f32 %v1805, %v2153
    %v2280 = vadd.f32 %v1806, %v2155
    %v2281 = vadd.f32 %v1807, %v2159
    %v2282 = vadd.f32 %v1808, %v2161
    %v2283 = vadd.f32 %v1809, %v2165
    %v2284 = vadd.f32 %v1810, %v2167
    %v2285 = vadd.f32 %v1811, %v2171
    %v2286 = vadd.f32 %v1812, %v2173
    %v2287 = vadd.f32 %v1813, %v2177
    %v2288 = vadd.f32 %v1814, %v2179
    %v2289 = vadd.f32 %v1815, %v2183
    %v2290 = vadd.f32 %v1816, %v2185
    %v2291 = vadd.f32 %v1817, %v2189
    %v2292 = vadd.f32 %v1818, %v2191
    %v2293 = vadd.f32 %v1819, %v2195
    %v2294 = vadd.f32 %v1820, %v2197
    %v2295 = vadd.f32 %v1821, %v2201
    %v2296 = vadd.f32 %v1822, %v2203
    %v2297 = vadd.f32 %v1823, %v2207
    %v2298 = vadd.f32 %v1824, %v2209
    %v2299 = vadd.f32 %v1825, %v2213
    %v2300 = vadd.f32 %v1826, %v2215
    %v2301 = vadd.f32 %v1827, %v2219
    %v2302 = vadd.f32 %v1828, %v2221
    %v2303 = vadd.f32 %v1829, %v2225
    %v2304 = vadd.f32 %v1830, %v2227
    %v2305 = vadd.f32 %v1831, %v2231
    %v2306 = vadd.f32 %v1832, %v2233
    %v2307 = vadd.f32 %v1833, %v2237
    %v2308 = vadd.f32 %v1834, %v2239
    %v2309 = vadd.f32 %v1835, %v2243
    %v2310 = vadd.f32 %v1836, %v2245
    %v2311 = vld [vmem:[%s2] sm:$0x3]
    %v2313 = vlaneseq
    %v2314 = vshrl.u32 %v2313, 7
    %v2315 = vsub.s32 0, %v2314
    %v2316 = vrot.slane %v2311, %v2315
    %v2317 = vlaneseq
    %v2318 = vshrl.u32 %v2317, 7
    %v2319 = vsub.s32 1, %v2318
    %v2320 = vrot.slane %v2311, %v2319
    %v2323 = vadd.f32 %v2247, %v2316
    %v2324 = vadd.f32 %v2248, %v2320
    %v2325 = vadd.f32 %v2249, %v2316
    %v2326 = vadd.f32 %v2250, %v2320
    %v2327 = vadd.f32 %v2251, %v2316
    %v2328 = vadd.f32 %v2252, %v2320
    %v2329 = vadd.f32 %v2253, %v2316
    %v2330 = vadd.f32 %v2254, %v2320
    %v2331 = vadd.f32 %v2255, %v2316
    %v2332 = vadd.f32 %v2256, %v2320
    %v2333 = vadd.f32 %v2257, %v2316
    %v2334 = vadd.f32 %v2258, %v2320
    %v2335 = vadd.f32 %v2259, %v2316
    %v2336 = vadd.f32 %v2260, %v2320
    %v2337 = vadd.f32 %v2261, %v2316
    %v2338 = vadd.f32 %v2262, %v2320
    %v2339 = vadd.f32 %v2263, %v2316
    %v2340 = vadd.f32 %v2264, %v2320
    %v2341 = vadd.f32 %v2265, %v2316
    %v2342 = vadd.f32 %v2266, %v2320
    %v2343 = vadd.f32 %v2267, %v2316
    %v2344 = vadd.f32 %v2268, %v2320
    %v2345 = vadd.f32 %v2269, %v2316
    %v2346 = vadd.f32 %v2270, %v2320
    %v2347 = vadd.f32 %v2271, %v2316
    %v2348 = vadd.f32 %v2272, %v2320
    %v2349 = vadd.f32 %v2273, %v2316
    %v2350 = vadd.f32 %v2274, %v2320
    %v2351 = vadd.f32 %v2275, %v2316
    %v2352 = vadd.f32 %v2276, %v2320
    %v2353 = vadd.f32 %v2277, %v2316
    %v2354 = vadd.f32 %v2278, %v2320
    %v2355 = vadd.f32 %v2279, %v2316
    %v2356 = vadd.f32 %v2280, %v2320
    %v2357 = vadd.f32 %v2281, %v2316
    %v2358 = vadd.f32 %v2282, %v2320
    %v2359 = vadd.f32 %v2283, %v2316
    %v2360 = vadd.f32 %v2284, %v2320
    %v2361 = vadd.f32 %v2285, %v2316
    %v2362 = vadd.f32 %v2286, %v2320
    %v2363 = vadd.f32 %v2287, %v2316
    %v2364 = vadd.f32 %v2288, %v2320
    %v2365 = vadd.f32 %v2289, %v2316
    %v2366 = vadd.f32 %v2290, %v2320
    %v2367 = vadd.f32 %v2291, %v2316
    %v2368 = vadd.f32 %v2292, %v2320
    %v2369 = vadd.f32 %v2293, %v2316
    %v2370 = vadd.f32 %v2294, %v2320
    %v2371 = vadd.f32 %v2295, %v2316
    %v2372 = vadd.f32 %v2296, %v2320
    %v2373 = vadd.f32 %v2297, %v2316
    %v2374 = vadd.f32 %v2298, %v2320
    %v2375 = vadd.f32 %v2299, %v2316
    %v2376 = vadd.f32 %v2300, %v2320
    %v2377 = vadd.f32 %v2301, %v2316
    %v2378 = vadd.f32 %v2302, %v2320
    %v2379 = vadd.f32 %v2303, %v2316
    %v2380 = vadd.f32 %v2304, %v2320
    %v2381 = vadd.f32 %v2305, %v2316
    %v2382 = vadd.f32 %v2306, %v2320
    %v2383 = vadd.f32 %v2307, %v2316
    %v2384 = vadd.f32 %v2308, %v2320
    %v2385 = vadd.f32 %v2309, %v2316
    %v2386 = vadd.f32 %v2310, %v2320
    %v2387 = vtanh.pop %v2323
    %v2388 = vtanh.pop %v2324
    %v2389 = vtanh.pop %v2325
    %v2390 = vtanh.pop %v2326
    %v2391 = vtanh.pop %v2327
    %v2392 = vtanh.pop %v2328
    %v2393 = vtanh.pop %v2329
    %v2394 = vtanh.pop %v2330
    %v2395 = vtanh.pop %v2331
    %v2396 = vtanh.pop %v2332
    %v2397 = vtanh.pop %v2333
    %v2398 = vtanh.pop %v2334
    %v2399 = vtanh.pop %v2335
    %v2400 = vtanh.pop %v2336
    %v2401 = vtanh.pop %v2337
    %v2402 = vtanh.pop %v2338
    %v2403 = vtanh.pop %v2339
    %v2404 = vtanh.pop %v2340
    %v2405 = vtanh.pop %v2341
    %v2406 = vtanh.pop %v2342
    %v2407 = vtanh.pop %v2343
    %v2408 = vtanh.pop %v2344
    %v2409 = vtanh.pop %v2345
    %v2410 = vtanh.pop %v2346
    %v2411 = vtanh.pop %v2347
    %v2412 = vtanh.pop %v2348
    %v2413 = vtanh.pop %v2349
    %v2414 = vtanh.pop %v2350
    %v2415 = vtanh.pop %v2351
    %v2416 = vtanh.pop %v2352
    %v2417 = vtanh.pop %v2353
    %v2418 = vtanh.pop %v2354
    %v2419 = vtanh.pop %v2355
    %v2420 = vtanh.pop %v2356
    %v2421 = vtanh.pop %v2357
    %v2422 = vtanh.pop %v2358
    %v2423 = vtanh.pop %v2359
    %v2424 = vtanh.pop %v2360
    %v2425 = vtanh.pop %v2361
    %v2426 = vtanh.pop %v2362
    %v2427 = vtanh.pop %v2363
    %v2428 = vtanh.pop %v2364
    %v2429 = vtanh.pop %v2365
    %v2430 = vtanh.pop %v2366
    %v2431 = vtanh.pop %v2367
    %v2432 = vtanh.pop %v2368
    %v2433 = vtanh.pop %v2369
    %v2434 = vtanh.pop %v2370
    %v2435 = vtanh.pop %v2371
    %v2436 = vtanh.pop %v2372
    %v2437 = vtanh.pop %v2373
    %v2438 = vtanh.pop %v2374
    %v2439 = vtanh.pop %v2375
    %v2440 = vtanh.pop %v2376
    %v2441 = vtanh.pop %v2377
    %v2442 = vtanh.pop %v2378
    %v2443 = vtanh.pop %v2379
    %v2444 = vtanh.pop %v2380
    %v2445 = vtanh.pop %v2381
    %v2446 = vtanh.pop %v2382
    %v2447 = vtanh.pop %v2383
    %v2448 = vtanh.pop %v2384
    %v2449 = vtanh.pop %v2385
    %v2450 = vtanh.pop %v2386
    %v2451 = vld [vmem:[%s5] sm:$0xff]
    %v2452 = vld [vmem:[%s5 + $0x8] sm:$0xff]
    %v2453 = vld [vmem:[%s5 + $0x10] sm:$0xff]
    %v2454 = vld [vmem:[%s5 + $0x18] sm:$0xff]
    %v2455 = vld [vmem:[%s5 + $0x20] sm:$0xff]
    %v2456 = vld [vmem:[%s5 + $0x28] sm:$0xff]
    %v2457 = vld [vmem:[%s5 + $0x30] sm:$0xff]
    %v2458 = vld [vmem:[%s5 + $0x38] sm:$0xff]
    %v2459 = vld [vmem:[%s5 + $0x40] sm:$0xff]
    %v2460 = vld [vmem:[%s5 + $0x48] sm:$0xff]
    %v2461 = vld [vmem:[%s5 + $0x50] sm:$0xff]
    %v2462 = vld [vmem:[%s5 + $0x58] sm:$0xff]
    %v2463 = vld [vmem:[%s5 + $0x60] sm:$0xff]
    %v2464 = vld [vmem:[%s5 + $0x68] sm:$0xff]
    %v2465 = vld [vmem:[%s5 + $0x70] sm:$0xff]
    %v2466 = vld [vmem:[%s5 + $0x78] sm:$0xff]
    %v2467 = vld [vmem:[%s5 + $0x80] sm:$0xff]
    %v2468 = vld [vmem:[%s5 + $0x88] sm:$0xff]
    %v2469 = vld [vmem:[%s5 + $0x90] sm:$0xff]
    %v2470 = vld [vmem:[%s5 + $0x98] sm:$0xff]
    %v2471 = vld [vmem:[%s5 + $0xa0] sm:$0xff]
    %v2472 = vld [vmem:[%s5 + $0xa8] sm:$0xff]
    %v2473 = vld [vmem:[%s5 + $0xb0] sm:$0xff]
    %v2474 = vld [vmem:[%s5 + $0xb8] sm:$0xff]
    %v2475 = vld [vmem:[%s5 + $0xc0] sm:$0xff]
    %v2476 = vld [vmem:[%s5 + $0xc8] sm:$0xff]
    %v2477 = vld [vmem:[%s5 + $0xd0] sm:$0xff]
    %v2478 = vld [vmem:[%s5 + $0xd8] sm:$0xff]
    %vm2479 = vcmask 1014784
    %v2481 = vsel %vm2479, %v2452, 0
    %v2484 = vsel %vm2479, %v2454, 0
    %v2487 = vsel %vm2479, %v2456, 0
    %v2490 = vsel %vm2479, %v2458, 0
    %v2493 = vsel %vm2479, %v2460, 0
    %v2496 = vsel %vm2479, %v2462, 0
    %v2499 = vsel %vm2479, %v2464, 0
    %v2502 = vsel %vm2479, %v2466, 0
    %v2505 = vsel %vm2479, %v2468, 0
    %v2508 = vsel %vm2479, %v2470, 0
    %v2511 = vsel %vm2479, %v2472, 0
    %v2514 = vsel %vm2479, %v2474, 0
    %v2517 = vsel %vm2479, %v2476, 0
    %v2520 = vsel %vm2479, %v2478, 0
    %vm2522 = vcmask 1043456
    %v2524 = vsel %vm2522, %v2449, 0
    %v2527 = vsel %vm2522, %v2450, 0
    %2529 = vmatprep.subr.mxu0 %v2388
    %2530 = vmatpush1.msra.mxu0 %v2387
    %2531 = vmatprep.subr.mxu0 %v2390
    %2532 = vmatpush1.msra.mxu0 %v2389
    %2533 = vmatprep.subr.mxu0 %v2392
    %2534 = vmatpush1.msra.mxu0 %v2391
    %2535 = vmatprep.subr.mxu0 %v2394
    %2536 = vmatpush1.msra.mxu0 %v2393
    %2537 = vmatprep.subr.mxu0 %v2396
    %2538 = vmatpush1.msra.mxu0 %v2395
    %2539 = vmatprep.subr.mxu0 %v2398
    %2540 = vmatpush1.msra.mxu0 %v2397
    %2541 = vmatprep.subr.mxu0 %v2400
    %2542 = vmatpush1.msra.mxu0 %v2399
    %2543 = vmatprep.subr.mxu0 %v2402
    %2544 = vmatpush1.msra.mxu0 %v2401
    %2545 = vmatprep.subr.mxu0 %v2404
    %2546 = vmatpush1.msra.mxu0 %v2403
    %2547 = vmatprep.subr.mxu0 %v2406
    %2548 = vmatpush1.msra.mxu0 %v2405
    %2549 = vmatprep.subr.mxu0 %v2408
    %2550 = vmatpush1.msra.mxu0 %v2407
    %2551 = vmatprep.subr.mxu0 %v2410
    %2552 = vmatpush1.msra.mxu0 %v2409
    %2553 = vmatprep.subr.mxu0 %v2412
    %2554 = vmatpush1.msra.mxu0 %v2411
    %2555 = vmatprep.subr.mxu0 %v2414
    %2556 = vmatpush1.msra.mxu0 %v2413
    %2557 = vmatprep.subr.mxu0 %v2416
    %2558 = vmatpush1.msra.mxu0 %v2415
    %2559 = vmatprep.subr.mxu0 %v2418
    %2560 = vmatpush1.msra.mxu0 %v2417
    %2561 = vmatprep.subr.mxu0 %v2420
    %2562 = vmatpush1.msra.mxu0 %v2419
    %2563 = vmatprep.subr.mxu0 %v2422
    %2564 = vmatpush1.msra.mxu0 %v2421
    %2565 = vmatprep.subr.mxu0 %v2424
    %2566 = vmatpush1.msra.mxu0 %v2423
    %2567 = vmatprep.subr.mxu0 %v2426
    %2568 = vmatpush1.msra.mxu0 %v2425
    %2569 = vmatprep.subr.mxu0 %v2428
    %2570 = vmatpush1.msra.mxu0 %v2427
    %2571 = vmatprep.subr.mxu0 %v2430
    %2572 = vmatpush1.msra.mxu0 %v2429
    %2573 = vmatprep.subr.mxu0 %v2432
    %2574 = vmatpush1.msra.mxu0 %v2431
    %2575 = vmatprep.subr.mxu0 %v2434
    %2576 = vmatpush1.msra.mxu0 %v2433
    %2577 = vmatprep.subr.mxu0 %v2436
    %2578 = vmatpush1.msra.mxu0 %v2435
    %2579 = vmatprep.subr.mxu0 %v2438
    %2580 = vmatpush1.msra.mxu0 %v2437
    %2581 = vmatprep.subr.mxu0 %v2440
    %2582 = vmatpush1.msra.mxu0 %v2439
    %2583 = vmatprep.subr.mxu0 %v2442
    %2584 = vmatpush1.msra.mxu0 %v2441
    %2585 = vmatprep.subr.mxu0 %v2444
    %2586 = vmatpush1.msra.mxu0 %v2443
    %2587 = vmatprep.subr.mxu0 %v2446
    %2588 = vmatpush1.msra.mxu0 %v2445
    %2589 = vmatprep.subr.mxu0 %v2448
    %2590 = vmatpush1.msra.mxu0 %v2447
    %2591 = vmatprep.subr.mxu0 %v2527
    %2592 = vmatpush1.msra.mxu0 %v2524
    %2593 = vmatprep.mubr.f32.mxu0 %v2481
    %2594 = vmatmul.mubr.f32.gmra.mrb[0].mxu0 %v2451
    %v2595 = vpop.f32.mrb[0].mxu0
    %v2596 = vadd.f32 0.0, %v2595
    %v2597 = vpop.f32.mrb[0].mxu0
    %v2598 = vadd.f32 0.0, %v2597
    %2599 = vmatprep.mubr.f32.mxu0 %v2484
    %2600 = vmatmul.mubr.f32.gmra.mrb[0].mxu0 %v2453
    %v2601 = vpop.f32.mrb[0].mxu0
    %v2602 = vadd.f32 0.0, %v2601
    %v2603 = vpop.f32.mrb[0].mxu0
    %v2604 = vadd.f32 0.0, %v2603
    %2605 = vmatprep.mubr.f32.mxu0 %v2487
    %2606 = vmatmul.mubr.f32.gmra.mrb[0].mxu0 %v2455
    %v2607 = vpop.f32.mrb[0].mxu0
    %v2608 = vadd.f32 0.0, %v2607
    %v2609 = vpop.f32.mrb[0].mxu0
    %v2610 = vadd.f32 0.0, %v2609
    %2611 = vmatprep.mubr.f32.mxu0 %v2490
    %2612 = vmatmul.mubr.f32.gmra.mrb[0].mxu0 %v2457
    %v2613 = vpop.f32.mrb[0].mxu0
    %v2614 = vadd.f32 0.0, %v2613
    %v2615 = vpop.f32.mrb[0].mxu0
    %v2616 = vadd.f32 0.0, %v2615
    %2617 = vmatprep.mubr.f32.mxu0 %v2493
    %2618 = vmatmul.mubr.f32.gmra.mrb[0].mxu0 %v2459
    %v2619 = vpop.f32.mrb[0].mxu0
    %v2620 = vadd.f32 0.0, %v2619
    %v2621 = vpop.f32.mrb[0].mxu0
    %v2622 = vadd.f32 0.0, %v2621
    %2623 = vmatprep.mubr.f32.mxu0 %v2496
    %2624 = vmatmul.mubr.f32.gmra.mrb[0].mxu0 %v2461
    %v2625 = vpop.f32.mrb[0].mxu0
    %v2626 = vadd.f32 0.0, %v2625
    %v2627 = vpop.f32.mrb[0].mxu0
    %v2628 = vadd.f32 0.0, %v2627
    %2629 = vmatprep.mubr.f32.mxu0 %v2499
    %2630 = vmatmul.mubr.f32.gmra.mrb[0].mxu0 %v2463
    %v2631 = vpop.f32.mrb[0].mxu0
    %v2632 = vadd.f32 0.0, %v2631
    %v2633 = vpop.f32.mrb[0].mxu0
    %v2634 = vadd.f32 0.0, %v2633
    %2635 = vmatprep.mubr.f32.mxu0 %v2502
    %2636 = vmatmul.mubr.f32.gmra.mrb[0].mxu0 %v2465
    %v2637 = vpop.f32.mrb[0].mxu0
    %v2638 = vadd.f32 0.0, %v2637
    %v2639 = vpop.f32.mrb[0].mxu0
    %v2640 = vadd.f32 0.0, %v2639
    %2641 = vmatprep.mubr.f32.mxu0 %v2505
    %2642 = vmatmul.mubr.f32.gmra.mrb[0].mxu0 %v2467
    %v2643 = vpop.f32.mrb[0].mxu0
    %v2644 = vadd.f32 0.0, %v2643
    %v2645 = vpop.f32.mrb[0].mxu0
    %v2646 = vadd.f32 0.0, %v2645
    %2647 = vmatprep.mubr.f32.mxu0 %v2508
    %2648 = vmatmul.mubr.f32.gmra.mrb[0].mxu0 %v2469
    %v2649 = vpop.f32.mrb[0].mxu0
    %v2650 = vadd.f32 0.0, %v2649
    %v2651 = vpop.f32.mrb[0].mxu0
    %v2652 = vadd.f32 0.0, %v2651
    %2653 = vmatprep.mubr.f32.mxu0 %v2511
    %2654 = vmatmul.mubr.f32.gmra.mrb[0].mxu0 %v2471
    %v2655 = vpop.f32.mrb[0].mxu0
    %v2656 = vadd.f32 0.0, %v2655
    %v2657 = vpop.f32.mrb[0].mxu0
    %v2658 = vadd.f32 0.0, %v2657
    %2659 = vmatprep.mubr.f32.mxu0 %v2514
    %2660 = vmatmul.mubr.f32.gmra.mrb[0].mxu0 %v2473
    %v2661 = vpop.f32.mrb[0].mxu0
    %v2662 = vadd.f32 0.0, %v2661
    %v2663 = vpop.f32.mrb[0].mxu0
    %v2664 = vadd.f32 0.0, %v2663
    %2665 = vmatprep.mubr.f32.mxu0 %v2517
    %2666 = vmatmul.mubr.f32.gmra.mrb[0].mxu0 %v2475
    %v2667 = vpop.f32.mrb[0].mxu0
    %v2668 = vadd.f32 0.0, %v2667
    %v2669 = vpop.f32.mrb[0].mxu0
    %v2670 = vadd.f32 0.0, %v2669
    %2671 = vmatprep.mubr.f32.mxu0 %v2520
    %2672 = vmatmul.mubr.f32.gmra.mrb[0].mxu0 %v2477
    %v2673 = vpop.f32.mrb[0].mxu0
    %v2674 = vadd.f32 0.0, %v2673
    %v2675 = vpop.f32.mrb[0].mxu0
    %v2676 = vadd.f32 0.0, %v2675
    %2677 = vdwg.mxu0
    %v2678 = vld [vmem:[%s6] sm:$0xff]
    %v2679 = vld [vmem:[%s6 + $0x8] sm:$0xff]
    %v2680 = vld [vmem:[%s6 + $0x10] sm:$0xff]
    %v2681 = vld [vmem:[%s6 + $0x18] sm:$0xff]
    %v2682 = vld [vmem:[%s6 + $0x20] sm:$0xff]
    %v2683 = vld [vmem:[%s6 + $0x28] sm:$0xff]
    %v2684 = vld [vmem:[%s6 + $0x30] sm:$0xff]
    %v2685 = vld [vmem:[%s6 + $0x38] sm:$0xff]
    %v2686 = vld [vmem:[%s6 + $0x40] sm:$0xff]
    %v2687 = vld [vmem:[%s6 + $0x48] sm:$0xff]
    %v2688 = vld [vmem:[%s6 + $0x50] sm:$0xff]
    %v2689 = vld [vmem:[%s6 + $0x58] sm:$0xff]
    %v2690 = vld [vmem:[%s6 + $0x60] sm:$0xff]
    %v2691 = vld [vmem:[%s6 + $0x68] sm:$0xff]
    %v2692 = vld [vmem:[%s6 + $0x70] sm:$0xff]
    %v2693 = vld [vmem:[%s6 + $0x78] sm:$0xff]
    %v2694 = vld [vmem:[%s6 + $0x80] sm:$0xff]
    %v2695 = vld [vmem:[%s6 + $0x88] sm:$0xff]
    %v2696 = vld [vmem:[%s6 + $0x90] sm:$0xff]
    %v2697 = vld [vmem:[%s6 + $0x98] sm:$0xff]
    %v2698 = vld [vmem:[%s6 + $0xa0] sm:$0xff]
    %v2699 = vld [vmem:[%s6 + $0xa8] sm:$0xff]
    %v2700 = vld [vmem:[%s6 + $0xb0] sm:$0xff]
    %v2701 = vld [vmem:[%s6 + $0xb8] sm:$0xff]
    %v2702 = vld [vmem:[%s6 + $0xc0] sm:$0xff]
    %v2703 = vld [vmem:[%s6 + $0xc8] sm:$0xff]
    %v2704 = vld [vmem:[%s6 + $0xd0] sm:$0xff]
    %v2705 = vld [vmem:[%s6 + $0xd8] sm:$0xff]
    %v2707 = vsel %vm2479, %v2679, 0
    %v2710 = vsel %vm2479, %v2681, 0
    %v2713 = vsel %vm2479, %v2683, 0
    %v2716 = vsel %vm2479, %v2685, 0
    %v2719 = vsel %vm2479, %v2687, 0
    %v2722 = vsel %vm2479, %v2689, 0
    %v2725 = vsel %vm2479, %v2691, 0
    %v2728 = vsel %vm2479, %v2693, 0
    %v2731 = vsel %vm2479, %v2695, 0
    %v2734 = vsel %vm2479, %v2697, 0
    %v2737 = vsel %vm2479, %v2699, 0
    %v2740 = vsel %vm2479, %v2701, 0
    %v2743 = vsel %vm2479, %v2703, 0
    %v2746 = vsel %vm2479, %v2705, 0
    %2748 = vmatprep.subr.mxu0 %v2388
    %2749 = vmatpush1.msra.mxu0 %v2387
    %2750 = vmatprep.subr.mxu0 %v2390
    %2751 = vmatpush1.msra.mxu0 %v2389
    %2752 = vmatprep.subr.mxu0 %v2392
    %2753 = vmatpush1.msra.mxu0 %v2391
    %2754 = vmatprep.subr.mxu0 %v2394
    %2755 = vmatpush1.msra.mxu0 %v2393
    %2756 = vmatprep.subr.mxu0 %v2396
    %2757 = vmatpush1.msra.mxu0 %v2395
    %2758 = vmatprep.subr.mxu0 %v2398
    %2759 = vmatpush1.msra.mxu0 %v2397
    %2760 = vmatprep.subr.mxu0 %v2400
    %2761 = vmatpush1.msra.mxu0 %v2399
    %2762 = vmatprep.subr.mxu0 %v2402
    %2763 = vmatpush1.msra.mxu0 %v2401
    %2764 = vmatprep.subr.mxu0 %v2404
    %2765 = vmatpush1.msra.mxu0 %v2403
    %2766 = vmatprep.subr.mxu0 %v2406
    %2767 = vmatpush1.msra.mxu0 %v2405
    %2768 = vmatprep.subr.mxu0 %v2408
    %2769 = vmatpush1.msra.mxu0 %v2407
    %2770 = vmatprep.subr.mxu0 %v2410
    %2771 = vmatpush1.msra.mxu0 %v2409
    %2772 = vmatprep.subr.mxu0 %v2412
    %2773 = vmatpush1.msra.mxu0 %v2411
    %2774 = vmatprep.subr.mxu0 %v2414
    %2775 = vmatpush1.msra.mxu0 %v2413
    %2776 = vmatprep.subr.mxu0 %v2416
    %2777 = vmatpush1.msra.mxu0 %v2415
    %2778 = vmatprep.subr.mxu0 %v2418
    %2779 = vmatpush1.msra.mxu0 %v2417
    %2780 = vmatprep.subr.mxu0 %v2420
    %2781 = vmatpush1.msra.mxu0 %v2419
    %2782 = vmatprep.subr.mxu0 %v2422
    %2783 = vmatpush1.msra.mxu0 %v2421
    %2784 = vmatprep.subr.mxu0 %v2424
    %2785 = vmatpush1.msra.mxu0 %v2423
    %2786 = vmatprep.subr.mxu0 %v2426
    %2787 = vmatpush1.msra.mxu0 %v2425
    %2788 = vmatprep.subr.mxu0 %v2428
    %2789 = vmatpush1.msra.mxu0 %v2427
    %2790 = vmatprep.subr.mxu0 %v2430
    %2791 = vmatpush1.msra.mxu0 %v2429
    %2792 = vmatprep.subr.mxu0 %v2432
    %2793 = vmatpush1.msra.mxu0 %v2431
    %2794 = vmatprep.subr.mxu0 %v2434
    %2795 = vmatpush1.msra.mxu0 %v2433
    %2796 = vmatprep.subr.mxu0 %v2436
    %2797 = vmatpush1.msra.mxu0 %v2435
    %2798 = vmatprep.subr.mxu0 %v2438
    %2799 = vmatpush1.msra.mxu0 %v2437
    %2800 = vmatprep.subr.mxu0 %v2440
    %2801 = vmatpush1.msra.mxu0 %v2439
    %2802 = vmatprep.subr.mxu0 %v2442
    %2803 = vmatpush1.msra.mxu0 %v2441
    %2804 = vmatprep.subr.mxu0 %v2444
    %2805 = vmatpush1.msra.mxu0 %v2443
    %2806 = vmatprep.subr.mxu0 %v2446
    %2807 = vmatpush1.msra.mxu0 %v2445
    %2808 = vmatprep.subr.mxu0 %v2448
    %2809 = vmatpush1.msra.mxu0 %v2447
    %2810 = vmatprep.subr.mxu0 %v2527
    %2811 = vmatpush1.msra.mxu0 %v2524
    %2812 = vmatprep.mubr.f32.mxu0 %v2707
    %2813 = vmatmul.mubr.f32.gmra.mrb[0].mxu0 %v2678
    %v2814 = vpop.f32.mrb[0].mxu0
    %v2815 = vadd.f32 0.0, %v2814
    %v2816 = vpop.f32.mrb[0].mxu0
    %v2817 = vadd.f32 0.0, %v2816
    %2818 = vmatprep.mubr.f32.mxu0 %v2710
    %2819 = vmatmul.mubr.f32.gmra.mrb[0].mxu0 %v2680
    %v2820 = vpop.f32.mrb[0].mxu0
    %v2821 = vadd.f32 0.0, %v2820
    %v2822 = vpop.f32.mrb[0].mxu0
    %v2823 = vadd.f32 0.0, %v2822
    %2824 = vmatprep.mubr.f32.mxu0 %v2713
    %2825 = vmatmul.mubr.f32.gmra.mrb[0].mxu0 %v2682
    %v2826 = vpop.f32.mrb[0].mxu0
    %v2827 = vadd.f32 0.0, %v2826
    %v2828 = vpop.f32.mrb[0].mxu0
    %v2829 = vadd.f32 0.0, %v2828
    %2830 = vmatprep.mubr.f32.mxu0 %v2716
    %2831 = vmatmul.mubr.f32.gmra.mrb[0].mxu0 %v2684
    %v2832 = vpop.f32.mrb[0].mxu0
    %v2833 = vadd.f32 0.0, %v2832
    %v2834 = vpop.f32.mrb[0].mxu0
    %v2835 = vadd.f32 0.0, %v2834
    %2836 = vmatprep.mubr.f32.mxu0 %v2719
    %2837 = vmatmul.mubr.f32.gmra.mrb[0].mxu0 %v2686
    %v2838 = vpop.f32.mrb[0].mxu0
    %v2839 = vadd.f32 0.0, %v2838
    %v2840 = vpop.f32.mrb[0].mxu0
    %v2841 = vadd.f32 0.0, %v2840
    %2842 = vmatprep.mubr.f32.mxu0 %v2722
    %2843 = vmatmul.mubr.f32.gmra.mrb[0].mxu0 %v2688
    %v2844 = vpop.f32.mrb[0].mxu0
    %v2845 = vadd.f32 0.0, %v2844
    %v2846 = vpop.f32.mrb[0].mxu0
    %v2847 = vadd.f32 0.0, %v2846
    %2848 = vmatprep.mubr.f32.mxu0 %v2725
    %2849 = vmatmul.mubr.f32.gmra.mrb[0].mxu0 %v2690
    %v2850 = vpop.f32.mrb[0].mxu0
    %v2851 = vadd.f32 0.0, %v2850
    %v2852 = vpop.f32.mrb[0].mxu0
    %v2853 = vadd.f32 0.0, %v2852
    %2854 = vmatprep.mubr.f32.mxu0 %v2728
    %2855 = vmatmul.mubr.f32.gmra.mrb[0].mxu0 %v2692
    %v2856 = vpop.f32.mrb[0].mxu0
    %v2857 = vadd.f32 0.0, %v2856
    %v2858 = vpop.f32.mrb[0].mxu0
    %v2859 = vadd.f32 0.0, %v2858
    %2860 = vmatprep.mubr.f32.mxu0 %v2731
    %2861 = vmatmul.mubr.f32.gmra.mrb[0].mxu0 %v2694
    %v2862 = vpop.f32.mrb[0].mxu0
    %v2863 = vadd.f32 0.0, %v2862
    %v2864 = vpop.f32.mrb[0].mxu0
    %v2865 = vadd.f32 0.0, %v2864
    %2866 = vmatprep.mubr.f32.mxu0 %v2734
    %2867 = vmatmul.mubr.f32.gmra.mrb[0].mxu0 %v2696
    %v2868 = vpop.f32.mrb[0].mxu0
    %v2869 = vadd.f32 0.0, %v2868
    %v2870 = vpop.f32.mrb[0].mxu0
    %v2871 = vadd.f32 0.0, %v2870
    %2872 = vmatprep.mubr.f32.mxu0 %v2737
    %2873 = vmatmul.mubr.f32.gmra.mrb[0].mxu0 %v2698
    %v2874 = vpop.f32.mrb[0].mxu0
    %v2875 = vadd.f32 0.0, %v2874
    %v2876 = vpop.f32.mrb[0].mxu0
    %v2877 = vadd.f32 0.0, %v2876
    %2878 = vmatprep.mubr.f32.mxu0 %v2740
    %2879 = vmatmul.mubr.f32.gmra.mrb[0].mxu0 %v2700
    %v2880 = vpop.f32.mrb[0].mxu0
    %v2881 = vadd.f32 0.0, %v2880
    %v2882 = vpop.f32.mrb[0].mxu0
    %v2883 = vadd.f32 0.0, %v2882
    %2884 = vmatprep.mubr.f32.mxu0 %v2743
    %2885 = vmatmul.mubr.f32.gmra.mrb[0].mxu0 %v2702
    %v2886 = vpop.f32.mrb[0].mxu0
    %v2887 = vadd.f32 0.0, %v2886
    %v2888 = vpop.f32.mrb[0].mxu0
    %v2889 = vadd.f32 0.0, %v2888
    %2890 = vmatprep.mubr.f32.mxu0 %v2746
    %2891 = vmatmul.mubr.f32.gmra.mrb[0].mxu0 %v2704
    %v2892 = vpop.f32.mrb[0].mxu0
    %v2893 = vadd.f32 0.0, %v2892
    %v2894 = vpop.f32.mrb[0].mxu0
    %v2895 = vadd.f32 0.0, %v2894
    %2896 = vdwg.mxu0
    %v2897 = vmax.f32 %v2596, %v2815
    %v2898 = vmax.f32 %v2598, %v2817
    %v2899 = vmax.f32 %v2602, %v2821
    %v2900 = vmax.f32 %v2604, %v2823
    %v2901 = vmax.f32 %v2608, %v2827
    %v2902 = vmax.f32 %v2610, %v2829
    %v2903 = vmax.f32 %v2614, %v2833
    %v2904 = vmax.f32 %v2616, %v2835
    %v2905 = vmax.f32 %v2620, %v2839
    %v2906 = vmax.f32 %v2622, %v2841
    %v2907 = vmax.f32 %v2626, %v2845
    %v2908 = vmax.f32 %v2628, %v2847
    %v2909 = vmax.f32 %v2632, %v2851
    %v2910 = vmax.f32 %v2634, %v2853
    %v2911 = vmax.f32 %v2638, %v2857
    %v2912 = vmax.f32 %v2640, %v2859
    %v2913 = vmax.f32 %v2644, %v2863
    %v2914 = vmax.f32 %v2646, %v2865
    %v2915 = vmax.f32 %v2650, %v2869
    %v2916 = vmax.f32 %v2652, %v2871
    %v2917 = vmax.f32 %v2656, %v2875
    %v2918 = vmax.f32 %v2658, %v2877
    %v2919 = vmax.f32 %v2662, %v2881
    %v2920 = vmax.f32 %v2664, %v2883
    %v2921 = vmax.f32 %v2668, %v2887
    %v2922 = vmax.f32 %v2670, %v2889
    %v2923 = vmax.f32 %v2674, %v2893
    %v2924 = vmax.f32 %v2676, %v2895
    %v2925 = vld [vmem:[%s7] sm:$0xff]
    %v2926 = vld [vmem:[%s7 + $0x8] sm:$0xff]
    %v2927 = vld [vmem:[%s7 + $0x10] sm:$0xff]
    %v2928 = vld [vmem:[%s7 + $0x18] sm:$0xff]
    %v2929 = vld [vmem:[%s7 + $0x20] sm:$0xff]
    %v2930 = vld [vmem:[%s7 + $0x28] sm:$0xff]
    %v2931 = vld [vmem:[%s7 + $0x30] sm:$0xff]
    %v2932 = vld [vmem:[%s7 + $0x38] sm:$0xff]
    %v2933 = vld [vmem:[%s7 + $0x40] sm:$0xff]
    %v2934 = vld [vmem:[%s7 + $0x48] sm:$0xff]
    %v2935 = vld [vmem:[%s7 + $0x50] sm:$0xff]
    %v2936 = vld [vmem:[%s7 + $0x58] sm:$0xff]
    %v2937 = vld [vmem:[%s7 + $0x60] sm:$0xff]
    %v2938 = vld [vmem:[%s7 + $0x68] sm:$0xff]
    %v2939 = vld [vmem:[%s7 + $0x70] sm:$0xff]
    %v2940 = vld [vmem:[%s7 + $0x78] sm:$0xff]
    %v2941 = vld [vmem:[%s7 + $0x80] sm:$0xff]
    %v2942 = vld [vmem:[%s7 + $0x88] sm:$0xff]
    %v2943 = vld [vmem:[%s7 + $0x90] sm:$0xff]
    %v2944 = vld [vmem:[%s7 + $0x98] sm:$0xff]
    %v2945 = vld [vmem:[%s7 + $0xa0] sm:$0xff]
    %vm2946 = vcmask 326656
    %v2948 = vsel %vm2946, %v2898, 0
    %v2951 = vsel %vm2946, %v2900, 0
    %v2954 = vsel %vm2946, %v2902, 0
    %v2957 = vsel %vm2946, %v2904, 0
    %v2960 = vsel %vm2946, %v2906, 0
    %v2963 = vsel %vm2946, %v2908, 0
    %v2966 = vsel %vm2946, %v2910, 0
    %v2969 = vsel %vm2946, %v2912, 0
    %v2972 = vsel %vm2946, %v2914, 0
    %v2975 = vsel %vm2946, %v2916, 0
    %v2978 = vsel %vm2946, %v2918, 0
    %v2981 = vsel %vm2946, %v2920, 0
    %v2984 = vsel %vm2946, %v2922, 0
    %v2987 = vsel %vm2946, %v2924, 0
    %2989 = vmatprep.subr.mxu0 0.0
    %2990 = vmatpush1.msra.mxu0 %v2925
    %2991 = vmatprep.subr.mxu0 0.0
    %2992 = vmatpush1.msra.mxu0 %v2926
    %2993 = vmatprep.subr.mxu0 0.0
    %2994 = vmatpush1.msra.mxu0 %v2927
    %2995 = vmatprep.subr.mxu0 0.0
    %2996 = vmatpush1.msra.mxu0 %v2928
    %2997 = vmatprep.subr.mxu0 0.0
    %2998 = vmatpush1.msra.mxu0 %v2929
    %2999 = vmatprep.subr.mxu0 0.0
    %3000 = vmatpush1.msra.mxu0 %v2930
    %3001 = vmatprep.subr.mxu0 0.0
    %3002 = vmatpush1.msra.mxu0 %v2931
    %3003 = vmatprep.subr.mxu0 0.0
    %3004 = vmatpush1.msra.mxu0 %v2932
    %3005 = vmatprep.subr.mxu0 0.0
    %3006 = vmatpush1.msra.mxu0 %v2933
    %3007 = vmatprep.subr.mxu0 0.0
    %3008 = vmatpush1.msra.mxu0 %v2934
    %3009 = vmatprep.subr.mxu0 0.0
    %3010 = vmatpush1.msra.mxu0 %v2935
    %3011 = vmatprep.subr.mxu0 0.0
    %3012 = vmatpush1.msra.mxu0 %v2936
    %3013 = vmatprep.subr.mxu0 0.0
    %3014 = vmatpush1.msra.mxu0 %v2937
    %3015 = vmatprep.subr.mxu0 0.0
    %3016 = vmatpush1.msra.mxu0 %v2938
    %3017 = vmatprep.subr.mxu0 0.0
    %3018 = vmatpush1.msra.mxu0 %v2939
    %3019 = vmatprep.subr.mxu0 0.0
    %3020 = vmatpush1.msra.mxu0 %v2940
    %3021 = vmatprep.subr.mxu0 0.0
    %3022 = vmatpush1.msra.mxu0 %v2941
    %3023 = vmatprep.subr.mxu0 0.0
    %3024 = vmatpush1.msra.mxu0 %v2942
    %3025 = vmatprep.subr.mxu0 0.0
    %3026 = vmatpush1.msra.mxu0 %v2943
    %3027 = vmatprep.subr.mxu0 0.0
    %3028 = vmatpush1.msra.mxu0 %v2944
    %3029 = vmatprep.subr.mxu0 0.0
    %3030 = vmatpush1.msra.mxu0 %v2945
    %3031 = vmatprep.subr.mxu0 0.0
    %3032 = vmatpush1.msra.mxu0 0.0
    %3033 = vmatprep.subr.mxu0 0.0
    %3034 = vmatpush1.msra.mxu0 0.0
    %3035 = vmatprep.subr.mxu0 0.0
    %3036 = vmatpush1.msra.mxu0 0.0
    %3037 = vmatprep.subr.mxu0 0.0
    %3038 = vmatpush1.msra.mxu0 0.0
    %3039 = vmatprep.subr.mxu0 0.0
    %3040 = vmatpush1.msra.mxu0 0.0
    %3041 = vmatprep.subr.mxu0 0.0
    %3042 = vmatpush1.msra.mxu0 0.0
    %3043 = vmatprep.subr.mxu0 0.0
    %3044 = vmatpush1.msra.mxu0 0.0
    %3045 = vmatprep.subr.mxu0 0.0
    %3046 = vmatpush1.msra.mxu0 0.0
    %3047 = vmatprep.subr.mxu0 0.0
    %3048 = vmatpush1.msra.mxu0 0.0
    %3049 = vmatprep.subr.mxu0 0.0
    %3050 = vmatpush1.msra.mxu0 0.0
    %3051 = vmatprep.subr.mxu0 0.0
    %3052 = vmatpush1.msra.mxu0 0.0
    %3053 = vmatprep.mubr.f32.mxu0 %v2948
    %3054 = vmatmul.mubr.f32.gmra.mrb[0].mxu0 %v2897
    %v3055 = vpop.f32.mrb[0].mxu0
    %v3056 = vadd.f32 0.0, %v3055
    %v3057 = vpop.f32.mrb[0].mxu0
    %3058 = vmatprep.mubr.f32.mxu0 %v2951
    %3059 = vmatmul.mubr.f32.gmra.mrb[0].mxu0 %v2899
    %v3060 = vpop.f32.mrb[0].mxu0
    %v3061 = vadd.f32 0.0, %v3060
    %v3062 = vpop.f32.mrb[0].mxu0
    %3063 = vmatprep.mubr.f32.mxu0 %v2954
    %3064 = vmatmul.mubr.f32.gmra.mrb[0].mxu0 %v2901
    %v3065 = vpop.f32.mrb[0].mxu0
    %v3066 = vadd.f32 0.0, %v3065
    %v3067 = vpop.f32.mrb[0].mxu0
    %3068 = vmatprep.mubr.f32.mxu0 %v2957
    %3069 = vmatmul.mubr.f32.gmra.mrb[0].mxu0 %v2903
    %v3070 = vpop.f32.mrb[0].mxu0
    %v3071 = vadd.f32 0.0, %v3070
    %v3072 = vpop.f32.mrb[0].mxu0
    %3073 = vmatprep.mubr.f32.mxu0 %v2960
    %3074 = vmatmul.mubr.f32.gmra.mrb[0].mxu0 %v2905
    %v3075 = vpop.f32.mrb[0].mxu0
    %v3076 = vadd.f32 0.0, %v3075
    %v3077 = vpop.f32.mrb[0].mxu0
    %3078 = vmatprep.mubr.f32.mxu0 %v2963
    %3079 = vmatmul.mubr.f32.gmra.mrb[0].mxu0 %v2907
    %v3080 = vpop.f32.mrb[0].mxu0
    %v3081 = vadd.f32 0.0, %v3080
    %v3082 = vpop.f32.mrb[0].mxu0
    %3083 = vmatprep.mubr.f32.mxu0 %v2966
    %3084 = vmatmul.mubr.f32.gmra.mrb[0].mxu0 %v2909
    %v3085 = vpop.f32.mrb[0].mxu0
    %v3086 = vadd.f32 0.0, %v3085
    %v3087 = vpop.f32.mrb[0].mxu0
    %3088 = vmatprep.mubr.f32.mxu0 %v2969
    %3089 = vmatmul.mubr.f32.gmra.mrb[0].mxu0 %v2911
    %v3090 = vpop.f32.mrb[0].mxu0
    %v3091 = vadd.f32 0.0, %v3090
    %v3092 = vpop.f32.mrb[0].mxu0
    %3093 = vmatprep.mubr.f32.mxu0 %v2972
    %3094 = vmatmul.mubr.f32.gmra.mrb[0].mxu0 %v2913
    %v3095 = vpop.f32.mrb[0].mxu0
    %v3096 = vadd.f32 0.0, %v3095
    %v3097 = vpop.f32.mrb[0].mxu0
    %3098 = vmatprep.mubr.f32.mxu0 %v2975
    %3099 = vmatmul.mubr.f32.gmra.mrb[0].mxu0 %v2915
    %v3100 = vpop.f32.mrb[0].mxu0
    %v3101 = vadd.f32 0.0, %v3100
    %v3102 = vpop.f32.mrb[0].mxu0
    %3103 = vmatprep.mubr.f32.mxu0 %v2978
    %3104 = vmatmul.mubr.f32.gmra.mrb[0].mxu0 %v2917
    %v3105 = vpop.f32.mrb[0].mxu0
    %v3106 = vadd.f32 0.0, %v3105
    %v3107 = vpop.f32.mrb[0].mxu0
    %3108 = vmatprep.mubr.f32.mxu0 %v2981
    %3109 = vmatmul.mubr.f32.gmra.mrb[0].mxu0 %v2919
    %v3110 = vpop.f32.mrb[0].mxu0
    %v3111 = vadd.f32 0.0, %v3110
    %v3112 = vpop.f32.mrb[0].mxu0
    %3113 = vmatprep.mubr.f32.mxu0 %v2984
    %3114 = vmatmul.mubr.f32.gmra.mrb[0].mxu0 %v2921
    %v3115 = vpop.f32.mrb[0].mxu0
    %v3116 = vadd.f32 0.0, %v3115
    %v3117 = vpop.f32.mrb[0].mxu0
    %3118 = vmatprep.mubr.f32.mxu0 %v2987
    %3119 = vmatmul.mubr.f32.gmra.mrb[0].mxu0 %v2923
    %v3120 = vpop.f32.mrb[0].mxu0
    %v3121 = vadd.f32 0.0, %v3120
    %v3122 = vpop.f32.mrb[0].mxu0
    %3123 = vdwg.mxu0
    %v3124 = vld [vmem:[%s8] sm:$0xff]
    %v3125 = vld [vmem:[%s8 + $0x8] sm:$0xff]
    %v3126 = vld [vmem:[%s8 + $0x10] sm:$0xff]
    %v3127 = vld [vmem:[%s8 + $0x18] sm:$0xff]
    %v3128 = vld [vmem:[%s8 + $0x20] sm:$0xff]
    %v3129 = vld [vmem:[%s8 + $0x28] sm:$0xff]
    %v3130 = vld [vmem:[%s8 + $0x30] sm:$0xff]
    %v3131 = vld [vmem:[%s8 + $0x38] sm:$0xff]
    %v3132 = vld [vmem:[%s8 + $0x40] sm:$0xff]
    %v3133 = vld [vmem:[%s8 + $0x48] sm:$0xff]
    %v3134 = vld [vmem:[%s8 + $0x50] sm:$0xff]
    %v3135 = vld [vmem:[%s8 + $0x58] sm:$0xff]
    %v3136 = vld [vmem:[%s8 + $0x60] sm:$0xff]
    %v3137 = vld [vmem:[%s8 + $0x68] sm:$0xff]
    %v3138 = vld [vmem:[%s8 + $0x70] sm:$0xff]
    %v3139 = vld [vmem:[%s8 + $0x78] sm:$0xff]
    %v3140 = vld [vmem:[%s8 + $0x80] sm:$0xff]
    %v3141 = vld [vmem:[%s8 + $0x88] sm:$0xff]
    %v3142 = vld [vmem:[%s8 + $0x90] sm:$0xff]
    %v3143 = vld [vmem:[%s8 + $0x98] sm:$0xff]
    %v3144 = vld [vmem:[%s8 + $0xa0] sm:$0xff]
    %3145 = vmatprep.subr.mxu0 0.0
    %3146 = vmatpush1.msra.mxu0 %v3124
    %3147 = vmatprep.subr.mxu0 0.0
    %3148 = vmatpush1.msra.mxu0 %v3125
    %3149 = vmatprep.subr.mxu0 0.0
    %3150 = vmatpush1.msra.mxu0 %v3126
    %3151 = vmatprep.subr.mxu0 0.0
    %3152 = vmatpush1.msra.mxu0 %v3127
    %3153 = vmatprep.subr.mxu0 0.0
    %3154 = vmatpush1.msra.mxu0 %v3128
    %3155 = vmatprep.subr.mxu0 0.0
    %3156 = vmatpush1.msra.mxu0 %v3129
    %3157 = vmatprep.subr.mxu0 0.0
    %3158 = vmatpush1.msra.mxu0 %v3130
    %3159 = vmatprep.subr.mxu0 0.0
    %3160 = vmatpush1.msra.mxu0 %v3131
    %3161 = vmatprep.subr.mxu0 0.0
    %3162 = vmatpush1.msra.mxu0 %v3132
    %3163 = vmatprep.subr.mxu0 0.0
    %3164 = vmatpush1.msra.mxu0 %v3133
    %3165 = vmatprep.subr.mxu0 0.0
    %3166 = vmatpush1.msra.mxu0 %v3134
    %3167 = vmatprep.subr.mxu0 0.0
    %3168 = vmatpush1.msra.mxu0 %v3135
    %3169 = vmatprep.subr.mxu0 0.0
    %3170 = vmatpush1.msra.mxu0 %v3136
    %3171 = vmatprep.subr.mxu0 0.0
    %3172 = vmatpush1.msra.mxu0 %v3137
    %3173 = vmatprep.subr.mxu0 0.0
    %3174 = vmatpush1.msra.mxu0 %v3138
    %3175 = vmatprep.subr.mxu0 0.0
    %3176 = vmatpush1.msra.mxu0 %v3139
    %3177 = vmatprep.subr.mxu0 0.0
    %3178 = vmatpush1.msra.mxu0 %v3140
    %3179 = vmatprep.subr.mxu0 0.0
    %3180 = vmatpush1.msra.mxu0 %v3141
    %3181 = vmatprep.subr.mxu0 0.0
    %3182 = vmatpush1.msra.mxu0 %v3142
    %3183 = vmatprep.subr.mxu0 0.0
    %3184 = vmatpush1.msra.mxu0 %v3143
    %3185 = vmatprep.subr.mxu0 0.0
    %3186 = vmatpush1.msra.mxu0 %v3144
    %3187 = vmatprep.subr.mxu0 0.0
    %3188 = vmatpush1.msra.mxu0 0.0
    %3189 = vmatprep.subr.mxu0 0.0
    %3190 = vmatpush1.msra.mxu0 0.0
    %3191 = vmatprep.subr.mxu0 0.0
    %3192 = vmatpush1.msra.mxu0 0.0
    %3193 = vmatprep.subr.mxu0 0.0
    %3194 = vmatpush1.msra.mxu0 0.0
    %3195 = vmatprep.subr.mxu0 0.0
    %3196 = vmatpush1.msra.mxu0 0.0
    %3197 = vmatprep.subr.mxu0 0.0
    %3198 = vmatpush1.msra.mxu0 0.0
    %3199 = vmatprep.subr.mxu0 0.0
    %3200 = vmatpush1.msra.mxu0 0.0
    %3201 = vmatprep.subr.mxu0 0.0
    %3202 = vmatpush1.msra.mxu0 0.0
    %3203 = vmatprep.subr.mxu0 0.0
    %3204 = vmatpush1.msra.mxu0 0.0
    %3205 = vmatprep.subr.mxu0 0.0
    %3206 = vmatpush1.msra.mxu0 0.0
    %3207 = vmatprep.subr.mxu0 0.0
    %3208 = vmatpush1.msra.mxu0 0.0
    %3209 = vmatprep.mubr.f32.mxu0 %v2948
    %3210 = vmatmul.mubr.f32.gmra.mrb[0].mxu0 %v2897
    %v3211 = vpop.f32.mrb[0].mxu0
    %v3212 = vadd.f32 0.0, %v3211
    %v3213 = vpop.f32.mrb[0].mxu0
    %3214 = vmatprep.mubr.f32.mxu0 %v2951
    %3215 = vmatmul.mubr.f32.gmra.mrb[0].mxu0 %v2899
    %v3216 = vpop.f32.mrb[0].mxu0
    %v3217 = vadd.f32 0.0, %v3216
    %v3218 = vpop.f32.mrb[0].mxu0
    %3219 = vmatprep.mubr.f32.mxu0 %v2954
    %3220 = vmatmul.mubr.f32.gmra.mrb[0].mxu0 %v2901
    %v3221 = vpop.f32.mrb[0].mxu0
    %v3222 = vadd.f32 0.0, %v3221
    %v3223 = vpop.f32.mrb[0].mxu0
    %3224 = vmatprep.mubr.f32.mxu0 %v2957
    %3225 = vmatmul.mubr.f32.gmra.mrb[0].mxu0 %v2903
    %v3226 = vpop.f32.mrb[0].mxu0
    %v3227 = vadd.f32 0.0, %v3226
    %v3228 = vpop.f32.mrb[0].mxu0
    %3229 = vmatprep.mubr.f32.mxu0 %v2960
    %3230 = vmatmul.mubr.f32.gmra.mrb[0].mxu0 %v2905
    %v3231 = vpop.f32.mrb[0].mxu0
    %v3232 = vadd.f32 0.0, %v3231
    %v3233 = vpop.f32.mrb[0].mxu0
    %3234 = vmatprep.mubr.f32.mxu0 %v2963
    %3235 = vmatmul.mubr.f32.gmra.mrb[0].mxu0 %v2907
    %v3236 = vpop.f32.mrb[0].mxu0
    %v3237 = vadd.f32 0.0, %v3236
    %v3238 = vpop.f32.mrb[0].mxu0
    %3239 = vmatprep.mubr.f32.mxu0 %v2966
    %3240 = vmatmul.mubr.f32.gmra.mrb[0].mxu0 %v2909
    %v3241 = vpop.f32.mrb[0].mxu0
    %v3242 = vadd.f32 0.0, %v3241
    %v3243 = vpop.f32.mrb[0].mxu0
    %3244 = vmatprep.mubr.f32.mxu0 %v2969
    %3245 = vmatmul.mubr.f32.gmra.mrb[0].mxu0 %v2911
    %v3246 = vpop.f32.mrb[0].mxu0
    %v3247 = vadd.f32 0.0, %v3246
    %v3248 = vpop.f32.mrb[0].mxu0
    %3249 = vmatprep.mubr.f32.mxu0 %v2972
    %3250 = vmatmul.mubr.f32.gmra.mrb[0].mxu0 %v2913
    %v3251 = vpop.f32.mrb[0].mxu0
    %v3252 = vadd.f32 0.0, %v3251
    %v3253 = vpop.f32.mrb[0].mxu0
    %3254 = vmatprep.mubr.f32.mxu0 %v2975
    %3255 = vmatmul.mubr.f32.gmra.mrb[0].mxu0 %v2915
    %v3256 = vpop.f32.mrb[0].mxu0
    %v3257 = vadd.f32 0.0, %v3256
    %v3258 = vpop.f32.mrb[0].mxu0
    %3259 = vmatprep.mubr.f32.mxu0 %v2978
    %3260 = vmatmul.mubr.f32.gmra.mrb[0].mxu0 %v2917
    %v3261 = vpop.f32.mrb[0].mxu0
    %v3262 = vadd.f32 0.0, %v3261
    %v3263 = vpop.f32.mrb[0].mxu0
    %3264 = vmatprep.mubr.f32.mxu0 %v2981
    %3265 = vmatmul.mubr.f32.gmra.mrb[0].mxu0 %v2919
    %v3266 = vpop.f32.mrb[0].mxu0
    %v3267 = vadd.f32 0.0, %v3266
    %v3268 = vpop.f32.mrb[0].mxu0
    %3269 = vmatprep.mubr.f32.mxu0 %v2984
    %3270 = vmatmul.mubr.f32.gmra.mrb[0].mxu0 %v2921
    %v3271 = vpop.f32.mrb[0].mxu0
    %v3272 = vadd.f32 0.0, %v3271
    %v3273 = vpop.f32.mrb[0].mxu0
    %3274 = vmatprep.mubr.f32.mxu0 %v2987
    %3275 = vmatmul.mubr.f32.gmra.mrb[0].mxu0 %v2923
    %v3276 = vpop.f32.mrb[0].mxu0
    %v3277 = vadd.f32 0.0, %v3276
    %v3278 = vpop.f32.mrb[0].mxu0
    %3279 = vdwg.mxu0
    %v3280 = vmax.f32 %v3056, %v3212
    %v3281 = vmax.f32 %v3061, %v3217
    %v3282 = vmax.f32 %v3066, %v3222
    %v3283 = vmax.f32 %v3071, %v3227
    %v3284 = vmax.f32 %v3076, %v3232
    %v3285 = vmax.f32 %v3081, %v3237
    %v3286 = vmax.f32 %v3086, %v3242
    %v3287 = vmax.f32 %v3091, %v3247
    %v3288 = vmax.f32 %v3096, %v3252
    %v3289 = vmax.f32 %v3101, %v3257
    %v3290 = vmax.f32 %v3106, %v3262
    %v3291 = vmax.f32 %v3111, %v3267
    %v3292 = vmax.f32 %v3116, %v3272
    %v3293 = vmax.f32 %v3121, %v3277
    %v3294 = vld [vmem:[%s3] sm:$0xff]
    %v3295 = vld [vmem:[%s3 + $0x8] sm:$0xff]
    %v3296 = vld [vmem:[%s3 + $0x10] sm:$0xff]
    %v3297 = vld [vmem:[%s3 + $0x18] sm:$0xff]
    %v3298 = vld [vmem:[%s3 + $0x20] sm:$0xff]
    %v3299 = vld [vmem:[%s3 + $0x28] sm:$0xff]
    %v3300 = vld [vmem:[%s3 + $0x30] sm:$0xff]
    %v3301 = vld [vmem:[%s3 + $0x38] sm:$0xff]
    %v3302 = vld [vmem:[%s3 + $0x40] sm:$0xff]
    %v3303 = vld [vmem:[%s3 + $0x48] sm:$0xff]
    %v3304 = vld [vmem:[%s3 + $0x50] sm:$0xff]
    %v3305 = vld [vmem:[%s3 + $0x58] sm:$0xff]
    %v3306 = vld [vmem:[%s3 + $0x60] sm:$0xff]
    %v3307 = vld [vmem:[%s3 + $0x68] sm:$0xff]
    %v3308 = vld [vmem:[%s3 + $0x70] sm:$0xff]
    %v3309 = vld [vmem:[%s3 + $0x78] sm:$0xff]
    %v3310 = vld [vmem:[%s3 + $0x80] sm:$0xff]
    %v3311 = vld [vmem:[%s3 + $0x88] sm:$0xff]
    %v3312 = vld [vmem:[%s3 + $0x90] sm:$0xff]
    %v3313 = vld [vmem:[%s3 + $0x98] sm:$0xff]
    %v3314 = vld [vmem:[%s3 + $0xa0] sm:$0xf]
    %v3315 = vld [vmem:[%s3 + $0xa8] sm:$0xf]
    %s3316 = scalar_lea.vmem %s3, 176
    %v3317 = vld [vmem:[%s3316] sm:$0xff]
    %v3318 = vld [vmem:[%s3316 + $0x8] sm:$0xff]
    %v3319 = vld [vmem:[%s3316 + $0x10] sm:$0xff]
    %v3320 = vld [vmem:[%s3316 + $0x18] sm:$0xff]
    %v3321 = vld [vmem:[%s3316 + $0x20] sm:$0xff]
    %v3322 = vld [vmem:[%s3316 + $0x28] sm:$0xff]
    %v3323 = vld [vmem:[%s3316 + $0x30] sm:$0xff]
    %v3324 = vld [vmem:[%s3316 + $0x38] sm:$0xff]
    %v3325 = vld [vmem:[%s3316 + $0x40] sm:$0xff]
    %v3326 = vld [vmem:[%s3316 + $0x48] sm:$0xff]
    %v3327 = vld [vmem:[%s3316 + $0x50] sm:$0xff]
    %v3328 = vld [vmem:[%s3316 + $0x58] sm:$0xff]
    %v3329 = vld [vmem:[%s3316 + $0x60] sm:$0xff]
    %v3330 = vld [vmem:[%s3316 + $0x68] sm:$0xff]
    %v3331 = vld [vmem:[%s3316 + $0x70] sm:$0xff]
    %v3332 = vld [vmem:[%s3316 + $0x78] sm:$0xff]
    %v3333 = vld [vmem:[%s3316 + $0x80] sm:$0xff]
    %v3334 = vld [vmem:[%s3316 + $0x88] sm:$0xff]
    %v3335 = vld [vmem:[%s3316 + $0x90] sm:$0xff]
    %v3336 = vld [vmem:[%s3316 + $0x98] sm:$0xff]
    %v3337 = vld [vmem:[%s3316 + $0xa0] sm:$0xf]
    %v3338 = vld [vmem:[%s3316 + $0xa8] sm:$0xf]
    %vm3353 = vcmask 1046528
    %v3354 = vrot.slane %v3280, 1
    %v3355 = vrot.slane %v3281, 1
    %v3356 = vsel %vm3353, %v3354, %v3355
    %v3357 = vrot.slane %v3282, 1
    %v3358 = vsel %vm3353, %v3355, %v3357
    %v3359 = vrot.slane %v3283, 1
    %v3360 = vsel %vm3353, %v3357, %v3359
    %v3361 = vrot.slane %v3284, 1
    %v3362 = vsel %vm3353, %v3359, %v3361
    %v3363 = vrot.slane %v3285, 1
    %v3364 = vsel %vm3353, %v3361, %v3363
    %v3365 = vrot.slane %v3286, 1
    %v3366 = vsel %vm3353, %v3363, %v3365
    %v3367 = vrot.slane %v3287, 1
    %v3368 = vsel %vm3353, %v3365, %v3367
    %v3369 = vrot.slane %v3288, 1
    %v3370 = vsel %vm3353, %v3367, %v3369
    %v3371 = vrot.slane %v3289, 1
    %v3372 = vsel %vm3353, %v3369, %v3371
    %v3373 = vrot.slane %v3290, 1
    %v3374 = vsel %vm3353, %v3371, %v3373
    %v3375 = vrot.slane %v3291, 1
    %v3376 = vsel %vm3353, %v3373, %v3375
    %v3377 = vrot.slane %v3292, 1
    %v3378 = vsel %vm3353, %v3375, %v3377
    %v3379 = vrot.slane %v3293, 1
    %v3380 = vsel %vm3353, %v3377, %v3379
    %vm3381 = vcmask 687104
    %v3382 = vsel %vm3381, %v3356, 0
    %v3384 = vsel %vm3381, %v3358, 0
    %v3386 = vsel %vm3381, %v3360, 0
    %v3388 = vsel %vm3381, %v3362, 0
    %v3390 = vsel %vm3381, %v3364, 0
    %v3392 = vsel %vm3381, %v3366, 0
    %v3394 = vsel %vm3381, %v3368, 0
    %v3396 = vsel %vm3381, %v3370, 0
    %v3398 = vsel %vm3381, %v3372, 0
    %v3400 = vsel %vm3381, %v3374, 0
    %v3402 = vsel %vm3381, %v3376, 0
    %v3404 = vsel %vm3381, %v3378, 0
    %v3406 = vsel %vm3381, %v3380, 0
    %v3408 = vsel %vm3381, %v3379, 0
    %v3411 = vsel %vm2522, %v3337, 0
    %v3414 = vsel %vm2522, %v3338, 0
    %3416 = vmatprep.subr.mxu0 %v3318
    %3417 = vmatpush1.msra.mxu0 %v3317
    %3418 = vmatprep.subr.mxu0 %v3320
    %3419 = vmatpush1.msra.mxu0 %v3319
    %3420 = vmatprep.subr.mxu0 %v3322
    %3421 = vmatpush1.msra.mxu0 %v3321
    %3422 = vmatprep.subr.mxu0 %v3324
    %3423 = vmatpush1.msra.mxu0 %v3323
    %3424 = vmatprep.subr.mxu0 %v3326
    %3425 = vmatpush1.msra.mxu0 %v3325
    %3426 = vmatprep.subr.mxu0 %v3328
    %3427 = vmatpush1.msra.mxu0 %v3327
    %3428 = vmatprep.subr.mxu0 %v3330
    %3429 = vmatpush1.msra.mxu0 %v3329
    %3430 = vmatprep.subr.mxu0 %v3332
    %3431 = vmatpush1.msra.mxu0 %v3331
    %3432 = vmatprep.subr.mxu0 %v3334
    %3433 = vmatpush1.msra.mxu0 %v3333
    %3434 = vmatprep.subr.mxu0 %v3336
    %3435 = vmatpush1.msra.mxu0 %v3335
    %3436 = vmatprep.subr.mxu0 %v3414
    %3437 = vmatpush1.msra.mxu0 %v3411
    %3438 = vmatprep.subr.mxu0 0.0
    %3439 = vmatpush1.msra.mxu0 0.0
    %3440 = vmatprep.subr.mxu0 0.0
    %3441 = vmatpush1.msra.mxu0 0.0
    %3442 = vmatprep.subr.mxu0 0.0
    %3443 = vmatpush1.msra.mxu0 0.0
    %3444 = vmatprep.subr.mxu0 0.0
    %3445 = vmatpush1.msra.mxu0 0.0
    %3446 = vmatprep.subr.mxu0 0.0
    %3447 = vmatpush1.msra.mxu0 0.0
    %3448 = vmatprep.subr.mxu0 0.0
    %3449 = vmatpush1.msra.mxu0 0.0
    %3450 = vmatprep.subr.mxu0 0.0
    %3451 = vmatpush1.msra.mxu0 0.0
    %3452 = vmatprep.subr.mxu0 0.0
    %3453 = vmatpush1.msra.mxu0 0.0
    %3454 = vmatprep.subr.mxu0 0.0
    %3455 = vmatpush1.msra.mxu0 0.0
    %3456 = vmatprep.subr.mxu0 0.0
    %3457 = vmatpush1.msra.mxu0 0.0
    %3458 = vmatprep.subr.mxu0 0.0
    %3459 = vmatpush1.msra.mxu0 0.0
    %3460 = vmatprep.subr.mxu0 0.0
    %3461 = vmatpush1.msra.mxu0 0.0
    %3462 = vmatprep.subr.mxu0 0.0
    %3463 = vmatpush1.msra.mxu0 0.0
    %3464 = vmatprep.subr.mxu0 0.0
    %3465 = vmatpush1.msra.mxu0 0.0
    %3466 = vmatprep.subr.mxu0 0.0
    %3467 = vmatpush1.msra.mxu0 0.0
    %3468 = vmatprep.subr.mxu0 0.0
    %3469 = vmatpush1.msra.mxu0 0.0
    %3470 = vmatprep.subr.mxu0 0.0
    %3471 = vmatpush1.msra.mxu0 0.0
    %3472 = vmatprep.subr.mxu0 0.0
    %3473 = vmatpush1.msra.mxu0 0.0
    %3474 = vmatprep.subr.mxu0 0.0
    %3475 = vmatpush1.msra.mxu0 0.0
    %3476 = vmatprep.subr.mxu0 0.0
    %3477 = vmatpush1.msra.mxu0 0.0
    %3478 = vmatprep.subr.mxu0 0.0
    %3479 = vmatpush1.msra.mxu0 0.0
    %3480 = vmatprep.mubr.f32.mxu0 0.0
    %3481 = vmatmul.mubr.f32.gmra.mrb[0].mxu0 %v3382
    %v3482 = vpop.f32.mrb[0].mxu0
    %v3483 = vadd.f32 0.0, %v3482
    %v3484 = vpop.f32.mrb[0].mxu0
    %v3485 = vadd.f32 0.0, %v3484
    %3486 = vmatprep.mubr.f32.mxu0 0.0
    %3487 = vmatmul.mubr.f32.gmra.mrb[0].mxu0 %v3384
    %v3488 = vpop.f32.mrb[0].mxu0
    %v3489 = vadd.f32 0.0, %v3488
    %v3490 = vpop.f32.mrb[0].mxu0
    %v3491 = vadd.f32 0.0, %v3490
    %3492 = vmatprep.mubr.f32.mxu0 0.0
    %3493 = vmatmul.mubr.f32.gmra.mrb[0].mxu0 %v3386
    %v3494 = vpop.f32.mrb[0].mxu0
    %v3495 = vadd.f32 0.0, %v3494
    %v3496 = vpop.f32.mrb[0].mxu0
    %v3497 = vadd.f32 0.0, %v3496
    %3498 = vmatprep.mubr.f32.mxu0 0.0
    %3499 = vmatmul.mubr.f32.gmra.mrb[0].mxu0 %v3388
    %v3500 = vpop.f32.mrb[0].mxu0
    %v3501 = vadd.f32 0.0, %v3500
    %v3502 = vpop.f32.mrb[0].mxu0
    %v3503 = vadd.f32 0.0, %v3502
    %3504 = vmatprep.mubr.f32.mxu0 0.0
    %3505 = vmatmul.mubr.f32.gmra.mrb[0].mxu0 %v3390
    %v3506 = vpop.f32.mrb[0].mxu0
    %v3507 = vadd.f32 0.0, %v3506
    %v3508 = vpop.f32.mrb[0].mxu0
    %v3509 = vadd.f32 0.0, %v3508
    %3510 = vmatprep.mubr.f32.mxu0 0.0
    %3511 = vmatmul.mubr.f32.gmra.mrb[0].mxu0 %v3392
    %v3512 = vpop.f32.mrb[0].mxu0
    %v3513 = vadd.f32 0.0, %v3512
    %v3514 = vpop.f32.mrb[0].mxu0
    %v3515 = vadd.f32 0.0, %v3514
    %3516 = vmatprep.mubr.f32.mxu0 0.0
    %3517 = vmatmul.mubr.f32.gmra.mrb[0].mxu0 %v3394
    %v3518 = vpop.f32.mrb[0].mxu0
    %v3519 = vadd.f32 0.0, %v3518
    %v3520 = vpop.f32.mrb[0].mxu0
    %v3521 = vadd.f32 0.0, %v3520
    %3522 = vmatprep.mubr.f32.mxu0 0.0
    %3523 = vmatmul.mubr.f32.gmra.mrb[0].mxu0 %v3396
    %v3524 = vpop.f32.mrb[0].mxu0
    %v3525 = vadd.f32 0.0, %v3524
    %v3526 = vpop.f32.mrb[0].mxu0
    %v3527 = vadd.f32 0.0, %v3526
    %3528 = vmatprep.mubr.f32.mxu0 0.0
    %3529 = vmatmul.mubr.f32.gmra.mrb[0].mxu0 %v3398
    %v3530 = vpop.f32.mrb[0].mxu0
    %v3531 = vadd.f32 0.0, %v3530
    %v3532 = vpop.f32.mrb[0].mxu0
    %v3533 = vadd.f32 0.0, %v3532
    %3534 = vmatprep.mubr.f32.mxu0 0.0
    %3535 = vmatmul.mubr.f32.gmra.mrb[0].mxu0 %v3400
    %v3536 = vpop.f32.mrb[0].mxu0
    %v3537 = vadd.f32 0.0, %v3536
    %v3538 = vpop.f32.mrb[0].mxu0
    %v3539 = vadd.f32 0.0, %v3538
    %3540 = vmatprep.mubr.f32.mxu0 0.0
    %3541 = vmatmul.mubr.f32.gmra.mrb[0].mxu0 %v3402
    %v3542 = vpop.f32.mrb[0].mxu0
    %v3543 = vadd.f32 0.0, %v3542
    %v3544 = vpop.f32.mrb[0].mxu0
    %v3545 = vadd.f32 0.0, %v3544
    %3546 = vmatprep.mubr.f32.mxu0 0.0
    %3547 = vmatmul.mubr.f32.gmra.mrb[0].mxu0 %v3404
    %v3548 = vpop.f32.mrb[0].mxu0
    %v3549 = vadd.f32 0.0, %v3548
    %v3550 = vpop.f32.mrb[0].mxu0
    %v3551 = vadd.f32 0.0, %v3550
    %3552 = vmatprep.mubr.f32.mxu0 0.0
    %3553 = vmatmul.mubr.f32.gmra.mrb[0].mxu0 %v3406
    %v3554 = vpop.f32.mrb[0].mxu0
    %v3555 = vadd.f32 0.0, %v3554
    %v3556 = vpop.f32.mrb[0].mxu0
    %v3557 = vadd.f32 0.0, %v3556
    %3558 = vmatprep.mubr.f32.mxu0 0.0
    %3559 = vmatmul.mubr.f32.gmra.mrb[0].mxu0 %v3408
    %v3560 = vpop.f32.mrb[0].mxu0
    %v3561 = vadd.f32 0.0, %v3560
    %v3562 = vpop.f32.mrb[0].mxu0
    %v3563 = vadd.f32 0.0, %v3562
    %3564 = vdwg.mxu0
    %v3565 = vsel %vm3381, %v3280, 0
    %v3567 = vsel %vm3381, %v3281, 0
    %v3569 = vsel %vm3381, %v3282, 0
    %v3571 = vsel %vm3381, %v3283, 0
    %v3573 = vsel %vm3381, %v3284, 0
    %v3575 = vsel %vm3381, %v3285, 0
    %v3577 = vsel %vm3381, %v3286, 0
    %v3579 = vsel %vm3381, %v3287, 0
    %v3581 = vsel %vm3381, %v3288, 0
    %v3583 = vsel %vm3381, %v3289, 0
    %v3585 = vsel %vm3381, %v3290, 0
    %v3587 = vsel %vm3381, %v3291, 0
    %v3589 = vsel %vm3381, %v3292, 0
    %v3591 = vsel %vm3381, %v3293, 0
    %v3594 = vsel %vm2522, %v3314, 0
    %v3597 = vsel %vm2522, %v3315, 0
    %3599 = vmatprep.subr.mxu0 %v3295
    %3600 = vmatpush1.msra.mxu0 %v3294
    %3601 = vmatprep.subr.mxu0 %v3297
    %3602 = vmatpush1.msra.mxu0 %v3296
    %3603 = vmatprep.subr.mxu0 %v3299
    %3604 = vmatpush1.msra.mxu0 %v3298
    %3605 = vmatprep.subr.mxu0 %v3301
    %3606 = vmatpush1.msra.mxu0 %v3300
    %3607 = vmatprep.subr.mxu0 %v3303
    %3608 = vmatpush1.msra.mxu0 %v3302
    %3609 = vmatprep.subr.mxu0 %v3305
    %3610 = vmatpush1.msra.mxu0 %v3304
    %3611 = vmatprep.subr.mxu0 %v3307
    %3612 = vmatpush1.msra.mxu0 %v3306
    %3613 = vmatprep.subr.mxu0 %v3309
    %3614 = vmatpush1.msra.mxu0 %v3308
    %3615 = vmatprep.subr.mxu0 %v3311
    %3616 = vmatpush1.msra.mxu0 %v3310
    %3617 = vmatprep.subr.mxu0 %v3313
    %3618 = vmatpush1.msra.mxu0 %v3312
    %3619 = vmatprep.subr.mxu0 %v3597
    %3620 = vmatpush1.msra.mxu0 %v3594
    %3621 = vmatprep.subr.mxu0 0.0
    %3622 = vmatpush1.msra.mxu0 0.0
    %3623 = vmatprep.subr.mxu0 0.0
    %3624 = vmatpush1.msra.mxu0 0.0
    %3625 = vmatprep.subr.mxu0 0.0
    %3626 = vmatpush1.msra.mxu0 0.0
    %3627 = vmatprep.subr.mxu0 0.0
    %3628 = vmatpush1.msra.mxu0 0.0
    %3629 = vmatprep.subr.mxu0 0.0
    %3630 = vmatpush1.msra.mxu0 0.0
    %3631 = vmatprep.subr.mxu0 0.0
    %3632 = vmatpush1.msra.mxu0 0.0
    %3633 = vmatprep.subr.mxu0 0.0
    %3634 = vmatpush1.msra.mxu0 0.0
    %3635 = vmatprep.subr.mxu0 0.0
    %3636 = vmatpush1.msra.mxu0 0.0
    %3637 = vmatprep.subr.mxu0 0.0
    %3638 = vmatpush1.msra.mxu0 0.0
    %3639 = vmatprep.subr.mxu0 0.0
    %3640 = vmatpush1.msra.mxu0 0.0
    %3641 = vmatprep.subr.mxu0 0.0
    %3642 = vmatpush1.msra.mxu0 0.0
    %3643 = vmatprep.subr.mxu0 0.0
    %3644 = vmatpush1.msra.mxu0 0.0
    %3645 = vmatprep.subr.mxu0 0.0
    %3646 = vmatpush1.msra.mxu0 0.0
    %3647 = vmatprep.subr.mxu0 0.0
    %3648 = vmatpush1.msra.mxu0 0.0
    %3649 = vmatprep.subr.mxu0 0.0
    %3650 = vmatpush1.msra.mxu0 0.0
    %3651 = vmatprep.subr.mxu0 0.0
    %3652 = vmatpush1.msra.mxu0 0.0
    %3653 = vmatprep.subr.mxu0 0.0
    %3654 = vmatpush1.msra.mxu0 0.0
    %3655 = vmatprep.subr.mxu0 0.0
    %3656 = vmatpush1.msra.mxu0 0.0
    %3657 = vmatprep.subr.mxu0 0.0
    %3658 = vmatpush1.msra.mxu0 0.0
    %3659 = vmatprep.subr.mxu0 0.0
    %3660 = vmatpush1.msra.mxu0 0.0
    %3661 = vmatprep.subr.mxu0 0.0
    %3662 = vmatpush1.msra.mxu0 0.0
    %3663 = vmatprep.mubr.f32.mxu0 0.0
    %3664 = vmatmul.mubr.f32.gmra.mrb[0].mxu0 %v3565
    %v3665 = vpop.f32.mrb[0].mxu0
    %v3666 = vadd.f32 %v3483, %v3665
    %v3667 = vpop.f32.mrb[0].mxu0
    %v3668 = vadd.f32 %v3485, %v3667
    %3669 = vmatprep.mubr.f32.mxu0 0.0
    %3670 = vmatmul.mubr.f32.gmra.mrb[0].mxu0 %v3567
    %v3671 = vpop.f32.mrb[0].mxu0
    %v3672 = vadd.f32 %v3489, %v3671
    %v3673 = vpop.f32.mrb[0].mxu0
    %v3674 = vadd.f32 %v3491, %v3673
    %3675 = vmatprep.mubr.f32.mxu0 0.0
    %3676 = vmatmul.mubr.f32.gmra.mrb[0].mxu0 %v3569
    %v3677 = vpop.f32.mrb[0].mxu0
    %v3678 = vadd.f32 %v3495, %v3677
    %v3679 = vpop.f32.mrb[0].mxu0
    %v3680 = vadd.f32 %v3497, %v3679
    %3681 = vmatprep.mubr.f32.mxu0 0.0
    %3682 = vmatmul.mubr.f32.gmra.mrb[0].mxu0 %v3571
    %v3683 = vpop.f32.mrb[0].mxu0
    %v3684 = vadd.f32 %v3501, %v3683
    %v3685 = vpop.f32.mrb[0].mxu0
    %v3686 = vadd.f32 %v3503, %v3685
    %3687 = vmatprep.mubr.f32.mxu0 0.0
    %3688 = vmatmul.mubr.f32.gmra.mrb[0].mxu0 %v3573
    %v3689 = vpop.f32.mrb[0].mxu0
    %v3690 = vadd.f32 %v3507, %v3689
    %v3691 = vpop.f32.mrb[0].mxu0
    %v3692 = vadd.f32 %v3509, %v3691
    %3693 = vmatprep.mubr.f32.mxu0 0.0
    %3694 = vmatmul.mubr.f32.gmra.mrb[0].mxu0 %v3575
    %v3695 = vpop.f32.mrb[0].mxu0
    %v3696 = vadd.f32 %v3513, %v3695
    %v3697 = vpop.f32.mrb[0].mxu0
    %v3698 = vadd.f32 %v3515, %v3697
    %3699 = vmatprep.mubr.f32.mxu0 0.0
    %3700 = vmatmul.mubr.f32.gmra.mrb[0].mxu0 %v3577
    %v3701 = vpop.f32.mrb[0].mxu0
    %v3702 = vadd.f32 %v3519, %v3701
    %v3703 = vpop.f32.mrb[0].mxu0
    %v3704 = vadd.f32 %v3521, %v3703
    %3705 = vmatprep.mubr.f32.mxu0 0.0
    %3706 = vmatmul.mubr.f32.gmra.mrb[0].mxu0 %v3579
    %v3707 = vpop.f32.mrb[0].mxu0
    %v3708 = vadd.f32 %v3525, %v3707
    %v3709 = vpop.f32.mrb[0].mxu0
    %v3710 = vadd.f32 %v3527, %v3709
    %3711 = vmatprep.mubr.f32.mxu0 0.0
    %3712 = vmatmul.mubr.f32.gmra.mrb[0].mxu0 %v3581
    %v3713 = vpop.f32.mrb[0].mxu0
    %v3714 = vadd.f32 %v3531, %v3713
    %v3715 = vpop.f32.mrb[0].mxu0
    %v3716 = vadd.f32 %v3533, %v3715
    %3717 = vmatprep.mubr.f32.mxu0 0.0
    %3718 = vmatmul.mubr.f32.gmra.mrb[0].mxu0 %v3583
    %v3719 = vpop.f32.mrb[0].mxu0
    %v3720 = vadd.f32 %v3537, %v3719
    %v3721 = vpop.f32.mrb[0].mxu0
    %v3722 = vadd.f32 %v3539, %v3721
    %3723 = vmatprep.mubr.f32.mxu0 0.0
    %3724 = vmatmul.mubr.f32.gmra.mrb[0].mxu0 %v3585
    %v3725 = vpop.f32.mrb[0].mxu0
    %v3726 = vadd.f32 %v3543, %v3725
    %v3727 = vpop.f32.mrb[0].mxu0
    %v3728 = vadd.f32 %v3545, %v3727
    %3729 = vmatprep.mubr.f32.mxu0 0.0
    %3730 = vmatmul.mubr.f32.gmra.mrb[0].mxu0 %v3587
    %v3731 = vpop.f32.mrb[0].mxu0
    %v3732 = vadd.f32 %v3549, %v3731
    %v3733 = vpop.f32.mrb[0].mxu0
    %v3734 = vadd.f32 %v3551, %v3733
    %3735 = vmatprep.mubr.f32.mxu0 0.0
    %3736 = vmatmul.mubr.f32.gmra.mrb[0].mxu0 %v3589
    %v3737 = vpop.f32.mrb[0].mxu0
    %v3738 = vadd.f32 %v3555, %v3737
    %v3739 = vpop.f32.mrb[0].mxu0
    %v3740 = vadd.f32 %v3557, %v3739
    %3741 = vmatprep.mubr.f32.mxu0 0.0
    %3742 = vmatmul.mubr.f32.gmra.mrb[0].mxu0 %v3591
    %v3743 = vpop.f32.mrb[0].mxu0
    %v3744 = vadd.f32 %v3561, %v3743
    %v3745 = vpop.f32.mrb[0].mxu0
    %v3746 = vadd.f32 %v3563, %v3745
    %3747 = vdwg.mxu0
    %s3748 = scalar_lea.vmem %s3, 352
    %v3749 = vld [vmem:[%s3748] sm:$0xff]
    %v3750 = vld [vmem:[%s3748 + $0x8] sm:$0xff]
    %v3751 = vld [vmem:[%s3748 + $0x10] sm:$0xff]
    %v3752 = vld [vmem:[%s3748 + $0x18] sm:$0xff]
    %v3753 = vld [vmem:[%s3748 + $0x20] sm:$0xff]
    %v3754 = vld [vmem:[%s3748 + $0x28] sm:$0xff]
    %v3755 = vld [vmem:[%s3748 + $0x30] sm:$0xff]
    %v3756 = vld [vmem:[%s3748 + $0x38] sm:$0xff]
    %v3757 = vld [vmem:[%s3748 + $0x40] sm:$0xff]
    %v3758 = vld [vmem:[%s3748 + $0x48] sm:$0xff]
    %v3759 = vld [vmem:[%s3748 + $0x50] sm:$0xff]
    %v3760 = vld [vmem:[%s3748 + $0x58] sm:$0xff]
    %v3761 = vld [vmem:[%s3748 + $0x60] sm:$0xff]
    %v3762 = vld [vmem:[%s3748 + $0x68] sm:$0xff]
    %v3763 = vld [vmem:[%s3748 + $0x70] sm:$0xff]
    %v3764 = vld [vmem:[%s3748 + $0x78] sm:$0xff]
    %v3765 = vld [vmem:[%s3748 + $0x80] sm:$0xff]
    %v3766 = vld [vmem:[%s3748 + $0x88] sm:$0xff]
    %v3767 = vld [vmem:[%s3748 + $0x90] sm:$0xff]
    %v3768 = vld [vmem:[%s3748 + $0x98] sm:$0xff]
    %v3769 = vld [vmem:[%s3748 + $0xa0] sm:$0xf]
    %v3770 = vld [vmem:[%s3748 + $0xa8] sm:$0xf]
    %vm3771 = vcmask 1045504
    %v3772 = vrot.slane %v3280, 2
    %v3773 = vrot.slane %v3281, 2
    %v3774 = vsel %vm3771, %v3772, %v3773
    %v3775 = vrot.slane %v3282, 2
    %v3776 = vsel %vm3771, %v3773, %v3775
    %v3777 = vrot.slane %v3283, 2
    %v3778 = vsel %vm3771, %v3775, %v3777
    %v3779 = vrot.slane %v3284, 2
    %v3780 = vsel %vm3771, %v3777, %v3779
    %v3781 = vrot.slane %v3285, 2
    %v3782 = vsel %vm3771, %v3779, %v3781
    %v3783 = vrot.slane %v3286, 2
    %v3784 = vsel %vm3771, %v3781, %v3783
    %v3785 = vrot.slane %v3287, 2
    %v3786 = vsel %vm3771, %v3783, %v3785
    %v3787 = vrot.slane %v3288, 2
    %v3788 = vsel %vm3771, %v3785, %v3787
    %v3789 = vrot.slane %v3289, 2
    %v3790 = vsel %vm3771, %v3787, %v3789
    %v3791 = vrot.slane %v3290, 2
    %v3792 = vsel %vm3771, %v3789, %v3791
    %v3793 = vrot.slane %v3291, 2
    %v3794 = vsel %vm3771, %v3791, %v3793
    %v3795 = vrot.slane %v3292, 2
    %v3796 = vsel %vm3771, %v3793, %v3795
    %v3797 = vrot.slane %v3293, 2
    %v3798 = vsel %vm3771, %v3795, %v3797
    %v3799 = vsel %vm3381, %v3774, 0
    %v3801 = vsel %vm3381, %v3776, 0
    %v3803 = vsel %vm3381, %v3778, 0
    %v3805 = vsel %vm3381, %v3780, 0
    %v3807 = vsel %vm3381, %v3782, 0
    %v3809 = vsel %vm3381, %v3784, 0
    %v3811 = vsel %vm3381, %v3786, 0
    %v3813 = vsel %vm3381, %v3788, 0
    %v3815 = vsel %vm3381, %v3790, 0
    %v3817 = vsel %vm3381, %v3792, 0
    %v3819 = vsel %vm3381, %v3794, 0
    %v3821 = vsel %vm3381, %v3796, 0
    %v3823 = vsel %vm3381, %v3798, 0
    %v3825 = vsel %vm3381, %v3797, 0
    %v3828 = vsel %vm2522, %v3769, 0
    %v3831 = vsel %vm2522, %v3770, 0
    %3833 = vmatprep.subr.mxu0 %v3750
    %3834 = vmatpush1.msra.mxu0 %v3749
    %3835 = vmatprep.subr.mxu0 %v3752
    %3836 = vmatpush1.msra.mxu0 %v3751
    %3837 = vmatprep.subr.mxu0 %v3754
    %3838 = vmatpush1.msra.mxu0 %v3753
    %3839 = vmatprep.subr.mxu0 %v3756
    %3840 = vmatpush1.msra.mxu0 %v3755
    %3841 = vmatprep.subr.mxu0 %v3758
    %3842 = vmatpush1.msra.mxu0 %v3757
    %3843 = vmatprep.subr.mxu0 %v3760
    %3844 = vmatpush1.msra.mxu0 %v3759
    %3845 = vmatprep.subr.mxu0 %v3762
    %3846 = vmatpush1.msra.mxu0 %v3761
    %3847 = vmatprep.subr.mxu0 %v3764
    %3848 = vmatpush1.msra.mxu0 %v3763
    %3849 = vmatprep.subr.mxu0 %v3766
    %3850 = vmatpush1.msra.mxu0 %v3765
    %3851 = vmatprep.subr.mxu0 %v3768
    %3852 = vmatpush1.msra.mxu0 %v3767
    %3853 = vmatprep.subr.mxu0 %v3831
    %3854 = vmatpush1.msra.mxu0 %v3828
    %3855 = vmatprep.subr.mxu0 0.0
    %3856 = vmatpush1.msra.mxu0 0.0
    %3857 = vmatprep.subr.mxu0 0.0
    %3858 = vmatpush1.msra.mxu0 0.0
    %3859 = vmatprep.subr.mxu0 0.0
    %3860 = vmatpush1.msra.mxu0 0.0
    %3861 = vmatprep.subr.mxu0 0.0
    %3862 = vmatpush1.msra.mxu0 0.0
    %3863 = vmatprep.subr.mxu0 0.0
    %3864 = vmatpush1.msra.mxu0 0.0
    %3865 = vmatprep.subr.mxu0 0.0
    %3866 = vmatpush1.msra.mxu0 0.0
    %3867 = vmatprep.subr.mxu0 0.0
    %3868 = vmatpush1.msra.mxu0 0.0
    %3869 = vmatprep.subr.mxu0 0.0
    %3870 = vmatpush1.msra.mxu0 0.0
    %3871 = vmatprep.subr.mxu0 0.0
    %3872 = vmatpush1.msra.mxu0 0.0
    %3873 = vmatprep.subr.mxu0 0.0
    %3874 = vmatpush1.msra.mxu0 0.0
    %3875 = vmatprep.subr.mxu0 0.0
    %3876 = vmatpush1.msra.mxu0 0.0
    %3877 = vmatprep.subr.mxu0 0.0
    %3878 = vmatpush1.msra.mxu0 0.0
    %3879 = vmatprep.subr.mxu0 0.0
    %3880 = vmatpush1.msra.mxu0 0.0
    %3881 = vmatprep.subr.mxu0 0.0
    %3882 = vmatpush1.msra.mxu0 0.0
    %3883 = vmatprep.subr.mxu0 0.0
    %3884 = vmatpush1.msra.mxu0 0.0
    %3885 = vmatprep.subr.mxu0 0.0
    %3886 = vmatpush1.msra.mxu0 0.0
    %3887 = vmatprep.subr.mxu0 0.0
    %3888 = vmatpush1.msra.mxu0 0.0
    %3889 = vmatprep.subr.mxu0 0.0
    %3890 = vmatpush1.msra.mxu0 0.0
    %3891 = vmatprep.subr.mxu0 0.0
    %3892 = vmatpush1.msra.mxu0 0.0
    %3893 = vmatprep.subr.mxu0 0.0
    %3894 = vmatpush1.msra.mxu0 0.0
    %3895 = vmatprep.subr.mxu0 0.0
    %3896 = vmatpush1.msra.mxu0 0.0
    %3897 = vmatprep.mubr.f32.mxu0 0.0
    %3898 = vmatmul.mubr.f32.gmra.mrb[0].mxu0 %v3799
    %v3899 = vpop.f32.mrb[0].mxu0
    %v3900 = vadd.f32 0.0, %v3899
    %v3901 = vpop.f32.mrb[0].mxu0
    %v3902 = vadd.f32 0.0, %v3901
    %3903 = vmatprep.mubr.f32.mxu0 0.0
    %3904 = vmatmul.mubr.f32.gmra.mrb[0].mxu0 %v3801
    %v3905 = vpop.f32.mrb[0].mxu0
    %v3906 = vadd.f32 0.0, %v3905
    %v3907 = vpop.f32.mrb[0].mxu0
    %v3908 = vadd.f32 0.0, %v3907
    %3909 = vmatprep.mubr.f32.mxu0 0.0
    %3910 = vmatmul.mubr.f32.gmra.mrb[0].mxu0 %v3803
    %v3911 = vpop.f32.mrb[0].mxu0
    %v3912 = vadd.f32 0.0, %v3911
    %v3913 = vpop.f32.mrb[0].mxu0
    %v3914 = vadd.f32 0.0, %v3913
    %3915 = vmatprep.mubr.f32.mxu0 0.0
    %3916 = vmatmul.mubr.f32.gmra.mrb[0].mxu0 %v3805
    %v3917 = vpop.f32.mrb[0].mxu0
    %v3918 = vadd.f32 0.0, %v3917
    %v3919 = vpop.f32.mrb[0].mxu0
    %v3920 = vadd.f32 0.0, %v3919
    %3921 = vmatprep.mubr.f32.mxu0 0.0
    %3922 = vmatmul.mubr.f32.gmra.mrb[0].mxu0 %v3807
    %v3923 = vpop.f32.mrb[0].mxu0
    %v3924 = vadd.f32 0.0, %v3923
    %v3925 = vpop.f32.mrb[0].mxu0
    %v3926 = vadd.f32 0.0, %v3925
    %3927 = vmatprep.mubr.f32.mxu0 0.0
    %3928 = vmatmul.mubr.f32.gmra.mrb[0].mxu0 %v3809
    %v3929 = vpop.f32.mrb[0].mxu0
    %v3930 = vadd.f32 0.0, %v3929
    %v3931 = vpop.f32.mrb[0].mxu0
    %v3932 = vadd.f32 0.0, %v3931
    %3933 = vmatprep.mubr.f32.mxu0 0.0
    %3934 = vmatmul.mubr.f32.gmra.mrb[0].mxu0 %v3811
    %v3935 = vpop.f32.mrb[0].mxu0
    %v3936 = vadd.f32 0.0, %v3935
    %v3937 = vpop.f32.mrb[0].mxu0
    %v3938 = vadd.f32 0.0, %v3937
    %3939 = vmatprep.mubr.f32.mxu0 0.0
    %3940 = vmatmul.mubr.f32.gmra.mrb[0].mxu0 %v3813
    %v3941 = vpop.f32.mrb[0].mxu0
    %v3942 = vadd.f32 0.0, %v3941
    %v3943 = vpop.f32.mrb[0].mxu0
    %v3944 = vadd.f32 0.0, %v3943
    %3945 = vmatprep.mubr.f32.mxu0 0.0
    %3946 = vmatmul.mubr.f32.gmra.mrb[0].mxu0 %v3815
    %v3947 = vpop.f32.mrb[0].mxu0
    %v3948 = vadd.f32 0.0, %v3947
    %v3949 = vpop.f32.mrb[0].mxu0
    %v3950 = vadd.f32 0.0, %v3949
    %3951 = vmatprep.mubr.f32.mxu0 0.0
    %3952 = vmatmul.mubr.f32.gmra.mrb[0].mxu0 %v3817
    %v3953 = vpop.f32.mrb[0].mxu0
    %v3954 = vadd.f32 0.0, %v3953
    %v3955 = vpop.f32.mrb[0].mxu0
    %v3956 = vadd.f32 0.0, %v3955
    %3957 = vmatprep.mubr.f32.mxu0 0.0
    %3958 = vmatmul.mubr.f32.gmra.mrb[0].mxu0 %v3819
    %v3959 = vpop.f32.mrb[0].mxu0
    %v3960 = vadd.f32 0.0, %v3959
    %v3961 = vpop.f32.mrb[0].mxu0
    %v3962 = vadd.f32 0.0, %v3961
    %3963 = vmatprep.mubr.f32.mxu0 0.0
    %3964 = vmatmul.mubr.f32.gmra.mrb[0].mxu0 %v3821
    %v3965 = vpop.f32.mrb[0].mxu0
    %v3966 = vadd.f32 0.0, %v3965
    %v3967 = vpop.f32.mrb[0].mxu0
    %v3968 = vadd.f32 0.0, %v3967
    %3969 = vmatprep.mubr.f32.mxu0 0.0
    %3970 = vmatmul.mubr.f32.gmra.mrb[0].mxu0 %v3823
    %v3971 = vpop.f32.mrb[0].mxu0
    %v3972 = vadd.f32 0.0, %v3971
    %v3973 = vpop.f32.mrb[0].mxu0
    %v3974 = vadd.f32 0.0, %v3973
    %3975 = vmatprep.mubr.f32.mxu0 0.0
    %3976 = vmatmul.mubr.f32.gmra.mrb[0].mxu0 %v3825
    %v3977 = vpop.f32.mrb[0].mxu0
    %v3978 = vadd.f32 0.0, %v3977
    %v3979 = vpop.f32.mrb[0].mxu0
    %v3980 = vadd.f32 0.0, %v3979
    %3981 = vdwg.mxu0
    %v3982 = vadd.f32 %v3666, %v3900
    %v3983 = vadd.f32 %v3668, %v3902
    %v3984 = vadd.f32 %v3672, %v3906
    %v3985 = vadd.f32 %v3674, %v3908
    %v3986 = vadd.f32 %v3678, %v3912
    %v3987 = vadd.f32 %v3680, %v3914
    %v3988 = vadd.f32 %v3684, %v3918
    %v3989 = vadd.f32 %v3686, %v3920
    %v3990 = vadd.f32 %v3690, %v3924
    %v3991 = vadd.f32 %v3692, %v3926
    %v3992 = vadd.f32 %v3696, %v3930
    %v3993 = vadd.f32 %v3698, %v3932
    %v3994 = vadd.f32 %v3702, %v3936
    %v3995 = vadd.f32 %v3704, %v3938
    %v3996 = vadd.f32 %v3708, %v3942
    %v3997 = vadd.f32 %v3710, %v3944
    %v3998 = vadd.f32 %v3714, %v3948
    %v3999 = vadd.f32 %v3716, %v3950
    %v4000 = vadd.f32 %v3720, %v3954
    %v4001 = vadd.f32 %v3722, %v3956
    %v4002 = vadd.f32 %v3726, %v3960
    %v4003 = vadd.f32 %v3728, %v3962
    %v4004 = vadd.f32 %v3732, %v3966
    %v4005 = vadd.f32 %v3734, %v3968
    %v4006 = vadd.f32 %v3738, %v3972
    %v4007 = vadd.f32 %v3740, %v3974
    %v4008 = vadd.f32 %v3744, %v3978
    %v4009 = vadd.f32 %v3746, %v3980
    %s4010 = scalar_lea.vmem %s3, 528
    %v4011 = vld [vmem:[%s4010] sm:$0xff]
    %v4012 = vld [vmem:[%s4010 + $0x8] sm:$0xff]
    %v4013 = vld [vmem:[%s4010 + $0x10] sm:$0xff]
    %v4014 = vld [vmem:[%s4010 + $0x18] sm:$0xff]
    %v4015 = vld [vmem:[%s4010 + $0x20] sm:$0xff]
    %v4016 = vld [vmem:[%s4010 + $0x28] sm:$0xff]
    %v4017 = vld [vmem:[%s4010 + $0x30] sm:$0xff]
    %v4018 = vld [vmem:[%s4010 + $0x38] sm:$0xff]
    %v4019 = vld [vmem:[%s4010 + $0x40] sm:$0xff]
    %v4020 = vld [vmem:[%s4010 + $0x48] sm:$0xff]
    %v4021 = vld [vmem:[%s4010 + $0x50] sm:$0xff]
    %v4022 = vld [vmem:[%s4010 + $0x58] sm:$0xff]
    %v4023 = vld [vmem:[%s4010 + $0x60] sm:$0xff]
    %v4024 = vld [vmem:[%s4010 + $0x68] sm:$0xff]
    %v4025 = vld [vmem:[%s4010 + $0x70] sm:$0xff]
    %v4026 = vld [vmem:[%s4010 + $0x78] sm:$0xff]
    %v4027 = vld [vmem:[%s4010 + $0x80] sm:$0xff]
    %v4028 = vld [vmem:[%s4010 + $0x88] sm:$0xff]
    %v4029 = vld [vmem:[%s4010 + $0x90] sm:$0xff]
    %v4030 = vld [vmem:[%s4010 + $0x98] sm:$0xff]
    %v4031 = vld [vmem:[%s4010 + $0xa0] sm:$0xf]
    %v4032 = vld [vmem:[%s4010 + $0xa8] sm:$0xf]
    %vm4033 = vcmask 1044480
    %v4034 = vrot.slane %v3280, 3
    %v4035 = vrot.slane %v3281, 3
    %v4036 = vsel %vm4033, %v4034, %v4035
    %v4037 = vrot.slane %v3282, 3
    %v4038 = vsel %vm4033, %v4035, %v4037
    %v4039 = vrot.slane %v3283, 3
    %v4040 = vsel %vm4033, %v4037, %v4039
    %v4041 = vrot.slane %v3284, 3
    %v4042 = vsel %vm4033, %v4039, %v4041
    %v4043 = vrot.slane %v3285, 3
    %v4044 = vsel %vm4033, %v4041, %v4043
    %v4045 = vrot.slane %v3286, 3
    %v4046 = vsel %vm4033, %v4043, %v4045
    %v4047 = vrot.slane %v3287, 3
    %v4048 = vsel %vm4033, %v4045, %v4047
    %v4049 = vrot.slane %v3288, 3
    %v4050 = vsel %vm4033, %v4047, %v4049
    %v4051 = vrot.slane %v3289, 3
    %v4052 = vsel %vm4033, %v4049, %v4051
    %v4053 = vrot.slane %v3290, 3
    %v4054 = vsel %vm4033, %v4051, %v4053
    %v4055 = vrot.slane %v3291, 3
    %v4056 = vsel %vm4033, %v4053, %v4055
    %v4057 = vrot.slane %v3292, 3
    %v4058 = vsel %vm4033, %v4055, %v4057
    %v4059 = vrot.slane %v3293, 3
    %v4060 = vsel %vm4033, %v4057, %v4059
    %v4061 = vsel %vm3381, %v4036, 0
    %v4063 = vsel %vm3381, %v4038, 0
    %v4065 = vsel %vm3381, %v4040, 0
    %v4067 = vsel %vm3381, %v4042, 0
    %v4069 = vsel %vm3381, %v4044, 0
    %v4071 = vsel %vm3381, %v4046, 0
    %v4073 = vsel %vm3381, %v4048, 0
    %v4075 = vsel %vm3381, %v4050, 0
    %v4077 = vsel %vm3381, %v4052, 0
    %v4079 = vsel %vm3381, %v4054, 0
    %v4081 = vsel %vm3381, %v4056, 0
    %v4083 = vsel %vm3381, %v4058, 0
    %v4085 = vsel %vm3381, %v4060, 0
    %v4087 = vsel %vm3381, %v4059, 0
    %v4090 = vsel %vm2522, %v4031, 0
    %v4093 = vsel %vm2522, %v4032, 0
    %4095 = vmatprep.subr.mxu0 %v4012
    %4096 = vmatpush1.msra.mxu0 %v4011
    %4097 = vmatprep.subr.mxu0 %v4014
    %4098 = vmatpush1.msra.mxu0 %v4013
    %4099 = vmatprep.subr.mxu0 %v4016
    %4100 = vmatpush1.msra.mxu0 %v4015
    %4101 = vmatprep.subr.mxu0 %v4018
    %4102 = vmatpush1.msra.mxu0 %v4017
    %4103 = vmatprep.subr.mxu0 %v4020
    %4104 = vmatpush1.msra.mxu0 %v4019
    %4105 = vmatprep.subr.mxu0 %v4022
    %4106 = vmatpush1.msra.mxu0 %v4021
    %4107 = vmatprep.subr.mxu0 %v4024
    %4108 = vmatpush1.msra.mxu0 %v4023
    %4109 = vmatprep.subr.mxu0 %v4026
    %4110 = vmatpush1.msra.mxu0 %v4025
    %4111 = vmatprep.subr.mxu0 %v4028
    %4112 = vmatpush1.msra.mxu0 %v4027
    %4113 = vmatprep.subr.mxu0 %v4030
    %4114 = vmatpush1.msra.mxu0 %v4029
    %4115 = vmatprep.subr.mxu0 %v4093
    %4116 = vmatpush1.msra.mxu0 %v4090
    %4117 = vmatprep.subr.mxu0 0.0
    %4118 = vmatpush1.msra.mxu0 0.0
    %4119 = vmatprep.subr.mxu0 0.0
    %4120 = vmatpush1.msra.mxu0 0.0
    %4121 = vmatprep.subr.mxu0 0.0
    %4122 = vmatpush1.msra.mxu0 0.0
    %4123 = vmatprep.subr.mxu0 0.0
    %4124 = vmatpush1.msra.mxu0 0.0
    %4125 = vmatprep.subr.mxu0 0.0
    %4126 = vmatpush1.msra.mxu0 0.0
    %4127 = vmatprep.subr.mxu0 0.0
    %4128 = vmatpush1.msra.mxu0 0.0
    %4129 = vmatprep.subr.mxu0 0.0
    %4130 = vmatpush1.msra.mxu0 0.0
    %4131 = vmatprep.subr.mxu0 0.0
    %4132 = vmatpush1.msra.mxu0 0.0
    %4133 = vmatprep.subr.mxu0 0.0
    %4134 = vmatpush1.msra.mxu0 0.0
    %4135 = vmatprep.subr.mxu0 0.0
    %4136 = vmatpush1.msra.mxu0 0.0
    %4137 = vmatprep.subr.mxu0 0.0
    %4138 = vmatpush1.msra.mxu0 0.0
    %4139 = vmatprep.subr.mxu0 0.0
    %4140 = vmatpush1.msra.mxu0 0.0
    %4141 = vmatprep.subr.mxu0 0.0
    %4142 = vmatpush1.msra.mxu0 0.0
    %4143 = vmatprep.subr.mxu0 0.0
    %4144 = vmatpush1.msra.mxu0 0.0
    %4145 = vmatprep.subr.mxu0 0.0
    %4146 = vmatpush1.msra.mxu0 0.0
    %4147 = vmatprep.subr.mxu0 0.0
    %4148 = vmatpush1.msra.mxu0 0.0
    %4149 = vmatprep.subr.mxu0 0.0
    %4150 = vmatpush1.msra.mxu0 0.0
    %4151 = vmatprep.subr.mxu0 0.0
    %4152 = vmatpush1.msra.mxu0 0.0
    %4153 = vmatprep.subr.mxu0 0.0
    %4154 = vmatpush1.msra.mxu0 0.0
    %4155 = vmatprep.subr.mxu0 0.0
    %4156 = vmatpush1.msra.mxu0 0.0
    %4157 = vmatprep.subr.mxu0 0.0
    %4158 = vmatpush1.msra.mxu0 0.0
    %4159 = vmatprep.mubr.f32.mxu0 0.0
    %4160 = vmatmul.mubr.f32.gmra.mrb[0].mxu0 %v4061
    %v4161 = vpop.f32.mrb[0].mxu0
    %v4162 = vadd.f32 0.0, %v4161
    %v4163 = vpop.f32.mrb[0].mxu0
    %v4164 = vadd.f32 0.0, %v4163
    %4165 = vmatprep.mubr.f32.mxu0 0.0
    %4166 = vmatmul.mubr.f32.gmra.mrb[0].mxu0 %v4063
    %v4167 = vpop.f32.mrb[0].mxu0
    %v4168 = vadd.f32 0.0, %v4167
    %v4169 = vpop.f32.mrb[0].mxu0
    %v4170 = vadd.f32 0.0, %v4169
    %4171 = vmatprep.mubr.f32.mxu0 0.0
    %4172 = vmatmul.mubr.f32.gmra.mrb[0].mxu0 %v4065
    %v4173 = vpop.f32.mrb[0].mxu0
    %v4174 = vadd.f32 0.0, %v4173
    %v4175 = vpop.f32.mrb[0].mxu0
    %v4176 = vadd.f32 0.0, %v4175
    %4177 = vmatprep.mubr.f32.mxu0 0.0
    %4178 = vmatmul.mubr.f32.gmra.mrb[0].mxu0 %v4067
    %v4179 = vpop.f32.mrb[0].mxu0
    %v4180 = vadd.f32 0.0, %v4179
    %v4181 = vpop.f32.mrb[0].mxu0
    %v4182 = vadd.f32 0.0, %v4181
    %4183 = vmatprep.mubr.f32.mxu0 0.0
    %4184 = vmatmul.mubr.f32.gmra.mrb[0].mxu0 %v4069
    %v4185 = vpop.f32.mrb[0].mxu0
    %v4186 = vadd.f32 0.0, %v4185
    %v4187 = vpop.f32.mrb[0].mxu0
    %v4188 = vadd.f32 0.0, %v4187
    %4189 = vmatprep.mubr.f32.mxu0 0.0
    %4190 = vmatmul.mubr.f32.gmra.mrb[0].mxu0 %v4071
    %v4191 = vpop.f32.mrb[0].mxu0
    %v4192 = vadd.f32 0.0, %v4191
    %v4193 = vpop.f32.mrb[0].mxu0
    %v4194 = vadd.f32 0.0, %v4193
    %4195 = vmatprep.mubr.f32.mxu0 0.0
    %4196 = vmatmul.mubr.f32.gmra.mrb[0].mxu0 %v4073
    %v4197 = vpop.f32.mrb[0].mxu0
    %v4198 = vadd.f32 0.0, %v4197
    %v4199 = vpop.f32.mrb[0].mxu0
    %v4200 = vadd.f32 0.0, %v4199
    %4201 = vmatprep.mubr.f32.mxu0 0.0
    %4202 = vmatmul.mubr.f32.gmra.mrb[0].mxu0 %v4075
    %v4203 = vpop.f32.mrb[0].mxu0
    %v4204 = vadd.f32 0.0, %v4203
    %v4205 = vpop.f32.mrb[0].mxu0
    %v4206 = vadd.f32 0.0, %v4205
    %4207 = vmatprep.mubr.f32.mxu0 0.0
    %4208 = vmatmul.mubr.f32.gmra.mrb[0].mxu0 %v4077
    %v4209 = vpop.f32.mrb[0].mxu0
    %v4210 = vadd.f32 0.0, %v4209
    %v4211 = vpop.f32.mrb[0].mxu0
    %v4212 = vadd.f32 0.0, %v4211
    %4213 = vmatprep.mubr.f32.mxu0 0.0
    %4214 = vmatmul.mubr.f32.gmra.mrb[0].mxu0 %v4079
    %v4215 = vpop.f32.mrb[0].mxu0
    %v4216 = vadd.f32 0.0, %v4215
    %v4217 = vpop.f32.mrb[0].mxu0
    %v4218 = vadd.f32 0.0, %v4217
    %4219 = vmatprep.mubr.f32.mxu0 0.0
    %4220 = vmatmul.mubr.f32.gmra.mrb[0].mxu0 %v4081
    %v4221 = vpop.f32.mrb[0].mxu0
    %v4222 = vadd.f32 0.0, %v4221
    %v4223 = vpop.f32.mrb[0].mxu0
    %v4224 = vadd.f32 0.0, %v4223
    %4225 = vmatprep.mubr.f32.mxu0 0.0
    %4226 = vmatmul.mubr.f32.gmra.mrb[0].mxu0 %v4083
    %v4227 = vpop.f32.mrb[0].mxu0
    %v4228 = vadd.f32 0.0, %v4227
    %v4229 = vpop.f32.mrb[0].mxu0
    %v4230 = vadd.f32 0.0, %v4229
    %4231 = vmatprep.mubr.f32.mxu0 0.0
    %4232 = vmatmul.mubr.f32.gmra.mrb[0].mxu0 %v4085
    %v4233 = vpop.f32.mrb[0].mxu0
    %v4234 = vadd.f32 0.0, %v4233
    %v4235 = vpop.f32.mrb[0].mxu0
    %v4236 = vadd.f32 0.0, %v4235
    %4237 = vmatprep.mubr.f32.mxu0 0.0
    %4238 = vmatmul.mubr.f32.gmra.mrb[0].mxu0 %v4087
    %v4239 = vpop.f32.mrb[0].mxu0
    %v4240 = vadd.f32 0.0, %v4239
    %v4241 = vpop.f32.mrb[0].mxu0
    %v4242 = vadd.f32 0.0, %v4241
    %4243 = vdwg.mxu0
    %v4244 = vadd.f32 %v3982, %v4162
    %v4245 = vadd.f32 %v3983, %v4164
    %v4246 = vadd.f32 %v3984, %v4168
    %v4247 = vadd.f32 %v3985, %v4170
    %v4248 = vadd.f32 %v3986, %v4174
    %v4249 = vadd.f32 %v3987, %v4176
    %v4250 = vadd.f32 %v3988, %v4180
    %v4251 = vadd.f32 %v3989, %v4182
    %v4252 = vadd.f32 %v3990, %v4186
    %v4253 = vadd.f32 %v3991, %v4188
    %v4254 = vadd.f32 %v3992, %v4192
    %v4255 = vadd.f32 %v3993, %v4194
    %v4256 = vadd.f32 %v3994, %v4198
    %v4257 = vadd.f32 %v3995, %v4200
    %v4258 = vadd.f32 %v3996, %v4204
    %v4259 = vadd.f32 %v3997, %v4206
    %v4260 = vadd.f32 %v3998, %v4210
    %v4261 = vadd.f32 %v3999, %v4212
    %v4262 = vadd.f32 %v4000, %v4216
    %v4263 = vadd.f32 %v4001, %v4218
    %v4264 = vadd.f32 %v4002, %v4222
    %v4265 = vadd.f32 %v4003, %v4224
    %v4266 = vadd.f32 %v4004, %v4228
    %v4267 = vadd.f32 %v4005, %v4230
    %v4268 = vadd.f32 %v4006, %v4234
    %v4269 = vadd.f32 %v4007, %v4236
    %v4270 = vadd.f32 %v4008, %v4240
    %v4271 = vadd.f32 %v4009, %v4242
    %s4272 = scalar_lea.vmem %s3, 704
    %v4273 = vld [vmem:[%s4272] sm:$0xff]
    %v4274 = vld [vmem:[%s4272 + $0x8] sm:$0xff]
    %v4275 = vld [vmem:[%s4272 + $0x10] sm:$0xff]
    %v4276 = vld [vmem:[%s4272 + $0x18] sm:$0xff]
    %v4277 = vld [vmem:[%s4272 + $0x20] sm:$0xff]
    %v4278 = vld [vmem:[%s4272 + $0x28] sm:$0xff]
    %v4279 = vld [vmem:[%s4272 + $0x30] sm:$0xff]
    %v4280 = vld [vmem:[%s4272 + $0x38] sm:$0xff]
    %v4281 = vld [vmem:[%s4272 + $0x40] sm:$0xff]
    %v4282 = vld [vmem:[%s4272 + $0x48] sm:$0xff]
    %v4283 = vld [vmem:[%s4272 + $0x50] sm:$0xff]
    %v4284 = vld [vmem:[%s4272 + $0x58] sm:$0xff]
    %v4285 = vld [vmem:[%s4272 + $0x60] sm:$0xff]
    %v4286 = vld [vmem:[%s4272 + $0x68] sm:$0xff]
    %v4287 = vld [vmem:[%s4272 + $0x70] sm:$0xff]
    %v4288 = vld [vmem:[%s4272 + $0x78] sm:$0xff]
    %v4289 = vld [vmem:[%s4272 + $0x80] sm:$0xff]
    %v4290 = vld [vmem:[%s4272 + $0x88] sm:$0xff]
    %v4291 = vld [vmem:[%s4272 + $0x90] sm:$0xff]
    %v4292 = vld [vmem:[%s4272 + $0x98] sm:$0xff]
    %v4293 = vld [vmem:[%s4272 + $0xa0] sm:$0xf]
    %v4294 = vld [vmem:[%s4272 + $0xa8] sm:$0xf]
    %v4295 = vrot.slane %v3280, 4
    %v4296 = vrot.slane %v3281, 4
    %v4297 = vsel %vm2522, %v4295, %v4296
    %v4298 = vrot.slane %v3282, 4
    %v4299 = vsel %vm2522, %v4296, %v4298
    %v4300 = vrot.slane %v3283, 4
    %v4301 = vsel %vm2522, %v4298, %v4300
    %v4302 = vrot.slane %v3284, 4
    %v4303 = vsel %vm2522, %v4300, %v4302
    %v4304 = vrot.slane %v3285, 4
    %v4305 = vsel %vm2522, %v4302, %v4304
    %v4306 = vrot.slane %v3286, 4
    %v4307 = vsel %vm2522, %v4304, %v4306
    %v4308 = vrot.slane %v3287, 4
    %v4309 = vsel %vm2522, %v4306, %v4308
    %v4310 = vrot.slane %v3288, 4
    %v4311 = vsel %vm2522, %v4308, %v4310
    %v4312 = vrot.slane %v3289, 4
    %v4313 = vsel %vm2522, %v4310, %v4312
    %v4314 = vrot.slane %v3290, 4
    %v4315 = vsel %vm2522, %v4312, %v4314
    %v4316 = vrot.slane %v3291, 4
    %v4317 = vsel %vm2522, %v4314, %v4316
    %v4318 = vrot.slane %v3292, 4
    %v4319 = vsel %vm2522, %v4316, %v4318
    %v4320 = vrot.slane %v3293, 4
    %v4321 = vsel %vm2522, %v4318, %v4320
    %v4322 = vsel %vm3381, %v4297, 0
    %v4324 = vsel %vm3381, %v4299, 0
    %v4326 = vsel %vm3381, %v4301, 0
    %v4328 = vsel %vm3381, %v4303, 0
    %v4330 = vsel %vm3381, %v4305, 0
    %v4332 = vsel %vm3381, %v4307, 0
    %v4334 = vsel %vm3381, %v4309, 0
    %v4336 = vsel %vm3381, %v4311, 0
    %v4338 = vsel %vm3381, %v4313, 0
    %v4340 = vsel %vm3381, %v4315, 0
    %v4342 = vsel %vm3381, %v4317, 0
    %v4344 = vsel %vm3381, %v4319, 0
    %v4346 = vsel %vm3381, %v4321, 0
    %v4348 = vsel %vm3381, %v4320, 0
    %v4351 = vsel %vm2522, %v4293, 0
    %v4354 = vsel %vm2522, %v4294, 0
    %4356 = vmatprep.subr.mxu0 %v4274
    %4357 = vmatpush1.msra.mxu0 %v4273
    %4358 = vmatprep.subr.mxu0 %v4276
    %4359 = vmatpush1.msra.mxu0 %v4275
    %4360 = vmatprep.subr.mxu0 %v4278
    %4361 = vmatpush1.msra.mxu0 %v4277
    %4362 = vmatprep.subr.mxu0 %v4280
    %4363 = vmatpush1.msra.mxu0 %v4279
    %4364 = vmatprep.subr.mxu0 %v4282
    %4365 = vmatpush1.msra.mxu0 %v4281
    %4366 = vmatprep.subr.mxu0 %v4284
    %4367 = vmatpush1.msra.mxu0 %v4283
    %4368 = vmatprep.subr.mxu0 %v4286
    %4369 = vmatpush1.msra.mxu0 %v4285
    %4370 = vmatprep.subr.mxu0 %v4288
    %4371 = vmatpush1.msra.mxu0 %v4287
    %4372 = vmatprep.subr.mxu0 %v4290
    %4373 = vmatpush1.msra.mxu0 %v4289
    %4374 = vmatprep.subr.mxu0 %v4292
    %4375 = vmatpush1.msra.mxu0 %v4291
    %4376 = vmatprep.subr.mxu0 %v4354
    %4377 = vmatpush1.msra.mxu0 %v4351
    %4378 = vmatprep.subr.mxu0 0.0
    %4379 = vmatpush1.msra.mxu0 0.0
    %4380 = vmatprep.subr.mxu0 0.0
    %4381 = vmatpush1.msra.mxu0 0.0
    %4382 = vmatprep.subr.mxu0 0.0
    %4383 = vmatpush1.msra.mxu0 0.0
    %4384 = vmatprep.subr.mxu0 0.0
    %4385 = vmatpush1.msra.mxu0 0.0
    %4386 = vmatprep.subr.mxu0 0.0
    %4387 = vmatpush1.msra.mxu0 0.0
    %4388 = vmatprep.subr.mxu0 0.0
    %4389 = vmatpush1.msra.mxu0 0.0
    %4390 = vmatprep.subr.mxu0 0.0
    %4391 = vmatpush1.msra.mxu0 0.0
    %4392 = vmatprep.subr.mxu0 0.0
    %4393 = vmatpush1.msra.mxu0 0.0
    %4394 = vmatprep.subr.mxu0 0.0
    %4395 = vmatpush1.msra.mxu0 0.0
    %4396 = vmatprep.subr.mxu0 0.0
    %4397 = vmatpush1.msra.mxu0 0.0
    %4398 = vmatprep.subr.mxu0 0.0
    %4399 = vmatpush1.msra.mxu0 0.0
    %4400 = vmatprep.subr.mxu0 0.0
    %4401 = vmatpush1.msra.mxu0 0.0
    %4402 = vmatprep.subr.mxu0 0.0
    %4403 = vmatpush1.msra.mxu0 0.0
    %4404 = vmatprep.subr.mxu0 0.0
    %4405 = vmatpush1.msra.mxu0 0.0
    %4406 = vmatprep.subr.mxu0 0.0
    %4407 = vmatpush1.msra.mxu0 0.0
    %4408 = vmatprep.subr.mxu0 0.0
    %4409 = vmatpush1.msra.mxu0 0.0
    %4410 = vmatprep.subr.mxu0 0.0
    %4411 = vmatpush1.msra.mxu0 0.0
    %4412 = vmatprep.subr.mxu0 0.0
    %4413 = vmatpush1.msra.mxu0 0.0
    %4414 = vmatprep.subr.mxu0 0.0
    %4415 = vmatpush1.msra.mxu0 0.0
    %4416 = vmatprep.subr.mxu0 0.0
    %4417 = vmatpush1.msra.mxu0 0.0
    %4418 = vmatprep.subr.mxu0 0.0
    %4419 = vmatpush1.msra.mxu0 0.0
    %4420 = vmatprep.mubr.f32.mxu0 0.0
    %4421 = vmatmul.mubr.f32.gmra.mrb[0].mxu0 %v4322
    %v4422 = vpop.f32.mrb[0].mxu0
    %v4423 = vadd.f32 0.0, %v4422
    %v4424 = vpop.f32.mrb[0].mxu0
    %v4425 = vadd.f32 0.0, %v4424
    %4426 = vmatprep.mubr.f32.mxu0 0.0
    %4427 = vmatmul.mubr.f32.gmra.mrb[0].mxu0 %v4324
    %v4428 = vpop.f32.mrb[0].mxu0
    %v4429 = vadd.f32 0.0, %v4428
    %v4430 = vpop.f32.mrb[0].mxu0
    %v4431 = vadd.f32 0.0, %v4430
    %4432 = vmatprep.mubr.f32.mxu0 0.0
    %4433 = vmatmul.mubr.f32.gmra.mrb[0].mxu0 %v4326
    %v4434 = vpop.f32.mrb[0].mxu0
    %v4435 = vadd.f32 0.0, %v4434
    %v4436 = vpop.f32.mrb[0].mxu0
    %v4437 = vadd.f32 0.0, %v4436
    %4438 = vmatprep.mubr.f32.mxu0 0.0
    %4439 = vmatmul.mubr.f32.gmra.mrb[0].mxu0 %v4328
    %v4440 = vpop.f32.mrb[0].mxu0
    %v4441 = vadd.f32 0.0, %v4440
    %v4442 = vpop.f32.mrb[0].mxu0
    %v4443 = vadd.f32 0.0, %v4442
    %4444 = vmatprep.mubr.f32.mxu0 0.0
    %4445 = vmatmul.mubr.f32.gmra.mrb[0].mxu0 %v4330
    %v4446 = vpop.f32.mrb[0].mxu0
    %v4447 = vadd.f32 0.0, %v4446
    %v4448 = vpop.f32.mrb[0].mxu0
    %v4449 = vadd.f32 0.0, %v4448
    %4450 = vmatprep.mubr.f32.mxu0 0.0
    %4451 = vmatmul.mubr.f32.gmra.mrb[0].mxu0 %v4332
    %v4452 = vpop.f32.mrb[0].mxu0
    %v4453 = vadd.f32 0.0, %v4452
    %v4454 = vpop.f32.mrb[0].mxu0
    %v4455 = vadd.f32 0.0, %v4454
    %4456 = vmatprep.mubr.f32.mxu0 0.0
    %4457 = vmatmul.mubr.f32.gmra.mrb[0].mxu0 %v4334
    %v4458 = vpop.f32.mrb[0].mxu0
    %v4459 = vadd.f32 0.0, %v4458
    %v4460 = vpop.f32.mrb[0].mxu0
    %v4461 = vadd.f32 0.0, %v4460
    %4462 = vmatprep.mubr.f32.mxu0 0.0
    %4463 = vmatmul.mubr.f32.gmra.mrb[0].mxu0 %v4336
    %v4464 = vpop.f32.mrb[0].mxu0
    %v4465 = vadd.f32 0.0, %v4464
    %v4466 = vpop.f32.mrb[0].mxu0
    %v4467 = vadd.f32 0.0, %v4466
    %4468 = vmatprep.mubr.f32.mxu0 0.0
    %4469 = vmatmul.mubr.f32.gmra.mrb[0].mxu0 %v4338
    %v4470 = vpop.f32.mrb[0].mxu0
    %v4471 = vadd.f32 0.0, %v4470
    %v4472 = vpop.f32.mrb[0].mxu0
    %v4473 = vadd.f32 0.0, %v4472
    %4474 = vmatprep.mubr.f32.mxu0 0.0
    %4475 = vmatmul.mubr.f32.gmra.mrb[0].mxu0 %v4340
    %v4476 = vpop.f32.mrb[0].mxu0
    %v4477 = vadd.f32 0.0, %v4476
    %v4478 = vpop.f32.mrb[0].mxu0
    %v4479 = vadd.f32 0.0, %v4478
    %4480 = vmatprep.mubr.f32.mxu0 0.0
    %4481 = vmatmul.mubr.f32.gmra.mrb[0].mxu0 %v4342
    %v4482 = vpop.f32.mrb[0].mxu0
    %v4483 = vadd.f32 0.0, %v4482
    %v4484 = vpop.f32.mrb[0].mxu0
    %v4485 = vadd.f32 0.0, %v4484
    %4486 = vmatprep.mubr.f32.mxu0 0.0
    %4487 = vmatmul.mubr.f32.gmra.mrb[0].mxu0 %v4344
    %v4488 = vpop.f32.mrb[0].mxu0
    %v4489 = vadd.f32 0.0, %v4488
    %v4490 = vpop.f32.mrb[0].mxu0
    %v4491 = vadd.f32 0.0, %v4490
    %4492 = vmatprep.mubr.f32.mxu0 0.0
    %4493 = vmatmul.mubr.f32.gmra.mrb[0].mxu0 %v4346
    %v4494 = vpop.f32.mrb[0].mxu0
    %v4495 = vadd.f32 0.0, %v4494
    %v4496 = vpop.f32.mrb[0].mxu0
    %v4497 = vadd.f32 0.0, %v4496
    %4498 = vmatprep.mubr.f32.mxu0 0.0
    %4499 = vmatmul.mubr.f32.gmra.mrb[0].mxu0 %v4348
    %v4500 = vpop.f32.mrb[0].mxu0
    %v4501 = vadd.f32 0.0, %v4500
    %v4502 = vpop.f32.mrb[0].mxu0
    %v4503 = vadd.f32 0.0, %v4502
    %4504 = vdwg.mxu0
    %v4505 = vadd.f32 %v4244, %v4423
    %v4506 = vadd.f32 %v4245, %v4425
    %v4507 = vadd.f32 %v4246, %v4429
    %v4508 = vadd.f32 %v4247, %v4431
    %v4509 = vadd.f32 %v4248, %v4435
    %v4510 = vadd.f32 %v4249, %v4437
    %v4511 = vadd.f32 %v4250, %v4441
    %v4512 = vadd.f32 %v4251, %v4443
    %v4513 = vadd.f32 %v4252, %v4447
    %v4514 = vadd.f32 %v4253, %v4449
    %v4515 = vadd.f32 %v4254, %v4453
    %v4516 = vadd.f32 %v4255, %v4455
    %v4517 = vadd.f32 %v4256, %v4459
    %v4518 = vadd.f32 %v4257, %v4461
    %v4519 = vadd.f32 %v4258, %v4465
    %v4520 = vadd.f32 %v4259, %v4467
    %v4521 = vadd.f32 %v4260, %v4471
    %v4522 = vadd.f32 %v4261, %v4473
    %v4523 = vadd.f32 %v4262, %v4477
    %v4524 = vadd.f32 %v4263, %v4479
    %v4525 = vadd.f32 %v4264, %v4483
    %v4526 = vadd.f32 %v4265, %v4485
    %v4527 = vadd.f32 %v4266, %v4489
    %v4528 = vadd.f32 %v4267, %v4491
    %v4529 = vadd.f32 %v4268, %v4495
    %v4530 = vadd.f32 %v4269, %v4497
    %v4531 = vadd.f32 %v4270, %v4501
    %v4532 = vadd.f32 %v4271, %v4503
    %v4533 = vld [vmem:[%s4] sm:$0x3]
    %v4535 = vlaneseq
    %v4536 = vshrl.u32 %v4535, 7
    %v4537 = vsub.s32 0, %v4536
    %v4538 = vrot.slane %v4533, %v4537
    %v4539 = vlaneseq
    %v4540 = vshrl.u32 %v4539, 7
    %v4541 = vsub.s32 1, %v4540
    %v4542 = vrot.slane %v4533, %v4541
    %v4545 = vadd.f32 %v4505, %v4538
    %v4546 = vadd.f32 %v4506, %v4542
    %v4547 = vadd.f32 %v4507, %v4538
    %v4548 = vadd.f32 %v4508, %v4542
    %v4549 = vadd.f32 %v4509, %v4538
    %v4550 = vadd.f32 %v4510, %v4542
    %v4551 = vadd.f32 %v4511, %v4538
    %v4552 = vadd.f32 %v4512, %v4542
    %v4553 = vadd.f32 %v4513, %v4538
    %v4554 = vadd.f32 %v4514, %v4542
    %v4555 = vadd.f32 %v4515, %v4538
    %v4556 = vadd.f32 %v4516, %v4542
    %v4557 = vadd.f32 %v4517, %v4538
    %v4558 = vadd.f32 %v4518, %v4542
    %v4559 = vadd.f32 %v4519, %v4538
    %v4560 = vadd.f32 %v4520, %v4542
    %v4561 = vadd.f32 %v4521, %v4538
    %v4562 = vadd.f32 %v4522, %v4542
    %v4563 = vadd.f32 %v4523, %v4538
    %v4564 = vadd.f32 %v4524, %v4542
    %v4565 = vadd.f32 %v4525, %v4538
    %v4566 = vadd.f32 %v4526, %v4542
    %v4567 = vadd.f32 %v4527, %v4538
    %v4568 = vadd.f32 %v4528, %v4542
    %v4569 = vadd.f32 %v4529, %v4538
    %v4570 = vadd.f32 %v4530, %v4542
    %v4571 = vadd.f32 %v4531, %v4538
    %v4572 = vadd.f32 %v4532, %v4542
    %v4573 = vtanh.pop %v4545
    %v4574 = vtanh.pop %v4546
    %v4575 = vtanh.pop %v4547
    %v4576 = vtanh.pop %v4548
    %v4577 = vtanh.pop %v4549
    %v4578 = vtanh.pop %v4550
    %v4579 = vtanh.pop %v4551
    %v4580 = vtanh.pop %v4552
    %v4581 = vtanh.pop %v4553
    %v4582 = vtanh.pop %v4554
    %v4583 = vtanh.pop %v4555
    %v4584 = vtanh.pop %v4556
    %v4585 = vtanh.pop %v4557
    %v4586 = vtanh.pop %v4558
    %v4587 = vtanh.pop %v4559
    %v4588 = vtanh.pop %v4560
    %v4589 = vtanh.pop %v4561
    %v4590 = vtanh.pop %v4562
    %v4591 = vtanh.pop %v4563
    %v4592 = vtanh.pop %v4564
    %v4593 = vtanh.pop %v4565
    %v4594 = vtanh.pop %v4566
    %v4595 = vtanh.pop %v4567
    %v4596 = vtanh.pop %v4568
    %v4597 = vtanh.pop %v4569
    %v4598 = vtanh.pop %v4570
    %v4599 = vtanh.pop %v4571
    %v4600 = vtanh.pop %v4572
    %v4601 = vld [vmem:[%s9] sm:$0xff]
    %v4602 = vld [vmem:[%s9 + $0x8] sm:$0xff]
    %v4603 = vld [vmem:[%s9 + $0x10] sm:$0xff]
    %v4604 = vld [vmem:[%s9 + $0x18] sm:$0xff]
    %v4605 = vld [vmem:[%s9 + $0x20] sm:$0xff]
    %vm4606 = vcmask 883712
    %v4608 = vsel %vm4606, %v4601, 0
    %v4611 = vsel %vm4606, %v4602, 0
    %v4614 = vsel %vm4606, %v4603, 0
    %v4617 = vsel %vm4606, %v4604, 0
    %v4620 = vsel %vm4606, %v4605, 0
    %v4623 = vsel %vm2522, %v4599, 0
    %v4626 = vsel %vm2522, %v4600, 0
    %4628 = vmatprep.subr.mxu0 %v4574
    %4629 = vmatpush1.msra.mxu0 %v4573
    %4630 = vmatprep.subr.mxu0 %v4576
    %4631 = vmatpush1.msra.mxu0 %v4575
    %4632 = vmatprep.subr.mxu0 %v4578
    %4633 = vmatpush1.msra.mxu0 %v4577
    %4634 = vmatprep.subr.mxu0 %v4580
    %4635 = vmatpush1.msra.mxu0 %v4579
    %4636 = vmatprep.subr.mxu0 %v4582
    %4637 = vmatpush1.msra.mxu0 %v4581
    %4638 = vmatprep.subr.mxu0 %v4584
    %4639 = vmatpush1.msra.mxu0 %v4583
    %4640 = vmatprep.subr.mxu0 %v4586
    %4641 = vmatpush1.msra.mxu0 %v4585
    %4642 = vmatprep.subr.mxu0 %v4588
    %4643 = vmatpush1.msra.mxu0 %v4587
    %4644 = vmatprep.subr.mxu0 %v4590
    %4645 = vmatpush1.msra.mxu0 %v4589
    %4646 = vmatprep.subr.mxu0 %v4592
    %4647 = vmatpush1.msra.mxu0 %v4591
    %4648 = vmatprep.subr.mxu0 %v4594
    %4649 = vmatpush1.msra.mxu0 %v4593
    %4650 = vmatprep.subr.mxu0 %v4596
    %4651 = vmatpush1.msra.mxu0 %v4595
    %4652 = vmatprep.subr.mxu0 %v4598
    %4653 = vmatpush1.msra.mxu0 %v4597
    %4654 = vmatprep.subr.mxu0 %v4626
    %4655 = vmatpush1.msra.mxu0 %v4623
    %4656 = vmatprep.subr.mxu0 0.0
    %4657 = vmatpush1.msra.mxu0 0.0
    %4658 = vmatprep.subr.mxu0 0.0
    %4659 = vmatpush1.msra.mxu0 0.0
    %4660 = vmatprep.subr.mxu0 0.0
    %4661 = vmatpush1.msra.mxu0 0.0
    %4662 = vmatprep.subr.mxu0 0.0
    %4663 = vmatpush1.msra.mxu0 0.0
    %4664 = vmatprep.subr.mxu0 0.0
    %4665 = vmatpush1.msra.mxu0 0.0
    %4666 = vmatprep.subr.mxu0 0.0
    %4667 = vmatpush1.msra.mxu0 0.0
    %4668 = vmatprep.subr.mxu0 0.0
    %4669 = vmatpush1.msra.mxu0 0.0
    %4670 = vmatprep.subr.mxu0 0.0
    %4671 = vmatpush1.msra.mxu0 0.0
    %4672 = vmatprep.subr.mxu0 0.0
    %4673 = vmatpush1.msra.mxu0 0.0
    %4674 = vmatprep.subr.mxu0 0.0
    %4675 = vmatpush1.msra.mxu0 0.0
    %4676 = vmatprep.subr.mxu0 0.0
    %4677 = vmatpush1.msra.mxu0 0.0
    %4678 = vmatprep.subr.mxu0 0.0
    %4679 = vmatpush1.msra.mxu0 0.0
    %4680 = vmatprep.subr.mxu0 0.0
    %4681 = vmatpush1.msra.mxu0 0.0
    %4682 = vmatprep.subr.mxu0 0.0
    %4683 = vmatpush1.msra.mxu0 0.0
    %4684 = vmatprep.subr.mxu0 0.0
    %4685 = vmatpush1.msra.mxu0 0.0
    %4686 = vmatprep.subr.mxu0 0.0
    %4687 = vmatpush1.msra.mxu0 0.0
    %4688 = vmatprep.subr.mxu0 0.0
    %4689 = vmatpush1.msra.mxu0 0.0
    %4690 = vmatprep.subr.mxu0 0.0
    %4691 = vmatpush1.msra.mxu0 0.0
    %4692 = vmatprep.mubr.f32.mxu0 0.0
    %4693 = vmatmul.mubr.f32.gmra.mrb[0].mxu0 %v4608
    %v4694 = vpop.f32.mrb[0].mxu0
    %v4695 = vadd.f32 0.0, %v4694
    %v4696 = vpop.f32.mrb[0].mxu0
    %v4697 = vadd.f32 0.0, %v4696
    %4698 = vmatprep.mubr.f32.mxu0 0.0
    %4699 = vmatmul.mubr.f32.gmra.mrb[0].mxu0 %v4611
    %v4700 = vpop.f32.mrb[0].mxu0
    %v4701 = vadd.f32 0.0, %v4700
    %v4702 = vpop.f32.mrb[0].mxu0
    %v4703 = vadd.f32 0.0, %v4702
    %4704 = vmatprep.mubr.f32.mxu0 0.0
    %4705 = vmatmul.mubr.f32.gmra.mrb[0].mxu0 %v4614
    %v4706 = vpop.f32.mrb[0].mxu0
    %v4707 = vadd.f32 0.0, %v4706
    %v4708 = vpop.f32.mrb[0].mxu0
    %v4709 = vadd.f32 0.0, %v4708
    %4710 = vmatprep.mubr.f32.mxu0 0.0
    %4711 = vmatmul.mubr.f32.gmra.mrb[0].mxu0 %v4617
    %v4712 = vpop.f32.mrb[0].mxu0
    %v4713 = vadd.f32 0.0, %v4712
    %v4714 = vpop.f32.mrb[0].mxu0
    %v4715 = vadd.f32 0.0, %v4714
    %4716 = vmatprep.mubr.f32.mxu0 0.0
    %4717 = vmatmul.mubr.f32.gmra.mrb[0].mxu0 %v4620
    %v4718 = vpop.f32.mrb[0].mxu0
    %v4719 = vadd.f32 0.0, %v4718
    %v4720 = vpop.f32.mrb[0].mxu0
    %v4721 = vadd.f32 0.0, %v4720
    %4722 = vdwg.mxu0
    %v4723 = vld [vmem:[%s10] sm:$0xff]
    %v4724 = vld [vmem:[%s10 + $0x8] sm:$0xff]
    %v4725 = vld [vmem:[%s10 + $0x10] sm:$0xff]
    %v4726 = vld [vmem:[%s10 + $0x18] sm:$0xff]
    %v4727 = vld [vmem:[%s10 + $0x20] sm:$0xff]
    %v4729 = vsel %vm4606, %v4723, 0
    %v4732 = vsel %vm4606, %v4724, 0
    %v4735 = vsel %vm4606, %v4725, 0
    %v4738 = vsel %vm4606, %v4726, 0
    %v4741 = vsel %vm4606, %v4727, 0
    %4743 = vmatprep.subr.mxu0 %v4574
    %4744 = vmatpush1.msra.mxu0 %v4573
    %4745 = vmatprep.subr.mxu0 %v4576
    %4746 = vmatpush1.msra.mxu0 %v4575
    %4747 = vmatprep.subr.mxu0 %v4578
    %4748 = vmatpush1.msra.mxu0 %v4577
    %4749 = vmatprep.subr.mxu0 %v4580
    %4750 = vmatpush1.msra.mxu0 %v4579
    %4751 = vmatprep.subr.mxu0 %v4582
    %4752 = vmatpush1.msra.mxu0 %v4581
    %4753 = vmatprep.subr.mxu0 %v4584
    %4754 = vmatpush1.msra.mxu0 %v4583
    %4755 = vmatprep.subr.mxu0 %v4586
    %4756 = vmatpush1.msra.mxu0 %v4585
    %4757 = vmatprep.subr.mxu0 %v4588
    %4758 = vmatpush1.msra.mxu0 %v4587
    %4759 = vmatprep.subr.mxu0 %v4590
    %4760 = vmatpush1.msra.mxu0 %v4589
    %4761 = vmatprep.subr.mxu0 %v4592
    %4762 = vmatpush1.msra.mxu0 %v4591
    %4763 = vmatprep.subr.mxu0 %v4594
    %4764 = vmatpush1.msra.mxu0 %v4593
    %4765 = vmatprep.subr.mxu0 %v4596
    %4766 = vmatpush1.msra.mxu0 %v4595
    %4767 = vmatprep.subr.mxu0 %v4598
    %4768 = vmatpush1.msra.mxu0 %v4597
    %4769 = vmatprep.subr.mxu0 %v4626
    %4770 = vmatpush1.msra.mxu0 %v4623
    %4771 = vmatprep.subr.mxu0 0.0
    %4772 = vmatpush1.msra.mxu0 0.0
    %4773 = vmatprep.subr.mxu0 0.0
    %4774 = vmatpush1.msra.mxu0 0.0
    %4775 = vmatprep.subr.mxu0 0.0
    %4776 = vmatpush1.msra.mxu0 0.0
    %4777 = vmatprep.subr.mxu0 0.0
    %4778 = vmatpush1.msra.mxu0 0.0
    %4779 = vmatprep.subr.mxu0 0.0
    %4780 = vmatpush1.msra.mxu0 0.0
    %4781 = vmatprep.subr.mxu0 0.0
    %4782 = vmatpush1.msra.mxu0 0.0
    %4783 = vmatprep.subr.mxu0 0.0
    %4784 = vmatpush1.msra.mxu0 0.0
    %4785 = vmatprep.subr.mxu0 0.0
    %4786 = vmatpush1.msra.mxu0 0.0
    %4787 = vmatprep.subr.mxu0 0.0
    %4788 = vmatpush1.msra.mxu0 0.0
    %4789 = vmatprep.subr.mxu0 0.0
    %4790 = vmatpush1.msra.mxu0 0.0
    %4791 = vmatprep.subr.mxu0 0.0
    %4792 = vmatpush1.msra.mxu0 0.0
    %4793 = vmatprep.subr.mxu0 0.0
    %4794 = vmatpush1.msra.mxu0 0.0
    %4795 = vmatprep.subr.mxu0 0.0
    %4796 = vmatpush1.msra.mxu0 0.0
    %4797 = vmatprep.subr.mxu0 0.0
    %4798 = vmatpush1.msra.mxu0 0.0
    %4799 = vmatprep.subr.mxu0 0.0
    %4800 = vmatpush1.msra.mxu0 0.0
    %4801 = vmatprep.subr.mxu0 0.0
    %4802 = vmatpush1.msra.mxu0 0.0
    %4803 = vmatprep.subr.mxu0 0.0
    %4804 = vmatpush1.msra.mxu0 0.0
    %4805 = vmatprep.subr.mxu0 0.0
    %4806 = vmatpush1.msra.mxu0 0.0
    %4807 = vmatprep.mubr.f32.mxu0 0.0
    %4808 = vmatmul.mubr.f32.gmra.mrb[0].mxu0 %v4729
    %v4809 = vpop.f32.mrb[0].mxu0
    %v4810 = vadd.f32 0.0, %v4809
    %v4811 = vpop.f32.mrb[0].mxu0
    %v4812 = vadd.f32 0.0, %v4811
    %4813 = vmatprep.mubr.f32.mxu0 0.0
    %4814 = vmatmul.mubr.f32.gmra.mrb[0].mxu0 %v4732
    %v4815 = vpop.f32.mrb[0].mxu0
    %v4816 = vadd.f32 0.0, %v4815
    %v4817 = vpop.f32.mrb[0].mxu0
    %v4818 = vadd.f32 0.0, %v4817
    %4819 = vmatprep.mubr.f32.mxu0 0.0
    %4820 = vmatmul.mubr.f32.gmra.mrb[0].mxu0 %v4735
    %v4821 = vpop.f32.mrb[0].mxu0
    %v4822 = vadd.f32 0.0, %v4821
    %v4823 = vpop.f32.mrb[0].mxu0
    %v4824 = vadd.f32 0.0, %v4823
    %4825 = vmatprep.mubr.f32.mxu0 0.0
    %4826 = vmatmul.mubr.f32.gmra.mrb[0].mxu0 %v4738
    %v4827 = vpop.f32.mrb[0].mxu0
    %v4828 = vadd.f32 0.0, %v4827
    %v4829 = vpop.f32.mrb[0].mxu0
    %v4830 = vadd.f32 0.0, %v4829
    %4831 = vmatprep.mubr.f32.mxu0 0.0
    %4832 = vmatmul.mubr.f32.gmra.mrb[0].mxu0 %v4741
    %v4833 = vpop.f32.mrb[0].mxu0
    %v4834 = vadd.f32 0.0, %v4833
    %v4835 = vpop.f32.mrb[0].mxu0
    %v4836 = vadd.f32 0.0, %v4835
    %4837 = vdwg.mxu0
    %v4838 = vmax.f32 %v4695, %v4810
    %v4839 = vmax.f32 %v4697, %v4812
    %v4840 = vmax.f32 %v4701, %v4816
    %v4841 = vmax.f32 %v4703, %v4818
    %v4842 = vmax.f32 %v4707, %v4822
    %v4843 = vmax.f32 %v4709, %v4824
    %v4844 = vmax.f32 %v4713, %v4828
    %v4845 = vmax.f32 %v4715, %v4830
    %v4846 = vmax.f32 %v4719, %v4834
    %v4847 = vmax.f32 %v4721, %v4836
    %v4848 = vld [vmem:[%s11] sm:$0xff]
    %v4849 = vld [vmem:[%s11 + $0x8] sm:$0xff]
    %v4850 = vld [vmem:[%s11 + $0x10] sm:$0xff]
    %v4851 = vld [vmem:[%s11 + $0x18] sm:$0xff]
    %v4852 = vld [vmem:[%s11 + $0x20] sm:$0xff]
    %v4853 = vld [vmem:[%s11 + $0x28] sm:$0xff]
    %v4854 = vld [vmem:[%s11 + $0x30] sm:$0xff]
    %v4855 = vld [vmem:[%s11 + $0x38] sm:$0xff]
    %v4856 = vld [vmem:[%s11 + $0x40] sm:$0xff]
    %v4857 = vld [vmem:[%s11 + $0x48] sm:$0xff]
    %v4858 = vld [vmem:[%s11 + $0x50] sm:$0xff]
    %v4859 = vld [vmem:[%s11 + $0x58] sm:$0xff]
    %v4860 = vld [vmem:[%s11 + $0x60] sm:$0xff]
    %v4861 = vld [vmem:[%s11 + $0x68] sm:$0xff]
    %v4862 = vld [vmem:[%s11 + $0x70] sm:$0xff]
    %v4863 = vld [vmem:[%s11 + $0x78] sm:$0xff]
    %v4864 = vld [vmem:[%s11 + $0x80] sm:$0xff]
    %v4865 = vld [vmem:[%s11 + $0x88] sm:$0xff]
    %v4866 = vld [vmem:[%s11 + $0x90] sm:$0xff]
    %v4867 = vld [vmem:[%s11 + $0x98] sm:$0xff]
    %vm4868 = vcmask 261120
    %v4870 = vsel %vm4868, %v4839, 0
    %v4873 = vsel %vm4868, %v4841, 0
    %v4876 = vsel %vm4868, %v4843, 0
    %v4879 = vsel %vm4868, %v4845, 0
    %v4882 = vsel %vm4868, %v4847, 0
    %4884 = vmatprep.subr.mxu0 0.0
    %4885 = vmatpush1.msra.mxu0 %v4848
    %4886 = vmatprep.subr.mxu0 0.0
    %4887 = vmatpush1.msra.mxu0 %v4849
    %4888 = vmatprep.subr.mxu0 0.0
    %4889 = vmatpush1.msra.mxu0 %v4850
    %4890 = vmatprep.subr.mxu0 0.0
    %4891 = vmatpush1.msra.mxu0 %v4851
    %4892 = vmatprep.subr.mxu0 0.0
    %4893 = vmatpush1.msra.mxu0 %v4852
    %4894 = vmatprep.subr.mxu0 0.0
    %4895 = vmatpush1.msra.mxu0 %v4853
    %4896 = vmatprep.subr.mxu0 0.0
    %4897 = vmatpush1.msra.mxu0 %v4854
    %4898 = vmatprep.subr.mxu0 0.0
    %4899 = vmatpush1.msra.mxu0 %v4855
    %4900 = vmatprep.subr.mxu0 0.0
    %4901 = vmatpush1.msra.mxu0 %v4856
    %4902 = vmatprep.subr.mxu0 0.0
    %4903 = vmatpush1.msra.mxu0 %v4857
    %4904 = vmatprep.subr.mxu0 0.0
    %4905 = vmatpush1.msra.mxu0 %v4858
    %4906 = vmatprep.subr.mxu0 0.0
    %4907 = vmatpush1.msra.mxu0 %v4859
    %4908 = vmatprep.subr.mxu0 0.0
    %4909 = vmatpush1.msra.mxu0 %v4860
    %4910 = vmatprep.subr.mxu0 0.0
    %4911 = vmatpush1.msra.mxu0 %v4861
    %4912 = vmatprep.subr.mxu0 0.0
    %4913 = vmatpush1.msra.mxu0 %v4862
    %4914 = vmatprep.subr.mxu0 0.0
    %4915 = vmatpush1.msra.mxu0 %v4863
    %4916 = vmatprep.subr.mxu0 0.0
    %4917 = vmatpush1.msra.mxu0 %v4864
    %4918 = vmatprep.subr.mxu0 0.0
    %4919 = vmatpush1.msra.mxu0 %v4865
    %4920 = vmatprep.subr.mxu0 0.0
    %4921 = vmatpush1.msra.mxu0 %v4866
    %4922 = vmatprep.subr.mxu0 0.0
    %4923 = vmatpush1.msra.mxu0 %v4867
    %4924 = vmatprep.subr.mxu0 0.0
    %4925 = vmatpush1.msra.mxu0 0.0
    %4926 = vmatprep.subr.mxu0 0.0
    %4927 = vmatpush1.msra.mxu0 0.0
    %4928 = vmatprep.subr.mxu0 0.0
    %4929 = vmatpush1.msra.mxu0 0.0
    %4930 = vmatprep.subr.mxu0 0.0
    %4931 = vmatpush1.msra.mxu0 0.0
    %4932 = vmatprep.subr.mxu0 0.0
    %4933 = vmatpush1.msra.mxu0 0.0
    %4934 = vmatprep.subr.mxu0 0.0
    %4935 = vmatpush1.msra.mxu0 0.0
    %4936 = vmatprep.subr.mxu0 0.0
    %4937 = vmatpush1.msra.mxu0 0.0
    %4938 = vmatprep.subr.mxu0 0.0
    %4939 = vmatpush1.msra.mxu0 0.0
    %4940 = vmatprep.subr.mxu0 0.0
    %4941 = vmatpush1.msra.mxu0 0.0
    %4942 = vmatprep.subr.mxu0 0.0
    %4943 = vmatpush1.msra.mxu0 0.0
    %4944 = vmatprep.subr.mxu0 0.0
    %4945 = vmatpush1.msra.mxu0 0.0
    %4946 = vmatprep.subr.mxu0 0.0
    %4947 = vmatpush1.msra.mxu0 0.0
    %4948 = vmatprep.mubr.f32.mxu0 %v4870
    %4949 = vmatmul.mubr.f32.gmra.mrb[0].mxu0 %v4838
    %v4950 = vpop.f32.mrb[0].mxu0
    %v4951 = vadd.f32 0.0, %v4950
    %v4952 = vpop.f32.mrb[0].mxu0
    %4953 = vmatprep.mubr.f32.mxu0 %v4873
    %4954 = vmatmul.mubr.f32.gmra.mrb[0].mxu0 %v4840
    %v4955 = vpop.f32.mrb[0].mxu0
    %v4956 = vadd.f32 0.0, %v4955
    %v4957 = vpop.f32.mrb[0].mxu0
    %4958 = vmatprep.mubr.f32.mxu0 %v4876
    %4959 = vmatmul.mubr.f32.gmra.mrb[0].mxu0 %v4842
    %v4960 = vpop.f32.mrb[0].mxu0
    %v4961 = vadd.f32 0.0, %v4960
    %v4962 = vpop.f32.mrb[0].mxu0
    %4963 = vmatprep.mubr.f32.mxu0 %v4879
    %4964 = vmatmul.mubr.f32.gmra.mrb[0].mxu0 %v4844
    %v4965 = vpop.f32.mrb[0].mxu0
    %v4966 = vadd.f32 0.0, %v4965
    %v4967 = vpop.f32.mrb[0].mxu0
    %4968 = vmatprep.mubr.f32.mxu0 %v4882
    %4969 = vmatmul.mubr.f32.gmra.mrb[0].mxu0 %v4846
    %v4970 = vpop.f32.mrb[0].mxu0
    %v4971 = vadd.f32 0.0, %v4970
    %v4972 = vpop.f32.mrb[0].mxu0
    %4973 = vdwg.mxu0
    %v4974 = vld [vmem:[%s12] sm:$0xff]
    %v4975 = vld [vmem:[%s12 + $0x8] sm:$0xff]
    %v4976 = vld [vmem:[%s12 + $0x10] sm:$0xff]
    %v4977 = vld [vmem:[%s12 + $0x18] sm:$0xff]
    %v4978 = vld [vmem:[%s12 + $0x20] sm:$0xff]
    %v4979 = vld [vmem:[%s12 + $0x28] sm:$0xff]
    %v4980 = vld [vmem:[%s12 + $0x30] sm:$0xff]
    %v4981 = vld [vmem:[%s12 + $0x38] sm:$0xff]
    %v4982 = vld [vmem:[%s12 + $0x40] sm:$0xff]
    %v4983 = vld [vmem:[%s12 + $0x48] sm:$0xff]
    %v4984 = vld [vmem:[%s12 + $0x50] sm:$0xff]
    %v4985 = vld [vmem:[%s12 + $0x58] sm:$0xff]
    %v4986 = vld [vmem:[%s12 + $0x60] sm:$0xff]
    %v4987 = vld [vmem:[%s12 + $0x68] sm:$0xff]
    %v4988 = vld [vmem:[%s12 + $0x70] sm:$0xff]
    %v4989 = vld [vmem:[%s12 + $0x78] sm:$0xff]
    %v4990 = vld [vmem:[%s12 + $0x80] sm:$0xff]
    %v4991 = vld [vmem:[%s12 + $0x88] sm:$0xff]
    %v4992 = vld [vmem:[%s12 + $0x90] sm:$0xff]
    %v4993 = vld [vmem:[%s12 + $0x98] sm:$0xff]
    %4994 = vmatprep.subr.mxu0 0.0
    %4995 = vmatpush1.msra.mxu0 %v4974
    %4996 = vmatprep.subr.mxu0 0.0
    %4997 = vmatpush1.msra.mxu0 %v4975
    %4998 = vmatprep.subr.mxu0 0.0
    %4999 = vmatpush1.msra.mxu0 %v4976
    %5000 = vmatprep.subr.mxu0 0.0
    %5001 = vmatpush1.msra.mxu0 %v4977
    %5002 = vmatprep.subr.mxu0 0.0
    %5003 = vmatpush1.msra.mxu0 %v4978
    %5004 = vmatprep.subr.mxu0 0.0
    %5005 = vmatpush1.msra.mxu0 %v4979
    %5006 = vmatprep.subr.mxu0 0.0
    %5007 = vmatpush1.msra.mxu0 %v4980
    %5008 = vmatprep.subr.mxu0 0.0
    %5009 = vmatpush1.msra.mxu0 %v4981
    %5010 = vmatprep.subr.mxu0 0.0
    %5011 = vmatpush1.msra.mxu0 %v4982
    %5012 = vmatprep.subr.mxu0 0.0
    %5013 = vmatpush1.msra.mxu0 %v4983
    %5014 = vmatprep.subr.mxu0 0.0
    %5015 = vmatpush1.msra.mxu0 %v4984
    %5016 = vmatprep.subr.mxu0 0.0
    %5017 = vmatpush1.msra.mxu0 %v4985
    %5018 = vmatprep.subr.mxu0 0.0
    %5019 = vmatpush1.msra.mxu0 %v4986
    %5020 = vmatprep.subr.mxu0 0.0
    %5021 = vmatpush1.msra.mxu0 %v4987
    %5022 = vmatprep.subr.mxu0 0.0
    %5023 = vmatpush1.msra.mxu0 %v4988
    %5024 = vmatprep.subr.mxu0 0.0
    %5025 = vmatpush1.msra.mxu0 %v4989
    %5026 = vmatprep.subr.mxu0 0.0
    %5027 = vmatpush1.msra.mxu0 %v4990
    %5028 = vmatprep.subr.mxu0 0.0
    %5029 = vmatpush1.msra.mxu0 %v4991
    %5030 = vmatprep.subr.mxu0 0.0
    %5031 = vmatpush1.msra.mxu0 %v4992
    %5032 = vmatprep.subr.mxu0 0.0
    %5033 = vmatpush1.msra.mxu0 %v4993
    %5034 = vmatprep.subr.mxu0 0.0
    %5035 = vmatpush1.msra.mxu0 0.0
    %5036 = vmatprep.subr.mxu0 0.0
    %5037 = vmatpush1.msra.mxu0 0.0
    %5038 = vmatprep.subr.mxu0 0.0
    %5039 = vmatpush1.msra.mxu0 0.0
    %5040 = vmatprep.subr.mxu0 0.0
    %5041 = vmatpush1.msra.mxu0 0.0
    %5042 = vmatprep.subr.mxu0 0.0
    %5043 = vmatpush1.msra.mxu0 0.0
    %5044 = vmatprep.subr.mxu0 0.0
    %5045 = vmatpush1.msra.mxu0 0.0
    %5046 = vmatprep.subr.mxu0 0.0
    %5047 = vmatpush1.msra.mxu0 0.0
    %5048 = vmatprep.subr.mxu0 0.0
    %5049 = vmatpush1.msra.mxu0 0.0
    %5050 = vmatprep.subr.mxu0 0.0
    %5051 = vmatpush1.msra.mxu0 0.0
    %5052 = vmatprep.subr.mxu0 0.0
    %5053 = vmatpush1.msra.mxu0 0.0
    %5054 = vmatprep.subr.mxu0 0.0
    %5055 = vmatpush1.msra.mxu0 0.0
    %5056 = vmatprep.subr.mxu0 0.0
    %5057 = vmatpush1.msra.mxu0 0.0
    %5058 = vmatprep.mubr.f32.mxu0 %v4870
    %5059 = vmatmul.mubr.f32.gmra.mrb[0].mxu0 %v4838
    %v5060 = vpop.f32.mrb[0].mxu0
    %v5061 = vadd.f32 0.0, %v5060
    %v5062 = vpop.f32.mrb[0].mxu0
    %5063 = vmatprep.mubr.f32.mxu0 %v4873
    %5064 = vmatmul.mubr.f32.gmra.mrb[0].mxu0 %v4840
    %v5065 = vpop.f32.mrb[0].mxu0
    %v5066 = vadd.f32 0.0, %v5065
    %v5067 = vpop.f32.mrb[0].mxu0
    %5068 = vmatprep.mubr.f32.mxu0 %v4876
    %5069 = vmatmul.mubr.f32.gmra.mrb[0].mxu0 %v4842
    %v5070 = vpop.f32.mrb[0].mxu0
    %v5071 = vadd.f32 0.0, %v5070
    %v5072 = vpop.f32.mrb[0].mxu0
    %5073 = vmatprep.mubr.f32.mxu0 %v4879
    %5074 = vmatmul.mubr.f32.gmra.mrb[0].mxu0 %v4844
    %v5075 = vpop.f32.mrb[0].mxu0
    %v5076 = vadd.f32 0.0, %v5075
    %v5077 = vpop.f32.mrb[0].mxu0
    %5078 = vmatprep.mubr.f32.mxu0 %v4882
    %5079 = vmatmul.mubr.f32.gmra.mrb[0].mxu0 %v4846
    %v5080 = vpop.f32.mrb[0].mxu0
    %v5081 = vadd.f32 0.0, %v5080
    %v5082 = vpop.f32.mrb[0].mxu0
    %5083 = vdwg.mxu0
    %v5084 = vmax.f32 %v4951, %v5061
    %v5085 = vmax.f32 %v4956, %v5066
    %v5086 = vmax.f32 %v4961, %v5071
    %v5087 = vmax.f32 %v4966, %v5076
    %v5088 = vmax.f32 %v4971, %v5081
    %v5089 = vld [vmem:[%s13] sm:$0xff]
    %v5091 = vsel %vm2946, %v5089, 0
    %5093 = vmatprep.subr.mxu0 0.0
    %5094 = vmatpush1.msra.mxu0 %v5084
    %5095 = vmatprep.subr.mxu0 0.0
    %5096 = vmatpush1.msra.mxu0 %v5085
    %5097 = vmatprep.subr.mxu0 0.0
    %5098 = vmatpush1.msra.mxu0 %v5086
    %5099 = vmatprep.subr.mxu0 0.0
    %5100 = vmatpush1.msra.mxu0 %v5087
    %5101 = vmatprep.subr.mxu0 0.0
    %5102 = vmatpush1.msra.mxu0 %v5088
    %5103 = vmatprep.subr.mxu0 0.0
    %5104 = vmatpush1.msra.mxu0 0.0
    %5105 = vmatprep.subr.mxu0 0.0
    %5106 = vmatpush1.msra.mxu0 0.0
    %5107 = vmatprep.subr.mxu0 0.0
    %5108 = vmatpush1.msra.mxu0 0.0
    %5109 = vmatprep.subr.mxu0 0.0
    %5110 = vmatpush1.msra.mxu0 0.0
    %5111 = vmatprep.subr.mxu0 0.0
    %5112 = vmatpush1.msra.mxu0 0.0
    %5113 = vmatprep.subr.mxu0 0.0
    %5114 = vmatpush1.msra.mxu0 0.0
    %5115 = vmatprep.subr.mxu0 0.0
    %5116 = vmatpush1.msra.mxu0 0.0
    %5117 = vmatprep.subr.mxu0 0.0
    %5118 = vmatpush1.msra.mxu0 0.0
    %5119 = vmatprep.subr.mxu0 0.0
    %5120 = vmatpush1.msra.mxu0 0.0
    %5121 = vmatprep.subr.mxu0 0.0
    %5122 = vmatpush1.msra.mxu0 0.0
    %5123 = vmatprep.subr.mxu0 0.0
    %5124 = vmatpush1.msra.mxu0 0.0
    %5125 = vmatprep.subr.mxu0 0.0
    %5126 = vmatpush1.msra.mxu0 0.0
    %5127 = vmatprep.subr.mxu0 0.0
    %5128 = vmatpush1.msra.mxu0 0.0
    %5129 = vmatprep.subr.mxu0 0.0
    %5130 = vmatpush1.msra.mxu0 0.0
    %5131 = vmatprep.subr.mxu0 0.0
    %5132 = vmatpush1.msra.mxu0 0.0
    %5133 = vmatprep.subr.mxu0 0.0
    %5134 = vmatpush1.msra.mxu0 0.0
    %5135 = vmatprep.subr.mxu0 0.0
    %5136 = vmatpush1.msra.mxu0 0.0
    %5137 = vmatprep.subr.mxu0 0.0
    %5138 = vmatpush1.msra.mxu0 0.0
    %5139 = vmatprep.subr.mxu0 0.0
    %5140 = vmatpush1.msra.mxu0 0.0
    %5141 = vmatprep.subr.mxu0 0.0
    %5142 = vmatpush1.msra.mxu0 0.0
    %5143 = vmatprep.subr.mxu0 0.0
    %5144 = vmatpush1.msra.mxu0 0.0
    %5145 = vmatprep.subr.mxu0 0.0
    %5146 = vmatpush1.msra.mxu0 0.0
    %5147 = vmatprep.subr.mxu0 0.0
    %5148 = vmatpush1.msra.mxu0 0.0
    %5149 = vmatprep.subr.mxu0 0.0
    %5150 = vmatpush1.msra.mxu0 0.0
    %5151 = vmatprep.subr.mxu0 0.0
    %5152 = vmatpush1.msra.mxu0 0.0
    %5153 = vmatprep.subr.mxu0 0.0
    %5154 = vmatpush1.msra.mxu0 0.0
    %5155 = vmatprep.subr.mxu0 0.0
    %5156 = vmatpush1.msra.mxu0 0.0
    %5157 = vmatprep.mubr.f32.mxu0 0.0
    %5158 = vmatmul.mubr.f32.gmra.mrb[0].mxu0 %v5091
    %v5159 = vpop.f32.mrb[0].mxu0
    %v5160 = vadd.f32 0.0, %v5159
    %v5161 = vpop.f32.mrb[0].mxu0
    %5162 = vdwg.mxu0
    %v5163 = vld [vmem:[%s14] sm:$0xff]
    %v5164 = vld [vmem:[%s14 + $0x8] sm:$0xff]
    %v5165 = vld [vmem:[%s14 + $0x10] sm:$0xff]
    %v5166 = vld [vmem:[%s14 + $0x18] sm:$0xff]
    %v5167 = vld [vmem:[%s14 + $0x20] sm:$0xff]
    %v5168 = vld [vmem:[%s14 + $0x28] sm:$0xff]
    %v5169 = vld [vmem:[%s14 + $0x30] sm:$0xff]
    %v5170 = vld [vmem:[%s14 + $0x38] sm:$0xff]
    %v5171 = vld [vmem:[%s14 + $0x40] sm:$0xff]
    %v5172 = vld [vmem:[%s14 + $0x48] sm:$0xff]
    %s5173 = scalar_lea.vmem %s13, 8
    %v5174 = vld [vmem:[%s5173] sm:$0xff]
    %v5176 = vsel %vm2946, %v5174, 0
    %5178 = vmatprep.subr.mxu0 0.0
    %5179 = vmatpush1.msra.mxu0 %v5084
    %5180 = vmatprep.subr.mxu0 0.0
    %5181 = vmatpush1.msra.mxu0 %v5085
    %5182 = vmatprep.subr.mxu0 0.0
    %5183 = vmatpush1.msra.mxu0 %v5086
    %5184 = vmatprep.subr.mxu0 0.0
    %5185 = vmatpush1.msra.mxu0 %v5087
    %5186 = vmatprep.subr.mxu0 0.0
    %5187 = vmatpush1.msra.mxu0 %v5088
    %5188 = vmatprep.subr.mxu0 0.0
    %5189 = vmatpush1.msra.mxu0 0.0
    %5190 = vmatprep.subr.mxu0 0.0
    %5191 = vmatpush1.msra.mxu0 0.0
    %5192 = vmatprep.subr.mxu0 0.0
    %5193 = vmatpush1.msra.mxu0 0.0
    %5194 = vmatprep.subr.mxu0 0.0
    %5195 = vmatpush1.msra.mxu0 0.0
    %5196 = vmatprep.subr.mxu0 0.0
    %5197 = vmatpush1.msra.mxu0 0.0
    %5198 = vmatprep.subr.mxu0 0.0
    %5199 = vmatpush1.msra.mxu0 0.0
    %5200 = vmatprep.subr.mxu0 0.0
    %5201 = vmatpush1.msra.mxu0 0.0
    %5202 = vmatprep.subr.mxu0 0.0
    %5203 = vmatpush1.msra.mxu0 0.0
    %5204 = vmatprep.subr.mxu0 0.0
    %5205 = vmatpush1.msra.mxu0 0.0
    %5206 = vmatprep.subr.mxu0 0.0
    %5207 = vmatpush1.msra.mxu0 0.0
    %5208 = vmatprep.subr.mxu0 0.0
    %5209 = vmatpush1.msra.mxu0 0.0
    %5210 = vmatprep.subr.mxu0 0.0
    %5211 = vmatpush1.msra.mxu0 0.0
    %5212 = vmatprep.subr.mxu0 0.0
    %5213 = vmatpush1.msra.mxu0 0.0
    %5214 = vmatprep.subr.mxu0 0.0
    %5215 = vmatpush1.msra.mxu0 0.0
    %5216 = vmatprep.subr.mxu0 0.0
    %5217 = vmatpush1.msra.mxu0 0.0
    %5218 = vmatprep.subr.mxu0 0.0
    %5219 = vmatpush1.msra.mxu0 0.0
    %5220 = vmatprep.subr.mxu0 0.0
    %5221 = vmatpush1.msra.mxu0 0.0
    %5222 = vmatprep.subr.mxu0 0.0
    %5223 = vmatpush1.msra.mxu0 0.0
    %5224 = vmatprep.subr.mxu0 0.0
    %5225 = vmatpush1.msra.mxu0 0.0
    %5226 = vmatprep.subr.mxu0 0.0
    %5227 = vmatpush1.msra.mxu0 0.0
    %5228 = vmatprep.subr.mxu0 0.0
    %5229 = vmatpush1.msra.mxu0 0.0
    %5230 = vmatprep.subr.mxu0 0.0
    %5231 = vmatpush1.msra.mxu0 0.0
    %5232 = vmatprep.subr.mxu0 0.0
    %5233 = vmatpush1.msra.mxu0 0.0
    %5234 = vmatprep.subr.mxu0 0.0
    %5235 = vmatpush1.msra.mxu0 0.0
    %5236 = vmatprep.subr.mxu0 0.0
    %5237 = vmatpush1.msra.mxu0 0.0
    %5238 = vmatprep.subr.mxu0 0.0
    %5239 = vmatpush1.msra.mxu0 0.0
    %5240 = vmatprep.subr.mxu0 0.0
    %5241 = vmatpush1.msra.mxu0 0.0
    %5242 = vmatprep.mubr.f32.mxu0 0.0
    %5243 = vmatmul.mubr.f32.gmra.mrb[0].mxu0 %v5176
    %v5244 = vpop.f32.mrb[0].mxu0
    %v5245 = vadd.f32 0.0, %v5244
    %v5246 = vpop.f32.mrb[0].mxu0
    %5247 = vdwg.mxu0
    %s5248 = scalar_lea.vmem %s14, 80
    %v5249 = vld [vmem:[%s5248] sm:$0xff]
    %v5250 = vld [vmem:[%s5248 + $0x8] sm:$0xff]
    %v5251 = vld [vmem:[%s5248 + $0x10] sm:$0xff]
    %v5252 = vld [vmem:[%s5248 + $0x18] sm:$0xff]
    %v5253 = vld [vmem:[%s5248 + $0x20] sm:$0xff]
    %v5254 = vld [vmem:[%s5248 + $0x28] sm:$0xff]
    %v5255 = vld [vmem:[%s5248 + $0x30] sm:$0xff]
    %v5256 = vld [vmem:[%s5248 + $0x38] sm:$0xff]
    %v5257 = vld [vmem:[%s5248 + $0x40] sm:$0xff]
    %v5258 = vld [vmem:[%s5248 + $0x48] sm:$0xff]
    %vm5259 = vcmask 654336
    %v5261 = vsel %vm5259, %v5245, 0
    %5263 = vmatprep.subr.mxu0 0.0
    %5264 = vmatpush1.msra.mxu0 %v5249
    %5265 = vmatprep.subr.mxu0 0.0
    %5266 = vmatpush1.msra.mxu0 %v5250
    %5267 = vmatprep.subr.mxu0 0.0
    %5268 = vmatpush1.msra.mxu0 %v5251
    %5269 = vmatprep.subr.mxu0 0.0
    %5270 = vmatpush1.msra.mxu0 %v5252
    %5271 = vmatprep.subr.mxu0 0.0
    %5272 = vmatpush1.msra.mxu0 %v5253
    %5273 = vmatprep.subr.mxu0 0.0
    %5274 = vmatpush1.msra.mxu0 %v5254
    %5275 = vmatprep.subr.mxu0 0.0
    %5276 = vmatpush1.msra.mxu0 %v5255
    %5277 = vmatprep.subr.mxu0 0.0
    %5278 = vmatpush1.msra.mxu0 %v5256
    %5279 = vmatprep.subr.mxu0 0.0
    %5280 = vmatpush1.msra.mxu0 %v5257
    %5281 = vmatprep.subr.mxu0 0.0
    %5282 = vmatpush1.msra.mxu0 %v5258
    %5283 = vmatprep.subr.mxu0 0.0
    %5284 = vmatpush1.msra.mxu0 0.0
    %5285 = vmatprep.subr.mxu0 0.0
    %5286 = vmatpush1.msra.mxu0 0.0
    %5287 = vmatprep.subr.mxu0 0.0
    %5288 = vmatpush1.msra.mxu0 0.0
    %5289 = vmatprep.subr.mxu0 0.0
    %5290 = vmatpush1.msra.mxu0 0.0
    %5291 = vmatprep.subr.mxu0 0.0
    %5292 = vmatpush1.msra.mxu0 0.0
    %5293 = vmatprep.subr.mxu0 0.0
    %5294 = vmatpush1.msra.mxu0 0.0
    %5295 = vmatprep.subr.mxu0 0.0
    %5296 = vmatpush1.msra.mxu0 0.0
    %5297 = vmatprep.subr.mxu0 0.0
    %5298 = vmatpush1.msra.mxu0 0.0
    %5299 = vmatprep.subr.mxu0 0.0
    %5300 = vmatpush1.msra.mxu0 0.0
    %5301 = vmatprep.subr.mxu0 0.0
    %5302 = vmatpush1.msra.mxu0 0.0
    %5303 = vmatprep.subr.mxu0 0.0
    %5304 = vmatpush1.msra.mxu0 0.0
    %5305 = vmatprep.subr.mxu0 0.0
    %5306 = vmatpush1.msra.mxu0 0.0
    %5307 = vmatprep.subr.mxu0 0.0
    %5308 = vmatpush1.msra.mxu0 0.0
    %5309 = vmatprep.subr.mxu0 0.0
    %5310 = vmatpush1.msra.mxu0 0.0
    %5311 = vmatprep.subr.mxu0 0.0
    %5312 = vmatpush1.msra.mxu0 0.0
    %5313 = vmatprep.subr.mxu0 0.0
    %5314 = vmatpush1.msra.mxu0 0.0
    %5315 = vmatprep.subr.mxu0 0.0
    %5316 = vmatpush1.msra.mxu0 0.0
    %5317 = vmatprep.subr.mxu0 0.0
    %5318 = vmatpush1.msra.mxu0 0.0
    %5319 = vmatprep.subr.mxu0 0.0
    %5320 = vmatpush1.msra.mxu0 0.0
    %5321 = vmatprep.subr.mxu0 0.0
    %5322 = vmatpush1.msra.mxu0 0.0
    %5323 = vmatprep.subr.mxu0 0.0
    %5324 = vmatpush1.msra.mxu0 0.0
    %5325 = vmatprep.subr.mxu0 0.0
    %5326 = vmatpush1.msra.mxu0 0.0
    %5327 = vmatprep.mubr.f32.mxu0 0.0
    %5328 = vmatmul.mubr.f32.gmra.mrb[0].mxu0 %v5261
    %v5329 = vpop.f32.mrb[0].mxu0
    %v5330 = vadd.f32 0.0, %v5329
    %v5331 = vpop.f32.mrb[0].mxu0
    %5332 = vdwg.mxu0
    %v5334 = vsel %vm5259, %v5160, 0
    %5336 = vmatprep.subr.mxu0 0.0
    %5337 = vmatpush1.msra.mxu0 %v5163
    %5338 = vmatprep.subr.mxu0 0.0
    %5339 = vmatpush1.msra.mxu0 %v5164
    %5340 = vmatprep.subr.mxu0 0.0
    %5341 = vmatpush1.msra.mxu0 %v5165
    %5342 = vmatprep.subr.mxu0 0.0
    %5343 = vmatpush1.msra.mxu0 %v5166
    %5344 = vmatprep.subr.mxu0 0.0
    %5345 = vmatpush1.msra.mxu0 %v5167
    %5346 = vmatprep.subr.mxu0 0.0
    %5347 = vmatpush1.msra.mxu0 %v5168
    %5348 = vmatprep.subr.mxu0 0.0
    %5349 = vmatpush1.msra.mxu0 %v5169
    %5350 = vmatprep.subr.mxu0 0.0
    %5351 = vmatpush1.msra.mxu0 %v5170
    %5352 = vmatprep.subr.mxu0 0.0
    %5353 = vmatpush1.msra.mxu0 %v5171
    %5354 = vmatprep.subr.mxu0 0.0
    %5355 = vmatpush1.msra.mxu0 %v5172
    %5356 = vmatprep.subr.mxu0 0.0
    %5357 = vmatpush1.msra.mxu0 0.0
    %5358 = vmatprep.subr.mxu0 0.0
    %5359 = vmatpush1.msra.mxu0 0.0
    %5360 = vmatprep.subr.mxu0 0.0
    %5361 = vmatpush1.msra.mxu0 0.0
    %5362 = vmatprep.subr.mxu0 0.0
    %5363 = vmatpush1.msra.mxu0 0.0
    %5364 = vmatprep.subr.mxu0 0.0
    %5365 = vmatpush1.msra.mxu0 0.0
    %5366 = vmatprep.subr.mxu0 0.0
    %5367 = vmatpush1.msra.mxu0 0.0
    %5368 = vmatprep.subr.mxu0 0.0
    %5369 = vmatpush1.msra.mxu0 0.0
    %5370 = vmatprep.subr.mxu0 0.0
    %5371 = vmatpush1.msra.mxu0 0.0
    %5372 = vmatprep.subr.mxu0 0.0
    %5373 = vmatpush1.msra.mxu0 0.0
    %5374 = vmatprep.subr.mxu0 0.0
    %5375 = vmatpush1.msra.mxu0 0.0
    %5376 = vmatprep.subr.mxu0 0.0
    %5377 = vmatpush1.msra.mxu0 0.0
    %5378 = vmatprep.subr.mxu0 0.0
    %5379 = vmatpush1.msra.mxu0 0.0
    %5380 = vmatprep.subr.mxu0 0.0
    %5381 = vmatpush1.msra.mxu0 0.0
    %5382 = vmatprep.subr.mxu0 0.0
    %5383 = vmatpush1.msra.mxu0 0.0
    %5384 = vmatprep.subr.mxu0 0.0
    %5385 = vmatpush1.msra.mxu0 0.0
    %5386 = vmatprep.subr.mxu0 0.0
    %5387 = vmatpush1.msra.mxu0 0.0
    %5388 = vmatprep.subr.mxu0 0.0
    %5389 = vmatpush1.msra.mxu0 0.0
    %5390 = vmatprep.subr.mxu0 0.0
    %5391 = vmatpush1.msra.mxu0 0.0
    %5392 = vmatprep.subr.mxu0 0.0
    %5393 = vmatpush1.msra.mxu0 0.0
    %5394 = vmatprep.subr.mxu0 0.0
    %5395 = vmatpush1.msra.mxu0 0.0
    %5396 = vmatprep.subr.mxu0 0.0
    %5397 = vmatpush1.msra.mxu0 0.0
    %5398 = vmatprep.subr.mxu0 0.0
    %5399 = vmatpush1.msra.mxu0 0.0
    %5400 = vmatprep.mubr.f32.mxu0 0.0
    %5401 = vmatmul.mubr.f32.gmra.mrb[0].mxu0 %v5334
    %v5402 = vpop.f32.mrb[0].mxu0
    %v5403 = vadd.f32 %v5330, %v5402
    %v5404 = vpop.f32.mrb[0].mxu0
    %5405 = vdwg.mxu0
    %s5406 = scalar_lea.vmem %s13, 16
    %v5407 = vld [vmem:[%s5406] sm:$0xff]
    %v5409 = vsel %vm2946, %v5407, 0
    %5411 = vmatprep.subr.mxu0 0.0
    %5412 = vmatpush1.msra.mxu0 %v5084
    %5413 = vmatprep.subr.mxu0 0.0
    %5414 = vmatpush1.msra.mxu0 %v5085
    %5415 = vmatprep.subr.mxu0 0.0
    %5416 = vmatpush1.msra.mxu0 %v5086
    %5417 = vmatprep.subr.mxu0 0.0
    %5418 = vmatpush1.msra.mxu0 %v5087
    %5419 = vmatprep.subr.mxu0 0.0
    %5420 = vmatpush1.msra.mxu0 %v5088
    %5421 = vmatprep.subr.mxu0 0.0
    %5422 = vmatpush1.msra.mxu0 0.0
    %5423 = vmatprep.subr.mxu0 0.0
    %5424 = vmatpush1.msra.mxu0 0.0
    %5425 = vmatprep.subr.mxu0 0.0
    %5426 = vmatpush1.msra.mxu0 0.0
    %5427 = vmatprep.subr.mxu0 0.0
    %5428 = vmatpush1.msra.mxu0 0.0
    %5429 = vmatprep.subr.mxu0 0.0
    %5430 = vmatpush1.msra.mxu0 0.0
    %5431 = vmatprep.subr.mxu0 0.0
    %5432 = vmatpush1.msra.mxu0 0.0
    %5433 = vmatprep.subr.mxu0 0.0
    %5434 = vmatpush1.msra.mxu0 0.0
    %5435 = vmatprep.subr.mxu0 0.0
    %5436 = vmatpush1.msra.mxu0 0.0
    %5437 = vmatprep.subr.mxu0 0.0
    %5438 = vmatpush1.msra.mxu0 0.0
    %5439 = vmatprep.subr.mxu0 0.0
    %5440 = vmatpush1.msra.mxu0 0.0
    %5441 = vmatprep.subr.mxu0 0.0
    %5442 = vmatpush1.msra.mxu0 0.0
    %5443 = vmatprep.subr.mxu0 0.0
    %5444 = vmatpush1.msra.mxu0 0.0
    %5445 = vmatprep.subr.mxu0 0.0
    %5446 = vmatpush1.msra.mxu0 0.0
    %5447 = vmatprep.subr.mxu0 0.0
    %5448 = vmatpush1.msra.mxu0 0.0
    %5449 = vmatprep.subr.mxu0 0.0
    %5450 = vmatpush1.msra.mxu0 0.0
    %5451 = vmatprep.subr.mxu0 0.0
    %5452 = vmatpush1.msra.mxu0 0.0
    %5453 = vmatprep.subr.mxu0 0.0
    %5454 = vmatpush1.msra.mxu0 0.0
    %5455 = vmatprep.subr.mxu0 0.0
    %5456 = vmatpush1.msra.mxu0 0.0
    %5457 = vmatprep.subr.mxu0 0.0
    %5458 = vmatpush1.msra.mxu0 0.0
    %5459 = vmatprep.subr.mxu0 0.0
    %5460 = vmatpush1.msra.mxu0 0.0
    %5461 = vmatprep.subr.mxu0 0.0
    %5462 = vmatpush1.msra.mxu0 0.0
    %5463 = vmatprep.subr.mxu0 0.0
    %5464 = vmatpush1.msra.mxu0 0.0
    %5465 = vmatprep.subr.mxu0 0.0
    %5466 = vmatpush1.msra.mxu0 0.0
    %5467 = vmatprep.subr.mxu0 0.0
    %5468 = vmatpush1.msra.mxu0 0.0
    %5469 = vmatprep.subr.mxu0 0.0
    %5470 = vmatpush1.msra.mxu0 0.0
    %5471 = vmatprep.subr.mxu0 0.0
    %5472 = vmatpush1.msra.mxu0 0.0
    %5473 = vmatprep.subr.mxu0 0.0
    %5474 = vmatpush1.msra.mxu0 0.0
    %5475 = vmatprep.mubr.f32.mxu0 0.0
    %5476 = vmatmul.mubr.f32.gmra.mrb[0].mxu0 %v5409
    %v5477 = vpop.f32.mrb[0].mxu0
    %v5478 = vadd.f32 0.0, %v5477
    %v5479 = vpop.f32.mrb[0].mxu0
    %5480 = vdwg.mxu0
    %s5481 = scalar_lea.vmem %s14, 160
    %v5482 = vld [vmem:[%s5481] sm:$0xff]
    %v5483 = vld [vmem:[%s5481 + $0x8] sm:$0xff]
    %v5484 = vld [vmem:[%s5481 + $0x10] sm:$0xff]
    %v5485 = vld [vmem:[%s5481 + $0x18] sm:$0xff]
    %v5486 = vld [vmem:[%s5481 + $0x20] sm:$0xff]
    %v5487 = vld [vmem:[%s5481 + $0x28] sm:$0xff]
    %v5488 = vld [vmem:[%s5481 + $0x30] sm:$0xff]
    %v5489 = vld [vmem:[%s5481 + $0x38] sm:$0xff]
    %v5490 = vld [vmem:[%s5481 + $0x40] sm:$0xff]
    %v5491 = vld [vmem:[%s5481 + $0x48] sm:$0xff]
    %v5493 = vsel %vm5259, %v5478, 0
    %5495 = vmatprep.subr.mxu0 0.0
    %5496 = vmatpush1.msra.mxu0 %v5482
    %5497 = vmatprep.subr.mxu0 0.0
    %5498 = vmatpush1.msra.mxu0 %v5483
    %5499 = vmatprep.subr.mxu0 0.0
    %5500 = vmatpush1.msra.mxu0 %v5484
    %5501 = vmatprep.subr.mxu0 0.0
    %5502 = vmatpush1.msra.mxu0 %v5485
    %5503 = vmatprep.subr.mxu0 0.0
    %5504 = vmatpush1.msra.mxu0 %v5486
    %5505 = vmatprep.subr.mxu0 0.0
    %5506 = vmatpush1.msra.mxu0 %v5487
    %5507 = vmatprep.subr.mxu0 0.0
    %5508 = vmatpush1.msra.mxu0 %v5488
    %5509 = vmatprep.subr.mxu0 0.0
    %5510 = vmatpush1.msra.mxu0 %v5489
    %5511 = vmatprep.subr.mxu0 0.0
    %5512 = vmatpush1.msra.mxu0 %v5490
    %5513 = vmatprep.subr.mxu0 0.0
    %5514 = vmatpush1.msra.mxu0 %v5491
    %5515 = vmatprep.subr.mxu0 0.0
    %5516 = vmatpush1.msra.mxu0 0.0
    %5517 = vmatprep.subr.mxu0 0.0
    %5518 = vmatpush1.msra.mxu0 0.0
    %5519 = vmatprep.subr.mxu0 0.0
    %5520 = vmatpush1.msra.mxu0 0.0
    %5521 = vmatprep.subr.mxu0 0.0
    %5522 = vmatpush1.msra.mxu0 0.0
    %5523 = vmatprep.subr.mxu0 0.0
    %5524 = vmatpush1.msra.mxu0 0.0
    %5525 = vmatprep.subr.mxu0 0.0
    %5526 = vmatpush1.msra.mxu0 0.0
    %5527 = vmatprep.subr.mxu0 0.0
    %5528 = vmatpush1.msra.mxu0 0.0
    %5529 = vmatprep.subr.mxu0 0.0
    %5530 = vmatpush1.msra.mxu0 0.0
    %5531 = vmatprep.subr.mxu0 0.0
    %5532 = vmatpush1.msra.mxu0 0.0
    %5533 = vmatprep.subr.mxu0 0.0
    %5534 = vmatpush1.msra.mxu0 0.0
    %5535 = vmatprep.subr.mxu0 0.0
    %5536 = vmatpush1.msra.mxu0 0.0
    %5537 = vmatprep.subr.mxu0 0.0
    %5538 = vmatpush1.msra.mxu0 0.0
    %5539 = vmatprep.subr.mxu0 0.0
    %5540 = vmatpush1.msra.mxu0 0.0
    %5541 = vmatprep.subr.mxu0 0.0
    %5542 = vmatpush1.msra.mxu0 0.0
    %5543 = vmatprep.subr.mxu0 0.0
    %5544 = vmatpush1.msra.mxu0 0.0
    %5545 = vmatprep.subr.mxu0 0.0
    %5546 = vmatpush1.msra.mxu0 0.0
    %5547 = vmatprep.subr.mxu0 0.0
    %5548 = vmatpush1.msra.mxu0 0.0
    %5549 = vmatprep.subr.mxu0 0.0
    %5550 = vmatpush1.msra.mxu0 0.0
    %5551 = vmatprep.subr.mxu0 0.0
    %5552 = vmatpush1.msra.mxu0 0.0
    %5553 = vmatprep.subr.mxu0 0.0
    %5554 = vmatpush1.msra.mxu0 0.0
    %5555 = vmatprep.subr.mxu0 0.0
    %5556 = vmatpush1.msra.mxu0 0.0
    %5557 = vmatprep.subr.mxu0 0.0
    %5558 = vmatpush1.msra.mxu0 0.0
    %5559 = vmatprep.mubr.f32.mxu0 0.0
    %5560 = vmatmul.mubr.f32.gmra.mrb[0].mxu0 %v5493
    %v5561 = vpop.f32.mrb[0].mxu0
    %v5562 = vadd.f32 0.0, %v5561
    %v5563 = vpop.f32.mrb[0].mxu0
    %5564 = vdwg.mxu0
    %v5565 = vadd.f32 %v5403, %v5562
    %s5566 = scalar_lea.vmem %s13, 24
    %v5567 = vld [vmem:[%s5566] sm:$0xff]
    %v5569 = vsel %vm2946, %v5567, 0
    %5571 = vmatprep.subr.mxu0 0.0
    %5572 = vmatpush1.msra.mxu0 %v5084
    %5573 = vmatprep.subr.mxu0 0.0
    %5574 = vmatpush1.msra.mxu0 %v5085
    %5575 = vmatprep.subr.mxu0 0.0
    %5576 = vmatpush1.msra.mxu0 %v5086
    %5577 = vmatprep.subr.mxu0 0.0
    %5578 = vmatpush1.msra.mxu0 %v5087
    %5579 = vmatprep.subr.mxu0 0.0
    %5580 = vmatpush1.msra.mxu0 %v5088
    %5581 = vmatprep.subr.mxu0 0.0
    %5582 = vmatpush1.msra.mxu0 0.0
    %5583 = vmatprep.subr.mxu0 0.0
    %5584 = vmatpush1.msra.mxu0 0.0
    %5585 = vmatprep.subr.mxu0 0.0
    %5586 = vmatpush1.msra.mxu0 0.0
    %5587 = vmatprep.subr.mxu0 0.0
    %5588 = vmatpush1.msra.mxu0 0.0
    %5589 = vmatprep.subr.mxu0 0.0
    %5590 = vmatpush1.msra.mxu0 0.0
    %5591 = vmatprep.subr.mxu0 0.0
    %5592 = vmatpush1.msra.mxu0 0.0
    %5593 = vmatprep.subr.mxu0 0.0
    %5594 = vmatpush1.msra.mxu0 0.0
    %5595 = vmatprep.subr.mxu0 0.0
    %5596 = vmatpush1.msra.mxu0 0.0
    %5597 = vmatprep.subr.mxu0 0.0
    %5598 = vmatpush1.msra.mxu0 0.0
    %5599 = vmatprep.subr.mxu0 0.0
    %5600 = vmatpush1.msra.mxu0 0.0
    %5601 = vmatprep.subr.mxu0 0.0
    %5602 = vmatpush1.msra.mxu0 0.0
    %5603 = vmatprep.subr.mxu0 0.0
    %5604 = vmatpush1.msra.mxu0 0.0
    %5605 = vmatprep.subr.mxu0 0.0
    %5606 = vmatpush1.msra.mxu0 0.0
    %5607 = vmatprep.subr.mxu0 0.0
    %5608 = vmatpush1.msra.mxu0 0.0
    %5609 = vmatprep.subr.mxu0 0.0
    %5610 = vmatpush1.msra.mxu0 0.0
    %5611 = vmatprep.subr.mxu0 0.0
    %5612 = vmatpush1.msra.mxu0 0.0
    %5613 = vmatprep.subr.mxu0 0.0
    %5614 = vmatpush1.msra.mxu0 0.0
    %5615 = vmatprep.subr.mxu0 0.0
    %5616 = vmatpush1.msra.mxu0 0.0
    %5617 = vmatprep.subr.mxu0 0.0
    %5618 = vmatpush1.msra.mxu0 0.0
    %5619 = vmatprep.subr.mxu0 0.0
    %5620 = vmatpush1.msra.mxu0 0.0
    %5621 = vmatprep.subr.mxu0 0.0
    %5622 = vmatpush1.msra.mxu0 0.0
    %5623 = vmatprep.subr.mxu0 0.0
    %5624 = vmatpush1.msra.mxu0 0.0
    %5625 = vmatprep.subr.mxu0 0.0
    %5626 = vmatpush1.msra.mxu0 0.0
    %5627 = vmatprep.subr.mxu0 0.0
    %5628 = vmatpush1.msra.mxu0 0.0
    %5629 = vmatprep.subr.mxu0 0.0
    %5630 = vmatpush1.msra.mxu0 0.0
    %5631 = vmatprep.subr.mxu0 0.0
    %5632 = vmatpush1.msra.mxu0 0.0
    %5633 = vmatprep.subr.mxu0 0.0
    %5634 = vmatpush1.msra.mxu0 0.0
    %5635 = vmatprep.mubr.f32.mxu0 0.0
    %5636 = vmatmul.mubr.f32.gmra.mrb[0].mxu0 %v5569
    %v5637 = vpop.f32.mrb[0].mxu0
    %v5638 = vadd.f32 0.0, %v5637
    %v5639 = vpop.f32.mrb[0].mxu0
    %5640 = vdwg.mxu0
    %s5641 = scalar_lea.vmem %s14, 240
    %v5642 = vld [vmem:[%s5641] sm:$0xff]
    %v5643 = vld [vmem:[%s5641 + $0x8] sm:$0xff]
    %v5644 = vld [vmem:[%s5641 + $0x10] sm:$0xff]
    %v5645 = vld [vmem:[%s5641 + $0x18] sm:$0xff]
    %v5646 = vld [vmem:[%s5641 + $0x20] sm:$0xff]
    %v5647 = vld [vmem:[%s5641 + $0x28] sm:$0xff]
    %v5648 = vld [vmem:[%s5641 + $0x30] sm:$0xff]
    %v5649 = vld [vmem:[%s5641 + $0x38] sm:$0xff]
    %v5650 = vld [vmem:[%s5641 + $0x40] sm:$0xff]
    %v5651 = vld [vmem:[%s5641 + $0x48] sm:$0xff]
    %v5653 = vsel %vm5259, %v5638, 0
    %5655 = vmatprep.subr.mxu0 0.0
    %5656 = vmatpush1.msra.mxu0 %v5642
    %5657 = vmatprep.subr.mxu0 0.0
    %5658 = vmatpush1.msra.mxu0 %v5643
    %5659 = vmatprep.subr.mxu0 0.0
    %5660 = vmatpush1.msra.mxu0 %v5644
    %5661 = vmatprep.subr.mxu0 0.0
    %5662 = vmatpush1.msra.mxu0 %v5645
    %5663 = vmatprep.subr.mxu0 0.0
    %5664 = vmatpush1.msra.mxu0 %v5646
    %5665 = vmatprep.subr.mxu0 0.0
    %5666 = vmatpush1.msra.mxu0 %v5647
    %5667 = vmatprep.subr.mxu0 0.0
    %5668 = vmatpush1.msra.mxu0 %v5648
    %5669 = vmatprep.subr.mxu0 0.0
    %5670 = vmatpush1.msra.mxu0 %v5649
    %5671 = vmatprep.subr.mxu0 0.0
    %5672 = vmatpush1.msra.mxu0 %v5650
    %5673 = vmatprep.subr.mxu0 0.0
    %5674 = vmatpush1.msra.mxu0 %v5651
    %5675 = vmatprep.subr.mxu0 0.0
    %5676 = vmatpush1.msra.mxu0 0.0
    %5677 = vmatprep.subr.mxu0 0.0
    %5678 = vmatpush1.msra.mxu0 0.0
    %5679 = vmatprep.subr.mxu0 0.0
    %5680 = vmatpush1.msra.mxu0 0.0
    %5681 = vmatprep.subr.mxu0 0.0
    %5682 = vmatpush1.msra.mxu0 0.0
    %5683 = vmatprep.subr.mxu0 0.0
    %5684 = vmatpush1.msra.mxu0 0.0
    %5685 = vmatprep.subr.mxu0 0.0
    %5686 = vmatpush1.msra.mxu0 0.0
    %5687 = vmatprep.subr.mxu0 0.0
    %5688 = vmatpush1.msra.mxu0 0.0
    %5689 = vmatprep.subr.mxu0 0.0
    %5690 = vmatpush1.msra.mxu0 0.0
    %5691 = vmatprep.subr.mxu0 0.0
    %5692 = vmatpush1.msra.mxu0 0.0
    %5693 = vmatprep.subr.mxu0 0.0
    %5694 = vmatpush1.msra.mxu0 0.0
    %5695 = vmatprep.subr.mxu0 0.0
    %5696 = vmatpush1.msra.mxu0 0.0
    %5697 = vmatprep.subr.mxu0 0.0
    %5698 = vmatpush1.msra.mxu0 0.0
    %5699 = vmatprep.subr.mxu0 0.0
    %5700 = vmatpush1.msra.mxu0 0.0
    %5701 = vmatprep.subr.mxu0 0.0
    %5702 = vmatpush1.msra.mxu0 0.0
    %5703 = vmatprep.subr.mxu0 0.0
    %5704 = vmatpush1.msra.mxu0 0.0
    %5705 = vmatprep.subr.mxu0 0.0
    %5706 = vmatpush1.msra.mxu0 0.0
    %5707 = vmatprep.subr.mxu0 0.0
    %5708 = vmatpush1.msra.mxu0 0.0
    %5709 = vmatprep.subr.mxu0 0.0
    %5710 = vmatpush1.msra.mxu0 0.0
    %5711 = vmatprep.subr.mxu0 0.0
    %5712 = vmatpush1.msra.mxu0 0.0
    %5713 = vmatprep.subr.mxu0 0.0
    %5714 = vmatpush1.msra.mxu0 0.0
    %5715 = vmatprep.subr.mxu0 0.0
    %5716 = vmatpush1.msra.mxu0 0.0
    %5717 = vmatprep.subr.mxu0 0.0
    %5718 = vmatpush1.msra.mxu0 0.0
    %5719 = vmatprep.mubr.f32.mxu0 0.0
    %5720 = vmatmul.mubr.f32.gmra.mrb[0].mxu0 %v5653
    %v5721 = vpop.f32.mrb[0].mxu0
    %v5722 = vadd.f32 0.0, %v5721
    %v5723 = vpop.f32.mrb[0].mxu0
    %5724 = vdwg.mxu0
    %v5725 = vadd.f32 %v5565, %v5722
    %s5726 = scalar_lea.vmem %s13, 32
    %v5727 = vld [vmem:[%s5726] sm:$0xff]
    %v5729 = vsel %vm2946, %v5727, 0
    %5731 = vmatprep.subr.mxu0 0.0
    %5732 = vmatpush1.msra.mxu0 %v5084
    %5733 = vmatprep.subr.mxu0 0.0
    %5734 = vmatpush1.msra.mxu0 %v5085
    %5735 = vmatprep.subr.mxu0 0.0
    %5736 = vmatpush1.msra.mxu0 %v5086
    %5737 = vmatprep.subr.mxu0 0.0
    %5738 = vmatpush1.msra.mxu0 %v5087
    %5739 = vmatprep.subr.mxu0 0.0
    %5740 = vmatpush1.msra.mxu0 %v5088
    %5741 = vmatprep.subr.mxu0 0.0
    %5742 = vmatpush1.msra.mxu0 0.0
    %5743 = vmatprep.subr.mxu0 0.0
    %5744 = vmatpush1.msra.mxu0 0.0
    %5745 = vmatprep.subr.mxu0 0.0
    %5746 = vmatpush1.msra.mxu0 0.0
    %5747 = vmatprep.subr.mxu0 0.0
    %5748 = vmatpush1.msra.mxu0 0.0
    %5749 = vmatprep.subr.mxu0 0.0
    %5750 = vmatpush1.msra.mxu0 0.0
    %5751 = vmatprep.subr.mxu0 0.0
    %5752 = vmatpush1.msra.mxu0 0.0
    %5753 = vmatprep.subr.mxu0 0.0
    %5754 = vmatpush1.msra.mxu0 0.0
    %5755 = vmatprep.subr.mxu0 0.0
    %5756 = vmatpush1.msra.mxu0 0.0
    %5757 = vmatprep.subr.mxu0 0.0
    %5758 = vmatpush1.msra.mxu0 0.0
    %5759 = vmatprep.subr.mxu0 0.0
    %5760 = vmatpush1.msra.mxu0 0.0
    %5761 = vmatprep.subr.mxu0 0.0
    %5762 = vmatpush1.msra.mxu0 0.0
    %5763 = vmatprep.subr.mxu0 0.0
    %5764 = vmatpush1.msra.mxu0 0.0
    %5765 = vmatprep.subr.mxu0 0.0
    %5766 = vmatpush1.msra.mxu0 0.0
    %5767 = vmatprep.subr.mxu0 0.0
    %5768 = vmatpush1.msra.mxu0 0.0
    %5769 = vmatprep.subr.mxu0 0.0
    %5770 = vmatpush1.msra.mxu0 0.0
    %5771 = vmatprep.subr.mxu0 0.0
    %5772 = vmatpush1.msra.mxu0 0.0
    %5773 = vmatprep.subr.mxu0 0.0
    %5774 = vmatpush1.msra.mxu0 0.0
    %5775 = vmatprep.subr.mxu0 0.0
    %5776 = vmatpush1.msra.mxu0 0.0
    %5777 = vmatprep.subr.mxu0 0.0
    %5778 = vmatpush1.msra.mxu0 0.0
    %5779 = vmatprep.subr.mxu0 0.0
    %5780 = vmatpush1.msra.mxu0 0.0
    %5781 = vmatprep.subr.mxu0 0.0
    %5782 = vmatpush1.msra.mxu0 0.0
    %5783 = vmatprep.subr.mxu0 0.0
    %5784 = vmatpush1.msra.mxu0 0.0
    %5785 = vmatprep.subr.mxu0 0.0
    %5786 = vmatpush1.msra.mxu0 0.0
    %5787 = vmatprep.subr.mxu0 0.0
    %5788 = vmatpush1.msra.mxu0 0.0
    %5789 = vmatprep.subr.mxu0 0.0
    %5790 = vmatpush1.msra.mxu0 0.0
    %5791 = vmatprep.subr.mxu0 0.0
    %5792 = vmatpush1.msra.mxu0 0.0
    %5793 = vmatprep.subr.mxu0 0.0
    %5794 = vmatpush1.msra.mxu0 0.0
    %5795 = vmatprep.mubr.f32.mxu0 0.0
    %5796 = vmatmul.mubr.f32.gmra.mrb[0].mxu0 %v5729
    %v5797 = vpop.f32.mrb[0].mxu0
    %v5798 = vadd.f32 0.0, %v5797
    %v5799 = vpop.f32.mrb[0].mxu0
    %5800 = vdwg.mxu0
    %s5801 = scalar_lea.vmem %s14, 320
    %v5802 = vld [vmem:[%s5801] sm:$0xff]
    %v5803 = vld [vmem:[%s5801 + $0x8] sm:$0xff]
    %v5804 = vld [vmem:[%s5801 + $0x10] sm:$0xff]
    %v5805 = vld [vmem:[%s5801 + $0x18] sm:$0xff]
    %v5806 = vld [vmem:[%s5801 + $0x20] sm:$0xff]
    %v5807 = vld [vmem:[%s5801 + $0x28] sm:$0xff]
    %v5808 = vld [vmem:[%s5801 + $0x30] sm:$0xff]
    %v5809 = vld [vmem:[%s5801 + $0x38] sm:$0xff]
    %v5810 = vld [vmem:[%s5801 + $0x40] sm:$0xff]
    %v5811 = vld [vmem:[%s5801 + $0x48] sm:$0xff]
    %v5813 = vsel %vm5259, %v5798, 0
    %5815 = vmatprep.subr.mxu0 0.0
    %5816 = vmatpush1.msra.mxu0 %v5802
    %5817 = vmatprep.subr.mxu0 0.0
    %5818 = vmatpush1.msra.mxu0 %v5803
    %5819 = vmatprep.subr.mxu0 0.0
    %5820 = vmatpush1.msra.mxu0 %v5804
    %5821 = vmatprep.subr.mxu0 0.0
    %5822 = vmatpush1.msra.mxu0 %v5805
    %5823 = vmatprep.subr.mxu0 0.0
    %5824 = vmatpush1.msra.mxu0 %v5806
    %5825 = vmatprep.subr.mxu0 0.0
    %5826 = vmatpush1.msra.mxu0 %v5807
    %5827 = vmatprep.subr.mxu0 0.0
    %5828 = vmatpush1.msra.mxu0 %v5808
    %5829 = vmatprep.subr.mxu0 0.0
    %5830 = vmatpush1.msra.mxu0 %v5809
    %5831 = vmatprep.subr.mxu0 0.0
    %5832 = vmatpush1.msra.mxu0 %v5810
    %5833 = vmatprep.subr.mxu0 0.0
    %5834 = vmatpush1.msra.mxu0 %v5811
    %5835 = vmatprep.subr.mxu0 0.0
    %5836 = vmatpush1.msra.mxu0 0.0
    %5837 = vmatprep.subr.mxu0 0.0
    %5838 = vmatpush1.msra.mxu0 0.0
    %5839 = vmatprep.subr.mxu0 0.0
    %5840 = vmatpush1.msra.mxu0 0.0
    %5841 = vmatprep.subr.mxu0 0.0
    %5842 = vmatpush1.msra.mxu0 0.0
    %5843 = vmatprep.subr.mxu0 0.0
    %5844 = vmatpush1.msra.mxu0 0.0
    %5845 = vmatprep.subr.mxu0 0.0
    %5846 = vmatpush1.msra.mxu0 0.0
    %5847 = vmatprep.subr.mxu0 0.0
    %5848 = vmatpush1.msra.mxu0 0.0
    %5849 = vmatprep.subr.mxu0 0.0
    %5850 = vmatpush1.msra.mxu0 0.0
    %5851 = vmatprep.subr.mxu0 0.0
    %5852 = vmatpush1.msra.mxu0 0.0
    %5853 = vmatprep.subr.mxu0 0.0
    %5854 = vmatpush1.msra.mxu0 0.0
    %5855 = vmatprep.subr.mxu0 0.0
    %5856 = vmatpush1.msra.mxu0 0.0
    %5857 = vmatprep.subr.mxu0 0.0
    %5858 = vmatpush1.msra.mxu0 0.0
    %5859 = vmatprep.subr.mxu0 0.0
    %5860 = vmatpush1.msra.mxu0 0.0
    %5861 = vmatprep.subr.mxu0 0.0
    %5862 = vmatpush1.msra.mxu0 0.0
    %5863 = vmatprep.subr.mxu0 0.0
    %5864 = vmatpush1.msra.mxu0 0.0
    %5865 = vmatprep.subr.mxu0 0.0
    %5866 = vmatpush1.msra.mxu0 0.0
    %5867 = vmatprep.subr.mxu0 0.0
    %5868 = vmatpush1.msra.mxu0 0.0
    %5869 = vmatprep.subr.mxu0 0.0
    %5870 = vmatpush1.msra.mxu0 0.0
    %5871 = vmatprep.subr.mxu0 0.0
    %5872 = vmatpush1.msra.mxu0 0.0
    %5873 = vmatprep.subr.mxu0 0.0
    %5874 = vmatpush1.msra.mxu0 0.0
    %5875 = vmatprep.subr.mxu0 0.0
    %5876 = vmatpush1.msra.mxu0 0.0
    %5877 = vmatprep.subr.mxu0 0.0
    %5878 = vmatpush1.msra.mxu0 0.0
    %5879 = vmatprep.mubr.f32.mxu0 0.0
    %5880 = vmatmul.mubr.f32.gmra.mrb[0].mxu0 %v5813
    %v5881 = vpop.f32.mrb[0].mxu0
    %v5882 = vadd.f32 0.0, %v5881
    %v5883 = vpop.f32.mrb[0].mxu0
    %5884 = vdwg.mxu0
    %v5885 = vadd.f32 %v5725, %v5882
    %v5886 = vld [vmem:[%s15] sm:$0x1]
    %v5888 = vlaneseq
    %v5889 = vshrl.u32 %v5888, 7
    %v5890 = vsub.s32 0, %v5889
    %v5891 = vrot.slane %v5886, %v5890
    %v5893 = vadd.f32 %v5885, %v5891
    %v5894 = vtanh.pop %v5893
    %v5895 = vld [vmem:[%s16] sm:$0xff]
    %v5896 = vld [vmem:[%s16 + $0x8] sm:$0xff]
    %v5897 = vld [vmem:[%s16 + $0x10] sm:$0xff]
    %v5898 = vld [vmem:[%s16 + $0x18] sm:$0xff]
    %v5899 = vld [vmem:[%s16 + $0x20] sm:$0xff]
    %v5900 = vld [vmem:[%s16 + $0x28] sm:$0xff]
    %v5901 = vld [vmem:[%s16 + $0x30] sm:$0xff]
    %v5902 = vld [vmem:[%s16 + $0x38] sm:$0xff]
    %v5903 = vld [vmem:[%s16 + $0x40] sm:$0xff]
    %v5904 = vld [vmem:[%s16 + $0x48] sm:$0xff]
    %v5905 = vld [vmem:[%s16 + $0x50] sm:$0xff]
    %v5906 = vld [vmem:[%s16 + $0x58] sm:$0xff]
    %v5907 = vld [vmem:[%s16 + $0x60] sm:$0xff]
    %v5908 = vld [vmem:[%s16 + $0x68] sm:$0xff]
    %v5909 = vld [vmem:[%s16 + $0x70] sm:$0xff]
    %v5910 = vld [vmem:[%s17] sm:$0x1]
    %v5912 = vlaneseq
    %v5913 = vshrl.u32 %v5912, 7
    %v5914 = vsub.s32 0, %v5913
    %v5915 = vrot.slane %v5910, %v5914
    %vm5917 = vcmask 982016
    %v5919 = vsel %vm5917, %v5894, 0
    %5921 = vmatprep.subr.mxu0 0.0
    %5922 = vmatpush1.msra.mxu0 %v5895
    %5923 = vmatprep.subr.mxu0 0.0
    %5924 = vmatpush1.msra.mxu0 %v5896
    %5925 = vmatprep.subr.mxu0 0.0
    %5926 = vmatpush1.msra.mxu0 %v5897
    %5927 = vmatprep.subr.mxu0 0.0
    %5928 = vmatpush1.msra.mxu0 %v5898
    %5929 = vmatprep.subr.mxu0 0.0
    %5930 = vmatpush1.msra.mxu0 %v5899
    %5931 = vmatprep.subr.mxu0 0.0
    %5932 = vmatpush1.msra.mxu0 %v5900
    %5933 = vmatprep.subr.mxu0 0.0
    %5934 = vmatpush1.msra.mxu0 %v5901
    %5935 = vmatprep.subr.mxu0 0.0
    %5936 = vmatpush1.msra.mxu0 %v5902
    %5937 = vmatprep.subr.mxu0 0.0
    %5938 = vmatpush1.msra.mxu0 %v5903
    %5939 = vmatprep.subr.mxu0 0.0
    %5940 = vmatpush1.msra.mxu0 %v5904
    %5941 = vmatprep.subr.mxu0 0.0
    %5942 = vmatpush1.msra.mxu0 %v5905
    %5943 = vmatprep.subr.mxu0 0.0
    %5944 = vmatpush1.msra.mxu0 %v5906
    %5945 = vmatprep.subr.mxu0 0.0
    %5946 = vmatpush1.msra.mxu0 %v5907
    %5947 = vmatprep.subr.mxu0 0.0
    %5948 = vmatpush1.msra.mxu0 %v5908
    %5949 = vmatprep.subr.mxu0 0.0
    %5950 = vmatpush1.msra.mxu0 %v5909
    %5951 = vmatprep.subr.mxu0 0.0
    %5952 = vmatpush1.msra.mxu0 0.0
    %5953 = vmatprep.subr.mxu0 0.0
    %5954 = vmatpush1.msra.mxu0 0.0
    %5955 = vmatprep.subr.mxu0 0.0
    %5956 = vmatpush1.msra.mxu0 0.0
    %5957 = vmatprep.subr.mxu0 0.0
    %5958 = vmatpush1.msra.mxu0 0.0
    %5959 = vmatprep.subr.mxu0 0.0
    %5960 = vmatpush1.msra.mxu0 0.0
    %5961 = vmatprep.subr.mxu0 0.0
    %5962 = vmatpush1.msra.mxu0 0.0
    %5963 = vmatprep.subr.mxu0 0.0
    %5964 = vmatpush1.msra.mxu0 0.0
    %5965 = vmatprep.subr.mxu0 0.0
    %5966 = vmatpush1.msra.mxu0 0.0
    %5967 = vmatprep.subr.mxu0 0.0
    %5968 = vmatpush1.msra.mxu0 0.0
    %5969 = vmatprep.subr.mxu0 0.0
    %5970 = vmatpush1.msra.mxu0 0.0
    %5971 = vmatprep.subr.mxu0 0.0
    %5972 = vmatpush1.msra.mxu0 0.0
    %5973 = vmatprep.subr.mxu0 0.0
    %5974 = vmatpush1.msra.mxu0 0.0
    %5975 = vmatprep.subr.mxu0 0.0
    %5976 = vmatpush1.msra.mxu0 0.0
    %5977 = vmatprep.subr.mxu0 0.0
    %5978 = vmatpush1.msra.mxu0 0.0
    %5979 = vmatprep.subr.mxu0 0.0
    %5980 = vmatpush1.msra.mxu0 0.0
    %5981 = vmatprep.subr.mxu0 0.0
    %5982 = vmatpush1.msra.mxu0 0.0
    %5983 = vmatprep.subr.mxu0 0.0
    %5984 = vmatpush1.msra.mxu0 0.0
    %5985 = vmatprep.mubr.f32.mxu0 0.0
    %5986 = vmatmul.mubr.f32.gmra.mrb[0].mxu0 %v5919
    %v5987 = vpop.f32.mrb[0].mxu0
    %v5988 = vadd.f32 %v5915, %v5987
    %v5989 = vpop.f32.mrb[0].mxu0
    %5990 = vdwg.mxu0
    %v5991 = vtanh.pop %v5988
    %v5992 = vld [vmem:[%s18] sm:$0xff]
    %v5993 = vld [vmem:[%s18 + $0x8] sm:$0xff]
    %v5994 = vld [vmem:[%s18 + $0x10] sm:$0xff]
    %v5995 = vld [vmem:[%s18 + $0x18] sm:$0xff]
    %v5996 = vld [vmem:[%s18 + $0x20] sm:$0xff]
    %v5997 = vld [vmem:[%s18 + $0x28] sm:$0xff]
    %v5998 = vld [vmem:[%s18 + $0x30] sm:$0xff]
    %v5999 = vld [vmem:[%s18 + $0x38] sm:$0xff]
    %v6000 = vld [vmem:[%s18 + $0x40] sm:$0xff]
    %v6001 = vld [vmem:[%s18 + $0x48] sm:$0xff]
    %v6002 = vld [vmem:[%s18 + $0x50] sm:$0xf]
    %v6003 = vld [vmem:[%s19] sm:$0x1]
    %v6005 = vlaneseq
    %v6006 = vshrl.u32 %v6005, 7
    %v6007 = vsub.s32 0, %v6006
    %v6008 = vrot.slane %v6003, %v6007
    %v6011 = vsel %vm3381, %v5991, 0
    %v6014 = vsel %vm2522, %v6002, 0
    %6016 = vmatprep.subr.mxu0 0.0
    %6017 = vmatpush1.msra.mxu0 %v5992
    %6018 = vmatprep.subr.mxu0 0.0
    %6019 = vmatpush1.msra.mxu0 %v5993
    %6020 = vmatprep.subr.mxu0 0.0
    %6021 = vmatpush1.msra.mxu0 %v5994
    %6022 = vmatprep.subr.mxu0 0.0
    %6023 = vmatpush1.msra.mxu0 %v5995
    %6024 = vmatprep.subr.mxu0 0.0
    %6025 = vmatpush1.msra.mxu0 %v5996
    %6026 = vmatprep.subr.mxu0 0.0
    %6027 = vmatpush1.msra.mxu0 %v5997
    %6028 = vmatprep.subr.mxu0 0.0
    %6029 = vmatpush1.msra.mxu0 %v5998
    %6030 = vmatprep.subr.mxu0 0.0
    %6031 = vmatpush1.msra.mxu0 %v5999
    %6032 = vmatprep.subr.mxu0 0.0
    %6033 = vmatpush1.msra.mxu0 %v6000
    %6034 = vmatprep.subr.mxu0 0.0
    %6035 = vmatpush1.msra.mxu0 %v6001
    %6036 = vmatprep.subr.mxu0 0.0
    %6037 = vmatpush1.msra.mxu0 %v6014
    %6038 = vmatprep.subr.mxu0 0.0
    %6039 = vmatpush1.msra.mxu0 0.0
    %6040 = vmatprep.subr.mxu0 0.0
    %6041 = vmatpush1.msra.mxu0 0.0
    %6042 = vmatprep.subr.mxu0 0.0
    %6043 = vmatpush1.msra.mxu0 0.0
    %6044 = vmatprep.subr.mxu0 0.0
    %6045 = vmatpush1.msra.mxu0 0.0
    %6046 = vmatprep.subr.mxu0 0.0
    %6047 = vmatpush1.msra.mxu0 0.0
    %6048 = vmatprep.subr.mxu0 0.0
    %6049 = vmatpush1.msra.mxu0 0.0
    %6050 = vmatprep.subr.mxu0 0.0
    %6051 = vmatpush1.msra.mxu0 0.0
    %6052 = vmatprep.subr.mxu0 0.0
    %6053 = vmatpush1.msra.mxu0 0.0
    %6054 = vmatprep.subr.mxu0 0.0
    %6055 = vmatpush1.msra.mxu0 0.0
    %6056 = vmatprep.subr.mxu0 0.0
    %6057 = vmatpush1.msra.mxu0 0.0
    %6058 = vmatprep.subr.mxu0 0.0
    %6059 = vmatpush1.msra.mxu0 0.0
    %6060 = vmatprep.subr.mxu0 0.0
    %6061 = vmatpush1.msra.mxu0 0.0
    %6062 = vmatprep.subr.mxu0 0.0
    %6063 = vmatpush1.msra.mxu0 0.0
    %6064 = vmatprep.subr.mxu0 0.0
    %6065 = vmatpush1.msra.mxu0 0.0
    %6066 = vmatprep.subr.mxu0 0.0
    %6067 = vmatpush1.msra.mxu0 0.0
    %6068 = vmatprep.subr.mxu0 0.0
    %6069 = vmatpush1.msra.mxu0 0.0
    %6070 = vmatprep.subr.mxu0 0.0
    %6071 = vmatpush1.msra.mxu0 0.0
    %6072 = vmatprep.subr.mxu0 0.0
    %6073 = vmatpush1.msra.mxu0 0.0
    %6074 = vmatprep.subr.mxu0 0.0
    %6075 = vmatpush1.msra.mxu0 0.0
    %6076 = vmatprep.subr.mxu0 0.0
    %6077 = vmatpush1.msra.mxu0 0.0
    %6078 = vmatprep.subr.mxu0 0.0
    %6079 = vmatpush1.msra.mxu0 0.0
    %6080 = vmatprep.mubr.f32.mxu0 0.0
    %6081 = vmatmul.mubr.f32.gmra.mrb[0].mxu0 %v6011
    %v6082 = vpop.f32.mrb[0].mxu0
    %v6083 = vadd.f32 %v6008, %v6082
    %v6084 = vpop.f32.mrb[0].mxu0
    %6085 = vdwg.mxu0
    %6086 = vmax.xlane.f32.xlu0 %v6083
    %v6087 = vpop.xlane.xlu0 %6086
    %v6088 = vsub.f32 %v6083, %v6087
    %v6089 = vmul.f32 %v6088, 1.442695
    %v6090 = vpow.pop %v6089
    %6091 = vadd.xlane.f32.xlu0 %v6090
    %v6092 = vpop.xlane.xlu0 %6091
    %v6093 = vrcp.pop %v6092
    %v6094 = vmul.f32 %v6090, %v6093
    %6095 = vst [vmem:[#allocation2] sm:$0xff] %v6083
    %6096 = vst [vmem:[#allocation4] sm:$0xff] %v6094
    // Predicated region
    $region82: #{tpu_custom_call.1} parent=1 // pred_check
      _
    $region83: #{tpu_custom_call.1} parent=1 // pred_check_branch
      %6098 = sbr.rel (0) target = $region85
    $region84: #{tpu_custom_call.1} parent=1 // pred_region
      %s6100 = ssub.s32 128, 128
      %6101 = vsyncadd [#allocation3], %s6100
      %s6103 = sshll.u32 [#allocation2], 4
      %s6104 = int_to_ptr.vmem [resolvable:$true] %s6103
      %6106 = dma.vmem_to_hbm [thread:$0]  %s6104, 128, %s20, [#allocation3]
    $region85: #{tpu_custom_call.1} parent=1 // pred_fallthru
      _
    // Predicated region
    $region86: #{tpu_custom_call.1} parent=1 // pred_check
      _
    $region87: #{tpu_custom_call.1} parent=1 // pred_check_branch
      %6108 = sbr.rel (0) target = $region89
    $region88: #{tpu_custom_call.1} parent=1 // pred_region
      %s6110 = ssub.s32 128, 128
      %6111 = vsyncadd [#allocation5], %s6110
      %s6113 = sshll.u32 [#allocation4], 4
      %s6114 = int_to_ptr.vmem [resolvable:$true] %s6113
      %6116 = dma.vmem_to_hbm [thread:$0]  %s6114, 128, %s21, [#allocation5]
    $region89: #{tpu_custom_call.1} parent=1 // pred_fallthru
      _
    // Predicated region
    $region90: #{tpu_custom_call.1} parent=1 // pred_check
      _
    $region91: #{tpu_custom_call.1} parent=1 // pred_check_branch
      %6118 = sbr.rel (0) target = $region93
    $region92: #{tpu_custom_call.1} parent=1 // pred_region
      %6119 = dma.done [#allocation3], 128
    $region93: #{tpu_custom_call.1} parent=1 // pred_fallthru
      _
    // Predicated region
    $region94: #{tpu_custom_call.1} parent=1 // pred_check
      _
    $region95: #{tpu_custom_call.1} parent=1 // pred_check_branch
      %6121 = sbr.rel (0) target = $region97
    $region96: #{tpu_custom_call.1} parent=1 // pred_region
      %6122 = dma.done [#allocation5], 128
    $region97: #{tpu_custom_call.1} parent=1 // pred_fallthru
      _
    %6123 = vsyncpa [#allocation3], 1
    %6124 = vsyncpa [#allocation5], 1

</llo_original>
